<compile_context>
chip_gen: v6e
topology: v6e:2x2x1
jax: 0.10.0
libtpu: 0.0.40
codegen_flags: <defaults>
</compile_context>

<pallas_src>
import functools

import jax
import jax.numpy as jnp
from jax.experimental import pallas as pl
from jax.experimental.pallas import tpu as pltpu


_CUBIC_W = (-0.09375, 0.59375, 0.59375, -0.09375)   # bicubic a=-0.75, fixed phase t=0.5


# ---------------------------------------------------------------------------
# Fused kernel: conv_first(s2) + trunk + skip + LR_conv + conv_last(s2 rows)
# ---------------------------------------------------------------------------
def _fused_kernel(xi_ref, wf_ref, bf_ref, tw_ref, tb_ref, lw_ref, lb_ref,
                  cw_ref, cb_ref, out_ref, plane, fea_s, res_s, *, nb, Ho, Wo, Ho2):
    nf = plane.shape[-1]
    M = Ho * Wo

    def conv3x3(get_w, bias):
        """3x3 / stride-1 / pad-1 conv over the zero-bordered bf16 plane.

        Per-tap accumulation: 9 (M, nf) @ (nf, n_out) MXU dots into one f32 acc;
        no 9*nf im2col slab is ever materialized in VMEM."""
        p = plane[...]                                             # (Ho+2, Wo+2, nf) bf16
        acc = None
        for t in range(9):
            ky, kx = t // 3, t % 3
            tap = p[ky:ky + Ho, kx:kx + Wo, :].reshape(M, nf)      # contiguous slices only
            d = jnp.dot(tap, get_w(t), preferred_element_type=jnp.float32)
            acc = d if acc is None else acc + d
        return acc + bias                                          # (M, n_out) f32

    def set_plane(v):
        # single f32 -> bf16 cast per plane write (instead of 9 casts per conv read)
        plane[1:1 + Ho, 1:1 + Wo, :] = v.reshape(Ho, Wo, nf).astype(jnp.bfloat16)

    # Zero only the 1-px border once; interiors are fully overwritten before every read.
    plane[0:1, :, :] = jnp.zeros((1, Wo + 2, nf), jnp.bfloat16)
    plane[Ho + 1:Ho + 2, :, :] = jnp.zeros((1, Wo + 2, nf), jnp.bfloat16)
    plane[:, 0:1, :] = jnp.zeros((Ho + 2, 1, nf), jnp.bfloat16)
    plane[:, Wo + 1:Wo + 2, :] = jnp.zeros((Ho + 2, 1, nf), jnp.bfloat16)

    # conv_first (stride 2; im2col built in XLA glue since Cin is tiny) + LeakyReLU(0.1)
    acc = jnp.dot(xi_ref[0], wf_ref[...], preferred_element_type=jnp.float32) + bf_ref[...]
    fea = jnp.where(acc >= 0, acc, 0.1 * acc)                      # (M, nf) f32
    fea_s[...] = fea
    res_s[...] = fea

    # trunk: nb x ResidualBlock_noBN.  fori_loop bounds live ranges; weights are read
    # per-tap with a dynamic block index so the full (nb,18,nf,nf) tensor is never live
    # in vregs.  Residual accumulation stays in f32 (res_s); conv inputs are bf16.
    def block(i, carry):
        set_plane(res_s[...])
        h = conv3x3(lambda t: tw_ref[i, t], tb_ref[i, 0])
        set_plane(jnp.maximum(h, 0.0))
        r = conv3x3(lambda t: tw_ref[i, 9 + t], tb_ref[i, 1])
        res_s[...] = res_s[...] + r
        return carry

    jax.lax.fori_loop(0, nb, block, 0)

    # trunk skip (f32), then LR_conv + LeakyReLU(0.1)
    set_plane(res_s[...] + fea_s[...])
    lr = conv3x3(lambda t: lw_ref[t], lb_ref[...])
    set_plane(jnp.where(lr >= 0, lr, 0.1 * lr))

    # conv_last (3x3, stride 2): stride-2 rows exactly (outer-dim reshape trick, no
    # strided vector accesses), stride-1 columns (2x overcompute on out_nc=3 is
    # negligible; the even-column subsample is a free strided slice in the XLA epilogue).
    p = plane[...]
    Wp = Wo + 2
    acc2 = None
    for t in range(9):
        ky, kx = t // 3, t % 3
        rows = p[ky:ky + 2 * Ho2].reshape(Ho2, 2, Wp, nf)[:, 0]    # rows ky, ky+2, ...
        tap = rows[:, kx:kx + Wo, :].reshape(Ho2 * Wo, nf)
        d = jnp.dot(tap, cw_ref[t], preferred_element_type=jnp.float32)
        acc2 = d if acc2 is None else acc2 + d
    out_ref[0] = (acc2 + cb_ref[...]).astype(out_ref.dtype)        # (Ho2*Wo, out_nc) f32


# ---------------------------------------------------------------------------
# XLA glue
# ---------------------------------------------------------------------------
def _im2col_3x3_s2(x):
    """3x3 / stride-2 / pad-1 patches for conv_first. x: (N,H,W,C) -> (N, Ho*Wo, 9*C)."""
    N, H, W, C = x.shape
    xp = jnp.pad(x, ((0, 0), (1, 1), (1, 1), (0, 0)))
    Ho = (H + 2 - 3) // 2 + 1
    Wo = (W + 2 - 3) // 2 + 1
    cols = [xp[:, ky:ky + 2 * (Ho - 1) + 1:2, kx:kx + 2 * (Wo - 1) + 1:2, :]
            for ky in range(3) for kx in range(3)]
    return jnp.concatenate(cols, axis=-1).reshape(N, Ho * Wo, 9 * C), Ho, Wo


def _bicubic_ds4_nchw(x_nhwc):
    """Exact /4 bicubic (a=-0.75, fixed phase t=0.5, no antialias), pure f32, NCHW out."""
    N, H, W, C = x_nhwc.shape
    Ho, Wo = H // 4, W // 4
    xr = x_nhwc.reshape(N, Ho, 4, Wo, 4, C)
    out = jnp.zeros((N, Ho, Wo, C), jnp.float32)
    for i in range(4):
        for j in range(4):
            out = out + (_CUBIC_W[i] * _CUBIC_W[j]) * xr[:, :, i, :, j, :]
    return jnp.transpose(out, (0, 3, 1, 2))


# ---------------------------------------------------------------------------
# DownsampleNet forward (Pallas)
# ---------------------------------------------------------------------------
def downsample_net_forward(x_nchw, params, downscale=4):
    assert downscale == 4   # TODO(synk): only the /4 variant of the module is implemented
    x = jnp.transpose(x_nchw, (0, 2, 3, 1)).astype(jnp.float32)        # NCHW -> NHWC
    N, H, W, in_nc = x.shape
    wf, bfp = params["conv_first"]
    nf = wf.shape[-1]
    nb = len(params["trunk"])
    wc, bc = params["conv_last"]
    out_nc = wc.shape[-1]
    assert in_nc == out_nc and H % 4 == 0 and W % 4 == 0

    Ho1, Wo1 = H // 2, W // 2
    Ho2, Wo2 = Ho1 // 2, Wo1 // 2

    # bf16 operands, per-tap weight layout matching the kernel (tap index = ky*3+kx).
    xi, _, _ = _im2col_3x3_s2(x.astype(jnp.bfloat16))                  # (N, Ho1*Wo1, 9*in_nc)
    wf2 = wf.reshape(9 * in_nc, nf).astype(jnp.bfloat16)
    bf2 = bfp.reshape(1, nf).astype(jnp.float32)
    tw = jnp.stack([jnp.concatenate([w1.reshape(9, nf, nf), w2.reshape(9, nf, nf)], axis=0)
                    for (w1, b1, w2, b2) in params["trunk"]]).astype(jnp.bfloat16)   # (nb,18,nf,nf)
    tb = jnp.stack([jnp.stack([b1.reshape(1, nf), b2.reshape(1, nf)])
                    for (w1, b1, w2, b2) in params["trunk"]]).astype(jnp.float32)    # (nb,2,1,nf)
    wl, bl = params["lr_conv"]
    lw2 = wl.reshape(9, nf, nf).astype(jnp.bfloat16)
    lb2 = bl.reshape(1, nf).astype(jnp.float32)
    cw2 = wc.reshape(9, nf, out_nc).astype(jnp.bfloat16)
    cb2 = bc.reshape(1, out_nc).astype(jnp.float32)

    raw = pl.pallas_call(
        functools.partial(_fused_kernel, nb=nb, Ho=Ho1, Wo=Wo1, Ho2=Ho2),
        out_shape=jax.ShapeDtypeStruct((N, Ho2 * Wo1, out_nc), jnp.float32),
        grid=(N,),
        in_specs=[
            pl.BlockSpec((1, Ho1 * Wo1, 9 * in_nc), lambda n: (n, 0, 0)),
            pl.BlockSpec((9 * in_nc, nf), lambda n: (0, 0)),
            pl.BlockSpec((1, nf), lambda n: (0, 0)),
            pl.BlockSpec((nb, 18, nf, nf), lambda n: (0, 0, 0, 0)),
            pl.BlockSpec((nb, 2, 1, nf), lambda n: (0, 0, 0, 0)),
            pl.BlockSpec((9, nf, nf), lambda n: (0, 0, 0)),
            pl.BlockSpec((1, nf), lambda n: (0, 0)),
            pl.BlockSpec((9, nf, out_nc), lambda n: (0, 0, 0)),
            pl.BlockSpec((1, out_nc), lambda n: (0, 0)),
        ],
        out_specs=pl.BlockSpec((1, Ho2 * Wo1, out_nc), lambda n: (n, 0, 0)),
        scratch_shapes=[pltpu.VMEM((Ho1 + 2, Wo1 + 2, nf), jnp.bfloat16),   # padded plane
                        pltpu.VMEM((Ho1 * Wo1, nf), jnp.float32),           # conv_first skip
                        pltpu.VMEM((Ho1 * Wo1, nf), jnp.float32)],          # f32 residual
        compiler_params=pltpu.CompilerParams(
            dimension_semantics=("parallel",),
            vmem_limit_bytes=32 * 1024 * 1024),
    )(xi, wf2, bf2, tw, tb, lw2, lb2, cw2, cb2)

    # Tiny 3-channel XLA epilogue: NCHW relayout, even-column subsample (completes the
    # stride-2 conv_last), f32 bicubic /4 skip add.
    c = jnp.transpose(raw.reshape(N, Ho2, Wo1, out_nc), (0, 3, 1, 2))[:, :, :, 0::2]
    return c + _bicubic_ds4_nchw(x)


# ---------------------------------------------------------------------------
# Deterministic synthetic parameters (HWIO layout; shapes from the module __init__)
# ---------------------------------------------------------------------------
def init_params(key, in_nc=3, out_nc=3, nf=64, nb=4):
    keys = jax.random.split(key, 2 * nb + 3)

    def conv_init(k, kh, kw, cin, cout, scale):
        std = scale * (2.0 / (cin * kh * kw)) ** 0.5
        w = std * jax.random.normal(k, (kh, kw, cin, cout), jnp.float32)
        return w, jnp.zeros((cout,), jnp.float32)

    p = {"conv_first": conv_init(keys[0], 3, 3, in_nc, nf, 0.1)}
    trunk = []
    for i in range(nb):
        w1, b1 = conv_init(keys[1 + 2 * i], 3, 3, nf, nf, 0.1)
        w2, b2 = conv_init(keys[2 + 2 * i], 3, 3, nf, nf, 0.1)
        trunk.append((w1, b1, w2, b2))
    p["trunk"] = trunk
    p["lr_conv"] = conv_init(keys[2 * nb + 1], 3, 3, nf, nf, 1.0)
    p["conv_last"] = conv_init(keys[2 * nb + 2], 3, 3, nf, out_nc, 0.1)
    return p


# ---------------------------------------------------------------------------
# Pure-JAX reference (lax.conv).  Conv operands are rounded to bf16 to mirror the
# kernel's bf16-operand / f32-accumulation matmuls; the bicubic skip is pure f32 on
# both sides, so the comparison is tight.
# ---------------------------------------------------------------------------
def _rbf16(v):
    return v.astype(jnp.bfloat16).astype(jnp.float32)


def _conv_ref(x, w, b, stride, padding, act, residual=None):
    out = jax.lax.conv_general_dilated(
        _rbf16(x), _rbf16(w), (stride, stride),
        [(padding, padding), (padding, padding)],
        dimension_numbers=("NHWC", "HWIO", "NHWC"),
        precision=jax.lax.Precision.HIGHEST)
    out = out + b
    if residual is not None:
        out = out + residual
    if act == "lrelu":
        out = jnp.where(out >= 0, out, 0.1 * out)
    elif act == "relu":
        out = jnp.maximum(out, 0.0)
    return out


def downsample_net_reference(x_nchw, params):
    x = jnp.transpose(x_nchw, (0, 2, 3, 1)).astype(jnp.float32)
    w, b = params["conv_first"]
    fea = _conv_ref(x, w, b, 2, 1, "lrelu")
    out = fea
    for (w1, b1, w2, b2) in params["trunk"]:
        h = _conv_ref(out, w1, b1, 1, 1, "relu")
        out = _conv_ref(h, w2, b2, 1, 1, "none", residual=out)
    out = out + fea
    w, b = params["lr_conv"]
    out = _conv_ref(out, w, b, 1, 1, "lrelu")
    w, b = params["conv_last"]
    out = _conv_ref(out, w, b, 2, 1, "none")

    # bicubic /4 skip in pure f32 (independent conv formulation)
    c = x.shape[-1]
    k = jnp.array(_CUBIC_W, jnp.float32)
    bw = (k[:, None] * k[None, :])[:, :, None, None] * jnp.eye(c, dtype=jnp.float32)[None, None]
    bic = jax.lax.conv_general_dilated(
        x, bw, (4, 4), [(0, 0), (0, 0)],
        dimension_numbers=("NHWC", "HWIO", "NHWC"),
        precision=jax.lax.Precision.HIGHEST)
    out = out + bic
    return jnp.transpose(out, (0, 3, 1, 2))


if __name__ == "__main__":
    key = jax.random.PRNGKey(0)
    kx_, kp = jax.random.split(key)
    x = jax.random.normal(kx_, (2, 3, 16, 16), jnp.float32)            # NCHW like PyTorch
    params = init_params(kp, in_nc=3, out_nc=3, nf=64, nb=4)

    fwd = jax.jit(lambda xx: downsample_net_forward(xx, params))
    out = jax.block_until_ready(fwd(x))
    assert out.shape == (2, 3, 4, 4), out.shape

    ref = jax.block_until_ready(downsample_net_reference(x, params))
    max_err = float(jnp.max(jnp.abs(out - ref)))
    assert max_err < 1e-3, f"Pallas vs reference mismatch: {max_err}"

    print("KERNEL_OK")
</pallas_src>

<mosaic_0001>
module attributes {stable_mosaic.version = 11 : i64} {
  func.func @_fused_kernel(%arg0: i32, %arg1: memref<1x64x27xbf16, #tpu.memory_space<vmem>>, %arg2: memref<27x64xbf16, #tpu.memory_space<vmem>>, %arg3: memref<1x64xf32, #tpu.memory_space<vmem>>, %arg4: memref<4x18x64x64xbf16, #tpu.memory_space<vmem>>, %arg5: memref<4x2x1x64xf32, #tpu.memory_space<vmem>>, %arg6: memref<9x64x64xbf16, #tpu.memory_space<vmem>>, %arg7: memref<1x64xf32, #tpu.memory_space<vmem>>, %arg8: memref<9x64x3xbf16, #tpu.memory_space<vmem>>, %arg9: memref<1x3xf32, #tpu.memory_space<vmem>>, %arg10: memref<1x32x3xf32, #tpu.memory_space<vmem>>, %arg11: memref<10x10x64xbf16, #tpu.memory_space<vmem>>, %arg12: memref<64x64xf32, #tpu.memory_space<vmem>>, %arg13: memref<64x64xf32, #tpu.memory_space<vmem>>) attributes {dimension_semantics = [#tpu.dimension_semantics<parallel>], iteration_bounds = array<i64: 2>, scalar_prefetch = 0 : i64, scratch_operands = 3 : i64, tpu.core_type = #tpu.core_type<tc>, window_params = [{transform_indices = @transform_0, window_bounds = array<i64: 1, 64, 27>}, {pipeline_mode = #tpu.pipeline_mode<synchronous>, transform_indices = @transform_1, window_bounds = array<i64: 27, 64>}, {pipeline_mode = #tpu.pipeline_mode<synchronous>, transform_indices = @transform_2, window_bounds = array<i64: 1, 64>}, {pipeline_mode = #tpu.pipeline_mode<synchronous>, transform_indices = @transform_3, window_bounds = array<i64: 4, 18, 64, 64>}, {pipeline_mode = #tpu.pipeline_mode<synchronous>, transform_indices = @transform_4, window_bounds = array<i64: 4, 2, 1, 64>}, {pipeline_mode = #tpu.pipeline_mode<synchronous>, transform_indices = @transform_5, window_bounds = array<i64: 9, 64, 64>}, {pipeline_mode = #tpu.pipeline_mode<synchronous>, transform_indices = @transform_6, window_bounds = array<i64: 1, 64>}, {pipeline_mode = #tpu.pipeline_mode<synchronous>, transform_indices = @transform_7, window_bounds = array<i64: 9, 64, 3>}, {pipeline_mode = #tpu.pipeline_mode<synchronous>, transform_indices = @transform_8, window_bounds = array<i64: 1, 3>}, {transform_indices = @transform_9, window_bounds = array<i64: 1, 32, 3>}]} {
    %cst = arith.constant 0.000000e+00 : bf16
    %0 = vector.broadcast %cst : bf16 to vector<1x10x64xbf16>
    %c0 = arith.constant 0 : index
    %c0_0 = arith.constant 0 : index
    %c0_1 = arith.constant 0 : index
    %1 = vector.load %arg11[%c0, %c0_0, %c0_1] : memref<10x10x64xbf16, #tpu.memory_space<vmem>>, vector<1x10x64xbf16>
    tpu.vector_store %arg11[%c0, %c0_0, %c0_1], %0 {strides = array<i32>} : memref<10x10x64xbf16, #tpu.memory_space<vmem>>, vector<1x10x64xbf16>,
    %cst_2 = arith.constant 0.000000e+00 : bf16
    %2 = vector.broadcast %cst_2 : bf16 to vector<1x10x64xbf16>
    %c9 = arith.constant 9 : index
    %c0_3 = arith.constant 0 : index
    %c0_4 = arith.constant 0 : index
    %3 = vector.load %arg11[%c9, %c0_3, %c0_4] : memref<10x10x64xbf16, #tpu.memory_space<vmem>>, vector<1x10x64xbf16>
    tpu.vector_store %arg11[%c9, %c0_3, %c0_4], %2 {strides = array<i32>} : memref<10x10x64xbf16, #tpu.memory_space<vmem>>, vector<1x10x64xbf16>,
    %cst_5 = arith.constant 0.000000e+00 : bf16
    %4 = vector.broadcast %cst_5 : bf16 to vector<10x1x64xbf16>
    %c0_6 = arith.constant 0 : index
    %c0_7 = arith.constant 0 : index
    %c0_8 = arith.constant 0 : index
    %5 = vector.load %arg11[%c0_6, %c0_7, %c0_8] : memref<10x10x64xbf16, #tpu.memory_space<vmem>>, vector<10x1x64xbf16>
    tpu.vector_store %arg11[%c0_6, %c0_7, %c0_8], %4 {strides = array<i32>} : memref<10x10x64xbf16, #tpu.memory_space<vmem>>, vector<10x1x64xbf16>,
    %cst_9 = arith.constant 0.000000e+00 : bf16
    %6 = vector.broadcast %cst_9 : bf16 to vector<10x1x64xbf16>
    %c0_10 = arith.constant 0 : index
    %c9_11 = arith.constant 9 : index
    %c0_12 = arith.constant 0 : index
    %7 = vector.load %arg11[%c0_10, %c9_11, %c0_12] : memref<10x10x64xbf16, #tpu.memory_space<vmem>>, vector<10x1x64xbf16>
    tpu.vector_store %arg11[%c0_10, %c9_11, %c0_12], %6 {strides = array<i32>} : memref<10x10x64xbf16, #tpu.memory_space<vmem>>, vector<10x1x64xbf16>,
    %c0_13 = arith.constant 0 : index
    %c0_14 = arith.constant 0 : index
    %c0_15 = arith.constant 0 : index
    %8 = vector.load %arg1[%c0_13, %c0_14, %c0_15] : memref<1x64x27xbf16, #tpu.memory_space<vmem>>, vector<1x64x27xbf16>
    %9 = vector.shape_cast %8 : vector<1x64x27xbf16> to vector<64x27xbf16>
    %c0_16 = arith.constant 0 : index
    %c0_17 = arith.constant 0 : index
    %10 = vector.load %arg2[%c0_16, %c0_17] : memref<27x64xbf16, #tpu.memory_space<vmem>>, vector<27x64xbf16>
    %cst_18 = arith.constant dense<0.000000e+00> : vector<64x64xf32>
    %11 = tpu.matmul %9, %10, %cst_18 {dimension_numbers = #tpu.dot_dimension_numbers<[1], [0], [0], [1], [0, 0, 1, 1], [], []>} : vector<64x27xbf16>, vector<27x64xbf16>, vector<64x64xf32> -> vector<64x64xf32>
    %c0_19 = arith.constant 0 : index
    %c0_20 = arith.constant 0 : index
    %12 = vector.load %arg3[%c0_19, %c0_20] : memref<1x64xf32, #tpu.memory_space<vmem>>, vector<1x64xf32>
    %13 = vector.broadcast %12 : vector<1x64xf32> to vector<64x64xf32>
    %14 = arith.addf %11, %13 : vector<64x64xf32>
    %cst_21 = arith.constant 0.000000e+00 : f32
    %15 = vector.broadcast %cst_21 : f32 to vector<64x64xf32>
    %16 = arith.cmpf oge, %14, %15 : vector<64x64xf32>
    %cst_22 = arith.constant 1.000000e-01 : f32
    %17 = vector.broadcast %cst_22 : f32 to vector<64x64xf32>
    %18 = arith.mulf %17, %14 : vector<64x64xf32>
    %19 = arith.select %16, %14, %18 : vector<64x64xi1>, vector<64x64xf32>
    %c0_23 = arith.constant 0 : index
    %c0_24 = arith.constant 0 : index
    %20 = vector.load %arg12[%c0_23, %c0_24] : memref<64x64xf32, #tpu.memory_space<vmem>>, vector<64x64xf32>
    tpu.vector_store %arg12[%c0_23, %c0_24], %19 {strides = array<i32>} : memref<64x64xf32, #tpu.memory_space<vmem>>, vector<64x64xf32>,
    %c0_25 = arith.constant 0 : index
    %c0_26 = arith.constant 0 : index
    %21 = vector.load %arg13[%c0_25, %c0_26] : memref<64x64xf32, #tpu.memory_space<vmem>>, vector<64x64xf32>
    tpu.vector_store %arg13[%c0_25, %c0_26], %19 {strides = array<i32>} : memref<64x64xf32, #tpu.memory_space<vmem>>, vector<64x64xf32>,
    %c0_i32 = arith.constant 0 : i32
    %c4_i32 = arith.constant 4 : i32
    %22 = arith.addi %c0_i32, %c4_i32 : i32
    %c1_i32 = arith.constant 1 : i32
    scf.for %arg14 = %c0_i32 to %22 step %c1_i32  : i32 {
      %c0_117 = arith.constant 0 : index
      %c0_118 = arith.constant 0 : index
      %190 = vector.load %arg13[%c0_117, %c0_118] : memref<64x64xf32, #tpu.memory_space<vmem>>, vector<64x64xf32>
      %191 = vector.shape_cast %190 : vector<64x64xf32> to vector<8x8x64xf32>
      %192 = arith.truncf %191 : vector<8x8x64xf32> to vector<8x8x64xbf16>
      %c1_119 = arith.constant 1 : index
      %c1_120 = arith.constant 1 : index
      %c0_121 = arith.constant 0 : index
      %193 = vector.load %arg11[%c1_119, %c1_120, %c0_121] : memref<10x10x64xbf16, #tpu.memory_space<vmem>>, vector<8x8x64xbf16>
      tpu.vector_store %arg11[%c1_119, %c1_120, %c0_121], %192 {strides = array<i32>} : memref<10x10x64xbf16, #tpu.memory_space<vmem>>, vector<8x8x64xbf16>,
      %194 = arith.index_cast %arg14 : i32 to index
      %c0_122 = arith.constant 0 : index
      %c0_123 = arith.constant 0 : index
      %c0_124 = arith.constant 0 : index
      %195 = vector.load %arg5[%194, %c0_122, %c0_123, %c0_124] : memref<4x2x1x64xf32, #tpu.memory_space<vmem>>, vector<1x1x1x64xf32>
      %196 = vector.shape_cast %195 : vector<1x1x1x64xf32> to vector<1x64xf32>
      %c0_125 = arith.constant 0 : index
      %c0_126 = arith.constant 0 : index
      %c0_127 = arith.constant 0 : index
      %197 = vector.load %arg11[%c0_125, %c0_126, %c0_127] : memref<10x10x64xbf16, #tpu.memory_space<vmem>>, vector<10x10x64xbf16>
      %198 = vector.extract_strided_slice %197 {offsets = [0, 0, 0], sizes = [8, 8, 64], strides = [1, 1, 1]} : vector<10x10x64xbf16> to vector<8x8x64xbf16>
      %199 = vector.shape_cast %198 : vector<8x8x64xbf16> to vector<64x64xbf16>
      %200 = arith.index_cast %arg14 : i32 to index
      %c0_128 = arith.constant 0 : index
      %c0_129 = arith.constant 0 : index
      %c0_130 = arith.constant 0 : index
      %201 = vector.load %arg4[%200, %c0_128, %c0_129, %c0_130] : memref<4x18x64x64xbf16, #tpu.memory_space<vmem>>, vector<1x1x64x64xbf16>
      %202 = vector.shape_cast %201 : vector<1x1x64x64xbf16> to vector<64x64xbf16>
      %cst_131 = arith.constant dense<0.000000e+00> : vector<64x64xf32>
      %203 = tpu.matmul %199, %202, %cst_131 {dimension_numbers = #tpu.dot_dimension_numbers<[1], [0], [0], [1], [0, 0, 1, 1], [], []>} : vector<64x64xbf16>, vector<64x64xbf16>, vector<64x64xf32> -> vector<64x64xf32>
      %204 = vector.extract_strided_slice %197 {offsets = [0, 1, 0], sizes = [8, 8, 64], strides = [1, 1, 1]} : vector<10x10x64xbf16> to vector<8x8x64xbf16>
      %205 = vector.shape_cast %204 : vector<8x8x64xbf16> to vector<64x64xbf16>
      %206 = arith.index_cast %arg14 : i32 to index
      %c1_132 = arith.constant 1 : index
      %c0_133 = arith.constant 0 : index
      %c0_134 = arith.constant 0 : index
      %207 = vector.load %arg4[%206, %c1_132, %c0_133, %c0_134] : memref<4x18x64x64xbf16, #tpu.memory_space<vmem>>, vector<1x1x64x64xbf16>
      %208 = vector.shape_cast %207 : vector<1x1x64x64xbf16> to vector<64x64xbf16>
      %cst_135 = arith.constant dense<0.000000e+00> : vector<64x64xf32>
      %209 = tpu.matmul %205, %208, %cst_135 {dimension_numbers = #tpu.dot_dimension_numbers<[1], [0], [0], [1], [0, 0, 1, 1], [], []>} : vector<64x64xbf16>, vector<64x64xbf16>, vector<64x64xf32> -> vector<64x64xf32>
      %210 = arith.addf %203, %209 : vector<64x64xf32>
      %211 = vector.extract_strided_slice %197 {offsets = [0, 2, 0], sizes = [8, 8, 64], strides = [1, 1, 1]} : vector<10x10x64xbf16> to vector<8x8x64xbf16>
      %212 = vector.shape_cast %211 : vector<8x8x64xbf16> to vector<64x64xbf16>
      %213 = arith.index_cast %arg14 : i32 to index
      %c2_136 = arith.constant 2 : index
      %c0_137 = arith.constant 0 : index
      %c0_138 = arith.constant 0 : index
      %214 = vector.load %arg4[%213, %c2_136, %c0_137, %c0_138] : memref<4x18x64x64xbf16, #tpu.memory_space<vmem>>, vector<1x1x64x64xbf16>
      %215 = vector.shape_cast %214 : vector<1x1x64x64xbf16> to vector<64x64xbf16>
      %cst_139 = arith.constant dense<0.000000e+00> : vector<64x64xf32>
      %216 = tpu.matmul %212, %215, %cst_139 {dimension_numbers = #tpu.dot_dimension_numbers<[1], [0], [0], [1], [0, 0, 1, 1], [], []>} : vector<64x64xbf16>, vector<64x64xbf16>, vector<64x64xf32> -> vector<64x64xf32>
      %217 = arith.addf %210, %216 : vector<64x64xf32>
      %218 = vector.extract_strided_slice %197 {offsets = [1, 0, 0], sizes = [8, 8, 64], strides = [1, 1, 1]} : vector<10x10x64xbf16> to vector<8x8x64xbf16>
      %219 = vector.shape_cast %218 : vector<8x8x64xbf16> to vector<64x64xbf16>
      %220 = arith.index_cast %arg14 : i32 to index
      %c3_140 = arith.constant 3 : index
      %c0_141 = arith.constant 0 : index
      %c0_142 = arith.constant 0 : index
      %221 = vector.load %arg4[%220, %c3_140, %c0_141, %c0_142] : memref<4x18x64x64xbf16, #tpu.memory_space<vmem>>, vector<1x1x64x64xbf16>
      %222 = vector.shape_cast %221 : vector<1x1x64x64xbf16> to vector<64x64xbf16>
      %cst_143 = arith.constant dense<0.000000e+00> : vector<64x64xf32>
      %223 = tpu.matmul %219, %222, %cst_143 {dimension_numbers = #tpu.dot_dimension_numbers<[1], [0], [0], [1], [0, 0, 1, 1], [], []>} : vector<64x64xbf16>, vector<64x64xbf16>, vector<64x64xf32> -> vector<64x64xf32>
      %224 = arith.addf %217, %223 : vector<64x64xf32>
      %225 = vector.extract_strided_slice %197 {offsets = [1, 1, 0], sizes = [8, 8, 64], strides = [1, 1, 1]} : vector<10x10x64xbf16> to vector<8x8x64xbf16>
      %226 = vector.shape_cast %225 : vector<8x8x64xbf16> to vector<64x64xbf16>
      %227 = arith.index_cast %arg14 : i32 to index
      %c4_144 = arith.constant 4 : index
      %c0_145 = arith.constant 0 : index
      %c0_146 = arith.constant 0 : index
      %228 = vector.load %arg4[%227, %c4_144, %c0_145, %c0_146] : memref<4x18x64x64xbf16, #tpu.memory_space<vmem>>, vector<1x1x64x64xbf16>
      %229 = vector.shape_cast %228 : vector<1x1x64x64xbf16> to vector<64x64xbf16>
      %cst_147 = arith.constant dense<0.000000e+00> : vector<64x64xf32>
      %230 = tpu.matmul %226, %229, %cst_147 {dimension_numbers = #tpu.dot_dimension_numbers<[1], [0], [0], [1], [0, 0, 1, 1], [], []>} : vector<64x64xbf16>, vector<64x64xbf16>, vector<64x64xf32> -> vector<64x64xf32>
      %231 = arith.addf %224, %230 : vector<64x64xf32>
      %232 = vector.extract_strided_slice %197 {offsets = [1, 2, 0], sizes = [8, 8, 64], strides = [1, 1, 1]} : vector<10x10x64xbf16> to vector<8x8x64xbf16>
      %233 = vector.shape_cast %232 : vector<8x8x64xbf16> to vector<64x64xbf16>
      %234 = arith.index_cast %arg14 : i32 to index
      %c5_148 = arith.constant 5 : index
      %c0_149 = arith.constant 0 : index
      %c0_150 = arith.constant 0 : index
      %235 = vector.load %arg4[%234, %c5_148, %c0_149, %c0_150] : memref<4x18x64x64xbf16, #tpu.memory_space<vmem>>, vector<1x1x64x64xbf16>
      %236 = vector.shape_cast %235 : vector<1x1x64x64xbf16> to vector<64x64xbf16>
      %cst_151 = arith.constant dense<0.000000e+00> : vector<64x64xf32>
      %237 = tpu.matmul %233, %236, %cst_151 {dimension_numbers = #tpu.dot_dimension_numbers<[1], [0], [0], [1], [0, 0, 1, 1], [], []>} : vector<64x64xbf16>, vector<64x64xbf16>, vector<64x64xf32> -> vector<64x64xf32>
      %238 = arith.addf %231, %237 : vector<64x64xf32>
      %239 = vector.extract_strided_slice %197 {offsets = [2, 0, 0], sizes = [8, 8, 64], strides = [1, 1, 1]} : vector<10x10x64xbf16> to vector<8x8x64xbf16>
      %240 = vector.shape_cast %239 : vector<8x8x64xbf16> to vector<64x64xbf16>
      %241 = arith.index_cast %arg14 : i32 to index
      %c6_152 = arith.constant 6 : index
      %c0_153 = arith.constant 0 : index
      %c0_154 = arith.constant 0 : index
      %242 = vector.load %arg4[%241, %c6_152, %c0_153, %c0_154] : memref<4x18x64x64xbf16, #tpu.memory_space<vmem>>, vector<1x1x64x64xbf16>
      %243 = vector.shape_cast %242 : vector<1x1x64x64xbf16> to vector<64x64xbf16>
      %cst_155 = arith.constant dense<0.000000e+00> : vector<64x64xf32>
      %244 = tpu.matmul %240, %243, %cst_155 {dimension_numbers = #tpu.dot_dimension_numbers<[1], [0], [0], [1], [0, 0, 1, 1], [], []>} : vector<64x64xbf16>, vector<64x64xbf16>, vector<64x64xf32> -> vector<64x64xf32>
      %245 = arith.addf %238, %244 : vector<64x64xf32>
      %246 = vector.extract_strided_slice %197 {offsets = [2, 1, 0], sizes = [8, 8, 64], strides = [1, 1, 1]} : vector<10x10x64xbf16> to vector<8x8x64xbf16>
      %247 = vector.shape_cast %246 : vector<8x8x64xbf16> to vector<64x64xbf16>
      %248 = arith.index_cast %arg14 : i32 to index
      %c7_156 = arith.constant 7 : index
      %c0_157 = arith.constant 0 : index
      %c0_158 = arith.constant 0 : index
      %249 = vector.load %arg4[%248, %c7_156, %c0_157, %c0_158] : memref<4x18x64x64xbf16, #tpu.memory_space<vmem>>, vector<1x1x64x64xbf16>
      %250 = vector.shape_cast %249 : vector<1x1x64x64xbf16> to vector<64x64xbf16>
      %cst_159 = arith.constant dense<0.000000e+00> : vector<64x64xf32>
      %251 = tpu.matmul %247, %250, %cst_159 {dimension_numbers = #tpu.dot_dimension_numbers<[1], [0], [0], [1], [0, 0, 1, 1], [], []>} : vector<64x64xbf16>, vector<64x64xbf16>, vector<64x64xf32> -> vector<64x64xf32>
      %252 = arith.addf %245, %251 : vector<64x64xf32>
      %253 = vector.extract_strided_slice %197 {offsets = [2, 2, 0], sizes = [8, 8, 64], strides = [1, 1, 1]} : vector<10x10x64xbf16> to vector<8x8x64xbf16>
      %254 = vector.shape_cast %253 : vector<8x8x64xbf16> to vector<64x64xbf16>
      %255 = arith.index_cast %arg14 : i32 to index
      %c8_160 = arith.constant 8 : index
      %c0_161 = arith.constant 0 : index
      %c0_162 = arith.constant 0 : index
      %256 = vector.load %arg4[%255, %c8_160, %c0_161, %c0_162] : memref<4x18x64x64xbf16, #tpu.memory_space<vmem>>, vector<1x1x64x64xbf16>
      %257 = vector.shape_cast %256 : vector<1x1x64x64xbf16> to vector<64x64xbf16>
      %cst_163 = arith.constant dense<0.000000e+00> : vector<64x64xf32>
      %258 = tpu.matmul %254, %257, %cst_163 {dimension_numbers = #tpu.dot_dimension_numbers<[1], [0], [0], [1], [0, 0, 1, 1], [], []>} : vector<64x64xbf16>, vector<64x64xbf16>, vector<64x64xf32> -> vector<64x64xf32>
      %259 = arith.addf %252, %258 : vector<64x64xf32>
      %260 = vector.broadcast %196 : vector<1x64xf32> to vector<64x64xf32>
      %261 = arith.addf %259, %260 : vector<64x64xf32>
      %cst_164 = arith.constant 0.000000e+00 : f32
      %262 = vector.broadcast %cst_164 : f32 to vector<64x64xf32>
      %263 = arith.maximumf %261, %262 : vector<64x64xf32>
      %264 = vector.shape_cast %263 : vector<64x64xf32> to vector<8x8x64xf32>
      %265 = arith.truncf %264 : vector<8x8x64xf32> to vector<8x8x64xbf16>
      %c1_165 = arith.constant 1 : index
      %c1_166 = arith.constant 1 : index
      %c0_167 = arith.constant 0 : index
      %266 = vector.load %arg11[%c1_165, %c1_166, %c0_167] : memref<10x10x64xbf16, #tpu.memory_space<vmem>>, vector<8x8x64xbf16>
      tpu.vector_store %arg11[%c1_165, %c1_166, %c0_167], %265 {strides = array<i32>} : memref<10x10x64xbf16, #tpu.memory_space<vmem>>, vector<8x8x64xbf16>,
      %267 = arith.index_cast %arg14 : i32 to index
      %c1_168 = arith.constant 1 : index
      %c0_169 = arith.constant 0 : index
      %c0_170 = arith.constant 0 : index
      %268 = vector.load %arg5[%267, %c1_168, %c0_169, %c0_170] : memref<4x2x1x64xf32, #tpu.memory_space<vmem>>, vector<1x1x1x64xf32>
      %269 = vector.shape_cast %268 : vector<1x1x1x64xf32> to vector<1x64xf32>
      %c0_171 = arith.constant 0 : index
      %c0_172 = arith.constant 0 : index
      %c0_173 = arith.constant 0 : index
      %270 = vector.load %arg11[%c0_171, %c0_172, %c0_173] : memref<10x10x64xbf16, #tpu.memory_space<vmem>>, vector<10x10x64xbf16>
      %271 = vector.extract_strided_slice %270 {offsets = [0, 0, 0], sizes = [8, 8, 64], strides = [1, 1, 1]} : vector<10x10x64xbf16> to vector<8x8x64xbf16>
      %272 = vector.shape_cast %271 : vector<8x8x64xbf16> to vector<64x64xbf16>
      %273 = arith.index_cast %arg14 : i32 to index
      %c9_174 = arith.constant 9 : index
      %c0_175 = arith.constant 0 : index
      %c0_176 = arith.constant 0 : index
      %274 = vector.load %arg4[%273, %c9_174, %c0_175, %c0_176] : memref<4x18x64x64xbf16, #tpu.memory_space<vmem>>, vector<1x1x64x64xbf16>
      %275 = vector.shape_cast %274 : vector<1x1x64x64xbf16> to vector<64x64xbf16>
      %cst_177 = arith.constant dense<0.000000e+00> : vector<64x64xf32>
      %276 = tpu.matmul %272, %275, %cst_177 {dimension_numbers = #tpu.dot_dimension_numbers<[1], [0], [0], [1], [0, 0, 1, 1], [], []>} : vector<64x64xbf16>, vector<64x64xbf16>, vector<64x64xf32> -> vector<64x64xf32>
      %277 = vector.extract_strided_slice %270 {offsets = [0, 1, 0], sizes = [8, 8, 64], strides = [1, 1, 1]} : vector<10x10x64xbf16> to vector<8x8x64xbf16>
      %278 = vector.shape_cast %277 : vector<8x8x64xbf16> to vector<64x64xbf16>
      %279 = arith.index_cast %arg14 : i32 to index
      %c10 = arith.constant 10 : index
      %c0_178 = arith.constant 0 : index
      %c0_179 = arith.constant 0 : index
      %280 = vector.load %arg4[%279, %c10, %c0_178, %c0_179] : memref<4x18x64x64xbf16, #tpu.memory_space<vmem>>, vector<1x1x64x64xbf16>
      %281 = vector.shape_cast %280 : vector<1x1x64x64xbf16> to vector<64x64xbf16>
      %cst_180 = arith.constant dense<0.000000e+00> : vector<64x64xf32>
      %282 = tpu.matmul %278, %281, %cst_180 {dimension_numbers = #tpu.dot_dimension_numbers<[1], [0], [0], [1], [0, 0, 1, 1], [], []>} : vector<64x64xbf16>, vector<64x64xbf16>, vector<64x64xf32> -> vector<64x64xf32>
      %283 = arith.addf %276, %282 : vector<64x64xf32>
      %284 = vector.extract_strided_slice %270 {offsets = [0, 2, 0], sizes = [8, 8, 64], strides = [1, 1, 1]} : vector<10x10x64xbf16> to vector<8x8x64xbf16>
      %285 = vector.shape_cast %284 : vector<8x8x64xbf16> to vector<64x64xbf16>
      %286 = arith.index_cast %arg14 : i32 to index
      %c11 = arith.constant 11 : index
      %c0_181 = arith.constant 0 : index
      %c0_182 = arith.constant 0 : index
      %287 = vector.load %arg4[%286, %c11, %c0_181, %c0_182] : memref<4x18x64x64xbf16, #tpu.memory_space<vmem>>, vector<1x1x64x64xbf16>
      %288 = vector.shape_cast %287 : vector<1x1x64x64xbf16> to vector<64x64xbf16>
      %cst_183 = arith.constant dense<0.000000e+00> : vector<64x64xf32>
      %289 = tpu.matmul %285, %288, %cst_183 {dimension_numbers = #tpu.dot_dimension_numbers<[1], [0], [0], [1], [0, 0, 1, 1], [], []>} : vector<64x64xbf16>, vector<64x64xbf16>, vector<64x64xf32> -> vector<64x64xf32>
      %290 = arith.addf %283, %289 : vector<64x64xf32>
      %291 = vector.extract_strided_slice %270 {offsets = [1, 0, 0], sizes = [8, 8, 64], strides = [1, 1, 1]} : vector<10x10x64xbf16> to vector<8x8x64xbf16>
      %292 = vector.shape_cast %291 : vector<8x8x64xbf16> to vector<64x64xbf16>
      %293 = arith.index_cast %arg14 : i32 to index
      %c12 = arith.constant 12 : index
      %c0_184 = arith.constant 0 : index
      %c0_185 = arith.constant 0 : index
      %294 = vector.load %arg4[%293, %c12, %c0_184, %c0_185] : memref<4x18x64x64xbf16, #tpu.memory_space<vmem>>, vector<1x1x64x64xbf16>
      %295 = vector.shape_cast %294 : vector<1x1x64x64xbf16> to vector<64x64xbf16>
      %cst_186 = arith.constant dense<0.000000e+00> : vector<64x64xf32>
      %296 = tpu.matmul %292, %295, %cst_186 {dimension_numbers = #tpu.dot_dimension_numbers<[1], [0], [0], [1], [0, 0, 1, 1], [], []>} : vector<64x64xbf16>, vector<64x64xbf16>, vector<64x64xf32> -> vector<64x64xf32>
      %297 = arith.addf %290, %296 : vector<64x64xf32>
      %298 = vector.extract_strided_slice %270 {offsets = [1, 1, 0], sizes = [8, 8, 64], strides = [1, 1, 1]} : vector<10x10x64xbf16> to vector<8x8x64xbf16>
      %299 = vector.shape_cast %298 : vector<8x8x64xbf16> to vector<64x64xbf16>
      %300 = arith.index_cast %arg14 : i32 to index
      %c13 = arith.constant 13 : index
      %c0_187 = arith.constant 0 : index
      %c0_188 = arith.constant 0 : index
      %301 = vector.load %arg4[%300, %c13, %c0_187, %c0_188] : memref<4x18x64x64xbf16, #tpu.memory_space<vmem>>, vector<1x1x64x64xbf16>
      %302 = vector.shape_cast %301 : vector<1x1x64x64xbf16> to vector<64x64xbf16>
      %cst_189 = arith.constant dense<0.000000e+00> : vector<64x64xf32>
      %303 = tpu.matmul %299, %302, %cst_189 {dimension_numbers = #tpu.dot_dimension_numbers<[1], [0], [0], [1], [0, 0, 1, 1], [], []>} : vector<64x64xbf16>, vector<64x64xbf16>, vector<64x64xf32> -> vector<64x64xf32>
      %304 = arith.addf %297, %303 : vector<64x64xf32>
      %305 = vector.extract_strided_slice %270 {offsets = [1, 2, 0], sizes = [8, 8, 64], strides = [1, 1, 1]} : vector<10x10x64xbf16> to vector<8x8x64xbf16>
      %306 = vector.shape_cast %305 : vector<8x8x64xbf16> to vector<64x64xbf16>
      %307 = arith.index_cast %arg14 : i32 to index
      %c14 = arith.constant 14 : index
      %c0_190 = arith.constant 0 : index
      %c0_191 = arith.constant 0 : index
      %308 = vector.load %arg4[%307, %c14, %c0_190, %c0_191] : memref<4x18x64x64xbf16, #tpu.memory_space<vmem>>, vector<1x1x64x64xbf16>
      %309 = vector.shape_cast %308 : vector<1x1x64x64xbf16> to vector<64x64xbf16>
      %cst_192 = arith.constant dense<0.000000e+00> : vector<64x64xf32>
      %310 = tpu.matmul %306, %309, %cst_192 {dimension_numbers = #tpu.dot_dimension_numbers<[1], [0], [0], [1], [0, 0, 1, 1], [], []>} : vector<64x64xbf16>, vector<64x64xbf16>, vector<64x64xf32> -> vector<64x64xf32>
      %311 = arith.addf %304, %310 : vector<64x64xf32>
      %312 = vector.extract_strided_slice %270 {offsets = [2, 0, 0], sizes = [8, 8, 64], strides = [1, 1, 1]} : vector<10x10x64xbf16> to vector<8x8x64xbf16>
      %313 = vector.shape_cast %312 : vector<8x8x64xbf16> to vector<64x64xbf16>
      %314 = arith.index_cast %arg14 : i32 to index
      %c15 = arith.constant 15 : index
      %c0_193 = arith.constant 0 : index
      %c0_194 = arith.constant 0 : index
      %315 = vector.load %arg4[%314, %c15, %c0_193, %c0_194] : memref<4x18x64x64xbf16, #tpu.memory_space<vmem>>, vector<1x1x64x64xbf16>
      %316 = vector.shape_cast %315 : vector<1x1x64x64xbf16> to vector<64x64xbf16>
      %cst_195 = arith.constant dense<0.000000e+00> : vector<64x64xf32>
      %317 = tpu.matmul %313, %316, %cst_195 {dimension_numbers = #tpu.dot_dimension_numbers<[1], [0], [0], [1], [0, 0, 1, 1], [], []>} : vector<64x64xbf16>, vector<64x64xbf16>, vector<64x64xf32> -> vector<64x64xf32>
      %318 = arith.addf %311, %317 : vector<64x64xf32>
      %319 = vector.extract_strided_slice %270 {offsets = [2, 1, 0], sizes = [8, 8, 64], strides = [1, 1, 1]} : vector<10x10x64xbf16> to vector<8x8x64xbf16>
      %320 = vector.shape_cast %319 : vector<8x8x64xbf16> to vector<64x64xbf16>
      %321 = arith.index_cast %arg14 : i32 to index
      %c16 = arith.constant 16 : index
      %c0_196 = arith.constant 0 : index
      %c0_197 = arith.constant 0 : index
      %322 = vector.load %arg4[%321, %c16, %c0_196, %c0_197] : memref<4x18x64x64xbf16, #tpu.memory_space<vmem>>, vector<1x1x64x64xbf16>
      %323 = vector.shape_cast %322 : vector<1x1x64x64xbf16> to vector<64x64xbf16>
      %cst_198 = arith.constant dense<0.000000e+00> : vector<64x64xf32>
      %324 = tpu.matmul %320, %323, %cst_198 {dimension_numbers = #tpu.dot_dimension_numbers<[1], [0], [0], [1], [0, 0, 1, 1], [], []>} : vector<64x64xbf16>, vector<64x64xbf16>, vector<64x64xf32> -> vector<64x64xf32>
      %325 = arith.addf %318, %324 : vector<64x64xf32>
      %326 = vector.extract_strided_slice %270 {offsets = [2, 2, 0], sizes = [8, 8, 64], strides = [1, 1, 1]} : vector<10x10x64xbf16> to vector<8x8x64xbf16>
      %327 = vector.shape_cast %326 : vector<8x8x64xbf16> to vector<64x64xbf16>
      %328 = arith.index_cast %arg14 : i32 to index
      %c17 = arith.constant 17 : index
      %c0_199 = arith.constant 0 : index
      %c0_200 = arith.constant 0 : index
      %329 = vector.load %arg4[%328, %c17, %c0_199, %c0_200] : memref<4x18x64x64xbf16, #tpu.memory_space<vmem>>, vector<1x1x64x64xbf16>
      %330 = vector.shape_cast %329 : vector<1x1x64x64xbf16> to vector<64x64xbf16>
      %cst_201 = arith.constant dense<0.000000e+00> : vector<64x64xf32>
      %331 = tpu.matmul %327, %330, %cst_201 {dimension_numbers = #tpu.dot_dimension_numbers<[1], [0], [0], [1], [0, 0, 1, 1], [], []>} : vector<64x64xbf16>, vector<64x64xbf16>, vector<64x64xf32> -> vector<64x64xf32>
      %332 = arith.addf %325, %331 : vector<64x64xf32>
      %333 = vector.broadcast %269 : vector<1x64xf32> to vector<64x64xf32>
      %334 = arith.addf %332, %333 : vector<64x64xf32>
      %c0_202 = arith.constant 0 : index
      %c0_203 = arith.constant 0 : index
      %335 = vector.load %arg13[%c0_202, %c0_203] : memref<64x64xf32, #tpu.memory_space<vmem>>, vector<64x64xf32>
      %336 = arith.addf %335, %334 : vector<64x64xf32>
      %c0_204 = arith.constant 0 : index
      %c0_205 = arith.constant 0 : index
      %337 = vector.load %arg13[%c0_204, %c0_205] : memref<64x64xf32, #tpu.memory_space<vmem>>, vector<64x64xf32>
      tpu.vector_store %arg13[%c0_204, %c0_205], %336 {strides = array<i32>} : memref<64x64xf32, #tpu.memory_space<vmem>>, vector<64x64xf32>,
    }
    %c4_i32_27 = arith.constant 4 : i32
    %c0_28 = arith.constant 0 : index
    %c0_29 = arith.constant 0 : index
    %23 = vector.load %arg13[%c0_28, %c0_29] : memref<64x64xf32, #tpu.memory_space<vmem>>, vector<64x64xf32>
    %c0_30 = arith.constant 0 : index
    %c0_31 = arith.constant 0 : index
    %24 = vector.load %arg12[%c0_30, %c0_31] : memref<64x64xf32, #tpu.memory_space<vmem>>, vector<64x64xf32>
    %25 = arith.addf %23, %24 : vector<64x64xf32>
    %26 = vector.shape_cast %25 : vector<64x64xf32> to vector<8x8x64xf32>
    %27 = arith.truncf %26 : vector<8x8x64xf32> to vector<8x8x64xbf16>
    %c1 = arith.constant 1 : index
    %c1_32 = arith.constant 1 : index
    %c0_33 = arith.constant 0 : index
    %28 = vector.load %arg11[%c1, %c1_32, %c0_33] : memref<10x10x64xbf16, #tpu.memory_space<vmem>>, vector<8x8x64xbf16>
    tpu.vector_store %arg11[%c1, %c1_32, %c0_33], %27 {strides = array<i32>} : memref<10x10x64xbf16, #tpu.memory_space<vmem>>, vector<8x8x64xbf16>,
    %c0_34 = arith.constant 0 : index
    %c0_35 = arith.constant 0 : index
    %29 = vector.load %arg7[%c0_34, %c0_35] : memref<1x64xf32, #tpu.memory_space<vmem>>, vector<1x64xf32>
    %c0_36 = arith.constant 0 : index
    %c0_37 = arith.constant 0 : index
    %c0_38 = arith.constant 0 : index
    %30 = vector.load %arg11[%c0_36, %c0_37, %c0_38] : memref<10x10x64xbf16, #tpu.memory_space<vmem>>, vector<10x10x64xbf16>
    %31 = vector.extract_strided_slice %30 {offsets = [0, 0, 0], sizes = [8, 8, 64], strides = [1, 1, 1]} : vector<10x10x64xbf16> to vector<8x8x64xbf16>
    %32 = vector.shape_cast %31 : vector<8x8x64xbf16> to vector<64x64xbf16>
    %c0_39 = arith.constant 0 : index
    %c0_40 = arith.constant 0 : index
    %c0_41 = arith.constant 0 : index
    %33 = vector.load %arg6[%c0_39, %c0_40, %c0_41] : memref<9x64x64xbf16, #tpu.memory_space<vmem>>, vector<1x64x64xbf16>
    %34 = vector.shape_cast %33 : vector<1x64x64xbf16> to vector<64x64xbf16>
    %cst_42 = arith.constant dense<0.000000e+00> : vector<64x64xf32>
    %35 = tpu.matmul %32, %34, %cst_42 {dimension_numbers = #tpu.dot_dimension_numbers<[1], [0], [0], [1], [0, 0, 1, 1], [], []>} : vector<64x64xbf16>, vector<64x64xbf16>, vector<64x64xf32> -> vector<64x64xf32>
    %36 = vector.extract_strided_slice %30 {offsets = [0, 1, 0], sizes = [8, 8, 64], strides = [1, 1, 1]} : vector<10x10x64xbf16> to vector<8x8x64xbf16>
    %37 = vector.shape_cast %36 : vector<8x8x64xbf16> to vector<64x64xbf16>
    %c1_43 = arith.constant 1 : index
    %c0_44 = arith.constant 0 : index
    %c0_45 = arith.constant 0 : index
    %38 = vector.load %arg6[%c1_43, %c0_44, %c0_45] : memref<9x64x64xbf16, #tpu.memory_space<vmem>>, vector<1x64x64xbf16>
    %39 = vector.shape_cast %38 : vector<1x64x64xbf16> to vector<64x64xbf16>
    %cst_46 = arith.constant dense<0.000000e+00> : vector<64x64xf32>
    %40 = tpu.matmul %37, %39, %cst_46 {dimension_numbers = #tpu.dot_dimension_numbers<[1], [0], [0], [1], [0, 0, 1, 1], [], []>} : vector<64x64xbf16>, vector<64x64xbf16>, vector<64x64xf32> -> vector<64x64xf32>
    %41 = arith.addf %35, %40 : vector<64x64xf32>
    %42 = vector.extract_strided_slice %30 {offsets = [0, 2, 0], sizes = [8, 8, 64], strides = [1, 1, 1]} : vector<10x10x64xbf16> to vector<8x8x64xbf16>
    %43 = vector.shape_cast %42 : vector<8x8x64xbf16> to vector<64x64xbf16>
    %c2 = arith.constant 2 : index
    %c0_47 = arith.constant 0 : index
    %c0_48 = arith.constant 0 : index
    %44 = vector.load %arg6[%c2, %c0_47, %c0_48] : memref<9x64x64xbf16, #tpu.memory_space<vmem>>, vector<1x64x64xbf16>
    %45 = vector.shape_cast %44 : vector<1x64x64xbf16> to vector<64x64xbf16>
    %cst_49 = arith.constant dense<0.000000e+00> : vector<64x64xf32>
    %46 = tpu.matmul %43, %45, %cst_49 {dimension_numbers = #tpu.dot_dimension_numbers<[1], [0], [0], [1], [0, 0, 1, 1], [], []>} : vector<64x64xbf16>, vector<64x64xbf16>, vector<64x64xf32> -> vector<64x64xf32>
    %47 = arith.addf %41, %46 : vector<64x64xf32>
    %48 = vector.extract_strided_slice %30 {offsets = [1, 0, 0], sizes = [8, 8, 64], strides = [1, 1, 1]} : vector<10x10x64xbf16> to vector<8x8x64xbf16>
    %49 = vector.shape_cast %48 : vector<8x8x64xbf16> to vector<64x64xbf16>
    %c3 = arith.constant 3 : index
    %c0_50 = arith.constant 0 : index
    %c0_51 = arith.constant 0 : index
    %50 = vector.load %arg6[%c3, %c0_50, %c0_51] : memref<9x64x64xbf16, #tpu.memory_space<vmem>>, vector<1x64x64xbf16>
    %51 = vector.shape_cast %50 : vector<1x64x64xbf16> to vector<64x64xbf16>
    %cst_52 = arith.constant dense<0.000000e+00> : vector<64x64xf32>
    %52 = tpu.matmul %49, %51, %cst_52 {dimension_numbers = #tpu.dot_dimension_numbers<[1], [0], [0], [1], [0, 0, 1, 1], [], []>} : vector<64x64xbf16>, vector<64x64xbf16>, vector<64x64xf32> -> vector<64x64xf32>
    %53 = arith.addf %47, %52 : vector<64x64xf32>
    %54 = vector.extract_strided_slice %30 {offsets = [1, 1, 0], sizes = [8, 8, 64], strides = [1, 1, 1]} : vector<10x10x64xbf16> to vector<8x8x64xbf16>
    %55 = vector.shape_cast %54 : vector<8x8x64xbf16> to vector<64x64xbf16>
    %c4 = arith.constant 4 : index
    %c0_53 = arith.constant 0 : index
    %c0_54 = arith.constant 0 : index
    %56 = vector.load %arg6[%c4, %c0_53, %c0_54] : memref<9x64x64xbf16, #tpu.memory_space<vmem>>, vector<1x64x64xbf16>
    %57 = vector.shape_cast %56 : vector<1x64x64xbf16> to vector<64x64xbf16>
    %cst_55 = arith.constant dense<0.000000e+00> : vector<64x64xf32>
    %58 = tpu.matmul %55, %57, %cst_55 {dimension_numbers = #tpu.dot_dimension_numbers<[1], [0], [0], [1], [0, 0, 1, 1], [], []>} : vector<64x64xbf16>, vector<64x64xbf16>, vector<64x64xf32> -> vector<64x64xf32>
    %59 = arith.addf %53, %58 : vector<64x64xf32>
    %60 = vector.extract_strided_slice %30 {offsets = [1, 2, 0], sizes = [8, 8, 64], strides = [1, 1, 1]} : vector<10x10x64xbf16> to vector<8x8x64xbf16>
    %61 = vector.shape_cast %60 : vector<8x8x64xbf16> to vector<64x64xbf16>
    %c5 = arith.constant 5 : index
    %c0_56 = arith.constant 0 : index
    %c0_57 = arith.constant 0 : index
    %62 = vector.load %arg6[%c5, %c0_56, %c0_57] : memref<9x64x64xbf16, #tpu.memory_space<vmem>>, vector<1x64x64xbf16>
    %63 = vector.shape_cast %62 : vector<1x64x64xbf16> to vector<64x64xbf16>
    %cst_58 = arith.constant dense<0.000000e+00> : vector<64x64xf32>
    %64 = tpu.matmul %61, %63, %cst_58 {dimension_numbers = #tpu.dot_dimension_numbers<[1], [0], [0], [1], [0, 0, 1, 1], [], []>} : vector<64x64xbf16>, vector<64x64xbf16>, vector<64x64xf32> -> vector<64x64xf32>
    %65 = arith.addf %59, %64 : vector<64x64xf32>
    %66 = vector.extract_strided_slice %30 {offsets = [2, 0, 0], sizes = [8, 8, 64], strides = [1, 1, 1]} : vector<10x10x64xbf16> to vector<8x8x64xbf16>
    %67 = vector.shape_cast %66 : vector<8x8x64xbf16> to vector<64x64xbf16>
    %c6 = arith.constant 6 : index
    %c0_59 = arith.constant 0 : index
    %c0_60 = arith.constant 0 : index
    %68 = vector.load %arg6[%c6, %c0_59, %c0_60] : memref<9x64x64xbf16, #tpu.memory_space<vmem>>, vector<1x64x64xbf16>
    %69 = vector.shape_cast %68 : vector<1x64x64xbf16> to vector<64x64xbf16>
    %cst_61 = arith.constant dense<0.000000e+00> : vector<64x64xf32>
    %70 = tpu.matmul %67, %69, %cst_61 {dimension_numbers = #tpu.dot_dimension_numbers<[1], [0], [0], [1], [0, 0, 1, 1], [], []>} : vector<64x64xbf16>, vector<64x64xbf16>, vector<64x64xf32> -> vector<64x64xf32>
    %71 = arith.addf %65, %70 : vector<64x64xf32>
    %72 = vector.extract_strided_slice %30 {offsets = [2, 1, 0], sizes = [8, 8, 64], strides = [1, 1, 1]} : vector<10x10x64xbf16> to vector<8x8x64xbf16>
    %73 = vector.shape_cast %72 : vector<8x8x64xbf16> to vector<64x64xbf16>
    %c7 = arith.constant 7 : index
    %c0_62 = arith.constant 0 : index
    %c0_63 = arith.constant 0 : index
    %74 = vector.load %arg6[%c7, %c0_62, %c0_63] : memref<9x64x64xbf16, #tpu.memory_space<vmem>>, vector<1x64x64xbf16>
    %75 = vector.shape_cast %74 : vector<1x64x64xbf16> to vector<64x64xbf16>
    %cst_64 = arith.constant dense<0.000000e+00> : vector<64x64xf32>
    %76 = tpu.matmul %73, %75, %cst_64 {dimension_numbers = #tpu.dot_dimension_numbers<[1], [0], [0], [1], [0, 0, 1, 1], [], []>} : vector<64x64xbf16>, vector<64x64xbf16>, vector<64x64xf32> -> vector<64x64xf32>
    %77 = arith.addf %71, %76 : vector<64x64xf32>
    %78 = vector.extract_strided_slice %30 {offsets = [2, 2, 0], sizes = [8, 8, 64], strides = [1, 1, 1]} : vector<10x10x64xbf16> to vector<8x8x64xbf16>
    %79 = vector.shape_cast %78 : vector<8x8x64xbf16> to vector<64x64xbf16>
    %c8 = arith.constant 8 : index
    %c0_65 = arith.constant 0 : index
    %c0_66 = arith.constant 0 : index
    %80 = vector.load %arg6[%c8, %c0_65, %c0_66] : memref<9x64x64xbf16, #tpu.memory_space<vmem>>, vector<1x64x64xbf16>
    %81 = vector.shape_cast %80 : vector<1x64x64xbf16> to vector<64x64xbf16>
    %cst_67 = arith.constant dense<0.000000e+00> : vector<64x64xf32>
    %82 = tpu.matmul %79, %81, %cst_67 {dimension_numbers = #tpu.dot_dimension_numbers<[1], [0], [0], [1], [0, 0, 1, 1], [], []>} : vector<64x64xbf16>, vector<64x64xbf16>, vector<64x64xf32> -> vector<64x64xf32>
    %83 = arith.addf %77, %82 : vector<64x64xf32>
    %84 = vector.broadcast %29 : vector<1x64xf32> to vector<64x64xf32>
    %85 = arith.addf %83, %84 : vector<64x64xf32>
    %cst_68 = arith.constant 0.000000e+00 : f32
    %86 = vector.broadcast %cst_68 : f32 to vector<64x64xf32>
    %87 = arith.cmpf oge, %85, %86 : vector<64x64xf32>
    %cst_69 = arith.constant 1.000000e-01 : f32
    %88 = vector.broadcast %cst_69 : f32 to vector<64x64xf32>
    %89 = arith.mulf %88, %85 : vector<64x64xf32>
    %90 = arith.select %87, %85, %89 : vector<64x64xi1>, vector<64x64xf32>
    %91 = vector.shape_cast %90 : vector<64x64xf32> to vector<8x8x64xf32>
    %92 = arith.truncf %91 : vector<8x8x64xf32> to vector<8x8x64xbf16>
    %c1_70 = arith.constant 1 : index
    %c1_71 = arith.constant 1 : index
    %c0_72 = arith.constant 0 : index
    %93 = vector.load %arg11[%c1_70, %c1_71, %c0_72] : memref<10x10x64xbf16, #tpu.memory_space<vmem>>, vector<8x8x64xbf16>
    tpu.vector_store %arg11[%c1_70, %c1_71, %c0_72], %92 {strides = array<i32>} : memref<10x10x64xbf16, #tpu.memory_space<vmem>>, vector<8x8x64xbf16>,
    %c0_73 = arith.constant 0 : index
    %c0_74 = arith.constant 0 : index
    %c0_75 = arith.constant 0 : index
    %94 = vector.load %arg11[%c0_73, %c0_74, %c0_75] : memref<10x10x64xbf16, #tpu.memory_space<vmem>>, vector<10x10x64xbf16>
    %95 = vector.extract_strided_slice %94 {offsets = [0, 0, 0], sizes = [8, 10, 64], strides = [1, 1, 1]} : vector<10x10x64xbf16> to vector<8x10x64xbf16>
    %96 = vector.shape_cast %95 : vector<8x10x64xbf16> to vector<4x2x10x64xbf16>
    %97 = vector.extract_strided_slice %96 {offsets = [0, 0, 0, 0], sizes = [4, 1, 10, 64], strides = [1, 1, 1, 1]} : vector<4x2x10x64xbf16> to vector<4x1x10x64xbf16>
    %98 = vector.shape_cast %97 : vector<4x1x10x64xbf16> to vector<4x10x64xbf16>
    %99 = vector.extract_strided_slice %98 {offsets = [0, 0, 0], sizes = [4, 8, 64], strides = [1, 1, 1]} : vector<4x10x64xbf16> to vector<4x8x64xbf16>
    %100 = vector.shape_cast %99 : vector<4x8x64xbf16> to vector<32x64xbf16>
    %c0_76 = arith.constant 0 : index
    %c0_77 = arith.constant 0 : index
    %c0_78 = arith.constant 0 : index
    %101 = vector.load %arg8[%c0_76, %c0_77, %c0_78] : memref<9x64x3xbf16, #tpu.memory_space<vmem>>, vector<1x64x3xbf16>
    %102 = vector.shape_cast %101 : vector<1x64x3xbf16> to vector<64x3xbf16>
    %cst_79 = arith.constant dense<0.000000e+00> : vector<32x3xf32>
    %103 = tpu.matmul %100, %102, %cst_79 {dimension_numbers = #tpu.dot_dimension_numbers<[1], [0], [0], [1], [0, 0, 1, 1], [], []>} : vector<32x64xbf16>, vector<64x3xbf16>, vector<32x3xf32> -> vector<32x3xf32>
    %104 = vector.extract_strided_slice %94 {offsets = [0, 0, 0], sizes = [8, 10, 64], strides = [1, 1, 1]} : vector<10x10x64xbf16> to vector<8x10x64xbf16>
    %105 = vector.shape_cast %104 : vector<8x10x64xbf16> to vector<4x2x10x64xbf16>
    %106 = vector.extract_strided_slice %105 {offsets = [0, 0, 0, 0], sizes = [4, 1, 10, 64], strides = [1, 1, 1, 1]} : vector<4x2x10x64xbf16> to vector<4x1x10x64xbf16>
    %107 = vector.shape_cast %106 : vector<4x1x10x64xbf16> to vector<4x10x64xbf16>
    %108 = vector.extract_strided_slice %107 {offsets = [0, 1, 0], sizes = [4, 8, 64], strides = [1, 1, 1]} : vector<4x10x64xbf16> to vector<4x8x64xbf16>
    %109 = vector.shape_cast %108 : vector<4x8x64xbf16> to vector<32x64xbf16>
    %c1_80 = arith.constant 1 : index
    %c0_81 = arith.constant 0 : index
    %c0_82 = arith.constant 0 : index
    %110 = vector.load %arg8[%c1_80, %c0_81, %c0_82] : memref<9x64x3xbf16, #tpu.memory_space<vmem>>, vector<1x64x3xbf16>
    %111 = vector.shape_cast %110 : vector<1x64x3xbf16> to vector<64x3xbf16>
    %cst_83 = arith.constant dense<0.000000e+00> : vector<32x3xf32>
    %112 = tpu.matmul %109, %111, %cst_83 {dimension_numbers = #tpu.dot_dimension_numbers<[1], [0], [0], [1], [0, 0, 1, 1], [], []>} : vector<32x64xbf16>, vector<64x3xbf16>, vector<32x3xf32> -> vector<32x3xf32>
    %113 = arith.addf %103, %112 : vector<32x3xf32>
    %114 = vector.extract_strided_slice %94 {offsets = [0, 0, 0], sizes = [8, 10, 64], strides = [1, 1, 1]} : vector<10x10x64xbf16> to vector<8x10x64xbf16>
    %115 = vector.shape_cast %114 : vector<8x10x64xbf16> to vector<4x2x10x64xbf16>
    %116 = vector.extract_strided_slice %115 {offsets = [0, 0, 0, 0], sizes = [4, 1, 10, 64], strides = [1, 1, 1, 1]} : vector<4x2x10x64xbf16> to vector<4x1x10x64xbf16>
    %117 = vector.shape_cast %116 : vector<4x1x10x64xbf16> to vector<4x10x64xbf16>
    %118 = vector.extract_strided_slice %117 {offsets = [0, 2, 0], sizes = [4, 8, 64], strides = [1, 1, 1]} : vector<4x10x64xbf16> to vector<4x8x64xbf16>
    %119 = vector.shape_cast %118 : vector<4x8x64xbf16> to vector<32x64xbf16>
    %c2_84 = arith.constant 2 : index
    %c0_85 = arith.constant 0 : index
    %c0_86 = arith.constant 0 : index
    %120 = vector.load %arg8[%c2_84, %c0_85, %c0_86] : memref<9x64x3xbf16, #tpu.memory_space<vmem>>, vector<1x64x3xbf16>
    %121 = vector.shape_cast %120 : vector<1x64x3xbf16> to vector<64x3xbf16>
    %cst_87 = arith.constant dense<0.000000e+00> : vector<32x3xf32>
    %122 = tpu.matmul %119, %121, %cst_87 {dimension_numbers = #tpu.dot_dimension_numbers<[1], [0], [0], [1], [0, 0, 1, 1], [], []>} : vector<32x64xbf16>, vector<64x3xbf16>, vector<32x3xf32> -> vector<32x3xf32>
    %123 = arith.addf %113, %122 : vector<32x3xf32>
    %124 = vector.extract_strided_slice %94 {offsets = [1, 0, 0], sizes = [8, 10, 64], strides = [1, 1, 1]} : vector<10x10x64xbf16> to vector<8x10x64xbf16>
    %125 = vector.shape_cast %124 : vector<8x10x64xbf16> to vector<4x2x10x64xbf16>
    %126 = vector.extract_strided_slice %125 {offsets = [0, 0, 0, 0], sizes = [4, 1, 10, 64], strides = [1, 1, 1, 1]} : vector<4x2x10x64xbf16> to vector<4x1x10x64xbf16>
    %127 = vector.shape_cast %126 : vector<4x1x10x64xbf16> to vector<4x10x64xbf16>
    %128 = vector.extract_strided_slice %127 {offsets = [0, 0, 0], sizes = [4, 8, 64], strides = [1, 1, 1]} : vector<4x10x64xbf16> to vector<4x8x64xbf16>
    %129 = vector.shape_cast %128 : vector<4x8x64xbf16> to vector<32x64xbf16>
    %c3_88 = arith.constant 3 : index
    %c0_89 = arith.constant 0 : index
    %c0_90 = arith.constant 0 : index
    %130 = vector.load %arg8[%c3_88, %c0_89, %c0_90] : memref<9x64x3xbf16, #tpu.memory_space<vmem>>, vector<1x64x3xbf16>
    %131 = vector.shape_cast %130 : vector<1x64x3xbf16> to vector<64x3xbf16>
    %cst_91 = arith.constant dense<0.000000e+00> : vector<32x3xf32>
    %132 = tpu.matmul %129, %131, %cst_91 {dimension_numbers = #tpu.dot_dimension_numbers<[1], [0], [0], [1], [0, 0, 1, 1], [], []>} : vector<32x64xbf16>, vector<64x3xbf16>, vector<32x3xf32> -> vector<32x3xf32>
    %133 = arith.addf %123, %132 : vector<32x3xf32>
    %134 = vector.extract_strided_slice %94 {offsets = [1, 0, 0], sizes = [8, 10, 64], strides = [1, 1, 1]} : vector<10x10x64xbf16> to vector<8x10x64xbf16>
    %135 = vector.shape_cast %134 : vector<8x10x64xbf16> to vector<4x2x10x64xbf16>
    %136 = vector.extract_strided_slice %135 {offsets = [0, 0, 0, 0], sizes = [4, 1, 10, 64], strides = [1, 1, 1, 1]} : vector<4x2x10x64xbf16> to vector<4x1x10x64xbf16>
    %137 = vector.shape_cast %136 : vector<4x1x10x64xbf16> to vector<4x10x64xbf16>
    %138 = vector.extract_strided_slice %137 {offsets = [0, 1, 0], sizes = [4, 8, 64], strides = [1, 1, 1]} : vector<4x10x64xbf16> to vector<4x8x64xbf16>
    %139 = vector.shape_cast %138 : vector<4x8x64xbf16> to vector<32x64xbf16>
    %c4_92 = arith.constant 4 : index
    %c0_93 = arith.constant 0 : index
    %c0_94 = arith.constant 0 : index
    %140 = vector.load %arg8[%c4_92, %c0_93, %c0_94] : memref<9x64x3xbf16, #tpu.memory_space<vmem>>, vector<1x64x3xbf16>
    %141 = vector.shape_cast %140 : vector<1x64x3xbf16> to vector<64x3xbf16>
    %cst_95 = arith.constant dense<0.000000e+00> : vector<32x3xf32>
    %142 = tpu.matmul %139, %141, %cst_95 {dimension_numbers = #tpu.dot_dimension_numbers<[1], [0], [0], [1], [0, 0, 1, 1], [], []>} : vector<32x64xbf16>, vector<64x3xbf16>, vector<32x3xf32> -> vector<32x3xf32>
    %143 = arith.addf %133, %142 : vector<32x3xf32>
    %144 = vector.extract_strided_slice %94 {offsets = [1, 0, 0], sizes = [8, 10, 64], strides = [1, 1, 1]} : vector<10x10x64xbf16> to vector<8x10x64xbf16>
    %145 = vector.shape_cast %144 : vector<8x10x64xbf16> to vector<4x2x10x64xbf16>
    %146 = vector.extract_strided_slice %145 {offsets = [0, 0, 0, 0], sizes = [4, 1, 10, 64], strides = [1, 1, 1, 1]} : vector<4x2x10x64xbf16> to vector<4x1x10x64xbf16>
    %147 = vector.shape_cast %146 : vector<4x1x10x64xbf16> to vector<4x10x64xbf16>
    %148 = vector.extract_strided_slice %147 {offsets = [0, 2, 0], sizes = [4, 8, 64], strides = [1, 1, 1]} : vector<4x10x64xbf16> to vector<4x8x64xbf16>
    %149 = vector.shape_cast %148 : vector<4x8x64xbf16> to vector<32x64xbf16>
    %c5_96 = arith.constant 5 : index
    %c0_97 = arith.constant 0 : index
    %c0_98 = arith.constant 0 : index
    %150 = vector.load %arg8[%c5_96, %c0_97, %c0_98] : memref<9x64x3xbf16, #tpu.memory_space<vmem>>, vector<1x64x3xbf16>
    %151 = vector.shape_cast %150 : vector<1x64x3xbf16> to vector<64x3xbf16>
    %cst_99 = arith.constant dense<0.000000e+00> : vector<32x3xf32>
    %152 = tpu.matmul %149, %151, %cst_99 {dimension_numbers = #tpu.dot_dimension_numbers<[1], [0], [0], [1], [0, 0, 1, 1], [], []>} : vector<32x64xbf16>, vector<64x3xbf16>, vector<32x3xf32> -> vector<32x3xf32>
    %153 = arith.addf %143, %152 : vector<32x3xf32>
    %154 = vector.extract_strided_slice %94 {offsets = [2, 0, 0], sizes = [8, 10, 64], strides = [1, 1, 1]} : vector<10x10x64xbf16> to vector<8x10x64xbf16>
    %155 = vector.shape_cast %154 : vector<8x10x64xbf16> to vector<4x2x10x64xbf16>
    %156 = vector.extract_strided_slice %155 {offsets = [0, 0, 0, 0], sizes = [4, 1, 10, 64], strides = [1, 1, 1, 1]} : vector<4x2x10x64xbf16> to vector<4x1x10x64xbf16>
    %157 = vector.shape_cast %156 : vector<4x1x10x64xbf16> to vector<4x10x64xbf16>
    %158 = vector.extract_strided_slice %157 {offsets = [0, 0, 0], sizes = [4, 8, 64], strides = [1, 1, 1]} : vector<4x10x64xbf16> to vector<4x8x64xbf16>
    %159 = vector.shape_cast %158 : vector<4x8x64xbf16> to vector<32x64xbf16>
    %c6_100 = arith.constant 6 : index
    %c0_101 = arith.constant 0 : index
    %c0_102 = arith.constant 0 : index
    %160 = vector.load %arg8[%c6_100, %c0_101, %c0_102] : memref<9x64x3xbf16, #tpu.memory_space<vmem>>, vector<1x64x3xbf16>
    %161 = vector.shape_cast %160 : vector<1x64x3xbf16> to vector<64x3xbf16>
    %cst_103 = arith.constant dense<0.000000e+00> : vector<32x3xf32>
    %162 = tpu.matmul %159, %161, %cst_103 {dimension_numbers = #tpu.dot_dimension_numbers<[1], [0], [0], [1], [0, 0, 1, 1], [], []>} : vector<32x64xbf16>, vector<64x3xbf16>, vector<32x3xf32> -> vector<32x3xf32>
    %163 = arith.addf %153, %162 : vector<32x3xf32>
    %164 = vector.extract_strided_slice %94 {offsets = [2, 0, 0], sizes = [8, 10, 64], strides = [1, 1, 1]} : vector<10x10x64xbf16> to vector<8x10x64xbf16>
    %165 = vector.shape_cast %164 : vector<8x10x64xbf16> to vector<4x2x10x64xbf16>
    %166 = vector.extract_strided_slice %165 {offsets = [0, 0, 0, 0], sizes = [4, 1, 10, 64], strides = [1, 1, 1, 1]} : vector<4x2x10x64xbf16> to vector<4x1x10x64xbf16>
    %167 = vector.shape_cast %166 : vector<4x1x10x64xbf16> to vector<4x10x64xbf16>
    %168 = vector.extract_strided_slice %167 {offsets = [0, 1, 0], sizes = [4, 8, 64], strides = [1, 1, 1]} : vector<4x10x64xbf16> to vector<4x8x64xbf16>
    %169 = vector.shape_cast %168 : vector<4x8x64xbf16> to vector<32x64xbf16>
    %c7_104 = arith.constant 7 : index
    %c0_105 = arith.constant 0 : index
    %c0_106 = arith.constant 0 : index
    %170 = vector.load %arg8[%c7_104, %c0_105, %c0_106] : memref<9x64x3xbf16, #tpu.memory_space<vmem>>, vector<1x64x3xbf16>
    %171 = vector.shape_cast %170 : vector<1x64x3xbf16> to vector<64x3xbf16>
    %cst_107 = arith.constant dense<0.000000e+00> : vector<32x3xf32>
    %172 = tpu.matmul %169, %171, %cst_107 {dimension_numbers = #tpu.dot_dimension_numbers<[1], [0], [0], [1], [0, 0, 1, 1], [], []>} : vector<32x64xbf16>, vector<64x3xbf16>, vector<32x3xf32> -> vector<32x3xf32>
    %173 = arith.addf %163, %172 : vector<32x3xf32>
    %174 = vector.extract_strided_slice %94 {offsets = [2, 0, 0], sizes = [8, 10, 64], strides = [1, 1, 1]} : vector<10x10x64xbf16> to vector<8x10x64xbf16>
    %175 = vector.shape_cast %174 : vector<8x10x64xbf16> to vector<4x2x10x64xbf16>
    %176 = vector.extract_strided_slice %175 {offsets = [0, 0, 0, 0], sizes = [4, 1, 10, 64], strides = [1, 1, 1, 1]} : vector<4x2x10x64xbf16> to vector<4x1x10x64xbf16>
    %177 = vector.shape_cast %176 : vector<4x1x10x64xbf16> to vector<4x10x64xbf16>
    %178 = vector.extract_strided_slice %177 {offsets = [0, 2, 0], sizes = [4, 8, 64], strides = [1, 1, 1]} : vector<4x10x64xbf16> to vector<4x8x64xbf16>
    %179 = vector.shape_cast %178 : vector<4x8x64xbf16> to vector<32x64xbf16>
    %c8_108 = arith.constant 8 : index
    %c0_109 = arith.constant 0 : index
    %c0_110 = arith.constant 0 : index
    %180 = vector.load %arg8[%c8_108, %c0_109, %c0_110] : memref<9x64x3xbf16, #tpu.memory_space<vmem>>, vector<1x64x3xbf16>
    %181 = vector.shape_cast %180 : vector<1x64x3xbf16> to vector<64x3xbf16>
    %cst_111 = arith.constant dense<0.000000e+00> : vector<32x3xf32>
    %182 = tpu.matmul %179, %181, %cst_111 {dimension_numbers = #tpu.dot_dimension_numbers<[1], [0], [0], [1], [0, 0, 1, 1], [], []>} : vector<32x64xbf16>, vector<64x3xbf16>, vector<32x3xf32> -> vector<32x3xf32>
    %183 = arith.addf %173, %182 : vector<32x3xf32>
    %c0_112 = arith.constant 0 : index
    %c0_113 = arith.constant 0 : index
    %184 = vector.load %arg9[%c0_112, %c0_113] : memref<1x3xf32, #tpu.memory_space<vmem>>, vector<1x3xf32>
    %185 = vector.broadcast %184 : vector<1x3xf32> to vector<32x3xf32>
    %186 = arith.addf %183, %185 : vector<32x3xf32>
    %c0_114 = arith.constant 0 : index
    %c0_115 = arith.constant 0 : index
    %c0_116 = arith.constant 0 : index
    %187 = vector.load %arg10[%c0_114, %c0_115, %c0_116] : memref<1x32x3xf32, #tpu.memory_space<vmem>>, vector<1x32x3xf32>
    %188 = vector.shape_cast %187 : vector<1x32x3xf32> to vector<32x3xf32>
    %189 = vector.shape_cast %186 : vector<32x3xf32> to vector<1x32x3xf32>
    tpu.vector_store %arg10[%c0_114, %c0_115, %c0_116], %189 {strides = array<i32>} : memref<1x32x3xf32, #tpu.memory_space<vmem>>, vector<1x32x3xf32>,
    return
  }
  func.func @transform_0(%arg0: i32) -> (i32, i32, i32) {
    %c0_i32 = arith.constant 0 : i32
    %c0_i32_0 = arith.constant 0 : i32
    %c0_i32_1 = arith.constant 0 : i32
    return %arg0, %c0_i32, %c0_i32_0 : i32, i32, i32
  }
  func.func @transform_1(%arg0: i32) -> (i32, i32) {
    %c0_i32 = arith.constant 0 : i32
    %c0_i32_0 = arith.constant 0 : i32
    %c0_i32_1 = arith.constant 0 : i32
    return %c0_i32, %c0_i32_0 : i32, i32
  }
  func.func @transform_2(%arg0: i32) -> (i32, i32) {
    %c0_i32 = arith.constant 0 : i32
    %c0_i32_0 = arith.constant 0 : i32
    %c0_i32_1 = arith.constant 0 : i32
    return %c0_i32, %c0_i32_0 : i32, i32
  }
  func.func @transform_3(%arg0: i32) -> (i32, i32, i32, i32) {
    %c0_i32 = arith.constant 0 : i32
    %c0_i32_0 = arith.constant 0 : i32
    %c0_i32_1 = arith.constant 0 : i32
    %c0_i32_2 = arith.constant 0 : i32
    %c0_i32_3 = arith.constant 0 : i32
    return %c0_i32, %c0_i32_0, %c0_i32_1, %c0_i32_2 : i32, i32, i32, i32
  }
  func.func @transform_4(%arg0: i32) -> (i32, i32, i32, i32) {
    %c0_i32 = arith.constant 0 : i32
    %c0_i32_0 = arith.constant 0 : i32
    %c0_i32_1 = arith.constant 0 : i32
    %c0_i32_2 = arith.constant 0 : i32
    %c0_i32_3 = arith.constant 0 : i32
    return %c0_i32, %c0_i32_0, %c0_i32_1, %c0_i32_2 : i32, i32, i32, i32
  }
  func.func @transform_5(%arg0: i32) -> (i32, i32, i32) {
    %c0_i32 = arith.constant 0 : i32
    %c0_i32_0 = arith.constant 0 : i32
    %c0_i32_1 = arith.constant 0 : i32
    %c0_i32_2 = arith.constant 0 : i32
    return %c0_i32, %c0_i32_0, %c0_i32_1 : i32, i32, i32
  }
  func.func @transform_6(%arg0: i32) -> (i32, i32) {
    %c0_i32 = arith.constant 0 : i32
    %c0_i32_0 = arith.constant 0 : i32
    %c0_i32_1 = arith.constant 0 : i32
    return %c0_i32, %c0_i32_0 : i32, i32
  }
  func.func @transform_7(%arg0: i32) -> (i32, i32, i32) {
    %c0_i32 = arith.constant 0 : i32
    %c0_i32_0 = arith.constant 0 : i32
    %c0_i32_1 = arith.constant 0 : i32
    %c0_i32_2 = arith.constant 0 : i32
    return %c0_i32, %c0_i32_0, %c0_i32_1 : i32, i32, i32
  }
  func.func @transform_8(%arg0: i32) -> (i32, i32) {
    %c0_i32 = arith.constant 0 : i32
    %c0_i32_0 = arith.constant 0 : i32
    %c0_i32_1 = arith.constant 0 : i32
    return %c0_i32, %c0_i32_0 : i32, i32
  }
  func.func @transform_9(%arg0: i32) -> (i32, i32, i32) {
    %c0_i32 = arith.constant 0 : i32
    %c0_i32_0 = arith.constant 0 : i32
    %c0_i32_1 = arith.constant 0 : i32
    return %arg0, %c0_i32, %c0_i32_0 : i32, i32, i32
  }
}

</mosaic_0001>

<llo_original>
// kernel: _lambda_.1
$region0: #{_lambda_.1}
  #allocation0 [shape = 'u32[]', space=smem, size = 0x4, offset = 0x4, fixed_abs, tag = 'smem constant byte address 0x4 - core index']
  #allocation1 [shape = 'u32[144,128]{1,0:T(1,128)}', space=vmem, size = 0x12000, scoped, tag = 'internal scratch']
  #allocation2 [shape = 'bf16[10,10,64]{2,1,0:T(8,128)(2,1)}', space=vmem, size = 0xa000, scoped, tag = 'scratch operand']
  #allocation3 [shape = 'f32[64,64]{1,0:T(8,128)}', space=vmem, size = 0x8000, scoped, tag = 'scratch operand']
  #allocation4 [shape = 'f32[64,64]{1,0:T(8,128)}', space=vmem, size = 0x8000, scoped, tag = 'scratch operand']
  %s0 = inlined_call_operand.vmem [shape: bf16[2,64,27], index: 0, kind: input, shape index: {}]
  %s1 = inlined_call_operand.vmem [shape: bf16[27,64], index: 1, kind: input, shape index: {}]
  %s2 = inlined_call_operand.vmem [shape: f32[1,64], index: 2, kind: input, shape index: {}, may-alias: {2,6}]
  %s3 = inlined_call_operand.vmem [shape: bf16[4,18,64,64], index: 3, kind: input, shape index: {}]
  %s4 = inlined_call_operand.vmem [shape: f32[4,2,1,64], index: 4, kind: input, shape index: {}]
  %s5 = inlined_call_operand.vmem [shape: bf16[9,64,64], index: 5, kind: input, shape index: {}]
  %s6 = inlined_call_operand.vmem [shape: f32[1,64], index: 6, kind: input, shape index: {}, may-alias: {2,6}]
  %s7 = inlined_call_operand.vmem [shape: bf16[9,64,3], index: 7, kind: input, shape index: {}]
  %s8 = inlined_call_operand.vmem [shape: f32[1,3], index: 8, kind: input, shape index: {}]
  %s9 = inlined_call_operand.vmem [shape: f32[2,32,3], index: 9, kind: output, shape index: {}]
  %s10 = sld [smem:[#allocation0]]
  $region76: #{_lambda_.1} parent=0
    _
  %s12 = ssub.s32 1, %s10
  %s13 = scalar_select 0, %s12, %s10
  loop: start=0, step=1, limit=4
  $region2: #{_lambda_.1} parent=0 // loop_pre_header
    _
  $region3: #{_lambda_.1} parent=0 // loop_header
    %s15 = sphi 0, %s19
    %p16 = scmp.ge.s32.totalorder %s15, 4
    %s25 = sphi 0, %s27
    %s28 = sphi 0, %s25
    %s29 = sphi 0, %s28
    %s45 = sphi 0, %s29
    %s49 = sphi 0, %s49
    %s51 = sphi 0, %s49
    %s52 = sphi 0, %s51
    %s66 = sphi 0, %s52
    %s70 = sphi 0, %s70
    %s72 = sphi 0, %s70
    %s73 = sphi 0, %s72
    %s87 = sphi 0, %s73
    %s91 = sphi 0, %s91
    %s93 = sphi 0, %s91
    %s94 = sphi 0, %s93
    %s108 = sphi 0, %s94
    %s112 = sphi 0, %s112
    %s114 = sphi 0, %s112
    %s115 = sphi 0, %s114
    %s129 = sphi 0, %s115
    %s133 = sphi 0, %s133
    %s135 = sphi 0, %s133
    %s136 = sphi 0, %s135
    %s150 = sphi 0, %s136
    %s154 = sphi 0, %s154
    %s156 = sphi 0, %s154
    %s157 = sphi 0, %s156
    %s171 = sphi 0, %s157
    %s175 = sphi 0, %s175
    %s177 = sphi 0, %s175
    %s178 = sphi 0, %s177
    %s192 = sphi 0, %s178
    %s196 = sphi 0, %s196
    %s198 = sphi 0, %s196
    %s199 = sphi 0, %s198
    %s213 = sphi 0, %s199
    %s219 = sphi 0, %s221
    %s222 = sphi 0, %s219
    %s223 = sphi 0, %s222
    %s239 = sphi 0, %s223
  $region4: #{_lambda_.1} parent=0 // loop_header_branch
    %18 = sbr.rel (%p16) target = $region8
  $region5: #{_lambda_.1} parent=0 // loop_body
    %s20 = ssub.s32 %s15, 1
    %s21 = ssub.s32 %s15, 2
    %s22 = sadd.s32 %s15, 1
    %s23 = ssub.s32 %s15, %s22
    %p24 = scmp.eq.s32.totalorder %s23, 0
    %s26 = sadd.s32 %s25, 1
    %s27 = scalar_select %p24, %s25, %s26
    %p30 = pneg %p24
    %p31 = scmp.eq.s32.totalorder %s15, 1
    %p32 = por %p30, %p31
    %p33 = scmp.ne.s32.totalorder %s25, %s28
    %p34 = scmp.eq.s32.totalorder %s15, 0
    %p35 = por %p33, %p34
    %p36 = scmp.ne.s32.totalorder %s25, %s28
    %p37 = scmp.eq.s32.totalorder %s20, 1
    %p38 = por %p36, %p37
    %p39 = scmp.ne.s32.totalorder %s28, %s29
    %p40 = scmp.eq.s32.totalorder %s20, 0
    %p41 = por %p39, %p40
    %p42 = scmp.ne.s32.totalorder %s28, %s29
    %p43 = scmp.eq.s32.totalorder %s21, 1
    %p44 = por %p42, %p43
    %p46 = scmp.ne.s32.totalorder %s29, %s45
    %p47 = scmp.eq.s32.totalorder %s21, 0
    %p48 = por %p46, %p47
    %s50 = sadd.s32 %s49, 1
    %p53 = scmp.eq.s32.totalorder %s15, 1
    %p54 = scmp.ne.s32.totalorder %s49, %s51
    %p55 = scmp.eq.s32.totalorder %s15, 0
    %p56 = por %p54, %p55
    %p57 = scmp.ne.s32.totalorder %s49, %s51
    %p58 = scmp.eq.s32.totalorder %s20, 1
    %p59 = por %p57, %p58
    %p60 = scmp.ne.s32.totalorder %s51, %s52
    %p61 = scmp.eq.s32.totalorder %s20, 0
    %p62 = por %p60, %p61
    %p63 = scmp.ne.s32.totalorder %s51, %s52
    %p64 = scmp.eq.s32.totalorder %s21, 1
    %p65 = por %p63, %p64
    %p67 = scmp.ne.s32.totalorder %s52, %s66
    %p68 = scmp.eq.s32.totalorder %s21, 0
    %p69 = por %p67, %p68
    %s71 = sadd.s32 %s70, 1
    %p74 = scmp.eq.s32.totalorder %s15, 1
    %p75 = scmp.ne.s32.totalorder %s70, %s72
    %p76 = scmp.eq.s32.totalorder %s15, 0
    %p77 = por %p75, %p76
    %p78 = scmp.ne.s32.totalorder %s70, %s72
    %p79 = scmp.eq.s32.totalorder %s20, 1
    %p80 = por %p78, %p79
    %p81 = scmp.ne.s32.totalorder %s72, %s73
    %p82 = scmp.eq.s32.totalorder %s20, 0
    %p83 = por %p81, %p82
    %p84 = scmp.ne.s32.totalorder %s72, %s73
    %p85 = scmp.eq.s32.totalorder %s21, 1
    %p86 = por %p84, %p85
    %p88 = scmp.ne.s32.totalorder %s73, %s87
    %p89 = scmp.eq.s32.totalorder %s21, 0
    %p90 = por %p88, %p89
    %s92 = sadd.s32 %s91, 1
    %p95 = scmp.eq.s32.totalorder %s15, 1
    %p96 = scmp.ne.s32.totalorder %s91, %s93
    %p97 = scmp.eq.s32.totalorder %s15, 0
    %p98 = por %p96, %p97
    %p99 = scmp.ne.s32.totalorder %s91, %s93
    %p100 = scmp.eq.s32.totalorder %s20, 1
    %p101 = por %p99, %p100
    %p102 = scmp.ne.s32.totalorder %s93, %s94
    %p103 = scmp.eq.s32.totalorder %s20, 0
    %p104 = por %p102, %p103
    %p105 = scmp.ne.s32.totalorder %s93, %s94
    %p106 = scmp.eq.s32.totalorder %s21, 1
    %p107 = por %p105, %p106
    %p109 = scmp.ne.s32.totalorder %s94, %s108
    %p110 = scmp.eq.s32.totalorder %s21, 0
    %p111 = por %p109, %p110
    %s113 = sadd.s32 %s112, 1
    %p116 = scmp.eq.s32.totalorder %s15, 1
    %p117 = scmp.ne.s32.totalorder %s112, %s114
    %p118 = scmp.eq.s32.totalorder %s15, 0
    %p119 = por %p117, %p118
    %p120 = scmp.ne.s32.totalorder %s112, %s114
    %p121 = scmp.eq.s32.totalorder %s20, 1
    %p122 = por %p120, %p121
    %p123 = scmp.ne.s32.totalorder %s114, %s115
    %p124 = scmp.eq.s32.totalorder %s20, 0
    %p125 = por %p123, %p124
    %p126 = scmp.ne.s32.totalorder %s114, %s115
    %p127 = scmp.eq.s32.totalorder %s21, 1
    %p128 = por %p126, %p127
    %p130 = scmp.ne.s32.totalorder %s115, %s129
    %p131 = scmp.eq.s32.totalorder %s21, 0
    %p132 = por %p130, %p131
    %s134 = sadd.s32 %s133, 1
    %p137 = scmp.eq.s32.totalorder %s15, 1
    %p138 = scmp.ne.s32.totalorder %s133, %s135
    %p139 = scmp.eq.s32.totalorder %s15, 0
    %p140 = por %p138, %p139
    %p141 = scmp.ne.s32.totalorder %s133, %s135
    %p142 = scmp.eq.s32.totalorder %s20, 1
    %p143 = por %p141, %p142
    %p144 = scmp.ne.s32.totalorder %s135, %s136
    %p145 = scmp.eq.s32.totalorder %s20, 0
    %p146 = por %p144, %p145
    %p147 = scmp.ne.s32.totalorder %s135, %s136
    %p148 = scmp.eq.s32.totalorder %s21, 1
    %p149 = por %p147, %p148
    %p151 = scmp.ne.s32.totalorder %s136, %s150
    %p152 = scmp.eq.s32.totalorder %s21, 0
    %p153 = por %p151, %p152
    %s155 = sadd.s32 %s154, 1
    %p158 = scmp.eq.s32.totalorder %s15, 1
    %p159 = scmp.ne.s32.totalorder %s154, %s156
    %p160 = scmp.eq.s32.totalorder %s15, 0
    %p161 = por %p159, %p160
    %p162 = scmp.ne.s32.totalorder %s154, %s156
    %p163 = scmp.eq.s32.totalorder %s20, 1
    %p164 = por %p162, %p163
    %p165 = scmp.ne.s32.totalorder %s156, %s157
    %p166 = scmp.eq.s32.totalorder %s20, 0
    %p167 = por %p165, %p166
    %p168 = scmp.ne.s32.totalorder %s156, %s157
    %p169 = scmp.eq.s32.totalorder %s21, 1
    %p170 = por %p168, %p169
    %p172 = scmp.ne.s32.totalorder %s157, %s171
    %p173 = scmp.eq.s32.totalorder %s21, 0
    %p174 = por %p172, %p173
    %s176 = sadd.s32 %s175, 1
    %p179 = scmp.eq.s32.totalorder %s15, 1
    %p180 = scmp.ne.s32.totalorder %s175, %s177
    %p181 = scmp.eq.s32.totalorder %s15, 0
    %p182 = por %p180, %p181
    %p183 = scmp.ne.s32.totalorder %s175, %s177
    %p184 = scmp.eq.s32.totalorder %s20, 1
    %p185 = por %p183, %p184
    %p186 = scmp.ne.s32.totalorder %s177, %s178
    %p187 = scmp.eq.s32.totalorder %s20, 0
    %p188 = por %p186, %p187
    %p189 = scmp.ne.s32.totalorder %s177, %s178
    %p190 = scmp.eq.s32.totalorder %s21, 1
    %p191 = por %p189, %p190
    %p193 = scmp.ne.s32.totalorder %s178, %s192
    %p194 = scmp.eq.s32.totalorder %s21, 0
    %p195 = por %p193, %p194
    %s197 = sadd.s32 %s196, 1
    %p200 = scmp.eq.s32.totalorder %s15, 1
    %p201 = scmp.ne.s32.totalorder %s196, %s198
    %p202 = scmp.eq.s32.totalorder %s15, 0
    %p203 = por %p201, %p202
    %p204 = scmp.ne.s32.totalorder %s196, %s198
    %p205 = scmp.eq.s32.totalorder %s20, 1
    %p206 = por %p204, %p205
    %p207 = scmp.ne.s32.totalorder %s198, %s199
    %p208 = scmp.eq.s32.totalorder %s20, 0
    %p209 = por %p207, %p208
    %p210 = scmp.ne.s32.totalorder %s198, %s199
    %p211 = scmp.eq.s32.totalorder %s21, 1
    %p212 = por %p210, %p211
    %p214 = scmp.ne.s32.totalorder %s199, %s213
    %p215 = scmp.eq.s32.totalorder %s21, 0
    %p216 = por %p214, %p215
    %s217 = ssub.s32 %s15, %s22
    %p218 = scmp.eq.s32.totalorder %s217, 0
    %s220 = sadd.s32 %s219, 1
    %s221 = scalar_select %p218, %s219, %s220
    %p224 = pneg %p218
    %p225 = scmp.eq.s32.totalorder %s15, 1
    %p226 = por %p224, %p225
    %p227 = scmp.ne.s32.totalorder %s219, %s222
    %p228 = scmp.eq.s32.totalorder %s15, 0
    %p229 = por %p227, %p228
    %p230 = scmp.ne.s32.totalorder %s219, %s222
    %p231 = scmp.eq.s32.totalorder %s20, 1
    %p232 = por %p230, %p231
    %p233 = scmp.ne.s32.totalorder %s222, %s223
    %p234 = scmp.eq.s32.totalorder %s20, 0
    %p235 = por %p233, %p234
    %p236 = scmp.ne.s32.totalorder %s222, %s223
    %p237 = scmp.eq.s32.totalorder %s21, 1
    %p238 = por %p236, %p237
    %p240 = scmp.ne.s32.totalorder %s223, %s239
    %p241 = scmp.eq.s32.totalorder %s21, 0
    %p242 = por %p240, %p241
    %p243 = scmp.le.s32.totalorder 1, %s15
    %p244 = scmp.lt.s32.totalorder %s15, 3
    %p245 = pnand %p243, %p244
    %p246 = pneg %p245
    // Predicated region
    $region9: #{_lambda_.1} parent=5 // pred_check
      _
    $region10: #{_lambda_.1} parent=5 // pred_check_branch
      %248 = sbr.rel (%p245) target = $region12
    $region11: #{_lambda_.1} parent=5 // pred_region
      %s249 = ssub.s32 %s15, 1
      // Predicated region
      $region13: #{_lambda_.1} parent=11 // pred_check
        %p250 = pneg %p62
      $region14: #{_lambda_.1} parent=11 // pred_check_branch
        %252 = sbr.rel (%p250) target = $region16
      $region15: #{_lambda_.1} parent=11 // pred_region
        _
      $region16: #{_lambda_.1} parent=11 // pred_fallthru
        _
      // Predicated region
      $region17: #{_lambda_.1} parent=11 // pred_check
        %p253 = pneg %p83
      $region18: #{_lambda_.1} parent=11 // pred_check_branch
        %255 = sbr.rel (%p253) target = $region20
      $region19: #{_lambda_.1} parent=11 // pred_region
        _
      $region20: #{_lambda_.1} parent=11 // pred_fallthru
        _
      // Predicated region
      $region21: #{_lambda_.1} parent=11 // pred_check
        %p256 = pneg %p104
      $region22: #{_lambda_.1} parent=11 // pred_check_branch
        %258 = sbr.rel (%p256) target = $region24
      $region23: #{_lambda_.1} parent=11 // pred_region
        _
      $region24: #{_lambda_.1} parent=11 // pred_fallthru
        _
      // Predicated region
      $region25: #{_lambda_.1} parent=11 // pred_check
        %p259 = pneg %p125
      $region26: #{_lambda_.1} parent=11 // pred_check_branch
        %261 = sbr.rel (%p259) target = $region28
      $region27: #{_lambda_.1} parent=11 // pred_region
        _
      $region28: #{_lambda_.1} parent=11 // pred_fallthru
        _
      // Predicated region
      $region29: #{_lambda_.1} parent=11 // pred_check
        %p262 = pneg %p146
      $region30: #{_lambda_.1} parent=11 // pred_check_branch
        %264 = sbr.rel (%p262) target = $region32
      $region31: #{_lambda_.1} parent=11 // pred_region
        _
      $region32: #{_lambda_.1} parent=11 // pred_fallthru
        _
      // Predicated region
      $region33: #{_lambda_.1} parent=11 // pred_check
        %p265 = pneg %p167
      $region34: #{_lambda_.1} parent=11 // pred_check_branch
        %267 = sbr.rel (%p265) target = $region36
      $region35: #{_lambda_.1} parent=11 // pred_region
        _
      $region36: #{_lambda_.1} parent=11 // pred_fallthru
        _
      // Predicated region
      $region37: #{_lambda_.1} parent=11 // pred_check
        %p268 = pneg %p188
      $region38: #{_lambda_.1} parent=11 // pred_check_branch
        %270 = sbr.rel (%p268) target = $region40
      $region39: #{_lambda_.1} parent=11 // pred_region
        _
      $region40: #{_lambda_.1} parent=11 // pred_fallthru
        _
      // Predicated region
      $region41: #{_lambda_.1} parent=11 // pred_check
        %p271 = pneg %p209
      $region42: #{_lambda_.1} parent=11 // pred_check_branch
        %273 = sbr.rel (%p271) target = $region44
      $region43: #{_lambda_.1} parent=11 // pred_region
        _
      $region44: #{_lambda_.1} parent=11 // pred_fallthru
        _
    $region12: #{_lambda_.1} parent=5 // pred_fallthru
      _
    %p274 = scmp.lt.s32.totalorder %s15, 2
    // Predicated region
    $region45: #{_lambda_.1} parent=5 // pred_check
      %p275 = pneg %p274
    $region46: #{_lambda_.1} parent=5 // pred_check_branch
      %277 = sbr.rel (%p275) target = $region48
    $region47: #{_lambda_.1} parent=5 // pred_region
      // Predicated region
      $region49: #{_lambda_.1} parent=47 // pred_check
        %p278 = pneg %p35
      $region50: #{_lambda_.1} parent=47 // pred_check_branch
        %280 = sbr.rel (%p278) target = $region52
      $region51: #{_lambda_.1} parent=47 // pred_region
        %p281 = scmp.lt.s32.totalorder %s15, 1
        %s282 = scalar_select %p281, %s15, 1
        %s283 = smul.addr %s282, 8
        %s284 = smul.addr %s283, 4
        %s285 = scalar_lea.vmem %s0, %s284
      $region52: #{_lambda_.1} parent=47 // pred_fallthru
        _
    $region48: #{_lambda_.1} parent=5 // pred_fallthru
      _
    %p286 = scmp.le.s32.totalorder 1, %s15
    %p287 = scmp.lt.s32.totalorder %s15, 3
    %p288 = pnand %p286, %p287
    %p289 = pneg %p288
    // Predicated region
    $region53: #{_lambda_.1} parent=5 // pred_check
      _
    $region54: #{_lambda_.1} parent=5 // pred_check_branch
      %291 = sbr.rel (%p288) target = $region56
    $region55: #{_lambda_.1} parent=5 // pred_region
      %s292 = ssub.s32 %s15, 1
      %p293 = scmp.lt.s32.totalorder %s20, 1
      %s294 = scalar_select %p293, %s20, 1
      %s295 = smul.addr %s294, 8
      %s296 = smul.addr %s295, 4
      %s297 = scalar_lea.vmem %s0, %s296
      %p298 = pneg %p41
      %p299 = pneg %p38
      %p300 = pneg %p62
      %p301 = pneg %p59
      %p302 = pneg %p83
      %p303 = pneg %p80
      %p304 = pneg %p104
      %p305 = pneg %p101
      %p306 = pneg %p125
      %p307 = pneg %p122
      %p308 = pneg %p146
      %p309 = pneg %p143
      %p310 = pneg %p167
      %p311 = pneg %p164
      %p312 = pneg %p188
      %p313 = pneg %p185
      %p314 = pneg %p209
      %p315 = pneg %p206
      %p316 = pneg %p235
      %p317 = pneg %p232
      %p318 = scmp.lt.s32.totalorder %s20, 1
      %s319 = scalar_select %p318, %s20, 1
      %s320 = smul.addr %s319, 4
      %s321 = smul.addr %s320, 8
      %s322 = scalar_lea.vmem %s9, %s321
      %p323 = scmp.lt.s32.totalorder %s20, 1
      %s324 = scalar_select %p323, %s20, 1
      %s325 = smul.addr %s324, 8
      %s326 = smul.addr %s325, 4
      %s327 = scalar_lea.vmem %s0, %s326
      %p328 = scmp.lt.s32.totalorder %s20, 1
      %s329 = scalar_select %p328, %s20, 1
      %s330 = smul.addr %s329, 4
      %s331 = smul.addr %s330, 8
      %s332 = scalar_lea.vmem %s9, %s331
      %vm334 = vcmask 519168
      %335 = vst.msk [vmem:[#allocation2] sm:$0xf] %vm334, 0
      %vm336 = vcmask 516096
      %337 = vst.msk [vmem:[#allocation2 + $0x4] sm:$0x1] %vm336, 0
      %s338 = scalar_lea.vmem [#allocation2], 72
      %339 = vst.msk [vmem:[%s338] sm:$0xf] %vm334, 0
      %340 = vst.msk [vmem:[%s338 + $0x4] sm:$0x1] %vm336, 0
      %vm341 = vcmask 516096
      %vm342 = vsmask.f32 256
      %vm343 = vmand %vm341, %vm342
      %v344 = vld [vmem:[#allocation2] sm:$0x1]
      %v345 = vsel %vm343, 0, %v344
      %346 = vst [vmem:[#allocation2] sm:$0x1] %v345
      %v347 = vld [vmem:[#allocation2 + $0x8] sm:$0x1]
      %v348 = vsel %vm343, 0, %v347
      %349 = vst [vmem:[#allocation2 + $0x8] sm:$0x1] %v348
      %v350 = vld [vmem:[#allocation2 + $0x10] sm:$0x1]
      %v351 = vsel %vm343, 0, %v350
      %352 = vst [vmem:[#allocation2 + $0x10] sm:$0x1] %v351
      %v353 = vld [vmem:[#allocation2 + $0x18] sm:$0x1]
      %v354 = vsel %vm343, 0, %v353
      %355 = vst [vmem:[#allocation2 + $0x18] sm:$0x1] %v354
      %v356 = vld [vmem:[#allocation2 + $0x20] sm:$0x1]
      %v357 = vsel %vm343, 0, %v356
      %358 = vst [vmem:[#allocation2 + $0x20] sm:$0x1] %v357
      %v359 = vld [vmem:[#allocation2 + $0x28] sm:$0x1]
      %v360 = vsel %vm343, 0, %v359
      %361 = vst [vmem:[#allocation2 + $0x28] sm:$0x1] %v360
      %v362 = vld [vmem:[#allocation2 + $0x30] sm:$0x1]
      %v363 = vsel %vm343, 0, %v362
      %364 = vst [vmem:[#allocation2 + $0x30] sm:$0x1] %v363
      %v365 = vld [vmem:[#allocation2 + $0x38] sm:$0x1]
      %v366 = vsel %vm343, 0, %v365
      %367 = vst [vmem:[#allocation2 + $0x38] sm:$0x1] %v366
      %v368 = vld [vmem:[#allocation2 + $0x40] sm:$0x1]
      %v369 = vsel %vm343, 0, %v368
      %370 = vst [vmem:[#allocation2 + $0x40] sm:$0x1] %v369
      %v371 = vld [vmem:[#allocation2 + $0x48] sm:$0x1]
      %v372 = vsel %vm343, 0, %v371
      %373 = vst [vmem:[#allocation2 + $0x48] sm:$0x1] %v372
      %vm374 = vsmask.f32 7938
      %vm375 = vmand %vm341, %vm374
      %v376 = vld [vmem:[#allocation2 + $0x4] sm:$0x1]
      %v377 = vsel %vm375, 0, %v376
      %378 = vst [vmem:[#allocation2 + $0x4] sm:$0x1] %v377
      %v379 = vld [vmem:[#allocation2 + $0xc] sm:$0x1]
      %v380 = vsel %vm375, 0, %v379
      %381 = vst [vmem:[#allocation2 + $0xc] sm:$0x1] %v380
      %v382 = vld [vmem:[#allocation2 + $0x14] sm:$0x1]
      %v383 = vsel %vm375, 0, %v382
      %384 = vst [vmem:[#allocation2 + $0x14] sm:$0x1] %v383
      %v385 = vld [vmem:[#allocation2 + $0x1c] sm:$0x1]
      %v386 = vsel %vm375, 0, %v385
      %387 = vst [vmem:[#allocation2 + $0x1c] sm:$0x1] %v386
      %v388 = vld [vmem:[#allocation2 + $0x24] sm:$0x1]
      %v389 = vsel %vm375, 0, %v388
      %390 = vst [vmem:[#allocation2 + $0x24] sm:$0x1] %v389
      %v391 = vld [vmem:[#allocation2 + $0x2c] sm:$0x1]
      %v392 = vsel %vm375, 0, %v391
      %393 = vst [vmem:[#allocation2 + $0x2c] sm:$0x1] %v392
      %v394 = vld [vmem:[#allocation2 + $0x34] sm:$0x1]
      %v395 = vsel %vm375, 0, %v394
      %396 = vst [vmem:[#allocation2 + $0x34] sm:$0x1] %v395
      %v397 = vld [vmem:[#allocation2 + $0x3c] sm:$0x1]
      %v398 = vsel %vm375, 0, %v397
      %399 = vst [vmem:[#allocation2 + $0x3c] sm:$0x1] %v398
      %v400 = vld [vmem:[#allocation2 + $0x44] sm:$0x1]
      %v401 = vsel %vm375, 0, %v400
      %402 = vst [vmem:[#allocation2 + $0x44] sm:$0x1] %v401
      %v403 = vld [vmem:[#allocation2 + $0x4c] sm:$0x1]
      %v404 = vsel %vm375, 0, %v403
      %405 = vst [vmem:[#allocation2 + $0x4c] sm:$0x1] %v404
      %v406 = vld [vmem:[%s327] sm:$0xf]
      %v407 = vld [vmem:[%s327 + $0x4] sm:$0xf]
      %v408 = vld [vmem:[%s327 + $0x8] sm:$0xf]
      %v409 = vld [vmem:[%s327 + $0xc] sm:$0xf]
      %v410 = vld [vmem:[%s327 + $0x10] sm:$0xf]
      %v411 = vld [vmem:[%s327 + $0x14] sm:$0xf]
      %v412 = vld [vmem:[%s327 + $0x18] sm:$0xf]
      %v413 = vld [vmem:[%s327 + $0x1c] sm:$0xf]
      %v414 = vld [vmem:[%s1] sm:$0xf]
      %v415 = vld [vmem:[%s1 + $0x4] sm:$0xf]
      %v416 = vld [vmem:[%s1 + $0x8] sm:$0xf]
      %v417 = vld [vmem:[%s1 + $0xc] sm:$0x3]
      %v418 = vld [vmem:[%s2] sm:$0x1]
      %v420 = vlaneseq
      %v421 = vshrl.u32 %v420, 7
      %v422 = vsub.s32 0, %v421
      %v423 = vrot.slane %v418, %v422
      %v433 = vunpack.c.l.b16 %v406
      %v434 = vunpack.c.l.b16 %v407
      %v435 = vunpack.c.l.b16 %v408
      %v436 = vunpack.c.l.b16 %v409
      %v437 = vunpack.c.l.b16 %v410
      %v438 = vunpack.c.l.b16 %v411
      %v439 = vunpack.c.l.b16 %v412
      %v440 = vunpack.c.l.b16 %v413
      %v441 = vpack.c.b16 %v434, %v433
      %v442 = vpack.c.b16 %v436, %v435
      %v443 = vpack.c.b16 %v438, %v437
      %v444 = vpack.c.b16 %v440, %v439
      %v449 = vunpack.c.l.b16 %v414
      %v450 = vunpack.c.l.b16 %v415
      %v451 = vunpack.c.l.b16 %v416
      %v452 = vunpack.c.l.b16 %v417
      %v453 = vpack.c.b16 %v450, %v449
      %v454 = vpack.c.b16 %v452, %v451
      %vm456 = vcmask 220160
      %v458 = vsel %vm456, %v441, 0
      %v461 = vsel %vm456, %v442, 0
      %v464 = vsel %vm456, %v443, 0
      %v467 = vsel %vm456, %v444, 0
      %vm469 = vcmask 1044480
      %vm470 = vcmask 1045504
      %v471 = vsel %vm469, 4294967295, 65535
      %v472 = vsel %vm470, %v471, 0
      %v474 = vand.u32 %v454, %v472
      %476 = vmatprep.subr.bf16.mxu0 0
      %477 = vmatpush1.bf16.msra.mxu0 0
      %478 = vmatprep.subr.bf16.mxu0 0
      %479 = vmatpush1.bf16.msra.mxu0 0
      %480 = vmatprep.subr.bf16.mxu0 0
      %481 = vmatpush1.bf16.msra.mxu0 0
      %482 = vmatprep.subr.bf16.mxu0 0
      %483 = vmatpush1.bf16.msra.mxu0 0
      %484 = vmatprep.subr.bf16.mxu0 0
      %485 = vmatpush1.bf16.msra.mxu0 0
      %486 = vmatprep.subr.bf16.mxu0 0
      %487 = vmatpush1.bf16.msra.mxu0 0
      %488 = vmatprep.subr.bf16.mxu0 0
      %489 = vmatpush1.bf16.msra.mxu0 %v474
      %490 = vmatprep.subr.bf16.mxu0 0
      %491 = vmatpush1.bf16.msra.mxu0 %v453
      %492 = vmatprep.subr.bf16.mxu0 0
      %493 = vmatpush2.bf16.msra.mxu0 0
      %494 = vmatprep.subr.bf16.mxu0 0
      %495 = vmatpush2.bf16.msra.mxu0 0
      %496 = vmatprep.subr.bf16.mxu0 0
      %497 = vmatpush2.bf16.msra.mxu0 0
      %498 = vmatprep.subr.bf16.mxu0 0
      %499 = vmatpush2.bf16.msra.mxu0 0
      %500 = vmatprep.subr.bf16.mxu0 0
      %501 = vmatpush2.bf16.msra.mxu0 0
      %502 = vmatprep.subr.bf16.mxu0 0
      %503 = vmatpush2.bf16.msra.mxu0 0
      %504 = vmatprep.subr.bf16.mxu0 0
      %505 = vmatpush2.bf16.msra.mxu0 0
      %506 = vmatprep.subr.bf16.mxu0 0
      %507 = vmatpush2.bf16.msra.mxu0 0
      %508 = vmatprep.mubr.bf16.mxu0 0
      %509 = vmatmul.mubr.bf16.gmra.mxu0 %v458
      %v510 = vpop.f32.mrf.mxu0
      %v511 = vadd.f32 %v423, %v510
      %v512 = vpop.f32.mrf.mxu0
      %v513 = vpop.f32.mrf.mxu0
      %v514 = vadd.f32 %v423, %v513
      %v515 = vpop.f32.mrf.mxu0
      %516 = vmatprep.mubr.bf16.mxu0 0
      %517 = vmatmul.mubr.bf16.gmra.mxu0 %v461
      %v518 = vpop.f32.mrf.mxu0
      %v519 = vadd.f32 %v423, %v518
      %v520 = vpop.f32.mrf.mxu0
      %v521 = vpop.f32.mrf.mxu0
      %v522 = vadd.f32 %v423, %v521
      %v523 = vpop.f32.mrf.mxu0
      %524 = vmatprep.mubr.bf16.mxu0 0
      %525 = vmatmul.mubr.bf16.gmra.mxu0 %v464
      %v526 = vpop.f32.mrf.mxu0
      %v527 = vadd.f32 %v423, %v526
      %v528 = vpop.f32.mrf.mxu0
      %v529 = vpop.f32.mrf.mxu0
      %v530 = vadd.f32 %v423, %v529
      %v531 = vpop.f32.mrf.mxu0
      %532 = vmatprep.mubr.bf16.mxu0 0
      %533 = vmatmul.mubr.bf16.gmra.mxu0 %v467
      %v534 = vpop.f32.mrf.mxu0
      %v535 = vadd.f32 %v423, %v534
      %v536 = vpop.f32.mrf.mxu0
      %v537 = vpop.f32.mrf.mxu0
      %v538 = vadd.f32 %v423, %v537
      %v539 = vpop.f32.mrf.mxu0
      %540 = vdwg.mxu0
      %vm541 = vcmp.ge.f32.partialorder %v511, 0.0
      %vm542 = vcmp.ge.f32.partialorder %v514, 0.0
      %vm543 = vcmp.ge.f32.partialorder %v519, 0.0
      %vm544 = vcmp.ge.f32.partialorder %v522, 0.0
      %vm545 = vcmp.ge.f32.partialorder %v527, 0.0
      %vm546 = vcmp.ge.f32.partialorder %v530, 0.0
      %vm547 = vcmp.ge.f32.partialorder %v535, 0.0
      %vm548 = vcmp.ge.f32.partialorder %v538, 0.0
      %v549 = vmul.f32 %v511, 0.1
      %v550 = vmul.f32 %v514, 0.1
      %v551 = vmul.f32 %v519, 0.1
      %v552 = vmul.f32 %v522, 0.1
      %v553 = vmul.f32 %v527, 0.1
      %v554 = vmul.f32 %v530, 0.1
      %v555 = vmul.f32 %v535, 0.1
      %v556 = vmul.f32 %v538, 0.1
      %v557 = vsel %vm541, %v511, %v549
      %v558 = vsel %vm542, %v514, %v550
      %v559 = vsel %vm543, %v519, %v551
      %v560 = vsel %vm544, %v522, %v552
      %v561 = vsel %vm545, %v527, %v553
      %v562 = vsel %vm546, %v530, %v554
      %v563 = vsel %vm547, %v535, %v555
      %v564 = vsel %vm548, %v538, %v556
      %vm565 = vcmask 523264
      %566 = vst.msk [vmem:[#allocation3] sm:$0xff] %vm565, %v557
      %567 = vst.msk [vmem:[#allocation3 + $0x8] sm:$0xff] %vm565, %v558
      %568 = vst.msk [vmem:[#allocation3 + $0x10] sm:$0xff] %vm565, %v559
      %569 = vst.msk [vmem:[#allocation3 + $0x18] sm:$0xff] %vm565, %v560
      %570 = vst.msk [vmem:[#allocation3 + $0x20] sm:$0xff] %vm565, %v561
      %571 = vst.msk [vmem:[#allocation3 + $0x28] sm:$0xff] %vm565, %v562
      %572 = vst.msk [vmem:[#allocation3 + $0x30] sm:$0xff] %vm565, %v563
      %573 = vst.msk [vmem:[#allocation3 + $0x38] sm:$0xff] %vm565, %v564
      %574 = vst.msk [vmem:[#allocation4] sm:$0xff] %vm565, %v557
      %575 = vst.msk [vmem:[#allocation4 + $0x8] sm:$0xff] %vm565, %v558
      %576 = vst.msk [vmem:[#allocation4 + $0x10] sm:$0xff] %vm565, %v559
      %577 = vst.msk [vmem:[#allocation4 + $0x18] sm:$0xff] %vm565, %v560
      %578 = vst.msk [vmem:[#allocation4 + $0x20] sm:$0xff] %vm565, %v561
      %579 = vst.msk [vmem:[#allocation4 + $0x28] sm:$0xff] %vm565, %v562
      %580 = vst.msk [vmem:[#allocation4 + $0x30] sm:$0xff] %vm565, %v563
      %581 = vst.msk [vmem:[#allocation4 + $0x38] sm:$0xff] %vm565, %v564
      loop: start=0, step=1, limit=4
      $region57: #{_lambda_.1} parent=55 // loop_pre_header
        _
      $region58: #{_lambda_.1} parent=55 // loop_header
        %s583 = sphi 0, %s587
        %p584 = scmp.ge.s32.totalorder %s583, 4
      $region59: #{_lambda_.1} parent=55 // loop_header_branch
        %586 = sbr.rel (%p584) target = $region63
      $region60: #{_lambda_.1} parent=55 // loop_body
        %v588 = vld [vmem:[#allocation4] sm:$0xff]
        %v589 = vld [vmem:[#allocation4 + $0x8] sm:$0xff]
        %v590 = vld [vmem:[#allocation4 + $0x10] sm:$0xff]
        %v591 = vld [vmem:[#allocation4 + $0x18] sm:$0xff]
        %v592 = vld [vmem:[#allocation4 + $0x20] sm:$0xff]
        %v593 = vld [vmem:[#allocation4 + $0x28] sm:$0xff]
        %v594 = vld [vmem:[#allocation4 + $0x30] sm:$0xff]
        %v595 = vld [vmem:[#allocation4 + $0x38] sm:$0xff]
        %v596 = vpack.c.bf16 %v588, %v588
        %v597 = vpack.c.bf16 %v589, %v589
        %v598 = vpack.c.bf16 %v590, %v590
        %v599 = vpack.c.bf16 %v591, %v591
        %v600 = vpack.c.bf16 %v592, %v592
        %v601 = vpack.c.bf16 %v593, %v593
        %v602 = vpack.c.bf16 %v594, %v594
        %v603 = vpack.c.bf16 %v595, %v595
        %v612 = vunpack.c.l.b16 %v596
        %v613 = vunpack.c.l.b16 %v597
        %v614 = vunpack.c.l.b16 %v598
        %v615 = vunpack.c.l.b16 %v599
        %v616 = vunpack.c.l.b16 %v600
        %v617 = vunpack.c.l.b16 %v601
        %v618 = vunpack.c.l.b16 %v602
        %v619 = vunpack.c.l.b16 %v603
        %v620 = vpack.c.b16 %v612, %v612
        %v621 = vpack.c.b16 %v613, %v613
        %v622 = vpack.c.b16 %v614, %v614
        %v623 = vpack.c.b16 %v615, %v615
        %v624 = vpack.c.b16 %v616, %v616
        %v625 = vpack.c.b16 %v617, %v617
        %v626 = vpack.c.b16 %v618, %v618
        %v627 = vpack.c.b16 %v619, %v619
        %v629 = vshrl.u32 %v620, 16
        %v631 = vrot.slane %v629, 7
        %v632 = vshll.u32 %v620, 16
        %v634 = vor.u32 %v631, %v632
        %v635 = vrot.slane %v631, 4
        %v637 = vshrl.u32 %v621, 16
        %v639 = vrot.slane %v637, 7
        %v640 = vshll.u32 %v621, 16
        %v642 = vor.u32 %v639, %v640
        %v643 = vrot.slane %v639, 4
        %v645 = vshrl.u32 %v622, 16
        %v647 = vrot.slane %v645, 7
        %v648 = vshll.u32 %v622, 16
        %v650 = vor.u32 %v647, %v648
        %v651 = vrot.slane %v647, 4
        %v653 = vshrl.u32 %v623, 16
        %v655 = vrot.slane %v653, 7
        %v656 = vshll.u32 %v623, 16
        %v658 = vor.u32 %v655, %v656
        %v659 = vrot.slane %v655, 4
        %v661 = vshrl.u32 %v624, 16
        %v663 = vrot.slane %v661, 7
        %v664 = vshll.u32 %v624, 16
        %v666 = vor.u32 %v663, %v664
        %v667 = vrot.slane %v663, 4
        %v669 = vshrl.u32 %v625, 16
        %v671 = vrot.slane %v669, 7
        %v672 = vshll.u32 %v625, 16
        %v674 = vor.u32 %v671, %v672
        %v675 = vrot.slane %v671, 4
        %v677 = vshrl.u32 %v626, 16
        %v679 = vrot.slane %v677, 7
        %v680 = vshll.u32 %v626, 16
        %v682 = vor.u32 %v679, %v680
        %v683 = vrot.slane %v679, 4
        %v685 = vshrl.u32 %v627, 16
        %v687 = vrot.slane %v685, 7
        %v688 = vshll.u32 %v627, 16
        %v690 = vor.u32 %v687, %v688
        %v691 = vrot.slane %v687, 4
        %s708 = scalar_lea.vmem [#allocation2], 8
        %vm709 = vcmask 519168
        %vm710 = vmand %vm709, %vm374
        %v711 = vld [vmem:[%s708] sm:$0xf]
        %v712 = vsel %vm710, %v634, %v711
        %713 = vst [vmem:[%s708] sm:$0xf] %v712
        %v714 = vld [vmem:[%s708 + $0x4] sm:$0x1]
        %v715 = vsel %vm343, %v635, %v714
        %716 = vst [vmem:[%s708 + $0x4] sm:$0x1] %v715
        %v717 = vld [vmem:[%s708 + $0x8] sm:$0xf]
        %v718 = vsel %vm710, %v642, %v717
        %719 = vst [vmem:[%s708 + $0x8] sm:$0xf] %v718
        %v720 = vld [vmem:[%s708 + $0xc] sm:$0x1]
        %v721 = vsel %vm343, %v643, %v720
        %722 = vst [vmem:[%s708 + $0xc] sm:$0x1] %v721
        %v723 = vld [vmem:[%s708 + $0x10] sm:$0xf]
        %v724 = vsel %vm710, %v650, %v723
        %725 = vst [vmem:[%s708 + $0x10] sm:$0xf] %v724
        %v726 = vld [vmem:[%s708 + $0x14] sm:$0x1]
        %v727 = vsel %vm343, %v651, %v726
        %728 = vst [vmem:[%s708 + $0x14] sm:$0x1] %v727
        %v729 = vld [vmem:[%s708 + $0x18] sm:$0xf]
        %v730 = vsel %vm710, %v658, %v729
        %731 = vst [vmem:[%s708 + $0x18] sm:$0xf] %v730
        %v732 = vld [vmem:[%s708 + $0x1c] sm:$0x1]
        %v733 = vsel %vm343, %v659, %v732
        %734 = vst [vmem:[%s708 + $0x1c] sm:$0x1] %v733
        %v735 = vld [vmem:[%s708 + $0x20] sm:$0xf]
        %v736 = vsel %vm710, %v666, %v735
        %737 = vst [vmem:[%s708 + $0x20] sm:$0xf] %v736
        %v738 = vld [vmem:[%s708 + $0x24] sm:$0x1]
        %v739 = vsel %vm343, %v667, %v738
        %740 = vst [vmem:[%s708 + $0x24] sm:$0x1] %v739
        %v741 = vld [vmem:[%s708 + $0x28] sm:$0xf]
        %v742 = vsel %vm710, %v674, %v741
        %743 = vst [vmem:[%s708 + $0x28] sm:$0xf] %v742
        %v744 = vld [vmem:[%s708 + $0x2c] sm:$0x1]
        %v745 = vsel %vm343, %v675, %v744
        %746 = vst [vmem:[%s708 + $0x2c] sm:$0x1] %v745
        %v747 = vld [vmem:[%s708 + $0x30] sm:$0xf]
        %v748 = vsel %vm710, %v682, %v747
        %749 = vst [vmem:[%s708 + $0x30] sm:$0xf] %v748
        %v750 = vld [vmem:[%s708 + $0x34] sm:$0x1]
        %v751 = vsel %vm343, %v683, %v750
        %752 = vst [vmem:[%s708 + $0x34] sm:$0x1] %v751
        %v753 = vld [vmem:[%s708 + $0x38] sm:$0xf]
        %v754 = vsel %vm710, %v690, %v753
        %755 = vst [vmem:[%s708 + $0x38] sm:$0xf] %v754
        %v756 = vld [vmem:[%s708 + $0x3c] sm:$0x1]
        %v757 = vsel %vm343, %v691, %v756
        %758 = vst [vmem:[%s708 + $0x3c] sm:$0x1] %v757
        %s759 = smul.u32 %s583, 2
        %s760 = scalar_lea.vmem %s4, %s759
        %v761 = vld [vmem:[%s760] sm:$0x1]
        %v762 = vld [vmem:[#allocation2] sm:$0xf]
        %v763 = vld [vmem:[#allocation2 + $0x4] sm:$0x1]
        %v764 = vld [vmem:[#allocation2 + $0x8] sm:$0xf]
        %v765 = vld [vmem:[#allocation2 + $0xc] sm:$0x1]
        %v766 = vld [vmem:[#allocation2 + $0x10] sm:$0xf]
        %v767 = vld [vmem:[#allocation2 + $0x14] sm:$0x1]
        %v768 = vld [vmem:[#allocation2 + $0x18] sm:$0xf]
        %v769 = vld [vmem:[#allocation2 + $0x1c] sm:$0x1]
        %v770 = vld [vmem:[#allocation2 + $0x20] sm:$0xf]
        %v771 = vld [vmem:[#allocation2 + $0x24] sm:$0x1]
        %v772 = vld [vmem:[#allocation2 + $0x28] sm:$0xf]
        %v773 = vld [vmem:[#allocation2 + $0x2c] sm:$0x1]
        %v774 = vld [vmem:[#allocation2 + $0x30] sm:$0xf]
        %v775 = vld [vmem:[#allocation2 + $0x34] sm:$0x1]
        %v776 = vld [vmem:[#allocation2 + $0x38] sm:$0xf]
        %v777 = vld [vmem:[#allocation2 + $0x3c] sm:$0x1]
        %v778 = vld [vmem:[#allocation2 + $0x40] sm:$0xf]
        %v779 = vld [vmem:[#allocation2 + $0x44] sm:$0x1]
        %v780 = vld [vmem:[#allocation2 + $0x48] sm:$0xf]
        %v781 = vld [vmem:[#allocation2 + $0x4c] sm:$0x1]
        %s782 = smul.u32 %s583, 144
        %s783 = smul.addr %s782, 4
        %s784 = scalar_lea.vmem %s3, %s783
        %v785 = vld [vmem:[%s784] sm:$0xf]
        %v786 = vld [vmem:[%s784 + $0x4] sm:$0xf]
        %v787 = vld [vmem:[%s784 + $0x8] sm:$0xf]
        %v788 = vld [vmem:[%s784 + $0xc] sm:$0xf]
        %v789 = vld [vmem:[%s784 + $0x10] sm:$0xf]
        %v790 = vld [vmem:[%s784 + $0x14] sm:$0xf]
        %v791 = vld [vmem:[%s784 + $0x18] sm:$0xf]
        %v792 = vld [vmem:[%s784 + $0x1c] sm:$0xf]
        %vm793 = vsmask.f32 3328
        %vm794 = vsmask.f32 7440
        %vm795 = vmor %vm793, %vm794
        %v797 = vshrl.u32 %v762, 16
        %v799 = vrot.slane %v797, 4
        %v800 = vshll.u32 %v762, 16
        %v802 = vrot.slane %v800, 5
        %v803 = vor.u32 %v799, %v802
        %v804 = vrot.slane %v803, 4
        %v806 = vshll.u32 %v763, 16
        %v808 = vrot.slane %v806, 5
        %v809 = vsel %vm795, %v804, %v808
        %v811 = vshrl.u32 %v764, 16
        %v813 = vrot.slane %v811, 4
        %v814 = vshll.u32 %v764, 16
        %v816 = vrot.slane %v814, 5
        %v817 = vor.u32 %v813, %v816
        %v818 = vrot.slane %v817, 4
        %v820 = vshll.u32 %v765, 16
        %v822 = vrot.slane %v820, 5
        %v823 = vsel %vm795, %v818, %v822
        %v825 = vshrl.u32 %v766, 16
        %v827 = vrot.slane %v825, 4
        %v828 = vshll.u32 %v766, 16
        %v830 = vrot.slane %v828, 5
        %v831 = vor.u32 %v827, %v830
        %v832 = vrot.slane %v831, 4
        %v834 = vshll.u32 %v767, 16
        %v836 = vrot.slane %v834, 5
        %v837 = vsel %vm795, %v832, %v836
        %v839 = vshrl.u32 %v768, 16
        %v841 = vrot.slane %v839, 4
        %v842 = vshll.u32 %v768, 16
        %v844 = vrot.slane %v842, 5
        %v845 = vor.u32 %v841, %v844
        %v846 = vrot.slane %v845, 4
        %v848 = vshll.u32 %v769, 16
        %v850 = vrot.slane %v848, 5
        %v851 = vsel %vm795, %v846, %v850
        %v853 = vshrl.u32 %v770, 16
        %v855 = vrot.slane %v853, 4
        %v856 = vshll.u32 %v770, 16
        %v858 = vrot.slane %v856, 5
        %v859 = vor.u32 %v855, %v858
        %v860 = vrot.slane %v859, 4
        %v862 = vshll.u32 %v771, 16
        %v864 = vrot.slane %v862, 5
        %v865 = vsel %vm795, %v860, %v864
        %v867 = vshrl.u32 %v772, 16
        %v869 = vrot.slane %v867, 4
        %v870 = vshll.u32 %v772, 16
        %v872 = vrot.slane %v870, 5
        %v873 = vor.u32 %v869, %v872
        %v874 = vrot.slane %v873, 4
        %v876 = vshll.u32 %v773, 16
        %v878 = vrot.slane %v876, 5
        %v879 = vsel %vm795, %v874, %v878
        %v881 = vshrl.u32 %v774, 16
        %v883 = vrot.slane %v881, 4
        %v884 = vshll.u32 %v774, 16
        %v886 = vrot.slane %v884, 5
        %v887 = vor.u32 %v883, %v886
        %v888 = vrot.slane %v887, 4
        %v890 = vshll.u32 %v775, 16
        %v892 = vrot.slane %v890, 5
        %v893 = vsel %vm795, %v888, %v892
        %v895 = vshrl.u32 %v776, 16
        %v897 = vrot.slane %v895, 4
        %v898 = vshll.u32 %v776, 16
        %v900 = vrot.slane %v898, 5
        %v901 = vor.u32 %v897, %v900
        %v902 = vrot.slane %v901, 4
        %v904 = vshll.u32 %v777, 16
        %v906 = vrot.slane %v904, 5
        %v907 = vsel %vm795, %v902, %v906
        %s908 = sadd.s32 8, %s782
        %s909 = smul.addr %s908, 4
        %s910 = scalar_lea.vmem %s3, %s909
        %v911 = vld [vmem:[%s910] sm:$0xf]
        %v912 = vld [vmem:[%s910 + $0x4] sm:$0xf]
        %v913 = vld [vmem:[%s910 + $0x8] sm:$0xf]
        %v914 = vld [vmem:[%s910 + $0xc] sm:$0xf]
        %v915 = vld [vmem:[%s910 + $0x10] sm:$0xf]
        %v916 = vld [vmem:[%s910 + $0x14] sm:$0xf]
        %v917 = vld [vmem:[%s910 + $0x18] sm:$0xf]
        %v918 = vld [vmem:[%s910 + $0x1c] sm:$0xf]
        %v919 = vunpack.c.l.b16 %v809
        %v920 = vunpack.c.l.b16 %v823
        %v921 = vunpack.c.l.b16 %v837
        %v922 = vunpack.c.l.b16 %v851
        %v923 = vunpack.c.l.b16 %v865
        %v924 = vunpack.c.l.b16 %v879
        %v925 = vunpack.c.l.b16 %v893
        %v926 = vunpack.c.l.b16 %v907
        %v927 = vpack.c.b16 %v920, %v919
        %v928 = vpack.c.b16 %v922, %v921
        %v929 = vpack.c.b16 %v924, %v923
        %v930 = vpack.c.b16 %v926, %v925
        %v939 = vunpack.c.l.b16 %v911
        %v940 = vunpack.c.l.b16 %v912
        %v941 = vunpack.c.l.b16 %v913
        %v942 = vunpack.c.l.b16 %v914
        %v943 = vunpack.c.l.b16 %v915
        %v944 = vunpack.c.l.b16 %v916
        %v945 = vunpack.c.l.b16 %v917
        %v946 = vunpack.c.l.b16 %v918
        %v947 = vpack.c.b16 %v940, %v939
        %v948 = vpack.c.b16 %v942, %v941
        %v949 = vpack.c.b16 %v944, %v943
        %v950 = vpack.c.b16 %v946, %v945
        %v956 = vsel %vm565, %v927, 0
        %v959 = vsel %vm565, %v928, 0
        %v962 = vsel %vm565, %v929, 0
        %v965 = vsel %vm565, %v930, 0
        %967 = vmatprep.subr.bf16.mxu0 0
        %968 = vmatpush1.bf16.msra.mxu0 0
        %969 = vmatprep.subr.bf16.mxu0 0
        %970 = vmatpush1.bf16.msra.mxu0 0
        %971 = vmatprep.subr.bf16.mxu0 0
        %972 = vmatpush1.bf16.msra.mxu0 0
        %973 = vmatprep.subr.bf16.mxu0 0
        %974 = vmatpush1.bf16.msra.mxu0 0
        %975 = vmatprep.subr.bf16.mxu0 0
        %976 = vmatpush1.bf16.msra.mxu0 %v950
        %977 = vmatprep.subr.bf16.mxu0 0
        %978 = vmatpush1.bf16.msra.mxu0 %v949
        %979 = vmatprep.subr.bf16.mxu0 0
        %980 = vmatpush1.bf16.msra.mxu0 %v948
        %981 = vmatprep.subr.bf16.mxu0 0
        %982 = vmatpush1.bf16.msra.mxu0 %v947
        %983 = vmatprep.subr.bf16.mxu0 0
        %984 = vmatpush2.bf16.msra.mxu0 0
        %985 = vmatprep.subr.bf16.mxu0 0
        %986 = vmatpush2.bf16.msra.mxu0 0
        %987 = vmatprep.subr.bf16.mxu0 0
        %988 = vmatpush2.bf16.msra.mxu0 0
        %989 = vmatprep.subr.bf16.mxu0 0
        %990 = vmatpush2.bf16.msra.mxu0 0
        %991 = vmatprep.subr.bf16.mxu0 0
        %992 = vmatpush2.bf16.msra.mxu0 0
        %993 = vmatprep.subr.bf16.mxu0 0
        %994 = vmatpush2.bf16.msra.mxu0 0
        %995 = vmatprep.subr.bf16.mxu0 0
        %996 = vmatpush2.bf16.msra.mxu0 0
        %997 = vmatprep.subr.bf16.mxu0 0
        %998 = vmatpush2.bf16.msra.mxu0 0
        %999 = vmatprep.mubr.bf16.mxu0 0
        %1000 = vmatmul.mubr.bf16.gmra.mxu0 %v956
        %v1001 = vpop.f32.mrf.mxu0
        %v1002 = vadd.f32 0.0, %v1001
        %v1003 = vpop.f32.mrf.mxu0
        %v1004 = vpop.f32.mrf.mxu0
        %v1005 = vadd.f32 0.0, %v1004
        %v1006 = vpop.f32.mrf.mxu0
        %1007 = vmatprep.mubr.bf16.mxu0 0
        %1008 = vmatmul.mubr.bf16.gmra.mxu0 %v959
        %v1009 = vpop.f32.mrf.mxu0
        %v1010 = vadd.f32 0.0, %v1009
        %v1011 = vpop.f32.mrf.mxu0
        %v1012 = vpop.f32.mrf.mxu0
        %v1013 = vadd.f32 0.0, %v1012
        %v1014 = vpop.f32.mrf.mxu0
        %1015 = vmatprep.mubr.bf16.mxu0 0
        %1016 = vmatmul.mubr.bf16.gmra.mxu0 %v962
        %v1017 = vpop.f32.mrf.mxu0
        %v1018 = vadd.f32 0.0, %v1017
        %v1019 = vpop.f32.mrf.mxu0
        %v1020 = vpop.f32.mrf.mxu0
        %v1021 = vadd.f32 0.0, %v1020
        %v1022 = vpop.f32.mrf.mxu0
        %1023 = vmatprep.mubr.bf16.mxu0 0
        %1024 = vmatmul.mubr.bf16.gmra.mxu0 %v965
        %v1025 = vpop.f32.mrf.mxu0
        %v1026 = vadd.f32 0.0, %v1025
        %v1027 = vpop.f32.mrf.mxu0
        %v1028 = vpop.f32.mrf.mxu0
        %v1029 = vadd.f32 0.0, %v1028
        %v1030 = vpop.f32.mrf.mxu0
        %1031 = vdwg.mxu0
        %v1040 = vunpack.c.l.b16 %v762
        %v1041 = vunpack.c.l.b16 %v764
        %v1042 = vunpack.c.l.b16 %v766
        %v1043 = vunpack.c.l.b16 %v768
        %v1044 = vunpack.c.l.b16 %v770
        %v1045 = vunpack.c.l.b16 %v772
        %v1046 = vunpack.c.l.b16 %v774
        %v1047 = vunpack.c.l.b16 %v776
        %v1048 = vpack.c.b16 %v1041, %v1040
        %v1049 = vpack.c.b16 %v1043, %v1042
        %v1050 = vpack.c.b16 %v1045, %v1044
        %v1051 = vpack.c.b16 %v1047, %v1046
        %v1060 = vunpack.c.l.b16 %v785
        %v1061 = vunpack.c.l.b16 %v786
        %v1062 = vunpack.c.l.b16 %v787
        %v1063 = vunpack.c.l.b16 %v788
        %v1064 = vunpack.c.l.b16 %v789
        %v1065 = vunpack.c.l.b16 %v790
        %v1066 = vunpack.c.l.b16 %v791
        %v1067 = vunpack.c.l.b16 %v792
        %v1068 = vpack.c.b16 %v1061, %v1060
        %v1069 = vpack.c.b16 %v1063, %v1062
        %v1070 = vpack.c.b16 %v1065, %v1064
        %v1071 = vpack.c.b16 %v1067, %v1066
        %v1077 = vsel %vm565, %v1048, 0
        %v1080 = vsel %vm565, %v1049, 0
        %v1083 = vsel %vm565, %v1050, 0
        %v1086 = vsel %vm565, %v1051, 0
        %1088 = vmatprep.subr.bf16.mxu0 0
        %1089 = vmatpush1.bf16.msra.mxu0 0
        %1090 = vmatprep.subr.bf16.mxu0 0
        %1091 = vmatpush1.bf16.msra.mxu0 0
        %1092 = vmatprep.subr.bf16.mxu0 0
        %1093 = vmatpush1.bf16.msra.mxu0 0
        %1094 = vmatprep.subr.bf16.mxu0 0
        %1095 = vmatpush1.bf16.msra.mxu0 0
        %1096 = vmatprep.subr.bf16.mxu0 0
        %1097 = vmatpush1.bf16.msra.mxu0 %v1071
        %1098 = vmatprep.subr.bf16.mxu0 0
        %1099 = vmatpush1.bf16.msra.mxu0 %v1070
        %1100 = vmatprep.subr.bf16.mxu0 0
        %1101 = vmatpush1.bf16.msra.mxu0 %v1069
        %1102 = vmatprep.subr.bf16.mxu0 0
        %1103 = vmatpush1.bf16.msra.mxu0 %v1068
        %1104 = vmatprep.subr.bf16.mxu0 0
        %1105 = vmatpush2.bf16.msra.mxu0 0
        %1106 = vmatprep.subr.bf16.mxu0 0
        %1107 = vmatpush2.bf16.msra.mxu0 0
        %1108 = vmatprep.subr.bf16.mxu0 0
        %1109 = vmatpush2.bf16.msra.mxu0 0
        %1110 = vmatprep.subr.bf16.mxu0 0
        %1111 = vmatpush2.bf16.msra.mxu0 0
        %1112 = vmatprep.subr.bf16.mxu0 0
        %1113 = vmatpush2.bf16.msra.mxu0 0
        %1114 = vmatprep.subr.bf16.mxu0 0
        %1115 = vmatpush2.bf16.msra.mxu0 0
        %1116 = vmatprep.subr.bf16.mxu0 0
        %1117 = vmatpush2.bf16.msra.mxu0 0
        %1118 = vmatprep.subr.bf16.mxu0 0
        %1119 = vmatpush2.bf16.msra.mxu0 0
        %1120 = vmatprep.mubr.bf16.mxu0 0
        %1121 = vmatmul.mubr.bf16.gmra.mxu0 %v1077
        %v1122 = vpop.f32.mrf.mxu0
        %v1123 = vadd.f32 %v1002, %v1122
        %v1124 = vpop.f32.mrf.mxu0
        %v1125 = vpop.f32.mrf.mxu0
        %v1126 = vadd.f32 %v1005, %v1125
        %v1127 = vpop.f32.mrf.mxu0
        %1128 = vmatprep.mubr.bf16.mxu0 0
        %1129 = vmatmul.mubr.bf16.gmra.mxu0 %v1080
        %v1130 = vpop.f32.mrf.mxu0
        %v1131 = vadd.f32 %v1010, %v1130
        %v1132 = vpop.f32.mrf.mxu0
        %v1133 = vpop.f32.mrf.mxu0
        %v1134 = vadd.f32 %v1013, %v1133
        %v1135 = vpop.f32.mrf.mxu0
        %1136 = vmatprep.mubr.bf16.mxu0 0
        %1137 = vmatmul.mubr.bf16.gmra.mxu0 %v1083
        %v1138 = vpop.f32.mrf.mxu0
        %v1139 = vadd.f32 %v1018, %v1138
        %v1140 = vpop.f32.mrf.mxu0
        %v1141 = vpop.f32.mrf.mxu0
        %v1142 = vadd.f32 %v1021, %v1141
        %v1143 = vpop.f32.mrf.mxu0
        %1144 = vmatprep.mubr.bf16.mxu0 0
        %1145 = vmatmul.mubr.bf16.gmra.mxu0 %v1086
        %v1146 = vpop.f32.mrf.mxu0
        %v1147 = vadd.f32 %v1026, %v1146
        %v1148 = vpop.f32.mrf.mxu0
        %v1149 = vpop.f32.mrf.mxu0
        %v1150 = vadd.f32 %v1029, %v1149
        %v1151 = vpop.f32.mrf.mxu0
        %1152 = vdwg.mxu0
        %vm1161 = vcmask 1042432
        %vm1162 = vcmask 1046532
        %vm1163 = vmor %vm1161, %vm1162
        %v1164 = vrot.slane %v762, 5
        %v1165 = vrot.slane %v1164, 4
        %v1166 = vrot.slane %v763, 5
        %v1167 = vsel %vm1163, %v1165, %v1166
        %v1168 = vrot.slane %v764, 5
        %v1169 = vrot.slane %v1168, 4
        %v1170 = vrot.slane %v765, 5
        %v1171 = vsel %vm1163, %v1169, %v1170
        %v1172 = vrot.slane %v766, 5
        %v1173 = vrot.slane %v1172, 4
        %v1174 = vrot.slane %v767, 5
        %v1175 = vsel %vm1163, %v1173, %v1174
        %v1176 = vrot.slane %v768, 5
        %v1177 = vrot.slane %v1176, 4
        %v1178 = vrot.slane %v769, 5
        %v1179 = vsel %vm1163, %v1177, %v1178
        %v1180 = vrot.slane %v770, 5
        %v1181 = vrot.slane %v1180, 4
        %v1182 = vrot.slane %v771, 5
        %v1183 = vsel %vm1163, %v1181, %v1182
        %v1184 = vrot.slane %v772, 5
        %v1185 = vrot.slane %v1184, 4
        %v1186 = vrot.slane %v773, 5
        %v1187 = vsel %vm1163, %v1185, %v1186
        %v1188 = vrot.slane %v774, 5
        %v1189 = vrot.slane %v1188, 4
        %v1190 = vrot.slane %v775, 5
        %v1191 = vsel %vm1163, %v1189, %v1190
        %v1192 = vrot.slane %v776, 5
        %v1193 = vrot.slane %v1192, 4
        %v1194 = vrot.slane %v777, 5
        %v1195 = vsel %vm1163, %v1193, %v1194
        %s1196 = sadd.s32 16, %s782
        %s1197 = smul.addr %s1196, 4
        %s1198 = scalar_lea.vmem %s3, %s1197
        %v1199 = vld [vmem:[%s1198] sm:$0xf]
        %v1200 = vld [vmem:[%s1198 + $0x4] sm:$0xf]
        %v1201 = vld [vmem:[%s1198 + $0x8] sm:$0xf]
        %v1202 = vld [vmem:[%s1198 + $0xc] sm:$0xf]
        %v1203 = vld [vmem:[%s1198 + $0x10] sm:$0xf]
        %v1204 = vld [vmem:[%s1198 + $0x14] sm:$0xf]
        %v1205 = vld [vmem:[%s1198 + $0x18] sm:$0xf]
        %v1206 = vld [vmem:[%s1198 + $0x1c] sm:$0xf]
        %v1207 = vunpack.c.l.b16 %v1167
        %v1208 = vunpack.c.l.b16 %v1171
        %v1209 = vunpack.c.l.b16 %v1175
        %v1210 = vunpack.c.l.b16 %v1179
        %v1211 = vunpack.c.l.b16 %v1183
        %v1212 = vunpack.c.l.b16 %v1187
        %v1213 = vunpack.c.l.b16 %v1191
        %v1214 = vunpack.c.l.b16 %v1195
        %v1215 = vpack.c.b16 %v1208, %v1207
        %v1216 = vpack.c.b16 %v1210, %v1209
        %v1217 = vpack.c.b16 %v1212, %v1211
        %v1218 = vpack.c.b16 %v1214, %v1213
        %v1227 = vunpack.c.l.b16 %v1199
        %v1228 = vunpack.c.l.b16 %v1200
        %v1229 = vunpack.c.l.b16 %v1201
        %v1230 = vunpack.c.l.b16 %v1202
        %v1231 = vunpack.c.l.b16 %v1203
        %v1232 = vunpack.c.l.b16 %v1204
        %v1233 = vunpack.c.l.b16 %v1205
        %v1234 = vunpack.c.l.b16 %v1206
        %v1235 = vpack.c.b16 %v1228, %v1227
        %v1236 = vpack.c.b16 %v1230, %v1229
        %v1237 = vpack.c.b16 %v1232, %v1231
        %v1238 = vpack.c.b16 %v1234, %v1233
        %v1244 = vsel %vm565, %v1215, 0
        %v1247 = vsel %vm565, %v1216, 0
        %v1250 = vsel %vm565, %v1217, 0
        %v1253 = vsel %vm565, %v1218, 0
        %1255 = vmatprep.subr.bf16.mxu0 0
        %1256 = vmatpush1.bf16.msra.mxu0 0
        %1257 = vmatprep.subr.bf16.mxu0 0
        %1258 = vmatpush1.bf16.msra.mxu0 0
        %1259 = vmatprep.subr.bf16.mxu0 0
        %1260 = vmatpush1.bf16.msra.mxu0 0
        %1261 = vmatprep.subr.bf16.mxu0 0
        %1262 = vmatpush1.bf16.msra.mxu0 0
        %1263 = vmatprep.subr.bf16.mxu0 0
        %1264 = vmatpush1.bf16.msra.mxu0 %v1238
        %1265 = vmatprep.subr.bf16.mxu0 0
        %1266 = vmatpush1.bf16.msra.mxu0 %v1237
        %1267 = vmatprep.subr.bf16.mxu0 0
        %1268 = vmatpush1.bf16.msra.mxu0 %v1236
        %1269 = vmatprep.subr.bf16.mxu0 0
        %1270 = vmatpush1.bf16.msra.mxu0 %v1235
        %1271 = vmatprep.subr.bf16.mxu0 0
        %1272 = vmatpush2.bf16.msra.mxu0 0
        %1273 = vmatprep.subr.bf16.mxu0 0
        %1274 = vmatpush2.bf16.msra.mxu0 0
        %1275 = vmatprep.subr.bf16.mxu0 0
        %1276 = vmatpush2.bf16.msra.mxu0 0
        %1277 = vmatprep.subr.bf16.mxu0 0
        %1278 = vmatpush2.bf16.msra.mxu0 0
        %1279 = vmatprep.subr.bf16.mxu0 0
        %1280 = vmatpush2.bf16.msra.mxu0 0
        %1281 = vmatprep.subr.bf16.mxu0 0
        %1282 = vmatpush2.bf16.msra.mxu0 0
        %1283 = vmatprep.subr.bf16.mxu0 0
        %1284 = vmatpush2.bf16.msra.mxu0 0
        %1285 = vmatprep.subr.bf16.mxu0 0
        %1286 = vmatpush2.bf16.msra.mxu0 0
        %1287 = vmatprep.mubr.bf16.mxu0 0
        %1288 = vmatmul.mubr.bf16.gmra.mxu0 %v1244
        %v1289 = vpop.f32.mrf.mxu0
        %v1290 = vadd.f32 0.0, %v1289
        %v1291 = vpop.f32.mrf.mxu0
        %v1292 = vpop.f32.mrf.mxu0
        %v1293 = vadd.f32 0.0, %v1292
        %v1294 = vpop.f32.mrf.mxu0
        %1295 = vmatprep.mubr.bf16.mxu0 0
        %1296 = vmatmul.mubr.bf16.gmra.mxu0 %v1247
        %v1297 = vpop.f32.mrf.mxu0
        %v1298 = vadd.f32 0.0, %v1297
        %v1299 = vpop.f32.mrf.mxu0
        %v1300 = vpop.f32.mrf.mxu0
        %v1301 = vadd.f32 0.0, %v1300
        %v1302 = vpop.f32.mrf.mxu0
        %1303 = vmatprep.mubr.bf16.mxu0 0
        %1304 = vmatmul.mubr.bf16.gmra.mxu0 %v1250
        %v1305 = vpop.f32.mrf.mxu0
        %v1306 = vadd.f32 0.0, %v1305
        %v1307 = vpop.f32.mrf.mxu0
        %v1308 = vpop.f32.mrf.mxu0
        %v1309 = vadd.f32 0.0, %v1308
        %v1310 = vpop.f32.mrf.mxu0
        %1311 = vmatprep.mubr.bf16.mxu0 0
        %1312 = vmatmul.mubr.bf16.gmra.mxu0 %v1253
        %v1313 = vpop.f32.mrf.mxu0
        %v1314 = vadd.f32 0.0, %v1313
        %v1315 = vpop.f32.mrf.mxu0
        %v1316 = vpop.f32.mrf.mxu0
        %v1317 = vadd.f32 0.0, %v1316
        %v1318 = vpop.f32.mrf.mxu0
        %1319 = vdwg.mxu0
        %v1320 = vadd.f32 %v1123, %v1290
        %v1321 = vadd.f32 %v1126, %v1293
        %v1322 = vadd.f32 %v1131, %v1298
        %v1323 = vadd.f32 %v1134, %v1301
        %v1324 = vadd.f32 %v1139, %v1306
        %v1325 = vadd.f32 %v1142, %v1309
        %v1326 = vadd.f32 %v1147, %v1314
        %v1327 = vadd.f32 %v1150, %v1317
        %s1328 = sadd.s32 24, %s782
        %s1329 = smul.addr %s1328, 4
        %s1330 = scalar_lea.vmem %s3, %s1329
        %v1331 = vld [vmem:[%s1330] sm:$0xf]
        %v1332 = vld [vmem:[%s1330 + $0x4] sm:$0xf]
        %v1333 = vld [vmem:[%s1330 + $0x8] sm:$0xf]
        %v1334 = vld [vmem:[%s1330 + $0xc] sm:$0xf]
        %v1335 = vld [vmem:[%s1330 + $0x10] sm:$0xf]
        %v1336 = vld [vmem:[%s1330 + $0x14] sm:$0xf]
        %v1337 = vld [vmem:[%s1330 + $0x18] sm:$0xf]
        %v1338 = vld [vmem:[%s1330 + $0x1c] sm:$0xf]
        %v1340 = vunpack.c.l.b16 %v778
        %v1341 = vpack.c.b16 %v1042, %v1041
        %v1342 = vpack.c.b16 %v1044, %v1043
        %v1343 = vpack.c.b16 %v1046, %v1045
        %v1344 = vpack.c.b16 %v1340, %v1047
        %v1353 = vunpack.c.l.b16 %v1331
        %v1354 = vunpack.c.l.b16 %v1332
        %v1355 = vunpack.c.l.b16 %v1333
        %v1356 = vunpack.c.l.b16 %v1334
        %v1357 = vunpack.c.l.b16 %v1335
        %v1358 = vunpack.c.l.b16 %v1336
        %v1359 = vunpack.c.l.b16 %v1337
        %v1360 = vunpack.c.l.b16 %v1338
        %v1361 = vpack.c.b16 %v1354, %v1353
        %v1362 = vpack.c.b16 %v1356, %v1355
        %v1363 = vpack.c.b16 %v1358, %v1357
        %v1364 = vpack.c.b16 %v1360, %v1359
        %v1370 = vsel %vm565, %v1341, 0
        %v1373 = vsel %vm565, %v1342, 0
        %v1376 = vsel %vm565, %v1343, 0
        %v1379 = vsel %vm565, %v1344, 0
        %1381 = vmatprep.subr.bf16.mxu0 0
        %1382 = vmatpush1.bf16.msra.mxu0 0
        %1383 = vmatprep.subr.bf16.mxu0 0
        %1384 = vmatpush1.bf16.msra.mxu0 0
        %1385 = vmatprep.subr.bf16.mxu0 0
        %1386 = vmatpush1.bf16.msra.mxu0 0
        %1387 = vmatprep.subr.bf16.mxu0 0
        %1388 = vmatpush1.bf16.msra.mxu0 0
        %1389 = vmatprep.subr.bf16.mxu0 0
        %1390 = vmatpush1.bf16.msra.mxu0 %v1364
        %1391 = vmatprep.subr.bf16.mxu0 0
        %1392 = vmatpush1.bf16.msra.mxu0 %v1363
        %1393 = vmatprep.subr.bf16.mxu0 0
        %1394 = vmatpush1.bf16.msra.mxu0 %v1362
        %1395 = vmatprep.subr.bf16.mxu0 0
        %1396 = vmatpush1.bf16.msra.mxu0 %v1361
        %1397 = vmatprep.subr.bf16.mxu0 0
        %1398 = vmatpush2.bf16.msra.mxu0 0
        %1399 = vmatprep.subr.bf16.mxu0 0
        %1400 = vmatpush2.bf16.msra.mxu0 0
        %1401 = vmatprep.subr.bf16.mxu0 0
        %1402 = vmatpush2.bf16.msra.mxu0 0
        %1403 = vmatprep.subr.bf16.mxu0 0
        %1404 = vmatpush2.bf16.msra.mxu0 0
        %1405 = vmatprep.subr.bf16.mxu0 0
        %1406 = vmatpush2.bf16.msra.mxu0 0
        %1407 = vmatprep.subr.bf16.mxu0 0
        %1408 = vmatpush2.bf16.msra.mxu0 0
        %1409 = vmatprep.subr.bf16.mxu0 0
        %1410 = vmatpush2.bf16.msra.mxu0 0
        %1411 = vmatprep.subr.bf16.mxu0 0
        %1412 = vmatpush2.bf16.msra.mxu0 0
        %1413 = vmatprep.mubr.bf16.mxu0 0
        %1414 = vmatmul.mubr.bf16.gmra.mxu0 %v1370
        %v1415 = vpop.f32.mrf.mxu0
        %v1416 = vadd.f32 0.0, %v1415
        %v1417 = vpop.f32.mrf.mxu0
        %v1418 = vpop.f32.mrf.mxu0
        %v1419 = vadd.f32 0.0, %v1418
        %v1420 = vpop.f32.mrf.mxu0
        %1421 = vmatprep.mubr.bf16.mxu0 0
        %1422 = vmatmul.mubr.bf16.gmra.mxu0 %v1373
        %v1423 = vpop.f32.mrf.mxu0
        %v1424 = vadd.f32 0.0, %v1423
        %v1425 = vpop.f32.mrf.mxu0
        %v1426 = vpop.f32.mrf.mxu0
        %v1427 = vadd.f32 0.0, %v1426
        %v1428 = vpop.f32.mrf.mxu0
        %1429 = vmatprep.mubr.bf16.mxu0 0
        %1430 = vmatmul.mubr.bf16.gmra.mxu0 %v1376
        %v1431 = vpop.f32.mrf.mxu0
        %v1432 = vadd.f32 0.0, %v1431
        %v1433 = vpop.f32.mrf.mxu0
        %v1434 = vpop.f32.mrf.mxu0
        %v1435 = vadd.f32 0.0, %v1434
        %v1436 = vpop.f32.mrf.mxu0
        %1437 = vmatprep.mubr.bf16.mxu0 0
        %1438 = vmatmul.mubr.bf16.gmra.mxu0 %v1379
        %v1439 = vpop.f32.mrf.mxu0
        %v1440 = vadd.f32 0.0, %v1439
        %v1441 = vpop.f32.mrf.mxu0
        %v1442 = vpop.f32.mrf.mxu0
        %v1443 = vadd.f32 0.0, %v1442
        %v1444 = vpop.f32.mrf.mxu0
        %1445 = vdwg.mxu0
        %v1446 = vadd.f32 %v1320, %v1416
        %v1447 = vadd.f32 %v1321, %v1419
        %v1448 = vadd.f32 %v1322, %v1424
        %v1449 = vadd.f32 %v1323, %v1427
        %v1450 = vadd.f32 %v1324, %v1432
        %v1451 = vadd.f32 %v1325, %v1435
        %v1452 = vadd.f32 %v1326, %v1440
        %v1453 = vadd.f32 %v1327, %v1443
        %v1455 = vshrl.u32 %v778, 16
        %v1457 = vrot.slane %v1455, 4
        %v1458 = vshll.u32 %v778, 16
        %v1460 = vrot.slane %v1458, 5
        %v1461 = vor.u32 %v1457, %v1460
        %v1462 = vrot.slane %v1461, 4
        %v1464 = vshll.u32 %v779, 16
        %v1466 = vrot.slane %v1464, 5
        %v1467 = vsel %vm795, %v1462, %v1466
        %s1468 = sadd.s32 32, %s782
        %s1469 = smul.addr %s1468, 4
        %s1470 = scalar_lea.vmem %s3, %s1469
        %v1471 = vld [vmem:[%s1470] sm:$0xf]
        %v1472 = vld [vmem:[%s1470 + $0x4] sm:$0xf]
        %v1473 = vld [vmem:[%s1470 + $0x8] sm:$0xf]
        %v1474 = vld [vmem:[%s1470 + $0xc] sm:$0xf]
        %v1475 = vld [vmem:[%s1470 + $0x10] sm:$0xf]
        %v1476 = vld [vmem:[%s1470 + $0x14] sm:$0xf]
        %v1477 = vld [vmem:[%s1470 + $0x18] sm:$0xf]
        %v1478 = vld [vmem:[%s1470 + $0x1c] sm:$0xf]
        %v1479 = vunpack.c.l.b16 %v1467
        %v1480 = vpack.c.b16 %v921, %v920
        %v1481 = vpack.c.b16 %v923, %v922
        %v1482 = vpack.c.b16 %v925, %v924
        %v1483 = vpack.c.b16 %v1479, %v926
        %v1492 = vunpack.c.l.b16 %v1471
        %v1493 = vunpack.c.l.b16 %v1472
        %v1494 = vunpack.c.l.b16 %v1473
        %v1495 = vunpack.c.l.b16 %v1474
        %v1496 = vunpack.c.l.b16 %v1475
        %v1497 = vunpack.c.l.b16 %v1476
        %v1498 = vunpack.c.l.b16 %v1477
        %v1499 = vunpack.c.l.b16 %v1478
        %v1500 = vpack.c.b16 %v1493, %v1492
        %v1501 = vpack.c.b16 %v1495, %v1494
        %v1502 = vpack.c.b16 %v1497, %v1496
        %v1503 = vpack.c.b16 %v1499, %v1498
        %v1509 = vsel %vm565, %v1480, 0
        %v1512 = vsel %vm565, %v1481, 0
        %v1515 = vsel %vm565, %v1482, 0
        %v1518 = vsel %vm565, %v1483, 0
        %1520 = vmatprep.subr.bf16.mxu0 0
        %1521 = vmatpush1.bf16.msra.mxu0 0
        %1522 = vmatprep.subr.bf16.mxu0 0
        %1523 = vmatpush1.bf16.msra.mxu0 0
        %1524 = vmatprep.subr.bf16.mxu0 0
        %1525 = vmatpush1.bf16.msra.mxu0 0
        %1526 = vmatprep.subr.bf16.mxu0 0
        %1527 = vmatpush1.bf16.msra.mxu0 0
        %1528 = vmatprep.subr.bf16.mxu0 0
        %1529 = vmatpush1.bf16.msra.mxu0 %v1503
        %1530 = vmatprep.subr.bf16.mxu0 0
        %1531 = vmatpush1.bf16.msra.mxu0 %v1502
        %1532 = vmatprep.subr.bf16.mxu0 0
        %1533 = vmatpush1.bf16.msra.mxu0 %v1501
        %1534 = vmatprep.subr.bf16.mxu0 0
        %1535 = vmatpush1.bf16.msra.mxu0 %v1500
        %1536 = vmatprep.subr.bf16.mxu0 0
        %1537 = vmatpush2.bf16.msra.mxu0 0
        %1538 = vmatprep.subr.bf16.mxu0 0
        %1539 = vmatpush2.bf16.msra.mxu0 0
        %1540 = vmatprep.subr.bf16.mxu0 0
        %1541 = vmatpush2.bf16.msra.mxu0 0
        %1542 = vmatprep.subr.bf16.mxu0 0
        %1543 = vmatpush2.bf16.msra.mxu0 0
        %1544 = vmatprep.subr.bf16.mxu0 0
        %1545 = vmatpush2.bf16.msra.mxu0 0
        %1546 = vmatprep.subr.bf16.mxu0 0
        %1547 = vmatpush2.bf16.msra.mxu0 0
        %1548 = vmatprep.subr.bf16.mxu0 0
        %1549 = vmatpush2.bf16.msra.mxu0 0
        %1550 = vmatprep.subr.bf16.mxu0 0
        %1551 = vmatpush2.bf16.msra.mxu0 0
        %1552 = vmatprep.mubr.bf16.mxu0 0
        %1553 = vmatmul.mubr.bf16.gmra.mxu0 %v1509
        %v1554 = vpop.f32.mrf.mxu0
        %v1555 = vadd.f32 0.0, %v1554
        %v1556 = vpop.f32.mrf.mxu0
        %v1557 = vpop.f32.mrf.mxu0
        %v1558 = vadd.f32 0.0, %v1557
        %v1559 = vpop.f32.mrf.mxu0
        %1560 = vmatprep.mubr.bf16.mxu0 0
        %1561 = vmatmul.mubr.bf16.gmra.mxu0 %v1512
        %v1562 = vpop.f32.mrf.mxu0
        %v1563 = vadd.f32 0.0, %v1562
        %v1564 = vpop.f32.mrf.mxu0
        %v1565 = vpop.f32.mrf.mxu0
        %v1566 = vadd.f32 0.0, %v1565
        %v1567 = vpop.f32.mrf.mxu0
        %1568 = vmatprep.mubr.bf16.mxu0 0
        %1569 = vmatmul.mubr.bf16.gmra.mxu0 %v1515
        %v1570 = vpop.f32.mrf.mxu0
        %v1571 = vadd.f32 0.0, %v1570
        %v1572 = vpop.f32.mrf.mxu0
        %v1573 = vpop.f32.mrf.mxu0
        %v1574 = vadd.f32 0.0, %v1573
        %v1575 = vpop.f32.mrf.mxu0
        %1576 = vmatprep.mubr.bf16.mxu0 0
        %1577 = vmatmul.mubr.bf16.gmra.mxu0 %v1518
        %v1578 = vpop.f32.mrf.mxu0
        %v1579 = vadd.f32 0.0, %v1578
        %v1580 = vpop.f32.mrf.mxu0
        %v1581 = vpop.f32.mrf.mxu0
        %v1582 = vadd.f32 0.0, %v1581
        %v1583 = vpop.f32.mrf.mxu0
        %1584 = vdwg.mxu0
        %v1585 = vadd.f32 %v1446, %v1555
        %v1586 = vadd.f32 %v1447, %v1558
        %v1587 = vadd.f32 %v1448, %v1563
        %v1588 = vadd.f32 %v1449, %v1566
        %v1589 = vadd.f32 %v1450, %v1571
        %v1590 = vadd.f32 %v1451, %v1574
        %v1591 = vadd.f32 %v1452, %v1579
        %v1592 = vadd.f32 %v1453, %v1582
        %v1594 = vrot.slane %v778, 5
        %v1595 = vrot.slane %v1594, 4
        %v1596 = vrot.slane %v779, 5
        %v1597 = vsel %vm1163, %v1595, %v1596
        %s1598 = sadd.s32 40, %s782
        %s1599 = smul.addr %s1598, 4
        %s1600 = scalar_lea.vmem %s3, %s1599
        %v1601 = vld [vmem:[%s1600] sm:$0xf]
        %v1602 = vld [vmem:[%s1600 + $0x4] sm:$0xf]
        %v1603 = vld [vmem:[%s1600 + $0x8] sm:$0xf]
        %v1604 = vld [vmem:[%s1600 + $0xc] sm:$0xf]
        %v1605 = vld [vmem:[%s1600 + $0x10] sm:$0xf]
        %v1606 = vld [vmem:[%s1600 + $0x14] sm:$0xf]
        %v1607 = vld [vmem:[%s1600 + $0x18] sm:$0xf]
        %v1608 = vld [vmem:[%s1600 + $0x1c] sm:$0xf]
        %v1609 = vunpack.c.l.b16 %v1597
        %v1610 = vpack.c.b16 %v1209, %v1208
        %v1611 = vpack.c.b16 %v1211, %v1210
        %v1612 = vpack.c.b16 %v1213, %v1212
        %v1613 = vpack.c.b16 %v1609, %v1214
        %v1622 = vunpack.c.l.b16 %v1601
        %v1623 = vunpack.c.l.b16 %v1602
        %v1624 = vunpack.c.l.b16 %v1603
        %v1625 = vunpack.c.l.b16 %v1604
        %v1626 = vunpack.c.l.b16 %v1605
        %v1627 = vunpack.c.l.b16 %v1606
        %v1628 = vunpack.c.l.b16 %v1607
        %v1629 = vunpack.c.l.b16 %v1608
        %v1630 = vpack.c.b16 %v1623, %v1622
        %v1631 = vpack.c.b16 %v1625, %v1624
        %v1632 = vpack.c.b16 %v1627, %v1626
        %v1633 = vpack.c.b16 %v1629, %v1628
        %v1639 = vsel %vm565, %v1610, 0
        %v1642 = vsel %vm565, %v1611, 0
        %v1645 = vsel %vm565, %v1612, 0
        %v1648 = vsel %vm565, %v1613, 0
        %1650 = vmatprep.subr.bf16.mxu0 0
        %1651 = vmatpush1.bf16.msra.mxu0 0
        %1652 = vmatprep.subr.bf16.mxu0 0
        %1653 = vmatpush1.bf16.msra.mxu0 0
        %1654 = vmatprep.subr.bf16.mxu0 0
        %1655 = vmatpush1.bf16.msra.mxu0 0
        %1656 = vmatprep.subr.bf16.mxu0 0
        %1657 = vmatpush1.bf16.msra.mxu0 0
        %1658 = vmatprep.subr.bf16.mxu0 0
        %1659 = vmatpush1.bf16.msra.mxu0 %v1633
        %1660 = vmatprep.subr.bf16.mxu0 0
        %1661 = vmatpush1.bf16.msra.mxu0 %v1632
        %1662 = vmatprep.subr.bf16.mxu0 0
        %1663 = vmatpush1.bf16.msra.mxu0 %v1631
        %1664 = vmatprep.subr.bf16.mxu0 0
        %1665 = vmatpush1.bf16.msra.mxu0 %v1630
        %1666 = vmatprep.subr.bf16.mxu0 0
        %1667 = vmatpush2.bf16.msra.mxu0 0
        %1668 = vmatprep.subr.bf16.mxu0 0
        %1669 = vmatpush2.bf16.msra.mxu0 0
        %1670 = vmatprep.subr.bf16.mxu0 0
        %1671 = vmatpush2.bf16.msra.mxu0 0
        %1672 = vmatprep.subr.bf16.mxu0 0
        %1673 = vmatpush2.bf16.msra.mxu0 0
        %1674 = vmatprep.subr.bf16.mxu0 0
        %1675 = vmatpush2.bf16.msra.mxu0 0
        %1676 = vmatprep.subr.bf16.mxu0 0
        %1677 = vmatpush2.bf16.msra.mxu0 0
        %1678 = vmatprep.subr.bf16.mxu0 0
        %1679 = vmatpush2.bf16.msra.mxu0 0
        %1680 = vmatprep.subr.bf16.mxu0 0
        %1681 = vmatpush2.bf16.msra.mxu0 0
        %1682 = vmatprep.mubr.bf16.mxu0 0
        %1683 = vmatmul.mubr.bf16.gmra.mxu0 %v1639
        %v1684 = vpop.f32.mrf.mxu0
        %v1685 = vadd.f32 0.0, %v1684
        %v1686 = vpop.f32.mrf.mxu0
        %v1687 = vpop.f32.mrf.mxu0
        %v1688 = vadd.f32 0.0, %v1687
        %v1689 = vpop.f32.mrf.mxu0
        %1690 = vmatprep.mubr.bf16.mxu0 0
        %1691 = vmatmul.mubr.bf16.gmra.mxu0 %v1642
        %v1692 = vpop.f32.mrf.mxu0
        %v1693 = vadd.f32 0.0, %v1692
        %v1694 = vpop.f32.mrf.mxu0
        %v1695 = vpop.f32.mrf.mxu0
        %v1696 = vadd.f32 0.0, %v1695
        %v1697 = vpop.f32.mrf.mxu0
        %1698 = vmatprep.mubr.bf16.mxu0 0
        %1699 = vmatmul.mubr.bf16.gmra.mxu0 %v1645
        %v1700 = vpop.f32.mrf.mxu0
        %v1701 = vadd.f32 0.0, %v1700
        %v1702 = vpop.f32.mrf.mxu0
        %v1703 = vpop.f32.mrf.mxu0
        %v1704 = vadd.f32 0.0, %v1703
        %v1705 = vpop.f32.mrf.mxu0
        %1706 = vmatprep.mubr.bf16.mxu0 0
        %1707 = vmatmul.mubr.bf16.gmra.mxu0 %v1648
        %v1708 = vpop.f32.mrf.mxu0
        %v1709 = vadd.f32 0.0, %v1708
        %v1710 = vpop.f32.mrf.mxu0
        %v1711 = vpop.f32.mrf.mxu0
        %v1712 = vadd.f32 0.0, %v1711
        %v1713 = vpop.f32.mrf.mxu0
        %1714 = vdwg.mxu0
        %v1715 = vadd.f32 %v1585, %v1685
        %v1716 = vadd.f32 %v1586, %v1688
        %v1717 = vadd.f32 %v1587, %v1693
        %v1718 = vadd.f32 %v1588, %v1696
        %v1719 = vadd.f32 %v1589, %v1701
        %v1720 = vadd.f32 %v1590, %v1704
        %v1721 = vadd.f32 %v1591, %v1709
        %v1722 = vadd.f32 %v1592, %v1712
        %s1723 = sadd.s32 48, %s782
        %s1724 = smul.addr %s1723, 4
        %s1725 = scalar_lea.vmem %s3, %s1724
        %v1726 = vld [vmem:[%s1725] sm:$0xf]
        %v1727 = vld [vmem:[%s1725 + $0x4] sm:$0xf]
        %v1728 = vld [vmem:[%s1725 + $0x8] sm:$0xf]
        %v1729 = vld [vmem:[%s1725 + $0xc] sm:$0xf]
        %v1730 = vld [vmem:[%s1725 + $0x10] sm:$0xf]
        %v1731 = vld [vmem:[%s1725 + $0x14] sm:$0xf]
        %v1732 = vld [vmem:[%s1725 + $0x18] sm:$0xf]
        %v1733 = vld [vmem:[%s1725 + $0x1c] sm:$0xf]
        %v1735 = vunpack.c.l.b16 %v780
        %v1736 = vpack.c.b16 %v1735, %v1340
        %v1745 = vunpack.c.l.b16 %v1726
        %v1746 = vunpack.c.l.b16 %v1727
        %v1747 = vunpack.c.l.b16 %v1728
        %v1748 = vunpack.c.l.b16 %v1729
        %v1749 = vunpack.c.l.b16 %v1730
        %v1750 = vunpack.c.l.b16 %v1731
        %v1751 = vunpack.c.l.b16 %v1732
        %v1752 = vunpack.c.l.b16 %v1733
        %v1753 = vpack.c.b16 %v1746, %v1745
        %v1754 = vpack.c.b16 %v1748, %v1747
        %v1755 = vpack.c.b16 %v1750, %v1749
        %v1756 = vpack.c.b16 %v1752, %v1751
        %v1762 = vsel %vm565, %v1736, 0
        %1764 = vmatprep.subr.bf16.mxu0 0
        %1765 = vmatpush1.bf16.msra.mxu0 0
        %1766 = vmatprep.subr.bf16.mxu0 0
        %1767 = vmatpush1.bf16.msra.mxu0 0
        %1768 = vmatprep.subr.bf16.mxu0 0
        %1769 = vmatpush1.bf16.msra.mxu0 0
        %1770 = vmatprep.subr.bf16.mxu0 0
        %1771 = vmatpush1.bf16.msra.mxu0 0
        %1772 = vmatprep.subr.bf16.mxu0 0
        %1773 = vmatpush1.bf16.msra.mxu0 %v1756
        %1774 = vmatprep.subr.bf16.mxu0 0
        %1775 = vmatpush1.bf16.msra.mxu0 %v1755
        %1776 = vmatprep.subr.bf16.mxu0 0
        %1777 = vmatpush1.bf16.msra.mxu0 %v1754
        %1778 = vmatprep.subr.bf16.mxu0 0
        %1779 = vmatpush1.bf16.msra.mxu0 %v1753
        %1780 = vmatprep.subr.bf16.mxu0 0
        %1781 = vmatpush2.bf16.msra.mxu0 0
        %1782 = vmatprep.subr.bf16.mxu0 0
        %1783 = vmatpush2.bf16.msra.mxu0 0
        %1784 = vmatprep.subr.bf16.mxu0 0
        %1785 = vmatpush2.bf16.msra.mxu0 0
        %1786 = vmatprep.subr.bf16.mxu0 0
        %1787 = vmatpush2.bf16.msra.mxu0 0
        %1788 = vmatprep.subr.bf16.mxu0 0
        %1789 = vmatpush2.bf16.msra.mxu0 0
        %1790 = vmatprep.subr.bf16.mxu0 0
        %1791 = vmatpush2.bf16.msra.mxu0 0
        %1792 = vmatprep.subr.bf16.mxu0 0
        %1793 = vmatpush2.bf16.msra.mxu0 0
        %1794 = vmatprep.subr.bf16.mxu0 0
        %1795 = vmatpush2.bf16.msra.mxu0 0
        %1796 = vmatprep.mubr.bf16.mxu0 0
        %1797 = vmatmul.mubr.bf16.gmra.mxu0 %v1080
        %v1798 = vpop.f32.mrf.mxu0
        %v1799 = vadd.f32 0.0, %v1798
        %v1800 = vpop.f32.mrf.mxu0
        %v1801 = vpop.f32.mrf.mxu0
        %v1802 = vadd.f32 0.0, %v1801
        %v1803 = vpop.f32.mrf.mxu0
        %1804 = vmatprep.mubr.bf16.mxu0 0
        %1805 = vmatmul.mubr.bf16.gmra.mxu0 %v1083
        %v1806 = vpop.f32.mrf.mxu0
        %v1807 = vadd.f32 0.0, %v1806
        %v1808 = vpop.f32.mrf.mxu0
        %v1809 = vpop.f32.mrf.mxu0
        %v1810 = vadd.f32 0.0, %v1809
        %v1811 = vpop.f32.mrf.mxu0
        %1812 = vmatprep.mubr.bf16.mxu0 0
        %1813 = vmatmul.mubr.bf16.gmra.mxu0 %v1086
        %v1814 = vpop.f32.mrf.mxu0
        %v1815 = vadd.f32 0.0, %v1814
        %v1816 = vpop.f32.mrf.mxu0
        %v1817 = vpop.f32.mrf.mxu0
        %v1818 = vadd.f32 0.0, %v1817
        %v1819 = vpop.f32.mrf.mxu0
        %1820 = vmatprep.mubr.bf16.mxu0 0
        %1821 = vmatmul.mubr.bf16.gmra.mxu0 %v1762
        %v1822 = vpop.f32.mrf.mxu0
        %v1823 = vadd.f32 0.0, %v1822
        %v1824 = vpop.f32.mrf.mxu0
        %v1825 = vpop.f32.mrf.mxu0
        %v1826 = vadd.f32 0.0, %v1825
        %v1827 = vpop.f32.mrf.mxu0
        %1828 = vdwg.mxu0
        %v1829 = vadd.f32 %v1715, %v1799
        %v1830 = vadd.f32 %v1716, %v1802
        %v1831 = vadd.f32 %v1717, %v1807
        %v1832 = vadd.f32 %v1718, %v1810
        %v1833 = vadd.f32 %v1719, %v1815
        %v1834 = vadd.f32 %v1720, %v1818
        %v1835 = vadd.f32 %v1721, %v1823
        %v1836 = vadd.f32 %v1722, %v1826
        %v1838 = vshrl.u32 %v780, 16
        %v1840 = vrot.slane %v1838, 4
        %v1841 = vshll.u32 %v780, 16
        %v1843 = vrot.slane %v1841, 5
        %v1844 = vor.u32 %v1840, %v1843
        %v1845 = vrot.slane %v1844, 4
        %v1847 = vshll.u32 %v781, 16
        %v1849 = vrot.slane %v1847, 5
        %v1850 = vsel %vm795, %v1845, %v1849
        %s1851 = sadd.s32 56, %s782
        %s1852 = smul.addr %s1851, 4
        %s1853 = scalar_lea.vmem %s3, %s1852
        %v1854 = vld [vmem:[%s1853] sm:$0xf]
        %v1855 = vld [vmem:[%s1853 + $0x4] sm:$0xf]
        %v1856 = vld [vmem:[%s1853 + $0x8] sm:$0xf]
        %v1857 = vld [vmem:[%s1853 + $0xc] sm:$0xf]
        %v1858 = vld [vmem:[%s1853 + $0x10] sm:$0xf]
        %v1859 = vld [vmem:[%s1853 + $0x14] sm:$0xf]
        %v1860 = vld [vmem:[%s1853 + $0x18] sm:$0xf]
        %v1861 = vld [vmem:[%s1853 + $0x1c] sm:$0xf]
        %v1862 = vunpack.c.l.b16 %v1850
        %v1863 = vpack.c.b16 %v1862, %v1479
        %v1872 = vunpack.c.l.b16 %v1854
        %v1873 = vunpack.c.l.b16 %v1855
        %v1874 = vunpack.c.l.b16 %v1856
        %v1875 = vunpack.c.l.b16 %v1857
        %v1876 = vunpack.c.l.b16 %v1858
        %v1877 = vunpack.c.l.b16 %v1859
        %v1878 = vunpack.c.l.b16 %v1860
        %v1879 = vunpack.c.l.b16 %v1861
        %v1880 = vpack.c.b16 %v1873, %v1872
        %v1881 = vpack.c.b16 %v1875, %v1874
        %v1882 = vpack.c.b16 %v1877, %v1876
        %v1883 = vpack.c.b16 %v1879, %v1878
        %v1889 = vsel %vm565, %v1863, 0
        %1891 = vmatprep.subr.bf16.mxu0 0
        %1892 = vmatpush1.bf16.msra.mxu0 0
        %1893 = vmatprep.subr.bf16.mxu0 0
        %1894 = vmatpush1.bf16.msra.mxu0 0
        %1895 = vmatprep.subr.bf16.mxu0 0
        %1896 = vmatpush1.bf16.msra.mxu0 0
        %1897 = vmatprep.subr.bf16.mxu0 0
        %1898 = vmatpush1.bf16.msra.mxu0 0
        %1899 = vmatprep.subr.bf16.mxu0 0
        %1900 = vmatpush1.bf16.msra.mxu0 %v1883
        %1901 = vmatprep.subr.bf16.mxu0 0
        %1902 = vmatpush1.bf16.msra.mxu0 %v1882
        %1903 = vmatprep.subr.bf16.mxu0 0
        %1904 = vmatpush1.bf16.msra.mxu0 %v1881
        %1905 = vmatprep.subr.bf16.mxu0 0
        %1906 = vmatpush1.bf16.msra.mxu0 %v1880
        %1907 = vmatprep.subr.bf16.mxu0 0
        %1908 = vmatpush2.bf16.msra.mxu0 0
        %1909 = vmatprep.subr.bf16.mxu0 0
        %1910 = vmatpush2.bf16.msra.mxu0 0
        %1911 = vmatprep.subr.bf16.mxu0 0
        %1912 = vmatpush2.bf16.msra.mxu0 0
        %1913 = vmatprep.subr.bf16.mxu0 0
        %1914 = vmatpush2.bf16.msra.mxu0 0
        %1915 = vmatprep.subr.bf16.mxu0 0
        %1916 = vmatpush2.bf16.msra.mxu0 0
        %1917 = vmatprep.subr.bf16.mxu0 0
        %1918 = vmatpush2.bf16.msra.mxu0 0
        %1919 = vmatprep.subr.bf16.mxu0 0
        %1920 = vmatpush2.bf16.msra.mxu0 0
        %1921 = vmatprep.subr.bf16.mxu0 0
        %1922 = vmatpush2.bf16.msra.mxu0 0
        %1923 = vmatprep.mubr.bf16.mxu0 0
        %1924 = vmatmul.mubr.bf16.gmra.mxu0 %v959
        %v1925 = vpop.f32.mrf.mxu0
        %v1926 = vadd.f32 0.0, %v1925
        %v1927 = vpop.f32.mrf.mxu0
        %v1928 = vpop.f32.mrf.mxu0
        %v1929 = vadd.f32 0.0, %v1928
        %v1930 = vpop.f32.mrf.mxu0
        %1931 = vmatprep.mubr.bf16.mxu0 0
        %1932 = vmatmul.mubr.bf16.gmra.mxu0 %v962
        %v1933 = vpop.f32.mrf.mxu0
        %v1934 = vadd.f32 0.0, %v1933
        %v1935 = vpop.f32.mrf.mxu0
        %v1936 = vpop.f32.mrf.mxu0
        %v1937 = vadd.f32 0.0, %v1936
        %v1938 = vpop.f32.mrf.mxu0
        %1939 = vmatprep.mubr.bf16.mxu0 0
        %1940 = vmatmul.mubr.bf16.gmra.mxu0 %v965
        %v1941 = vpop.f32.mrf.mxu0
        %v1942 = vadd.f32 0.0, %v1941
        %v1943 = vpop.f32.mrf.mxu0
        %v1944 = vpop.f32.mrf.mxu0
        %v1945 = vadd.f32 0.0, %v1944
        %v1946 = vpop.f32.mrf.mxu0
        %1947 = vmatprep.mubr.bf16.mxu0 0
        %1948 = vmatmul.mubr.bf16.gmra.mxu0 %v1889
        %v1949 = vpop.f32.mrf.mxu0
        %v1950 = vadd.f32 0.0, %v1949
        %v1951 = vpop.f32.mrf.mxu0
        %v1952 = vpop.f32.mrf.mxu0
        %v1953 = vadd.f32 0.0, %v1952
        %v1954 = vpop.f32.mrf.mxu0
        %1955 = vdwg.mxu0
        %v1956 = vadd.f32 %v1829, %v1926
        %v1957 = vadd.f32 %v1830, %v1929
        %v1958 = vadd.f32 %v1831, %v1934
        %v1959 = vadd.f32 %v1832, %v1937
        %v1960 = vadd.f32 %v1833, %v1942
        %v1961 = vadd.f32 %v1834, %v1945
        %v1962 = vadd.f32 %v1835, %v1950
        %v1963 = vadd.f32 %v1836, %v1953
        %v1965 = vrot.slane %v780, 5
        %v1966 = vrot.slane %v1965, 4
        %v1967 = vrot.slane %v781, 5
        %v1968 = vsel %vm1163, %v1966, %v1967
        %s1969 = sadd.s32 64, %s782
        %s1970 = smul.addr %s1969, 4
        %s1971 = scalar_lea.vmem %s3, %s1970
        %v1972 = vld [vmem:[%s1971] sm:$0xf]
        %v1973 = vld [vmem:[%s1971 + $0x4] sm:$0xf]
        %v1974 = vld [vmem:[%s1971 + $0x8] sm:$0xf]
        %v1975 = vld [vmem:[%s1971 + $0xc] sm:$0xf]
        %v1976 = vld [vmem:[%s1971 + $0x10] sm:$0xf]
        %v1977 = vld [vmem:[%s1971 + $0x14] sm:$0xf]
        %v1978 = vld [vmem:[%s1971 + $0x18] sm:$0xf]
        %v1979 = vld [vmem:[%s1971 + $0x1c] sm:$0xf]
        %v1980 = vunpack.c.l.b16 %v1968
        %v1981 = vpack.c.b16 %v1980, %v1609
        %v1990 = vunpack.c.l.b16 %v1972
        %v1991 = vunpack.c.l.b16 %v1973
        %v1992 = vunpack.c.l.b16 %v1974
        %v1993 = vunpack.c.l.b16 %v1975
        %v1994 = vunpack.c.l.b16 %v1976
        %v1995 = vunpack.c.l.b16 %v1977
        %v1996 = vunpack.c.l.b16 %v1978
        %v1997 = vunpack.c.l.b16 %v1979
        %v1998 = vpack.c.b16 %v1991, %v1990
        %v1999 = vpack.c.b16 %v1993, %v1992
        %v2000 = vpack.c.b16 %v1995, %v1994
        %v2001 = vpack.c.b16 %v1997, %v1996
        %v2007 = vsel %vm565, %v1981, 0
        %2009 = vmatprep.subr.bf16.mxu0 0
        %2010 = vmatpush1.bf16.msra.mxu0 0
        %2011 = vmatprep.subr.bf16.mxu0 0
        %2012 = vmatpush1.bf16.msra.mxu0 0
        %2013 = vmatprep.subr.bf16.mxu0 0
        %2014 = vmatpush1.bf16.msra.mxu0 0
        %2015 = vmatprep.subr.bf16.mxu0 0
        %2016 = vmatpush1.bf16.msra.mxu0 0
        %2017 = vmatprep.subr.bf16.mxu0 0
        %2018 = vmatpush1.bf16.msra.mxu0 %v2001
        %2019 = vmatprep.subr.bf16.mxu0 0
        %2020 = vmatpush1.bf16.msra.mxu0 %v2000
        %2021 = vmatprep.subr.bf16.mxu0 0
        %2022 = vmatpush1.bf16.msra.mxu0 %v1999
        %2023 = vmatprep.subr.bf16.mxu0 0
        %2024 = vmatpush1.bf16.msra.mxu0 %v1998
        %2025 = vmatprep.subr.bf16.mxu0 0
        %2026 = vmatpush2.bf16.msra.mxu0 0
        %2027 = vmatprep.subr.bf16.mxu0 0
        %2028 = vmatpush2.bf16.msra.mxu0 0
        %2029 = vmatprep.subr.bf16.mxu0 0
        %2030 = vmatpush2.bf16.msra.mxu0 0
        %2031 = vmatprep.subr.bf16.mxu0 0
        %2032 = vmatpush2.bf16.msra.mxu0 0
        %2033 = vmatprep.subr.bf16.mxu0 0
        %2034 = vmatpush2.bf16.msra.mxu0 0
        %2035 = vmatprep.subr.bf16.mxu0 0
        %2036 = vmatpush2.bf16.msra.mxu0 0
        %2037 = vmatprep.subr.bf16.mxu0 0
        %2038 = vmatpush2.bf16.msra.mxu0 0
        %2039 = vmatprep.subr.bf16.mxu0 0
        %2040 = vmatpush2.bf16.msra.mxu0 0
        %2041 = vmatprep.mubr.bf16.mxu0 0
        %2042 = vmatmul.mubr.bf16.gmra.mxu0 %v1247
        %v2043 = vpop.f32.mrf.mxu0
        %v2044 = vadd.f32 0.0, %v2043
        %v2045 = vpop.f32.mrf.mxu0
        %v2046 = vpop.f32.mrf.mxu0
        %v2047 = vadd.f32 0.0, %v2046
        %v2048 = vpop.f32.mrf.mxu0
        %2049 = vmatprep.mubr.bf16.mxu0 0
        %2050 = vmatmul.mubr.bf16.gmra.mxu0 %v1250
        %v2051 = vpop.f32.mrf.mxu0
        %v2052 = vadd.f32 0.0, %v2051
        %v2053 = vpop.f32.mrf.mxu0
        %v2054 = vpop.f32.mrf.mxu0
        %v2055 = vadd.f32 0.0, %v2054
        %v2056 = vpop.f32.mrf.mxu0
        %2057 = vmatprep.mubr.bf16.mxu0 0
        %2058 = vmatmul.mubr.bf16.gmra.mxu0 %v1253
        %v2059 = vpop.f32.mrf.mxu0
        %v2060 = vadd.f32 0.0, %v2059
        %v2061 = vpop.f32.mrf.mxu0
        %v2062 = vpop.f32.mrf.mxu0
        %v2063 = vadd.f32 0.0, %v2062
        %v2064 = vpop.f32.mrf.mxu0
        %2065 = vmatprep.mubr.bf16.mxu0 0
        %2066 = vmatmul.mubr.bf16.gmra.mxu0 %v2007
        %v2067 = vpop.f32.mrf.mxu0
        %v2068 = vadd.f32 0.0, %v2067
        %v2069 = vpop.f32.mrf.mxu0
        %v2070 = vpop.f32.mrf.mxu0
        %v2071 = vadd.f32 0.0, %v2070
        %v2072 = vpop.f32.mrf.mxu0
        %2073 = vdwg.mxu0
        %v2074 = vadd.f32 %v1956, %v2044
        %v2075 = vadd.f32 %v1957, %v2047
        %v2076 = vadd.f32 %v1958, %v2052
        %v2077 = vadd.f32 %v1959, %v2055
        %v2078 = vadd.f32 %v1960, %v2060
        %v2079 = vadd.f32 %v1961, %v2063
        %v2080 = vadd.f32 %v1962, %v2068
        %v2081 = vadd.f32 %v1963, %v2071
        %v2083 = vlaneseq
        %v2084 = vshrl.u32 %v2083, 7
        %v2085 = vsub.s32 0, %v2084
        %v2086 = vrot.slane %v761, %v2085
        %v2088 = vadd.f32 %v2074, %v2086
        %v2089 = vadd.f32 %v2075, %v2086
        %v2090 = vadd.f32 %v2076, %v2086
        %v2091 = vadd.f32 %v2077, %v2086
        %v2092 = vadd.f32 %v2078, %v2086
        %v2093 = vadd.f32 %v2079, %v2086
        %v2094 = vadd.f32 %v2080, %v2086
        %v2095 = vadd.f32 %v2081, %v2086
        %v2096 = vmax.f32 %v2088, 0.0
        %v2097 = vmax.f32 %v2089, 0.0
        %v2098 = vmax.f32 %v2090, 0.0
        %v2099 = vmax.f32 %v2091, 0.0
        %v2100 = vmax.f32 %v2092, 0.0
        %v2101 = vmax.f32 %v2093, 0.0
        %v2102 = vmax.f32 %v2094, 0.0
        %v2103 = vmax.f32 %v2095, 0.0
        %v2104 = vpack.c.bf16 %v2096, %v2096
        %v2105 = vpack.c.bf16 %v2097, %v2097
        %v2106 = vpack.c.bf16 %v2098, %v2098
        %v2107 = vpack.c.bf16 %v2099, %v2099
        %v2108 = vpack.c.bf16 %v2100, %v2100
        %v2109 = vpack.c.bf16 %v2101, %v2101
        %v2110 = vpack.c.bf16 %v2102, %v2102
        %v2111 = vpack.c.bf16 %v2103, %v2103
        %v2120 = vunpack.c.l.b16 %v2104
        %v2121 = vunpack.c.l.b16 %v2105
        %v2122 = vunpack.c.l.b16 %v2106
        %v2123 = vunpack.c.l.b16 %v2107
        %v2124 = vunpack.c.l.b16 %v2108
        %v2125 = vunpack.c.l.b16 %v2109
        %v2126 = vunpack.c.l.b16 %v2110
        %v2127 = vunpack.c.l.b16 %v2111
        %v2128 = vpack.c.b16 %v2120, %v2120
        %v2129 = vpack.c.b16 %v2121, %v2121
        %v2130 = vpack.c.b16 %v2122, %v2122
        %v2131 = vpack.c.b16 %v2123, %v2123
        %v2132 = vpack.c.b16 %v2124, %v2124
        %v2133 = vpack.c.b16 %v2125, %v2125
        %v2134 = vpack.c.b16 %v2126, %v2126
        %v2135 = vpack.c.b16 %v2127, %v2127
        %v2137 = vshrl.u32 %v2128, 16
        %v2139 = vrot.slane %v2137, 7
        %v2140 = vshll.u32 %v2128, 16
        %v2142 = vor.u32 %v2139, %v2140
        %v2143 = vrot.slane %v2139, 4
        %v2145 = vshrl.u32 %v2129, 16
        %v2147 = vrot.slane %v2145, 7
        %v2148 = vshll.u32 %v2129, 16
        %v2150 = vor.u32 %v2147, %v2148
        %v2151 = vrot.slane %v2147, 4
        %v2153 = vshrl.u32 %v2130, 16
        %v2155 = vrot.slane %v2153, 7
        %v2156 = vshll.u32 %v2130, 16
        %v2158 = vor.u32 %v2155, %v2156
        %v2159 = vrot.slane %v2155, 4
        %v2161 = vshrl.u32 %v2131, 16
        %v2163 = vrot.slane %v2161, 7
        %v2164 = vshll.u32 %v2131, 16
        %v2166 = vor.u32 %v2163, %v2164
        %v2167 = vrot.slane %v2163, 4
        %v2169 = vshrl.u32 %v2132, 16
        %v2171 = vrot.slane %v2169, 7
        %v2172 = vshll.u32 %v2132, 16
        %v2174 = vor.u32 %v2171, %v2172
        %v2175 = vrot.slane %v2171, 4
        %v2177 = vshrl.u32 %v2133, 16
        %v2179 = vrot.slane %v2177, 7
        %v2180 = vshll.u32 %v2133, 16
        %v2182 = vor.u32 %v2179, %v2180
        %v2183 = vrot.slane %v2179, 4
        %v2185 = vshrl.u32 %v2134, 16
        %v2187 = vrot.slane %v2185, 7
        %v2188 = vshll.u32 %v2134, 16
        %v2190 = vor.u32 %v2187, %v2188
        %v2191 = vrot.slane %v2187, 4
        %v2193 = vshrl.u32 %v2135, 16
        %v2195 = vrot.slane %v2193, 7
        %v2196 = vshll.u32 %v2135, 16
        %v2198 = vor.u32 %v2195, %v2196
        %v2199 = vrot.slane %v2195, 4
        %v2216 = vld [vmem:[%s708] sm:$0xf]
        %v2217 = vsel %vm710, %v2142, %v2216
        %2218 = vst [vmem:[%s708] sm:$0xf] %v2217
        %v2219 = vld [vmem:[%s708 + $0x4] sm:$0x1]
        %v2220 = vsel %vm343, %v2143, %v2219
        %2221 = vst [vmem:[%s708 + $0x4] sm:$0x1] %v2220
        %v2222 = vld [vmem:[%s708 + $0x8] sm:$0xf]
        %v2223 = vsel %vm710, %v2150, %v2222
        %2224 = vst [vmem:[%s708 + $0x8] sm:$0xf] %v2223
        %v2225 = vld [vmem:[%s708 + $0xc] sm:$0x1]
        %v2226 = vsel %vm343, %v2151, %v2225
        %2227 = vst [vmem:[%s708 + $0xc] sm:$0x1] %v2226
        %v2228 = vld [vmem:[%s708 + $0x10] sm:$0xf]
        %v2229 = vsel %vm710, %v2158, %v2228
        %2230 = vst [vmem:[%s708 + $0x10] sm:$0xf] %v2229
        %v2231 = vld [vmem:[%s708 + $0x14] sm:$0x1]
        %v2232 = vsel %vm343, %v2159, %v2231
        %2233 = vst [vmem:[%s708 + $0x14] sm:$0x1] %v2232
        %v2234 = vld [vmem:[%s708 + $0x18] sm:$0xf]
        %v2235 = vsel %vm710, %v2166, %v2234
        %2236 = vst [vmem:[%s708 + $0x18] sm:$0xf] %v2235
        %v2237 = vld [vmem:[%s708 + $0x1c] sm:$0x1]
        %v2238 = vsel %vm343, %v2167, %v2237
        %2239 = vst [vmem:[%s708 + $0x1c] sm:$0x1] %v2238
        %v2240 = vld [vmem:[%s708 + $0x20] sm:$0xf]
        %v2241 = vsel %vm710, %v2174, %v2240
        %2242 = vst [vmem:[%s708 + $0x20] sm:$0xf] %v2241
        %v2243 = vld [vmem:[%s708 + $0x24] sm:$0x1]
        %v2244 = vsel %vm343, %v2175, %v2243
        %2245 = vst [vmem:[%s708 + $0x24] sm:$0x1] %v2244
        %v2246 = vld [vmem:[%s708 + $0x28] sm:$0xf]
        %v2247 = vsel %vm710, %v2182, %v2246
        %2248 = vst [vmem:[%s708 + $0x28] sm:$0xf] %v2247
        %v2249 = vld [vmem:[%s708 + $0x2c] sm:$0x1]
        %v2250 = vsel %vm343, %v2183, %v2249
        %2251 = vst [vmem:[%s708 + $0x2c] sm:$0x1] %v2250
        %v2252 = vld [vmem:[%s708 + $0x30] sm:$0xf]
        %v2253 = vsel %vm710, %v2190, %v2252
        %2254 = vst [vmem:[%s708 + $0x30] sm:$0xf] %v2253
        %v2255 = vld [vmem:[%s708 + $0x34] sm:$0x1]
        %v2256 = vsel %vm343, %v2191, %v2255
        %2257 = vst [vmem:[%s708 + $0x34] sm:$0x1] %v2256
        %v2258 = vld [vmem:[%s708 + $0x38] sm:$0xf]
        %v2259 = vsel %vm710, %v2198, %v2258
        %2260 = vst [vmem:[%s708 + $0x38] sm:$0xf] %v2259
        %v2261 = vld [vmem:[%s708 + $0x3c] sm:$0x1]
        %v2262 = vsel %vm343, %v2199, %v2261
        %2263 = vst [vmem:[%s708 + $0x3c] sm:$0x1] %v2262
        %s2264 = sadd.s32 1, %s759
        %s2265 = scalar_lea.vmem %s4, %s2264
        %v2266 = vld [vmem:[%s2265] sm:$0x1]
        %v2267 = vld [vmem:[#allocation2] sm:$0xf]
        %v2268 = vld [vmem:[#allocation2 + $0x4] sm:$0x1]
        %v2269 = vld [vmem:[#allocation2 + $0x8] sm:$0xf]
        %v2270 = vld [vmem:[#allocation2 + $0xc] sm:$0x1]
        %v2271 = vld [vmem:[#allocation2 + $0x10] sm:$0xf]
        %v2272 = vld [vmem:[#allocation2 + $0x14] sm:$0x1]
        %v2273 = vld [vmem:[#allocation2 + $0x18] sm:$0xf]
        %v2274 = vld [vmem:[#allocation2 + $0x1c] sm:$0x1]
        %v2275 = vld [vmem:[#allocation2 + $0x20] sm:$0xf]
        %v2276 = vld [vmem:[#allocation2 + $0x24] sm:$0x1]
        %v2277 = vld [vmem:[#allocation2 + $0x28] sm:$0xf]
        %v2278 = vld [vmem:[#allocation2 + $0x2c] sm:$0x1]
        %v2279 = vld [vmem:[#allocation2 + $0x30] sm:$0xf]
        %v2280 = vld [vmem:[#allocation2 + $0x34] sm:$0x1]
        %v2281 = vld [vmem:[#allocation2 + $0x38] sm:$0xf]
        %v2282 = vld [vmem:[#allocation2 + $0x3c] sm:$0x1]
        %v2283 = vld [vmem:[#allocation2 + $0x40] sm:$0xf]
        %v2284 = vld [vmem:[#allocation2 + $0x44] sm:$0x1]
        %v2285 = vld [vmem:[#allocation2 + $0x48] sm:$0xf]
        %v2286 = vld [vmem:[#allocation2 + $0x4c] sm:$0x1]
        %s2287 = sadd.s32 72, %s782
        %s2288 = smul.addr %s2287, 4
        %s2289 = scalar_lea.vmem %s3, %s2288
        %v2290 = vld [vmem:[%s2289] sm:$0xf]
        %v2291 = vld [vmem:[%s2289 + $0x4] sm:$0xf]
        %v2292 = vld [vmem:[%s2289 + $0x8] sm:$0xf]
        %v2293 = vld [vmem:[%s2289 + $0xc] sm:$0xf]
        %v2294 = vld [vmem:[%s2289 + $0x10] sm:$0xf]
        %v2295 = vld [vmem:[%s2289 + $0x14] sm:$0xf]
        %v2296 = vld [vmem:[%s2289 + $0x18] sm:$0xf]
        %v2297 = vld [vmem:[%s2289 + $0x1c] sm:$0xf]
        %v2299 = vshrl.u32 %v2267, 16
        %v2301 = vrot.slane %v2299, 4
        %v2302 = vshll.u32 %v2267, 16
        %v2304 = vrot.slane %v2302, 5
        %v2305 = vor.u32 %v2301, %v2304
        %v2306 = vrot.slane %v2305, 4
        %v2308 = vshll.u32 %v2268, 16
        %v2310 = vrot.slane %v2308, 5
        %v2311 = vsel %vm795, %v2306, %v2310
        %v2313 = vshrl.u32 %v2269, 16
        %v2315 = vrot.slane %v2313, 4
        %v2316 = vshll.u32 %v2269, 16
        %v2318 = vrot.slane %v2316, 5
        %v2319 = vor.u32 %v2315, %v2318
        %v2320 = vrot.slane %v2319, 4
        %v2322 = vshll.u32 %v2270, 16
        %v2324 = vrot.slane %v2322, 5
        %v2325 = vsel %vm795, %v2320, %v2324
        %v2327 = vshrl.u32 %v2271, 16
        %v2329 = vrot.slane %v2327, 4
        %v2330 = vshll.u32 %v2271, 16
        %v2332 = vrot.slane %v2330, 5
        %v2333 = vor.u32 %v2329, %v2332
        %v2334 = vrot.slane %v2333, 4
        %v2336 = vshll.u32 %v2272, 16
        %v2338 = vrot.slane %v2336, 5
        %v2339 = vsel %vm795, %v2334, %v2338
        %v2341 = vshrl.u32 %v2273, 16
        %v2343 = vrot.slane %v2341, 4
        %v2344 = vshll.u32 %v2273, 16
        %v2346 = vrot.slane %v2344, 5
        %v2347 = vor.u32 %v2343, %v2346
        %v2348 = vrot.slane %v2347, 4
        %v2350 = vshll.u32 %v2274, 16
        %v2352 = vrot.slane %v2350, 5
        %v2353 = vsel %vm795, %v2348, %v2352
        %v2355 = vshrl.u32 %v2275, 16
        %v2357 = vrot.slane %v2355, 4
        %v2358 = vshll.u32 %v2275, 16
        %v2360 = vrot.slane %v2358, 5
        %v2361 = vor.u32 %v2357, %v2360
        %v2362 = vrot.slane %v2361, 4
        %v2364 = vshll.u32 %v2276, 16
        %v2366 = vrot.slane %v2364, 5
        %v2367 = vsel %vm795, %v2362, %v2366
        %v2369 = vshrl.u32 %v2277, 16
        %v2371 = vrot.slane %v2369, 4
        %v2372 = vshll.u32 %v2277, 16
        %v2374 = vrot.slane %v2372, 5
        %v2375 = vor.u32 %v2371, %v2374
        %v2376 = vrot.slane %v2375, 4
        %v2378 = vshll.u32 %v2278, 16
        %v2380 = vrot.slane %v2378, 5
        %v2381 = vsel %vm795, %v2376, %v2380
        %v2383 = vshrl.u32 %v2279, 16
        %v2385 = vrot.slane %v2383, 4
        %v2386 = vshll.u32 %v2279, 16
        %v2388 = vrot.slane %v2386, 5
        %v2389 = vor.u32 %v2385, %v2388
        %v2390 = vrot.slane %v2389, 4
        %v2392 = vshll.u32 %v2280, 16
        %v2394 = vrot.slane %v2392, 5
        %v2395 = vsel %vm795, %v2390, %v2394
        %v2397 = vshrl.u32 %v2281, 16
        %v2399 = vrot.slane %v2397, 4
        %v2400 = vshll.u32 %v2281, 16
        %v2402 = vrot.slane %v2400, 5
        %v2403 = vor.u32 %v2399, %v2402
        %v2404 = vrot.slane %v2403, 4
        %v2406 = vshll.u32 %v2282, 16
        %v2408 = vrot.slane %v2406, 5
        %v2409 = vsel %vm795, %v2404, %v2408
        %s2410 = sadd.s32 80, %s782
        %s2411 = smul.addr %s2410, 4
        %s2412 = scalar_lea.vmem %s3, %s2411
        %v2413 = vld [vmem:[%s2412] sm:$0xf]
        %v2414 = vld [vmem:[%s2412 + $0x4] sm:$0xf]
        %v2415 = vld [vmem:[%s2412 + $0x8] sm:$0xf]
        %v2416 = vld [vmem:[%s2412 + $0xc] sm:$0xf]
        %v2417 = vld [vmem:[%s2412 + $0x10] sm:$0xf]
        %v2418 = vld [vmem:[%s2412 + $0x14] sm:$0xf]
        %v2419 = vld [vmem:[%s2412 + $0x18] sm:$0xf]
        %v2420 = vld [vmem:[%s2412 + $0x1c] sm:$0xf]
        %v2421 = vunpack.c.l.b16 %v2311
        %v2422 = vunpack.c.l.b16 %v2325
        %v2423 = vunpack.c.l.b16 %v2339
        %v2424 = vunpack.c.l.b16 %v2353
        %v2425 = vunpack.c.l.b16 %v2367
        %v2426 = vunpack.c.l.b16 %v2381
        %v2427 = vunpack.c.l.b16 %v2395
        %v2428 = vunpack.c.l.b16 %v2409
        %v2429 = vpack.c.b16 %v2422, %v2421
        %v2430 = vpack.c.b16 %v2424, %v2423
        %v2431 = vpack.c.b16 %v2426, %v2425
        %v2432 = vpack.c.b16 %v2428, %v2427
        %v2441 = vunpack.c.l.b16 %v2413
        %v2442 = vunpack.c.l.b16 %v2414
        %v2443 = vunpack.c.l.b16 %v2415
        %v2444 = vunpack.c.l.b16 %v2416
        %v2445 = vunpack.c.l.b16 %v2417
        %v2446 = vunpack.c.l.b16 %v2418
        %v2447 = vunpack.c.l.b16 %v2419
        %v2448 = vunpack.c.l.b16 %v2420
        %v2449 = vpack.c.b16 %v2442, %v2441
        %v2450 = vpack.c.b16 %v2444, %v2443
        %v2451 = vpack.c.b16 %v2446, %v2445
        %v2452 = vpack.c.b16 %v2448, %v2447
        %v2458 = vsel %vm565, %v2429, 0
        %v2461 = vsel %vm565, %v2430, 0
        %v2464 = vsel %vm565, %v2431, 0
        %v2467 = vsel %vm565, %v2432, 0
        %2469 = vmatprep.subr.bf16.mxu0 0
        %2470 = vmatpush1.bf16.msra.mxu0 0
        %2471 = vmatprep.subr.bf16.mxu0 0
        %2472 = vmatpush1.bf16.msra.mxu0 0
        %2473 = vmatprep.subr.bf16.mxu0 0
        %2474 = vmatpush1.bf16.msra.mxu0 0
        %2475 = vmatprep.subr.bf16.mxu0 0
        %2476 = vmatpush1.bf16.msra.mxu0 0
        %2477 = vmatprep.subr.bf16.mxu0 0
        %2478 = vmatpush1.bf16.msra.mxu0 %v2452
        %2479 = vmatprep.subr.bf16.mxu0 0
        %2480 = vmatpush1.bf16.msra.mxu0 %v2451
        %2481 = vmatprep.subr.bf16.mxu0 0
        %2482 = vmatpush1.bf16.msra.mxu0 %v2450
        %2483 = vmatprep.subr.bf16.mxu0 0
        %2484 = vmatpush1.bf16.msra.mxu0 %v2449
        %2485 = vmatprep.subr.bf16.mxu0 0
        %2486 = vmatpush2.bf16.msra.mxu0 0
        %2487 = vmatprep.subr.bf16.mxu0 0
        %2488 = vmatpush2.bf16.msra.mxu0 0
        %2489 = vmatprep.subr.bf16.mxu0 0
        %2490 = vmatpush2.bf16.msra.mxu0 0
        %2491 = vmatprep.subr.bf16.mxu0 0
        %2492 = vmatpush2.bf16.msra.mxu0 0
        %2493 = vmatprep.subr.bf16.mxu0 0
        %2494 = vmatpush2.bf16.msra.mxu0 0
        %2495 = vmatprep.subr.bf16.mxu0 0
        %2496 = vmatpush2.bf16.msra.mxu0 0
        %2497 = vmatprep.subr.bf16.mxu0 0
        %2498 = vmatpush2.bf16.msra.mxu0 0
        %2499 = vmatprep.subr.bf16.mxu0 0
        %2500 = vmatpush2.bf16.msra.mxu0 0
        %2501 = vmatprep.mubr.bf16.mxu0 0
        %2502 = vmatmul.mubr.bf16.gmra.mxu0 %v2458
        %v2503 = vpop.f32.mrf.mxu0
        %v2504 = vadd.f32 0.0, %v2503
        %v2505 = vpop.f32.mrf.mxu0
        %v2506 = vpop.f32.mrf.mxu0
        %v2507 = vadd.f32 0.0, %v2506
        %v2508 = vpop.f32.mrf.mxu0
        %2509 = vmatprep.mubr.bf16.mxu0 0
        %2510 = vmatmul.mubr.bf16.gmra.mxu0 %v2461
        %v2511 = vpop.f32.mrf.mxu0
        %v2512 = vadd.f32 0.0, %v2511
        %v2513 = vpop.f32.mrf.mxu0
        %v2514 = vpop.f32.mrf.mxu0
        %v2515 = vadd.f32 0.0, %v2514
        %v2516 = vpop.f32.mrf.mxu0
        %2517 = vmatprep.mubr.bf16.mxu0 0
        %2518 = vmatmul.mubr.bf16.gmra.mxu0 %v2464
        %v2519 = vpop.f32.mrf.mxu0
        %v2520 = vadd.f32 0.0, %v2519
        %v2521 = vpop.f32.mrf.mxu0
        %v2522 = vpop.f32.mrf.mxu0
        %v2523 = vadd.f32 0.0, %v2522
        %v2524 = vpop.f32.mrf.mxu0
        %2525 = vmatprep.mubr.bf16.mxu0 0
        %2526 = vmatmul.mubr.bf16.gmra.mxu0 %v2467
        %v2527 = vpop.f32.mrf.mxu0
        %v2528 = vadd.f32 0.0, %v2527
        %v2529 = vpop.f32.mrf.mxu0
        %v2530 = vpop.f32.mrf.mxu0
        %v2531 = vadd.f32 0.0, %v2530
        %v2532 = vpop.f32.mrf.mxu0
        %2533 = vdwg.mxu0
        %v2542 = vunpack.c.l.b16 %v2267
        %v2543 = vunpack.c.l.b16 %v2269
        %v2544 = vunpack.c.l.b16 %v2271
        %v2545 = vunpack.c.l.b16 %v2273
        %v2546 = vunpack.c.l.b16 %v2275
        %v2547 = vunpack.c.l.b16 %v2277
        %v2548 = vunpack.c.l.b16 %v2279
        %v2549 = vunpack.c.l.b16 %v2281
        %v2550 = vpack.c.b16 %v2543, %v2542
        %v2551 = vpack.c.b16 %v2545, %v2544
        %v2552 = vpack.c.b16 %v2547, %v2546
        %v2553 = vpack.c.b16 %v2549, %v2548
        %v2562 = vunpack.c.l.b16 %v2290
        %v2563 = vunpack.c.l.b16 %v2291
        %v2564 = vunpack.c.l.b16 %v2292
        %v2565 = vunpack.c.l.b16 %v2293
        %v2566 = vunpack.c.l.b16 %v2294
        %v2567 = vunpack.c.l.b16 %v2295
        %v2568 = vunpack.c.l.b16 %v2296
        %v2569 = vunpack.c.l.b16 %v2297
        %v2570 = vpack.c.b16 %v2563, %v2562
        %v2571 = vpack.c.b16 %v2565, %v2564
        %v2572 = vpack.c.b16 %v2567, %v2566
        %v2573 = vpack.c.b16 %v2569, %v2568
        %v2579 = vsel %vm565, %v2550, 0
        %v2582 = vsel %vm565, %v2551, 0
        %v2585 = vsel %vm565, %v2552, 0
        %v2588 = vsel %vm565, %v2553, 0
        %2590 = vmatprep.subr.bf16.mxu0 0
        %2591 = vmatpush1.bf16.msra.mxu0 0
        %2592 = vmatprep.subr.bf16.mxu0 0
        %2593 = vmatpush1.bf16.msra.mxu0 0
        %2594 = vmatprep.subr.bf16.mxu0 0
        %2595 = vmatpush1.bf16.msra.mxu0 0
        %2596 = vmatprep.subr.bf16.mxu0 0
        %2597 = vmatpush1.bf16.msra.mxu0 0
        %2598 = vmatprep.subr.bf16.mxu0 0
        %2599 = vmatpush1.bf16.msra.mxu0 %v2573
        %2600 = vmatprep.subr.bf16.mxu0 0
        %2601 = vmatpush1.bf16.msra.mxu0 %v2572
        %2602 = vmatprep.subr.bf16.mxu0 0
        %2603 = vmatpush1.bf16.msra.mxu0 %v2571
        %2604 = vmatprep.subr.bf16.mxu0 0
        %2605 = vmatpush1.bf16.msra.mxu0 %v2570
        %2606 = vmatprep.subr.bf16.mxu0 0
        %2607 = vmatpush2.bf16.msra.mxu0 0
        %2608 = vmatprep.subr.bf16.mxu0 0
        %2609 = vmatpush2.bf16.msra.mxu0 0
        %2610 = vmatprep.subr.bf16.mxu0 0
        %2611 = vmatpush2.bf16.msra.mxu0 0
        %2612 = vmatprep.subr.bf16.mxu0 0
        %2613 = vmatpush2.bf16.msra.mxu0 0
        %2614 = vmatprep.subr.bf16.mxu0 0
        %2615 = vmatpush2.bf16.msra.mxu0 0
        %2616 = vmatprep.subr.bf16.mxu0 0
        %2617 = vmatpush2.bf16.msra.mxu0 0
        %2618 = vmatprep.subr.bf16.mxu0 0
        %2619 = vmatpush2.bf16.msra.mxu0 0
        %2620 = vmatprep.subr.bf16.mxu0 0
        %2621 = vmatpush2.bf16.msra.mxu0 0
        %2622 = vmatprep.mubr.bf16.mxu0 0
        %2623 = vmatmul.mubr.bf16.gmra.mxu0 %v2579
        %v2624 = vpop.f32.mrf.mxu0
        %v2625 = vadd.f32 %v2504, %v2624
        %v2626 = vpop.f32.mrf.mxu0
        %v2627 = vpop.f32.mrf.mxu0
        %v2628 = vadd.f32 %v2507, %v2627
        %v2629 = vpop.f32.mrf.mxu0
        %2630 = vmatprep.mubr.bf16.mxu0 0
        %2631 = vmatmul.mubr.bf16.gmra.mxu0 %v2582
        %v2632 = vpop.f32.mrf.mxu0
        %v2633 = vadd.f32 %v2512, %v2632
        %v2634 = vpop.f32.mrf.mxu0
        %v2635 = vpop.f32.mrf.mxu0
        %v2636 = vadd.f32 %v2515, %v2635
        %v2637 = vpop.f32.mrf.mxu0
        %2638 = vmatprep.mubr.bf16.mxu0 0
        %2639 = vmatmul.mubr.bf16.gmra.mxu0 %v2585
        %v2640 = vpop.f32.mrf.mxu0
        %v2641 = vadd.f32 %v2520, %v2640
        %v2642 = vpop.f32.mrf.mxu0
        %v2643 = vpop.f32.mrf.mxu0
        %v2644 = vadd.f32 %v2523, %v2643
        %v2645 = vpop.f32.mrf.mxu0
        %2646 = vmatprep.mubr.bf16.mxu0 0
        %2647 = vmatmul.mubr.bf16.gmra.mxu0 %v2588
        %v2648 = vpop.f32.mrf.mxu0
        %v2649 = vadd.f32 %v2528, %v2648
        %v2650 = vpop.f32.mrf.mxu0
        %v2651 = vpop.f32.mrf.mxu0
        %v2652 = vadd.f32 %v2531, %v2651
        %v2653 = vpop.f32.mrf.mxu0
        %2654 = vdwg.mxu0
        %v2663 = vrot.slane %v2267, 5
        %v2664 = vrot.slane %v2663, 4
        %v2665 = vrot.slane %v2268, 5
        %v2666 = vsel %vm1163, %v2664, %v2665
        %v2667 = vrot.slane %v2269, 5
        %v2668 = vrot.slane %v2667, 4
        %v2669 = vrot.slane %v2270, 5
        %v2670 = vsel %vm1163, %v2668, %v2669
        %v2671 = vrot.slane %v2271, 5
        %v2672 = vrot.slane %v2671, 4
        %v2673 = vrot.slane %v2272, 5
        %v2674 = vsel %vm1163, %v2672, %v2673
        %v2675 = vrot.slane %v2273, 5
        %v2676 = vrot.slane %v2675, 4
        %v2677 = vrot.slane %v2274, 5
        %v2678 = vsel %vm1163, %v2676, %v2677
        %v2679 = vrot.slane %v2275, 5
        %v2680 = vrot.slane %v2679, 4
        %v2681 = vrot.slane %v2276, 5
        %v2682 = vsel %vm1163, %v2680, %v2681
        %v2683 = vrot.slane %v2277, 5
        %v2684 = vrot.slane %v2683, 4
        %v2685 = vrot.slane %v2278, 5
        %v2686 = vsel %vm1163, %v2684, %v2685
        %v2687 = vrot.slane %v2279, 5
        %v2688 = vrot.slane %v2687, 4
        %v2689 = vrot.slane %v2280, 5
        %v2690 = vsel %vm1163, %v2688, %v2689
        %v2691 = vrot.slane %v2281, 5
        %v2692 = vrot.slane %v2691, 4
        %v2693 = vrot.slane %v2282, 5
        %v2694 = vsel %vm1163, %v2692, %v2693
        %s2695 = sadd.s32 88, %s782
        %s2696 = smul.addr %s2695, 4
        %s2697 = scalar_lea.vmem %s3, %s2696
        %v2698 = vld [vmem:[%s2697] sm:$0xf]
        %v2699 = vld [vmem:[%s2697 + $0x4] sm:$0xf]
        %v2700 = vld [vmem:[%s2697 + $0x8] sm:$0xf]
        %v2701 = vld [vmem:[%s2697 + $0xc] sm:$0xf]
        %v2702 = vld [vmem:[%s2697 + $0x10] sm:$0xf]
        %v2703 = vld [vmem:[%s2697 + $0x14] sm:$0xf]
        %v2704 = vld [vmem:[%s2697 + $0x18] sm:$0xf]
        %v2705 = vld [vmem:[%s2697 + $0x1c] sm:$0xf]
        %v2706 = vunpack.c.l.b16 %v2666
        %v2707 = vunpack.c.l.b16 %v2670
        %v2708 = vunpack.c.l.b16 %v2674
        %v2709 = vunpack.c.l.b16 %v2678
        %v2710 = vunpack.c.l.b16 %v2682
        %v2711 = vunpack.c.l.b16 %v2686
        %v2712 = vunpack.c.l.b16 %v2690
        %v2713 = vunpack.c.l.b16 %v2694
        %v2714 = vpack.c.b16 %v2707, %v2706
        %v2715 = vpack.c.b16 %v2709, %v2708
        %v2716 = vpack.c.b16 %v2711, %v2710
        %v2717 = vpack.c.b16 %v2713, %v2712
        %v2726 = vunpack.c.l.b16 %v2698
        %v2727 = vunpack.c.l.b16 %v2699
        %v2728 = vunpack.c.l.b16 %v2700
        %v2729 = vunpack.c.l.b16 %v2701
        %v2730 = vunpack.c.l.b16 %v2702
        %v2731 = vunpack.c.l.b16 %v2703
        %v2732 = vunpack.c.l.b16 %v2704
        %v2733 = vunpack.c.l.b16 %v2705
        %v2734 = vpack.c.b16 %v2727, %v2726
        %v2735 = vpack.c.b16 %v2729, %v2728
        %v2736 = vpack.c.b16 %v2731, %v2730
        %v2737 = vpack.c.b16 %v2733, %v2732
        %v2743 = vsel %vm565, %v2714, 0
        %v2746 = vsel %vm565, %v2715, 0
        %v2749 = vsel %vm565, %v2716, 0
        %v2752 = vsel %vm565, %v2717, 0
        %2754 = vmatprep.subr.bf16.mxu0 0
        %2755 = vmatpush1.bf16.msra.mxu0 0
        %2756 = vmatprep.subr.bf16.mxu0 0
        %2757 = vmatpush1.bf16.msra.mxu0 0
        %2758 = vmatprep.subr.bf16.mxu0 0
        %2759 = vmatpush1.bf16.msra.mxu0 0
        %2760 = vmatprep.subr.bf16.mxu0 0
        %2761 = vmatpush1.bf16.msra.mxu0 0
        %2762 = vmatprep.subr.bf16.mxu0 0
        %2763 = vmatpush1.bf16.msra.mxu0 %v2737
        %2764 = vmatprep.subr.bf16.mxu0 0
        %2765 = vmatpush1.bf16.msra.mxu0 %v2736
        %2766 = vmatprep.subr.bf16.mxu0 0
        %2767 = vmatpush1.bf16.msra.mxu0 %v2735
        %2768 = vmatprep.subr.bf16.mxu0 0
        %2769 = vmatpush1.bf16.msra.mxu0 %v2734
        %2770 = vmatprep.subr.bf16.mxu0 0
        %2771 = vmatpush2.bf16.msra.mxu0 0
        %2772 = vmatprep.subr.bf16.mxu0 0
        %2773 = vmatpush2.bf16.msra.mxu0 0
        %2774 = vmatprep.subr.bf16.mxu0 0
        %2775 = vmatpush2.bf16.msra.mxu0 0
        %2776 = vmatprep.subr.bf16.mxu0 0
        %2777 = vmatpush2.bf16.msra.mxu0 0
        %2778 = vmatprep.subr.bf16.mxu0 0
        %2779 = vmatpush2.bf16.msra.mxu0 0
        %2780 = vmatprep.subr.bf16.mxu0 0
        %2781 = vmatpush2.bf16.msra.mxu0 0
        %2782 = vmatprep.subr.bf16.mxu0 0
        %2783 = vmatpush2.bf16.msra.mxu0 0
        %2784 = vmatprep.subr.bf16.mxu0 0
        %2785 = vmatpush2.bf16.msra.mxu0 0
        %2786 = vmatprep.mubr.bf16.mxu0 0
        %2787 = vmatmul.mubr.bf16.gmra.mxu0 %v2743
        %v2788 = vpop.f32.mrf.mxu0
        %v2789 = vadd.f32 0.0, %v2788
        %v2790 = vpop.f32.mrf.mxu0
        %v2791 = vpop.f32.mrf.mxu0
        %v2792 = vadd.f32 0.0, %v2791
        %v2793 = vpop.f32.mrf.mxu0
        %2794 = vmatprep.mubr.bf16.mxu0 0
        %2795 = vmatmul.mubr.bf16.gmra.mxu0 %v2746
        %v2796 = vpop.f32.mrf.mxu0
        %v2797 = vadd.f32 0.0, %v2796
        %v2798 = vpop.f32.mrf.mxu0
        %v2799 = vpop.f32.mrf.mxu0
        %v2800 = vadd.f32 0.0, %v2799
        %v2801 = vpop.f32.mrf.mxu0
        %2802 = vmatprep.mubr.bf16.mxu0 0
        %2803 = vmatmul.mubr.bf16.gmra.mxu0 %v2749
        %v2804 = vpop.f32.mrf.mxu0
        %v2805 = vadd.f32 0.0, %v2804
        %v2806 = vpop.f32.mrf.mxu0
        %v2807 = vpop.f32.mrf.mxu0
        %v2808 = vadd.f32 0.0, %v2807
        %v2809 = vpop.f32.mrf.mxu0
        %2810 = vmatprep.mubr.bf16.mxu0 0
        %2811 = vmatmul.mubr.bf16.gmra.mxu0 %v2752
        %v2812 = vpop.f32.mrf.mxu0
        %v2813 = vadd.f32 0.0, %v2812
        %v2814 = vpop.f32.mrf.mxu0
        %v2815 = vpop.f32.mrf.mxu0
        %v2816 = vadd.f32 0.0, %v2815
        %v2817 = vpop.f32.mrf.mxu0
        %2818 = vdwg.mxu0
        %v2819 = vadd.f32 %v2625, %v2789
        %v2820 = vadd.f32 %v2628, %v2792
        %v2821 = vadd.f32 %v2633, %v2797
        %v2822 = vadd.f32 %v2636, %v2800
        %v2823 = vadd.f32 %v2641, %v2805
        %v2824 = vadd.f32 %v2644, %v2808
        %v2825 = vadd.f32 %v2649, %v2813
        %v2826 = vadd.f32 %v2652, %v2816
        %s2827 = sadd.s32 96, %s782
        %s2828 = smul.addr %s2827, 4
        %s2829 = scalar_lea.vmem %s3, %s2828
        %v2830 = vld [vmem:[%s2829] sm:$0xf]
        %v2831 = vld [vmem:[%s2829 + $0x4] sm:$0xf]
        %v2832 = vld [vmem:[%s2829 + $0x8] sm:$0xf]
        %v2833 = vld [vmem:[%s2829 + $0xc] sm:$0xf]
        %v2834 = vld [vmem:[%s2829 + $0x10] sm:$0xf]
        %v2835 = vld [vmem:[%s2829 + $0x14] sm:$0xf]
        %v2836 = vld [vmem:[%s2829 + $0x18] sm:$0xf]
        %v2837 = vld [vmem:[%s2829 + $0x1c] sm:$0xf]
        %v2839 = vunpack.c.l.b16 %v2283
        %v2840 = vpack.c.b16 %v2544, %v2543
        %v2841 = vpack.c.b16 %v2546, %v2545
        %v2842 = vpack.c.b16 %v2548, %v2547
        %v2843 = vpack.c.b16 %v2839, %v2549
        %v2852 = vunpack.c.l.b16 %v2830
        %v2853 = vunpack.c.l.b16 %v2831
        %v2854 = vunpack.c.l.b16 %v2832
        %v2855 = vunpack.c.l.b16 %v2833
        %v2856 = vunpack.c.l.b16 %v2834
        %v2857 = vunpack.c.l.b16 %v2835
        %v2858 = vunpack.c.l.b16 %v2836
        %v2859 = vunpack.c.l.b16 %v2837
        %v2860 = vpack.c.b16 %v2853, %v2852
        %v2861 = vpack.c.b16 %v2855, %v2854
        %v2862 = vpack.c.b16 %v2857, %v2856
        %v2863 = vpack.c.b16 %v2859, %v2858
        %v2869 = vsel %vm565, %v2840, 0
        %v2872 = vsel %vm565, %v2841, 0
        %v2875 = vsel %vm565, %v2842, 0
        %v2878 = vsel %vm565, %v2843, 0
        %2880 = vmatprep.subr.bf16.mxu0 0
        %2881 = vmatpush1.bf16.msra.mxu0 0
        %2882 = vmatprep.subr.bf16.mxu0 0
        %2883 = vmatpush1.bf16.msra.mxu0 0
        %2884 = vmatprep.subr.bf16.mxu0 0
        %2885 = vmatpush1.bf16.msra.mxu0 0
        %2886 = vmatprep.subr.bf16.mxu0 0
        %2887 = vmatpush1.bf16.msra.mxu0 0
        %2888 = vmatprep.subr.bf16.mxu0 0
        %2889 = vmatpush1.bf16.msra.mxu0 %v2863
        %2890 = vmatprep.subr.bf16.mxu0 0
        %2891 = vmatpush1.bf16.msra.mxu0 %v2862
        %2892 = vmatprep.subr.bf16.mxu0 0
        %2893 = vmatpush1.bf16.msra.mxu0 %v2861
        %2894 = vmatprep.subr.bf16.mxu0 0
        %2895 = vmatpush1.bf16.msra.mxu0 %v2860
        %2896 = vmatprep.subr.bf16.mxu0 0
        %2897 = vmatpush2.bf16.msra.mxu0 0
        %2898 = vmatprep.subr.bf16.mxu0 0
        %2899 = vmatpush2.bf16.msra.mxu0 0
        %2900 = vmatprep.subr.bf16.mxu0 0
        %2901 = vmatpush2.bf16.msra.mxu0 0
        %2902 = vmatprep.subr.bf16.mxu0 0
        %2903 = vmatpush2.bf16.msra.mxu0 0
        %2904 = vmatprep.subr.bf16.mxu0 0
        %2905 = vmatpush2.bf16.msra.mxu0 0
        %2906 = vmatprep.subr.bf16.mxu0 0
        %2907 = vmatpush2.bf16.msra.mxu0 0
        %2908 = vmatprep.subr.bf16.mxu0 0
        %2909 = vmatpush2.bf16.msra.mxu0 0
        %2910 = vmatprep.subr.bf16.mxu0 0
        %2911 = vmatpush2.bf16.msra.mxu0 0
        %2912 = vmatprep.mubr.bf16.mxu0 0
        %2913 = vmatmul.mubr.bf16.gmra.mxu0 %v2869
        %v2914 = vpop.f32.mrf.mxu0
        %v2915 = vadd.f32 0.0, %v2914
        %v2916 = vpop.f32.mrf.mxu0
        %v2917 = vpop.f32.mrf.mxu0
        %v2918 = vadd.f32 0.0, %v2917
        %v2919 = vpop.f32.mrf.mxu0
        %2920 = vmatprep.mubr.bf16.mxu0 0
        %2921 = vmatmul.mubr.bf16.gmra.mxu0 %v2872
        %v2922 = vpop.f32.mrf.mxu0
        %v2923 = vadd.f32 0.0, %v2922
        %v2924 = vpop.f32.mrf.mxu0
        %v2925 = vpop.f32.mrf.mxu0
        %v2926 = vadd.f32 0.0, %v2925
        %v2927 = vpop.f32.mrf.mxu0
        %2928 = vmatprep.mubr.bf16.mxu0 0
        %2929 = vmatmul.mubr.bf16.gmra.mxu0 %v2875
        %v2930 = vpop.f32.mrf.mxu0
        %v2931 = vadd.f32 0.0, %v2930
        %v2932 = vpop.f32.mrf.mxu0
        %v2933 = vpop.f32.mrf.mxu0
        %v2934 = vadd.f32 0.0, %v2933
        %v2935 = vpop.f32.mrf.mxu0
        %2936 = vmatprep.mubr.bf16.mxu0 0
        %2937 = vmatmul.mubr.bf16.gmra.mxu0 %v2878
        %v2938 = vpop.f32.mrf.mxu0
        %v2939 = vadd.f32 0.0, %v2938
        %v2940 = vpop.f32.mrf.mxu0
        %v2941 = vpop.f32.mrf.mxu0
        %v2942 = vadd.f32 0.0, %v2941
        %v2943 = vpop.f32.mrf.mxu0
        %2944 = vdwg.mxu0
        %v2945 = vadd.f32 %v2819, %v2915
        %v2946 = vadd.f32 %v2820, %v2918
        %v2947 = vadd.f32 %v2821, %v2923
        %v2948 = vadd.f32 %v2822, %v2926
        %v2949 = vadd.f32 %v2823, %v2931
        %v2950 = vadd.f32 %v2824, %v2934
        %v2951 = vadd.f32 %v2825, %v2939
        %v2952 = vadd.f32 %v2826, %v2942
        %v2954 = vshrl.u32 %v2283, 16
        %v2956 = vrot.slane %v2954, 4
        %v2957 = vshll.u32 %v2283, 16
        %v2959 = vrot.slane %v2957, 5
        %v2960 = vor.u32 %v2956, %v2959
        %v2961 = vrot.slane %v2960, 4
        %v2963 = vshll.u32 %v2284, 16
        %v2965 = vrot.slane %v2963, 5
        %v2966 = vsel %vm795, %v2961, %v2965
        %s2967 = sadd.s32 104, %s782
        %s2968 = smul.addr %s2967, 4
        %s2969 = scalar_lea.vmem %s3, %s2968
        %v2970 = vld [vmem:[%s2969] sm:$0xf]
        %v2971 = vld [vmem:[%s2969 + $0x4] sm:$0xf]
        %v2972 = vld [vmem:[%s2969 + $0x8] sm:$0xf]
        %v2973 = vld [vmem:[%s2969 + $0xc] sm:$0xf]
        %v2974 = vld [vmem:[%s2969 + $0x10] sm:$0xf]
        %v2975 = vld [vmem:[%s2969 + $0x14] sm:$0xf]
        %v2976 = vld [vmem:[%s2969 + $0x18] sm:$0xf]
        %v2977 = vld [vmem:[%s2969 + $0x1c] sm:$0xf]
        %v2978 = vunpack.c.l.b16 %v2966
        %v2979 = vpack.c.b16 %v2423, %v2422
        %v2980 = vpack.c.b16 %v2425, %v2424
        %v2981 = vpack.c.b16 %v2427, %v2426
        %v2982 = vpack.c.b16 %v2978, %v2428
        %v2991 = vunpack.c.l.b16 %v2970
        %v2992 = vunpack.c.l.b16 %v2971
        %v2993 = vunpack.c.l.b16 %v2972
        %v2994 = vunpack.c.l.b16 %v2973
        %v2995 = vunpack.c.l.b16 %v2974
        %v2996 = vunpack.c.l.b16 %v2975
        %v2997 = vunpack.c.l.b16 %v2976
        %v2998 = vunpack.c.l.b16 %v2977
        %v2999 = vpack.c.b16 %v2992, %v2991
        %v3000 = vpack.c.b16 %v2994, %v2993
        %v3001 = vpack.c.b16 %v2996, %v2995
        %v3002 = vpack.c.b16 %v2998, %v2997
        %v3008 = vsel %vm565, %v2979, 0
        %v3011 = vsel %vm565, %v2980, 0
        %v3014 = vsel %vm565, %v2981, 0
        %v3017 = vsel %vm565, %v2982, 0
        %3019 = vmatprep.subr.bf16.mxu0 0
        %3020 = vmatpush1.bf16.msra.mxu0 0
        %3021 = vmatprep.subr.bf16.mxu0 0
        %3022 = vmatpush1.bf16.msra.mxu0 0
        %3023 = vmatprep.subr.bf16.mxu0 0
        %3024 = vmatpush1.bf16.msra.mxu0 0
        %3025 = vmatprep.subr.bf16.mxu0 0
        %3026 = vmatpush1.bf16.msra.mxu0 0
        %3027 = vmatprep.subr.bf16.mxu0 0
        %3028 = vmatpush1.bf16.msra.mxu0 %v3002
        %3029 = vmatprep.subr.bf16.mxu0 0
        %3030 = vmatpush1.bf16.msra.mxu0 %v3001
        %3031 = vmatprep.subr.bf16.mxu0 0
        %3032 = vmatpush1.bf16.msra.mxu0 %v3000
        %3033 = vmatprep.subr.bf16.mxu0 0
        %3034 = vmatpush1.bf16.msra.mxu0 %v2999
        %3035 = vmatprep.subr.bf16.mxu0 0
        %3036 = vmatpush2.bf16.msra.mxu0 0
        %3037 = vmatprep.subr.bf16.mxu0 0
        %3038 = vmatpush2.bf16.msra.mxu0 0
        %3039 = vmatprep.subr.bf16.mxu0 0
        %3040 = vmatpush2.bf16.msra.mxu0 0
        %3041 = vmatprep.subr.bf16.mxu0 0
        %3042 = vmatpush2.bf16.msra.mxu0 0
        %3043 = vmatprep.subr.bf16.mxu0 0
        %3044 = vmatpush2.bf16.msra.mxu0 0
        %3045 = vmatprep.subr.bf16.mxu0 0
        %3046 = vmatpush2.bf16.msra.mxu0 0
        %3047 = vmatprep.subr.bf16.mxu0 0
        %3048 = vmatpush2.bf16.msra.mxu0 0
        %3049 = vmatprep.subr.bf16.mxu0 0
        %3050 = vmatpush2.bf16.msra.mxu0 0
        %3051 = vmatprep.mubr.bf16.mxu0 0
        %3052 = vmatmul.mubr.bf16.gmra.mxu0 %v3008
        %v3053 = vpop.f32.mrf.mxu0
        %v3054 = vadd.f32 0.0, %v3053
        %v3055 = vpop.f32.mrf.mxu0
        %v3056 = vpop.f32.mrf.mxu0
        %v3057 = vadd.f32 0.0, %v3056
        %v3058 = vpop.f32.mrf.mxu0
        %3059 = vmatprep.mubr.bf16.mxu0 0
        %3060 = vmatmul.mubr.bf16.gmra.mxu0 %v3011
        %v3061 = vpop.f32.mrf.mxu0
        %v3062 = vadd.f32 0.0, %v3061
        %v3063 = vpop.f32.mrf.mxu0
        %v3064 = vpop.f32.mrf.mxu0
        %v3065 = vadd.f32 0.0, %v3064
        %v3066 = vpop.f32.mrf.mxu0
        %3067 = vmatprep.mubr.bf16.mxu0 0
        %3068 = vmatmul.mubr.bf16.gmra.mxu0 %v3014
        %v3069 = vpop.f32.mrf.mxu0
        %v3070 = vadd.f32 0.0, %v3069
        %v3071 = vpop.f32.mrf.mxu0
        %v3072 = vpop.f32.mrf.mxu0
        %v3073 = vadd.f32 0.0, %v3072
        %v3074 = vpop.f32.mrf.mxu0
        %3075 = vmatprep.mubr.bf16.mxu0 0
        %3076 = vmatmul.mubr.bf16.gmra.mxu0 %v3017
        %v3077 = vpop.f32.mrf.mxu0
        %v3078 = vadd.f32 0.0, %v3077
        %v3079 = vpop.f32.mrf.mxu0
        %v3080 = vpop.f32.mrf.mxu0
        %v3081 = vadd.f32 0.0, %v3080
        %v3082 = vpop.f32.mrf.mxu0
        %3083 = vdwg.mxu0
        %v3084 = vadd.f32 %v2945, %v3054
        %v3085 = vadd.f32 %v2946, %v3057
        %v3086 = vadd.f32 %v2947, %v3062
        %v3087 = vadd.f32 %v2948, %v3065
        %v3088 = vadd.f32 %v2949, %v3070
        %v3089 = vadd.f32 %v2950, %v3073
        %v3090 = vadd.f32 %v2951, %v3078
        %v3091 = vadd.f32 %v2952, %v3081
        %v3093 = vrot.slane %v2283, 5
        %v3094 = vrot.slane %v3093, 4
        %v3095 = vrot.slane %v2284, 5
        %v3096 = vsel %vm1163, %v3094, %v3095
        %s3097 = sadd.s32 112, %s782
        %s3098 = smul.addr %s3097, 4
        %s3099 = scalar_lea.vmem %s3, %s3098
        %v3100 = vld [vmem:[%s3099] sm:$0xf]
        %v3101 = vld [vmem:[%s3099 + $0x4] sm:$0xf]
        %v3102 = vld [vmem:[%s3099 + $0x8] sm:$0xf]
        %v3103 = vld [vmem:[%s3099 + $0xc] sm:$0xf]
        %v3104 = vld [vmem:[%s3099 + $0x10] sm:$0xf]
        %v3105 = vld [vmem:[%s3099 + $0x14] sm:$0xf]
        %v3106 = vld [vmem:[%s3099 + $0x18] sm:$0xf]
        %v3107 = vld [vmem:[%s3099 + $0x1c] sm:$0xf]
        %v3108 = vunpack.c.l.b16 %v3096
        %v3109 = vpack.c.b16 %v2708, %v2707
        %v3110 = vpack.c.b16 %v2710, %v2709
        %v3111 = vpack.c.b16 %v2712, %v2711
        %v3112 = vpack.c.b16 %v3108, %v2713
        %v3121 = vunpack.c.l.b16 %v3100
        %v3122 = vunpack.c.l.b16 %v3101
        %v3123 = vunpack.c.l.b16 %v3102
        %v3124 = vunpack.c.l.b16 %v3103
        %v3125 = vunpack.c.l.b16 %v3104
        %v3126 = vunpack.c.l.b16 %v3105
        %v3127 = vunpack.c.l.b16 %v3106
        %v3128 = vunpack.c.l.b16 %v3107
        %v3129 = vpack.c.b16 %v3122, %v3121
        %v3130 = vpack.c.b16 %v3124, %v3123
        %v3131 = vpack.c.b16 %v3126, %v3125
        %v3132 = vpack.c.b16 %v3128, %v3127
        %v3138 = vsel %vm565, %v3109, 0
        %v3141 = vsel %vm565, %v3110, 0
        %v3144 = vsel %vm565, %v3111, 0
        %v3147 = vsel %vm565, %v3112, 0
        %3149 = vmatprep.subr.bf16.mxu0 0
        %3150 = vmatpush1.bf16.msra.mxu0 0
        %3151 = vmatprep.subr.bf16.mxu0 0
        %3152 = vmatpush1.bf16.msra.mxu0 0
        %3153 = vmatprep.subr.bf16.mxu0 0
        %3154 = vmatpush1.bf16.msra.mxu0 0
        %3155 = vmatprep.subr.bf16.mxu0 0
        %3156 = vmatpush1.bf16.msra.mxu0 0
        %3157 = vmatprep.subr.bf16.mxu0 0
        %3158 = vmatpush1.bf16.msra.mxu0 %v3132
        %3159 = vmatprep.subr.bf16.mxu0 0
        %3160 = vmatpush1.bf16.msra.mxu0 %v3131
        %3161 = vmatprep.subr.bf16.mxu0 0
        %3162 = vmatpush1.bf16.msra.mxu0 %v3130
        %3163 = vmatprep.subr.bf16.mxu0 0
        %3164 = vmatpush1.bf16.msra.mxu0 %v3129
        %3165 = vmatprep.subr.bf16.mxu0 0
        %3166 = vmatpush2.bf16.msra.mxu0 0
        %3167 = vmatprep.subr.bf16.mxu0 0
        %3168 = vmatpush2.bf16.msra.mxu0 0
        %3169 = vmatprep.subr.bf16.mxu0 0
        %3170 = vmatpush2.bf16.msra.mxu0 0
        %3171 = vmatprep.subr.bf16.mxu0 0
        %3172 = vmatpush2.bf16.msra.mxu0 0
        %3173 = vmatprep.subr.bf16.mxu0 0
        %3174 = vmatpush2.bf16.msra.mxu0 0
        %3175 = vmatprep.subr.bf16.mxu0 0
        %3176 = vmatpush2.bf16.msra.mxu0 0
        %3177 = vmatprep.subr.bf16.mxu0 0
        %3178 = vmatpush2.bf16.msra.mxu0 0
        %3179 = vmatprep.subr.bf16.mxu0 0
        %3180 = vmatpush2.bf16.msra.mxu0 0
        %3181 = vmatprep.mubr.bf16.mxu0 0
        %3182 = vmatmul.mubr.bf16.gmra.mxu0 %v3138
        %v3183 = vpop.f32.mrf.mxu0
        %v3184 = vadd.f32 0.0, %v3183
        %v3185 = vpop.f32.mrf.mxu0
        %v3186 = vpop.f32.mrf.mxu0
        %v3187 = vadd.f32 0.0, %v3186
        %v3188 = vpop.f32.mrf.mxu0
        %3189 = vmatprep.mubr.bf16.mxu0 0
        %3190 = vmatmul.mubr.bf16.gmra.mxu0 %v3141
        %v3191 = vpop.f32.mrf.mxu0
        %v3192 = vadd.f32 0.0, %v3191
        %v3193 = vpop.f32.mrf.mxu0
        %v3194 = vpop.f32.mrf.mxu0
        %v3195 = vadd.f32 0.0, %v3194
        %v3196 = vpop.f32.mrf.mxu0
        %3197 = vmatprep.mubr.bf16.mxu0 0
        %3198 = vmatmul.mubr.bf16.gmra.mxu0 %v3144
        %v3199 = vpop.f32.mrf.mxu0
        %v3200 = vadd.f32 0.0, %v3199
        %v3201 = vpop.f32.mrf.mxu0
        %v3202 = vpop.f32.mrf.mxu0
        %v3203 = vadd.f32 0.0, %v3202
        %v3204 = vpop.f32.mrf.mxu0
        %3205 = vmatprep.mubr.bf16.mxu0 0
        %3206 = vmatmul.mubr.bf16.gmra.mxu0 %v3147
        %v3207 = vpop.f32.mrf.mxu0
        %v3208 = vadd.f32 0.0, %v3207
        %v3209 = vpop.f32.mrf.mxu0
        %v3210 = vpop.f32.mrf.mxu0
        %v3211 = vadd.f32 0.0, %v3210
        %v3212 = vpop.f32.mrf.mxu0
        %3213 = vdwg.mxu0
        %v3214 = vadd.f32 %v3084, %v3184
        %v3215 = vadd.f32 %v3085, %v3187
        %v3216 = vadd.f32 %v3086, %v3192
        %v3217 = vadd.f32 %v3087, %v3195
        %v3218 = vadd.f32 %v3088, %v3200
        %v3219 = vadd.f32 %v3089, %v3203
        %v3220 = vadd.f32 %v3090, %v3208
        %v3221 = vadd.f32 %v3091, %v3211
        %s3222 = sadd.s32 120, %s782
        %s3223 = smul.addr %s3222, 4
        %s3224 = scalar_lea.vmem %s3, %s3223
        %v3225 = vld [vmem:[%s3224] sm:$0xf]
        %v3226 = vld [vmem:[%s3224 + $0x4] sm:$0xf]
        %v3227 = vld [vmem:[%s3224 + $0x8] sm:$0xf]
        %v3228 = vld [vmem:[%s3224 + $0xc] sm:$0xf]
        %v3229 = vld [vmem:[%s3224 + $0x10] sm:$0xf]
        %v3230 = vld [vmem:[%s3224 + $0x14] sm:$0xf]
        %v3231 = vld [vmem:[%s3224 + $0x18] sm:$0xf]
        %v3232 = vld [vmem:[%s3224 + $0x1c] sm:$0xf]
        %v3234 = vunpack.c.l.b16 %v2285
        %v3235 = vpack.c.b16 %v3234, %v2839
        %v3244 = vunpack.c.l.b16 %v3225
        %v3245 = vunpack.c.l.b16 %v3226
        %v3246 = vunpack.c.l.b16 %v3227
        %v3247 = vunpack.c.l.b16 %v3228
        %v3248 = vunpack.c.l.b16 %v3229
        %v3249 = vunpack.c.l.b16 %v3230
        %v3250 = vunpack.c.l.b16 %v3231
        %v3251 = vunpack.c.l.b16 %v3232
        %v3252 = vpack.c.b16 %v3245, %v3244
        %v3253 = vpack.c.b16 %v3247, %v3246
        %v3254 = vpack.c.b16 %v3249, %v3248
        %v3255 = vpack.c.b16 %v3251, %v3250
        %v3261 = vsel %vm565, %v3235, 0
        %3263 = vmatprep.subr.bf16.mxu0 0
        %3264 = vmatpush1.bf16.msra.mxu0 0
        %3265 = vmatprep.subr.bf16.mxu0 0
        %3266 = vmatpush1.bf16.msra.mxu0 0
        %3267 = vmatprep.subr.bf16.mxu0 0
        %3268 = vmatpush1.bf16.msra.mxu0 0
        %3269 = vmatprep.subr.bf16.mxu0 0
        %3270 = vmatpush1.bf16.msra.mxu0 0
        %3271 = vmatprep.subr.bf16.mxu0 0
        %3272 = vmatpush1.bf16.msra.mxu0 %v3255
        %3273 = vmatprep.subr.bf16.mxu0 0
        %3274 = vmatpush1.bf16.msra.mxu0 %v3254
        %3275 = vmatprep.subr.bf16.mxu0 0
        %3276 = vmatpush1.bf16.msra.mxu0 %v3253
        %3277 = vmatprep.subr.bf16.mxu0 0
        %3278 = vmatpush1.bf16.msra.mxu0 %v3252
        %3279 = vmatprep.subr.bf16.mxu0 0
        %3280 = vmatpush2.bf16.msra.mxu0 0
        %3281 = vmatprep.subr.bf16.mxu0 0
        %3282 = vmatpush2.bf16.msra.mxu0 0
        %3283 = vmatprep.subr.bf16.mxu0 0
        %3284 = vmatpush2.bf16.msra.mxu0 0
        %3285 = vmatprep.subr.bf16.mxu0 0
        %3286 = vmatpush2.bf16.msra.mxu0 0
        %3287 = vmatprep.subr.bf16.mxu0 0
        %3288 = vmatpush2.bf16.msra.mxu0 0
        %3289 = vmatprep.subr.bf16.mxu0 0
        %3290 = vmatpush2.bf16.msra.mxu0 0
        %3291 = vmatprep.subr.bf16.mxu0 0
        %3292 = vmatpush2.bf16.msra.mxu0 0
        %3293 = vmatprep.subr.bf16.mxu0 0
        %3294 = vmatpush2.bf16.msra.mxu0 0
        %3295 = vmatprep.mubr.bf16.mxu0 0
        %3296 = vmatmul.mubr.bf16.gmra.mxu0 %v2582
        %v3297 = vpop.f32.mrf.mxu0
        %v3298 = vadd.f32 0.0, %v3297
        %v3299 = vpop.f32.mrf.mxu0
        %v3300 = vpop.f32.mrf.mxu0
        %v3301 = vadd.f32 0.0, %v3300
        %v3302 = vpop.f32.mrf.mxu0
        %3303 = vmatprep.mubr.bf16.mxu0 0
        %3304 = vmatmul.mubr.bf16.gmra.mxu0 %v2585
        %v3305 = vpop.f32.mrf.mxu0
        %v3306 = vadd.f32 0.0, %v3305
        %v3307 = vpop.f32.mrf.mxu0
        %v3308 = vpop.f32.mrf.mxu0
        %v3309 = vadd.f32 0.0, %v3308
        %v3310 = vpop.f32.mrf.mxu0
        %3311 = vmatprep.mubr.bf16.mxu0 0
        %3312 = vmatmul.mubr.bf16.gmra.mxu0 %v2588
        %v3313 = vpop.f32.mrf.mxu0
        %v3314 = vadd.f32 0.0, %v3313
        %v3315 = vpop.f32.mrf.mxu0
        %v3316 = vpop.f32.mrf.mxu0
        %v3317 = vadd.f32 0.0, %v3316
        %v3318 = vpop.f32.mrf.mxu0
        %3319 = vmatprep.mubr.bf16.mxu0 0
        %3320 = vmatmul.mubr.bf16.gmra.mxu0 %v3261
        %v3321 = vpop.f32.mrf.mxu0
        %v3322 = vadd.f32 0.0, %v3321
        %v3323 = vpop.f32.mrf.mxu0
        %v3324 = vpop.f32.mrf.mxu0
        %v3325 = vadd.f32 0.0, %v3324
        %v3326 = vpop.f32.mrf.mxu0
        %3327 = vdwg.mxu0
        %v3328 = vadd.f32 %v3214, %v3298
        %v3329 = vadd.f32 %v3215, %v3301
        %v3330 = vadd.f32 %v3216, %v3306
        %v3331 = vadd.f32 %v3217, %v3309
        %v3332 = vadd.f32 %v3218, %v3314
        %v3333 = vadd.f32 %v3219, %v3317
        %v3334 = vadd.f32 %v3220, %v3322
        %v3335 = vadd.f32 %v3221, %v3325
        %v3337 = vshrl.u32 %v2285, 16
        %v3339 = vrot.slane %v3337, 4
        %v3340 = vshll.u32 %v2285, 16
        %v3342 = vrot.slane %v3340, 5
        %v3343 = vor.u32 %v3339, %v3342
        %v3344 = vrot.slane %v3343, 4
        %v3346 = vshll.u32 %v2286, 16
        %v3348 = vrot.slane %v3346, 5
        %v3349 = vsel %vm795, %v3344, %v3348
        %s3350 = sadd.s32 128, %s782
        %s3351 = smul.addr %s3350, 4
        %s3352 = scalar_lea.vmem %s3, %s3351
        %v3353 = vld [vmem:[%s3352] sm:$0xf]
        %v3354 = vld [vmem:[%s3352 + $0x4] sm:$0xf]
        %v3355 = vld [vmem:[%s3352 + $0x8] sm:$0xf]
        %v3356 = vld [vmem:[%s3352 + $0xc] sm:$0xf]
        %v3357 = vld [vmem:[%s3352 + $0x10] sm:$0xf]
        %v3358 = vld [vmem:[%s3352 + $0x14] sm:$0xf]
        %v3359 = vld [vmem:[%s3352 + $0x18] sm:$0xf]
        %v3360 = vld [vmem:[%s3352 + $0x1c] sm:$0xf]
        %v3361 = vunpack.c.l.b16 %v3349
        %v3362 = vpack.c.b16 %v3361, %v2978
        %v3371 = vunpack.c.l.b16 %v3353
        %v3372 = vunpack.c.l.b16 %v3354
        %v3373 = vunpack.c.l.b16 %v3355
        %v3374 = vunpack.c.l.b16 %v3356
        %v3375 = vunpack.c.l.b16 %v3357
        %v3376 = vunpack.c.l.b16 %v3358
        %v3377 = vunpack.c.l.b16 %v3359
        %v3378 = vunpack.c.l.b16 %v3360
        %v3379 = vpack.c.b16 %v3372, %v3371
        %v3380 = vpack.c.b16 %v3374, %v3373
        %v3381 = vpack.c.b16 %v3376, %v3375
        %v3382 = vpack.c.b16 %v3378, %v3377
        %v3388 = vsel %vm565, %v3362, 0
        %3390 = vmatprep.subr.bf16.mxu0 0
        %3391 = vmatpush1.bf16.msra.mxu0 0
        %3392 = vmatprep.subr.bf16.mxu0 0
        %3393 = vmatpush1.bf16.msra.mxu0 0
        %3394 = vmatprep.subr.bf16.mxu0 0
        %3395 = vmatpush1.bf16.msra.mxu0 0
        %3396 = vmatprep.subr.bf16.mxu0 0
        %3397 = vmatpush1.bf16.msra.mxu0 0
        %3398 = vmatprep.subr.bf16.mxu0 0
        %3399 = vmatpush1.bf16.msra.mxu0 %v3382
        %3400 = vmatprep.subr.bf16.mxu0 0
        %3401 = vmatpush1.bf16.msra.mxu0 %v3381
        %3402 = vmatprep.subr.bf16.mxu0 0
        %3403 = vmatpush1.bf16.msra.mxu0 %v3380
        %3404 = vmatprep.subr.bf16.mxu0 0
        %3405 = vmatpush1.bf16.msra.mxu0 %v3379
        %3406 = vmatprep.subr.bf16.mxu0 0
        %3407 = vmatpush2.bf16.msra.mxu0 0
        %3408 = vmatprep.subr.bf16.mxu0 0
        %3409 = vmatpush2.bf16.msra.mxu0 0
        %3410 = vmatprep.subr.bf16.mxu0 0
        %3411 = vmatpush2.bf16.msra.mxu0 0
        %3412 = vmatprep.subr.bf16.mxu0 0
        %3413 = vmatpush2.bf16.msra.mxu0 0
        %3414 = vmatprep.subr.bf16.mxu0 0
        %3415 = vmatpush2.bf16.msra.mxu0 0
        %3416 = vmatprep.subr.bf16.mxu0 0
        %3417 = vmatpush2.bf16.msra.mxu0 0
        %3418 = vmatprep.subr.bf16.mxu0 0
        %3419 = vmatpush2.bf16.msra.mxu0 0
        %3420 = vmatprep.subr.bf16.mxu0 0
        %3421 = vmatpush2.bf16.msra.mxu0 0
        %3422 = vmatprep.mubr.bf16.mxu0 0
        %3423 = vmatmul.mubr.bf16.gmra.mxu0 %v2461
        %v3424 = vpop.f32.mrf.mxu0
        %v3425 = vadd.f32 0.0, %v3424
        %v3426 = vpop.f32.mrf.mxu0
        %v3427 = vpop.f32.mrf.mxu0
        %v3428 = vadd.f32 0.0, %v3427
        %v3429 = vpop.f32.mrf.mxu0
        %3430 = vmatprep.mubr.bf16.mxu0 0
        %3431 = vmatmul.mubr.bf16.gmra.mxu0 %v2464
        %v3432 = vpop.f32.mrf.mxu0
        %v3433 = vadd.f32 0.0, %v3432
        %v3434 = vpop.f32.mrf.mxu0
        %v3435 = vpop.f32.mrf.mxu0
        %v3436 = vadd.f32 0.0, %v3435
        %v3437 = vpop.f32.mrf.mxu0
        %3438 = vmatprep.mubr.bf16.mxu0 0
        %3439 = vmatmul.mubr.bf16.gmra.mxu0 %v2467
        %v3440 = vpop.f32.mrf.mxu0
        %v3441 = vadd.f32 0.0, %v3440
        %v3442 = vpop.f32.mrf.mxu0
        %v3443 = vpop.f32.mrf.mxu0
        %v3444 = vadd.f32 0.0, %v3443
        %v3445 = vpop.f32.mrf.mxu0
        %3446 = vmatprep.mubr.bf16.mxu0 0
        %3447 = vmatmul.mubr.bf16.gmra.mxu0 %v3388
        %v3448 = vpop.f32.mrf.mxu0
        %v3449 = vadd.f32 0.0, %v3448
        %v3450 = vpop.f32.mrf.mxu0
        %v3451 = vpop.f32.mrf.mxu0
        %v3452 = vadd.f32 0.0, %v3451
        %v3453 = vpop.f32.mrf.mxu0
        %3454 = vdwg.mxu0
        %v3455 = vadd.f32 %v3328, %v3425
        %v3456 = vadd.f32 %v3329, %v3428
        %v3457 = vadd.f32 %v3330, %v3433
        %v3458 = vadd.f32 %v3331, %v3436
        %v3459 = vadd.f32 %v3332, %v3441
        %v3460 = vadd.f32 %v3333, %v3444
        %v3461 = vadd.f32 %v3334, %v3449
        %v3462 = vadd.f32 %v3335, %v3452
        %v3464 = vrot.slane %v2285, 5
        %v3465 = vrot.slane %v3464, 4
        %v3466 = vrot.slane %v2286, 5
        %v3467 = vsel %vm1163, %v3465, %v3466
        %s3468 = sadd.s32 136, %s782
        %s3469 = smul.addr %s3468, 4
        %s3470 = scalar_lea.vmem %s3, %s3469
        %v3471 = vld [vmem:[%s3470] sm:$0xf]
        %v3472 = vld [vmem:[%s3470 + $0x4] sm:$0xf]
        %v3473 = vld [vmem:[%s3470 + $0x8] sm:$0xf]
        %v3474 = vld [vmem:[%s3470 + $0xc] sm:$0xf]
        %v3475 = vld [vmem:[%s3470 + $0x10] sm:$0xf]
        %v3476 = vld [vmem:[%s3470 + $0x14] sm:$0xf]
        %v3477 = vld [vmem:[%s3470 + $0x18] sm:$0xf]
        %v3478 = vld [vmem:[%s3470 + $0x1c] sm:$0xf]
        %v3479 = vunpack.c.l.b16 %v3467
        %v3480 = vpack.c.b16 %v3479, %v3108
        %v3489 = vunpack.c.l.b16 %v3471
        %v3490 = vunpack.c.l.b16 %v3472
        %v3491 = vunpack.c.l.b16 %v3473
        %v3492 = vunpack.c.l.b16 %v3474
        %v3493 = vunpack.c.l.b16 %v3475
        %v3494 = vunpack.c.l.b16 %v3476
        %v3495 = vunpack.c.l.b16 %v3477
        %v3496 = vunpack.c.l.b16 %v3478
        %v3497 = vpack.c.b16 %v3490, %v3489
        %v3498 = vpack.c.b16 %v3492, %v3491
        %v3499 = vpack.c.b16 %v3494, %v3493
        %v3500 = vpack.c.b16 %v3496, %v3495
        %v3506 = vsel %vm565, %v3480, 0
        %3508 = vmatprep.subr.bf16.mxu0 0
        %3509 = vmatpush1.bf16.msra.mxu0 0
        %3510 = vmatprep.subr.bf16.mxu0 0
        %3511 = vmatpush1.bf16.msra.mxu0 0
        %3512 = vmatprep.subr.bf16.mxu0 0
        %3513 = vmatpush1.bf16.msra.mxu0 0
        %3514 = vmatprep.subr.bf16.mxu0 0
        %3515 = vmatpush1.bf16.msra.mxu0 0
        %3516 = vmatprep.subr.bf16.mxu0 0
        %3517 = vmatpush1.bf16.msra.mxu0 %v3500
        %3518 = vmatprep.subr.bf16.mxu0 0
        %3519 = vmatpush1.bf16.msra.mxu0 %v3499
        %3520 = vmatprep.subr.bf16.mxu0 0
        %3521 = vmatpush1.bf16.msra.mxu0 %v3498
        %3522 = vmatprep.subr.bf16.mxu0 0
        %3523 = vmatpush1.bf16.msra.mxu0 %v3497
        %3524 = vmatprep.subr.bf16.mxu0 0
        %3525 = vmatpush2.bf16.msra.mxu0 0
        %3526 = vmatprep.subr.bf16.mxu0 0
        %3527 = vmatpush2.bf16.msra.mxu0 0
        %3528 = vmatprep.subr.bf16.mxu0 0
        %3529 = vmatpush2.bf16.msra.mxu0 0
        %3530 = vmatprep.subr.bf16.mxu0 0
        %3531 = vmatpush2.bf16.msra.mxu0 0
        %3532 = vmatprep.subr.bf16.mxu0 0
        %3533 = vmatpush2.bf16.msra.mxu0 0
        %3534 = vmatprep.subr.bf16.mxu0 0
        %3535 = vmatpush2.bf16.msra.mxu0 0
        %3536 = vmatprep.subr.bf16.mxu0 0
        %3537 = vmatpush2.bf16.msra.mxu0 0
        %3538 = vmatprep.subr.bf16.mxu0 0
        %3539 = vmatpush2.bf16.msra.mxu0 0
        %3540 = vmatprep.mubr.bf16.mxu0 0
        %3541 = vmatmul.mubr.bf16.gmra.mxu0 %v2746
        %v3542 = vpop.f32.mrf.mxu0
        %v3543 = vadd.f32 0.0, %v3542
        %v3544 = vpop.f32.mrf.mxu0
        %v3545 = vpop.f32.mrf.mxu0
        %v3546 = vadd.f32 0.0, %v3545
        %v3547 = vpop.f32.mrf.mxu0
        %3548 = vmatprep.mubr.bf16.mxu0 0
        %3549 = vmatmul.mubr.bf16.gmra.mxu0 %v2749
        %v3550 = vpop.f32.mrf.mxu0
        %v3551 = vadd.f32 0.0, %v3550
        %v3552 = vpop.f32.mrf.mxu0
        %v3553 = vpop.f32.mrf.mxu0
        %v3554 = vadd.f32 0.0, %v3553
        %v3555 = vpop.f32.mrf.mxu0
        %3556 = vmatprep.mubr.bf16.mxu0 0
        %3557 = vmatmul.mubr.bf16.gmra.mxu0 %v2752
        %v3558 = vpop.f32.mrf.mxu0
        %v3559 = vadd.f32 0.0, %v3558
        %v3560 = vpop.f32.mrf.mxu0
        %v3561 = vpop.f32.mrf.mxu0
        %v3562 = vadd.f32 0.0, %v3561
        %v3563 = vpop.f32.mrf.mxu0
        %3564 = vmatprep.mubr.bf16.mxu0 0
        %3565 = vmatmul.mubr.bf16.gmra.mxu0 %v3506
        %v3566 = vpop.f32.mrf.mxu0
        %v3567 = vadd.f32 0.0, %v3566
        %v3568 = vpop.f32.mrf.mxu0
        %v3569 = vpop.f32.mrf.mxu0
        %v3570 = vadd.f32 0.0, %v3569
        %v3571 = vpop.f32.mrf.mxu0
        %3572 = vdwg.mxu0
        %v3573 = vadd.f32 %v3455, %v3543
        %v3574 = vadd.f32 %v3456, %v3546
        %v3575 = vadd.f32 %v3457, %v3551
        %v3576 = vadd.f32 %v3458, %v3554
        %v3577 = vadd.f32 %v3459, %v3559
        %v3578 = vadd.f32 %v3460, %v3562
        %v3579 = vadd.f32 %v3461, %v3567
        %v3580 = vadd.f32 %v3462, %v3570
        %v3582 = vlaneseq
        %v3583 = vshrl.u32 %v3582, 7
        %v3584 = vsub.s32 0, %v3583
        %v3585 = vrot.slane %v2266, %v3584
        %v3587 = vadd.f32 %v3573, %v3585
        %v3588 = vadd.f32 %v3574, %v3585
        %v3589 = vadd.f32 %v3575, %v3585
        %v3590 = vadd.f32 %v3576, %v3585
        %v3591 = vadd.f32 %v3577, %v3585
        %v3592 = vadd.f32 %v3578, %v3585
        %v3593 = vadd.f32 %v3579, %v3585
        %v3594 = vadd.f32 %v3580, %v3585
        %v3595 = vld [vmem:[#allocation4] sm:$0xff]
        %v3596 = vld [vmem:[#allocation4 + $0x8] sm:$0xff]
        %v3597 = vld [vmem:[#allocation4 + $0x10] sm:$0xff]
        %v3598 = vld [vmem:[#allocation4 + $0x18] sm:$0xff]
        %v3599 = vld [vmem:[#allocation4 + $0x20] sm:$0xff]
        %v3600 = vld [vmem:[#allocation4 + $0x28] sm:$0xff]
        %v3601 = vld [vmem:[#allocation4 + $0x30] sm:$0xff]
        %v3602 = vld [vmem:[#allocation4 + $0x38] sm:$0xff]
        %v3603 = vadd.f32 %v3595, %v3587
        %v3604 = vadd.f32 %v3596, %v3588
        %v3605 = vadd.f32 %v3597, %v3589
        %v3606 = vadd.f32 %v3598, %v3590
        %v3607 = vadd.f32 %v3599, %v3591
        %v3608 = vadd.f32 %v3600, %v3592
        %v3609 = vadd.f32 %v3601, %v3593
        %v3610 = vadd.f32 %v3602, %v3594
        %3611 = vst.msk [vmem:[#allocation4] sm:$0xff] %vm565, %v3603
        %3612 = vst.msk [vmem:[#allocation4 + $0x8] sm:$0xff] %vm565, %v3604
        %3613 = vst.msk [vmem:[#allocation4 + $0x10] sm:$0xff] %vm565, %v3605
        %3614 = vst.msk [vmem:[#allocation4 + $0x18] sm:$0xff] %vm565, %v3606
        %3615 = vst.msk [vmem:[#allocation4 + $0x20] sm:$0xff] %vm565, %v3607
        %3616 = vst.msk [vmem:[#allocation4 + $0x28] sm:$0xff] %vm565, %v3608
        %3617 = vst.msk [vmem:[#allocation4 + $0x30] sm:$0xff] %vm565, %v3609
        %3618 = vst.msk [vmem:[#allocation4 + $0x38] sm:$0xff] %vm565, %v3610
      $region61: #{_lambda_.1} parent=55 // loop_footer
        %s587 = sadd.s32 1, %s583
      $region62: #{_lambda_.1} parent=55 // loop_footer_branch
        %582 = sbr.rel target = $region58
      $region63: #{_lambda_.1} parent=55 // loop_exit
        _
      %v3619 = vld [vmem:[#allocation4] sm:$0xff]
      %v3620 = vld [vmem:[#allocation4 + $0x8] sm:$0xff]
      %v3621 = vld [vmem:[#allocation4 + $0x10] sm:$0xff]
      %v3622 = vld [vmem:[#allocation4 + $0x18] sm:$0xff]
      %v3623 = vld [vmem:[#allocation4 + $0x20] sm:$0xff]
      %v3624 = vld [vmem:[#allocation4 + $0x28] sm:$0xff]
      %v3625 = vld [vmem:[#allocation4 + $0x30] sm:$0xff]
      %v3626 = vld [vmem:[#allocation4 + $0x38] sm:$0xff]
      %v3627 = vld [vmem:[#allocation3] sm:$0xff]
      %v3628 = vld [vmem:[#allocation3 + $0x8] sm:$0xff]
      %v3629 = vld [vmem:[#allocation3 + $0x10] sm:$0xff]
      %v3630 = vld [vmem:[#allocation3 + $0x18] sm:$0xff]
      %v3631 = vld [vmem:[#allocation3 + $0x20] sm:$0xff]
      %v3632 = vld [vmem:[#allocation3 + $0x28] sm:$0xff]
      %v3633 = vld [vmem:[#allocation3 + $0x30] sm:$0xff]
      %v3634 = vld [vmem:[#allocation3 + $0x38] sm:$0xff]
      %v3635 = vadd.f32 %v3619, %v3627
      %v3636 = vadd.f32 %v3620, %v3628
      %v3637 = vadd.f32 %v3621, %v3629
      %v3638 = vadd.f32 %v3622, %v3630
      %v3639 = vadd.f32 %v3623, %v3631
      %v3640 = vadd.f32 %v3624, %v3632
      %v3641 = vadd.f32 %v3625, %v3633
      %v3642 = vadd.f32 %v3626, %v3634
      %v3643 = vpack.c.bf16 %v3635, %v3635
      %v3644 = vpack.c.bf16 %v3636, %v3636
      %v3645 = vpack.c.bf16 %v3637, %v3637
      %v3646 = vpack.c.bf16 %v3638, %v3638
      %v3647 = vpack.c.bf16 %v3639, %v3639
      %v3648 = vpack.c.bf16 %v3640, %v3640
      %v3649 = vpack.c.bf16 %v3641, %v3641
      %v3650 = vpack.c.bf16 %v3642, %v3642
      %v3659 = vunpack.c.l.b16 %v3643
      %v3660 = vunpack.c.l.b16 %v3644
      %v3661 = vunpack.c.l.b16 %v3645
      %v3662 = vunpack.c.l.b16 %v3646
      %v3663 = vunpack.c.l.b16 %v3647
      %v3664 = vunpack.c.l.b16 %v3648
      %v3665 = vunpack.c.l.b16 %v3649
      %v3666 = vunpack.c.l.b16 %v3650
      %v3667 = vpack.c.b16 %v3659, %v3659
      %v3668 = vpack.c.b16 %v3660, %v3660
      %v3669 = vpack.c.b16 %v3661, %v3661
      %v3670 = vpack.c.b16 %v3662, %v3662
      %v3671 = vpack.c.b16 %v3663, %v3663
      %v3672 = vpack.c.b16 %v3664, %v3664
      %v3673 = vpack.c.b16 %v3665, %v3665
      %v3674 = vpack.c.b16 %v3666, %v3666
      %v3676 = vshrl.u32 %v3667, 16
      %v3678 = vrot.slane %v3676, 7
      %v3679 = vshll.u32 %v3667, 16
      %v3681 = vor.u32 %v3678, %v3679
      %v3682 = vrot.slane %v3678, 4
      %v3684 = vshrl.u32 %v3668, 16
      %v3686 = vrot.slane %v3684, 7
      %v3687 = vshll.u32 %v3668, 16
      %v3689 = vor.u32 %v3686, %v3687
      %v3690 = vrot.slane %v3686, 4
      %v3692 = vshrl.u32 %v3669, 16
      %v3694 = vrot.slane %v3692, 7
      %v3695 = vshll.u32 %v3669, 16
      %v3697 = vor.u32 %v3694, %v3695
      %v3698 = vrot.slane %v3694, 4
      %v3700 = vshrl.u32 %v3670, 16
      %v3702 = vrot.slane %v3700, 7
      %v3703 = vshll.u32 %v3670, 16
      %v3705 = vor.u32 %v3702, %v3703
      %v3706 = vrot.slane %v3702, 4
      %v3708 = vshrl.u32 %v3671, 16
      %v3710 = vrot.slane %v3708, 7
      %v3711 = vshll.u32 %v3671, 16
      %v3713 = vor.u32 %v3710, %v3711
      %v3714 = vrot.slane %v3710, 4
      %v3716 = vshrl.u32 %v3672, 16
      %v3718 = vrot.slane %v3716, 7
      %v3719 = vshll.u32 %v3672, 16
      %v3721 = vor.u32 %v3718, %v3719
      %v3722 = vrot.slane %v3718, 4
      %v3724 = vshrl.u32 %v3673, 16
      %v3726 = vrot.slane %v3724, 7
      %v3727 = vshll.u32 %v3673, 16
      %v3729 = vor.u32 %v3726, %v3727
      %v3730 = vrot.slane %v3726, 4
      %v3732 = vshrl.u32 %v3674, 16
      %v3734 = vrot.slane %v3732, 7
      %v3735 = vshll.u32 %v3674, 16
      %v3737 = vor.u32 %v3734, %v3735
      %v3738 = vrot.slane %v3734, 4
      %s3755 = scalar_lea.vmem [#allocation2], 8
      %vm3756 = vcmask 519168
      %vm3757 = vmand %vm3756, %vm374
      %v3758 = vld [vmem:[%s3755] sm:$0xf]
      %v3759 = vsel %vm3757, %v3681, %v3758
      %3760 = vst [vmem:[%s3755] sm:$0xf] %v3759
      %v3761 = vld [vmem:[%s3755 + $0x4] sm:$0x1]
      %v3762 = vsel %vm343, %v3682, %v3761
      %3763 = vst [vmem:[%s3755 + $0x4] sm:$0x1] %v3762
      %v3764 = vld [vmem:[%s3755 + $0x8] sm:$0xf]
      %v3765 = vsel %vm3757, %v3689, %v3764
      %3766 = vst [vmem:[%s3755 + $0x8] sm:$0xf] %v3765
      %v3767 = vld [vmem:[%s3755 + $0xc] sm:$0x1]
      %v3768 = vsel %vm343, %v3690, %v3767
      %3769 = vst [vmem:[%s3755 + $0xc] sm:$0x1] %v3768
      %v3770 = vld [vmem:[%s3755 + $0x10] sm:$0xf]
      %v3771 = vsel %vm3757, %v3697, %v3770
      %3772 = vst [vmem:[%s3755 + $0x10] sm:$0xf] %v3771
      %v3773 = vld [vmem:[%s3755 + $0x14] sm:$0x1]
      %v3774 = vsel %vm343, %v3698, %v3773
      %3775 = vst [vmem:[%s3755 + $0x14] sm:$0x1] %v3774
      %v3776 = vld [vmem:[%s3755 + $0x18] sm:$0xf]
      %v3777 = vsel %vm3757, %v3705, %v3776
      %3778 = vst [vmem:[%s3755 + $0x18] sm:$0xf] %v3777
      %v3779 = vld [vmem:[%s3755 + $0x1c] sm:$0x1]
      %v3780 = vsel %vm343, %v3706, %v3779
      %3781 = vst [vmem:[%s3755 + $0x1c] sm:$0x1] %v3780
      %v3782 = vld [vmem:[%s3755 + $0x20] sm:$0xf]
      %v3783 = vsel %vm3757, %v3713, %v3782
      %3784 = vst [vmem:[%s3755 + $0x20] sm:$0xf] %v3783
      %v3785 = vld [vmem:[%s3755 + $0x24] sm:$0x1]
      %v3786 = vsel %vm343, %v3714, %v3785
      %3787 = vst [vmem:[%s3755 + $0x24] sm:$0x1] %v3786
      %v3788 = vld [vmem:[%s3755 + $0x28] sm:$0xf]
      %v3789 = vsel %vm3757, %v3721, %v3788
      %3790 = vst [vmem:[%s3755 + $0x28] sm:$0xf] %v3789
      %v3791 = vld [vmem:[%s3755 + $0x2c] sm:$0x1]
      %v3792 = vsel %vm343, %v3722, %v3791
      %3793 = vst [vmem:[%s3755 + $0x2c] sm:$0x1] %v3792
      %v3794 = vld [vmem:[%s3755 + $0x30] sm:$0xf]
      %v3795 = vsel %vm3757, %v3729, %v3794
      %3796 = vst [vmem:[%s3755 + $0x30] sm:$0xf] %v3795
      %v3797 = vld [vmem:[%s3755 + $0x34] sm:$0x1]
      %v3798 = vsel %vm343, %v3730, %v3797
      %3799 = vst [vmem:[%s3755 + $0x34] sm:$0x1] %v3798
      %v3800 = vld [vmem:[%s3755 + $0x38] sm:$0xf]
      %v3801 = vsel %vm3757, %v3737, %v3800
      %3802 = vst [vmem:[%s3755 + $0x38] sm:$0xf] %v3801
      %v3803 = vld [vmem:[%s3755 + $0x3c] sm:$0x1]
      %v3804 = vsel %vm343, %v3738, %v3803
      %3805 = vst [vmem:[%s3755 + $0x3c] sm:$0x1] %v3804
      %v3806 = vld [vmem:[%s6] sm:$0x1]
      %v3807 = vld [vmem:[#allocation2] sm:$0xf]
      %v3808 = vld [vmem:[#allocation2 + $0x4] sm:$0x1]
      %v3809 = vld [vmem:[#allocation2 + $0x8] sm:$0xf]
      %v3810 = vld [vmem:[#allocation2 + $0xc] sm:$0x1]
      %v3811 = vld [vmem:[#allocation2 + $0x10] sm:$0xf]
      %v3812 = vld [vmem:[#allocation2 + $0x14] sm:$0x1]
      %v3813 = vld [vmem:[#allocation2 + $0x18] sm:$0xf]
      %v3814 = vld [vmem:[#allocation2 + $0x1c] sm:$0x1]
      %v3815 = vld [vmem:[#allocation2 + $0x20] sm:$0xf]
      %v3816 = vld [vmem:[#allocation2 + $0x24] sm:$0x1]
      %v3817 = vld [vmem:[#allocation2 + $0x28] sm:$0xf]
      %v3818 = vld [vmem:[#allocation2 + $0x2c] sm:$0x1]
      %v3819 = vld [vmem:[#allocation2 + $0x30] sm:$0xf]
      %v3820 = vld [vmem:[#allocation2 + $0x34] sm:$0x1]
      %v3821 = vld [vmem:[#allocation2 + $0x38] sm:$0xf]
      %v3822 = vld [vmem:[#allocation2 + $0x3c] sm:$0x1]
      %v3823 = vld [vmem:[#allocation2 + $0x40] sm:$0xf]
      %v3824 = vld [vmem:[#allocation2 + $0x44] sm:$0x1]
      %v3825 = vld [vmem:[#allocation2 + $0x48] sm:$0xf]
      %v3826 = vld [vmem:[#allocation2 + $0x4c] sm:$0x1]
      %v3827 = vld [vmem:[%s5] sm:$0xf]
      %v3828 = vld [vmem:[%s5 + $0x4] sm:$0xf]
      %v3829 = vld [vmem:[%s5 + $0x8] sm:$0xf]
      %v3830 = vld [vmem:[%s5 + $0xc] sm:$0xf]
      %v3831 = vld [vmem:[%s5 + $0x10] sm:$0xf]
      %v3832 = vld [vmem:[%s5 + $0x14] sm:$0xf]
      %v3833 = vld [vmem:[%s5 + $0x18] sm:$0xf]
      %v3834 = vld [vmem:[%s5 + $0x1c] sm:$0xf]
      %vm3835 = vsmask.f32 3328
      %vm3836 = vsmask.f32 7440
      %vm3837 = vmor %vm3835, %vm3836
      %v3839 = vshrl.u32 %v3807, 16
      %v3841 = vrot.slane %v3839, 4
      %v3842 = vshll.u32 %v3807, 16
      %v3844 = vrot.slane %v3842, 5
      %v3845 = vor.u32 %v3841, %v3844
      %v3846 = vrot.slane %v3845, 4
      %v3848 = vshll.u32 %v3808, 16
      %v3850 = vrot.slane %v3848, 5
      %v3851 = vsel %vm3837, %v3846, %v3850
      %v3853 = vshrl.u32 %v3809, 16
      %v3855 = vrot.slane %v3853, 4
      %v3856 = vshll.u32 %v3809, 16
      %v3858 = vrot.slane %v3856, 5
      %v3859 = vor.u32 %v3855, %v3858
      %v3860 = vrot.slane %v3859, 4
      %v3862 = vshll.u32 %v3810, 16
      %v3864 = vrot.slane %v3862, 5
      %v3865 = vsel %vm3837, %v3860, %v3864
      %v3867 = vshrl.u32 %v3811, 16
      %v3869 = vrot.slane %v3867, 4
      %v3870 = vshll.u32 %v3811, 16
      %v3872 = vrot.slane %v3870, 5
      %v3873 = vor.u32 %v3869, %v3872
      %v3874 = vrot.slane %v3873, 4
      %v3876 = vshll.u32 %v3812, 16
      %v3878 = vrot.slane %v3876, 5
      %v3879 = vsel %vm3837, %v3874, %v3878
      %v3881 = vshrl.u32 %v3813, 16
      %v3883 = vrot.slane %v3881, 4
      %v3884 = vshll.u32 %v3813, 16
      %v3886 = vrot.slane %v3884, 5
      %v3887 = vor.u32 %v3883, %v3886
      %v3888 = vrot.slane %v3887, 4
      %v3890 = vshll.u32 %v3814, 16
      %v3892 = vrot.slane %v3890, 5
      %v3893 = vsel %vm3837, %v3888, %v3892
      %v3895 = vshrl.u32 %v3815, 16
      %v3897 = vrot.slane %v3895, 4
      %v3898 = vshll.u32 %v3815, 16
      %v3900 = vrot.slane %v3898, 5
      %v3901 = vor.u32 %v3897, %v3900
      %v3902 = vrot.slane %v3901, 4
      %v3904 = vshll.u32 %v3816, 16
      %v3906 = vrot.slane %v3904, 5
      %v3907 = vsel %vm3837, %v3902, %v3906
      %v3909 = vshrl.u32 %v3817, 16
      %v3911 = vrot.slane %v3909, 4
      %v3912 = vshll.u32 %v3817, 16
      %v3914 = vrot.slane %v3912, 5
      %v3915 = vor.u32 %v3911, %v3914
      %v3916 = vrot.slane %v3915, 4
      %v3918 = vshll.u32 %v3818, 16
      %v3920 = vrot.slane %v3918, 5
      %v3921 = vsel %vm3837, %v3916, %v3920
      %v3923 = vshrl.u32 %v3819, 16
      %v3925 = vrot.slane %v3923, 4
      %v3926 = vshll.u32 %v3819, 16
      %v3928 = vrot.slane %v3926, 5
      %v3929 = vor.u32 %v3925, %v3928
      %v3930 = vrot.slane %v3929, 4
      %v3932 = vshll.u32 %v3820, 16
      %v3934 = vrot.slane %v3932, 5
      %v3935 = vsel %vm3837, %v3930, %v3934
      %v3937 = vshrl.u32 %v3821, 16
      %v3939 = vrot.slane %v3937, 4
      %v3940 = vshll.u32 %v3821, 16
      %v3942 = vrot.slane %v3940, 5
      %v3943 = vor.u32 %v3939, %v3942
      %v3944 = vrot.slane %v3943, 4
      %v3946 = vshll.u32 %v3822, 16
      %v3948 = vrot.slane %v3946, 5
      %v3949 = vsel %vm3837, %v3944, %v3948
      %s3950 = scalar_lea.vmem %s5, 32
      %v3951 = vld [vmem:[%s3950] sm:$0xf]
      %v3952 = vld [vmem:[%s3950 + $0x4] sm:$0xf]
      %v3953 = vld [vmem:[%s3950 + $0x8] sm:$0xf]
      %v3954 = vld [vmem:[%s3950 + $0xc] sm:$0xf]
      %v3955 = vld [vmem:[%s3950 + $0x10] sm:$0xf]
      %v3956 = vld [vmem:[%s3950 + $0x14] sm:$0xf]
      %v3957 = vld [vmem:[%s3950 + $0x18] sm:$0xf]
      %v3958 = vld [vmem:[%s3950 + $0x1c] sm:$0xf]
      %v3959 = vunpack.c.l.b16 %v3851
      %v3960 = vunpack.c.l.b16 %v3865
      %v3961 = vunpack.c.l.b16 %v3879
      %v3962 = vunpack.c.l.b16 %v3893
      %v3963 = vunpack.c.l.b16 %v3907
      %v3964 = vunpack.c.l.b16 %v3921
      %v3965 = vunpack.c.l.b16 %v3935
      %v3966 = vunpack.c.l.b16 %v3949
      %v3967 = vpack.c.b16 %v3960, %v3959
      %v3968 = vpack.c.b16 %v3962, %v3961
      %v3969 = vpack.c.b16 %v3964, %v3963
      %v3970 = vpack.c.b16 %v3966, %v3965
      %v3979 = vunpack.c.l.b16 %v3951
      %v3980 = vunpack.c.l.b16 %v3952
      %v3981 = vunpack.c.l.b16 %v3953
      %v3982 = vunpack.c.l.b16 %v3954
      %v3983 = vunpack.c.l.b16 %v3955
      %v3984 = vunpack.c.l.b16 %v3956
      %v3985 = vunpack.c.l.b16 %v3957
      %v3986 = vunpack.c.l.b16 %v3958
      %v3987 = vpack.c.b16 %v3980, %v3979
      %v3988 = vpack.c.b16 %v3982, %v3981
      %v3989 = vpack.c.b16 %v3984, %v3983
      %v3990 = vpack.c.b16 %v3986, %v3985
      %v3996 = vsel %vm565, %v3967, 0
      %v3999 = vsel %vm565, %v3968, 0
      %v4002 = vsel %vm565, %v3969, 0
      %v4005 = vsel %vm565, %v3970, 0
      %4007 = vmatprep.subr.bf16.mxu0 0
      %4008 = vmatpush1.bf16.msra.mxu0 0
      %4009 = vmatprep.subr.bf16.mxu0 0
      %4010 = vmatpush1.bf16.msra.mxu0 0
      %4011 = vmatprep.subr.bf16.mxu0 0
      %4012 = vmatpush1.bf16.msra.mxu0 0
      %4013 = vmatprep.subr.bf16.mxu0 0
      %4014 = vmatpush1.bf16.msra.mxu0 0
      %4015 = vmatprep.subr.bf16.mxu0 0
      %4016 = vmatpush1.bf16.msra.mxu0 %v3990
      %4017 = vmatprep.subr.bf16.mxu0 0
      %4018 = vmatpush1.bf16.msra.mxu0 %v3989
      %4019 = vmatprep.subr.bf16.mxu0 0
      %4020 = vmatpush1.bf16.msra.mxu0 %v3988
      %4021 = vmatprep.subr.bf16.mxu0 0
      %4022 = vmatpush1.bf16.msra.mxu0 %v3987
      %4023 = vmatprep.subr.bf16.mxu0 0
      %4024 = vmatpush2.bf16.msra.mxu0 0
      %4025 = vmatprep.subr.bf16.mxu0 0
      %4026 = vmatpush2.bf16.msra.mxu0 0
      %4027 = vmatprep.subr.bf16.mxu0 0
      %4028 = vmatpush2.bf16.msra.mxu0 0
      %4029 = vmatprep.subr.bf16.mxu0 0
      %4030 = vmatpush2.bf16.msra.mxu0 0
      %4031 = vmatprep.subr.bf16.mxu0 0
      %4032 = vmatpush2.bf16.msra.mxu0 0
      %4033 = vmatprep.subr.bf16.mxu0 0
      %4034 = vmatpush2.bf16.msra.mxu0 0
      %4035 = vmatprep.subr.bf16.mxu0 0
      %4036 = vmatpush2.bf16.msra.mxu0 0
      %4037 = vmatprep.subr.bf16.mxu0 0
      %4038 = vmatpush2.bf16.msra.mxu0 0
      %4039 = vmatprep.mubr.bf16.mxu0 0
      %4040 = vmatmul.mubr.bf16.gmra.mxu0 %v3996
      %v4041 = vpop.f32.mrf.mxu0
      %v4042 = vadd.f32 0.0, %v4041
      %v4043 = vpop.f32.mrf.mxu0
      %v4044 = vpop.f32.mrf.mxu0
      %v4045 = vadd.f32 0.0, %v4044
      %v4046 = vpop.f32.mrf.mxu0
      %4047 = vmatprep.mubr.bf16.mxu0 0
      %4048 = vmatmul.mubr.bf16.gmra.mxu0 %v3999
      %v4049 = vpop.f32.mrf.mxu0
      %v4050 = vadd.f32 0.0, %v4049
      %v4051 = vpop.f32.mrf.mxu0
      %v4052 = vpop.f32.mrf.mxu0
      %v4053 = vadd.f32 0.0, %v4052
      %v4054 = vpop.f32.mrf.mxu0
      %4055 = vmatprep.mubr.bf16.mxu0 0
      %4056 = vmatmul.mubr.bf16.gmra.mxu0 %v4002
      %v4057 = vpop.f32.mrf.mxu0
      %v4058 = vadd.f32 0.0, %v4057
      %v4059 = vpop.f32.mrf.mxu0
      %v4060 = vpop.f32.mrf.mxu0
      %v4061 = vadd.f32 0.0, %v4060
      %v4062 = vpop.f32.mrf.mxu0
      %4063 = vmatprep.mubr.bf16.mxu0 0
      %4064 = vmatmul.mubr.bf16.gmra.mxu0 %v4005
      %v4065 = vpop.f32.mrf.mxu0
      %v4066 = vadd.f32 0.0, %v4065
      %v4067 = vpop.f32.mrf.mxu0
      %v4068 = vpop.f32.mrf.mxu0
      %v4069 = vadd.f32 0.0, %v4068
      %v4070 = vpop.f32.mrf.mxu0
      %4071 = vdwg.mxu0
      %v4080 = vunpack.c.l.b16 %v3807
      %v4081 = vunpack.c.l.b16 %v3809
      %v4082 = vunpack.c.l.b16 %v3811
      %v4083 = vunpack.c.l.b16 %v3813
      %v4084 = vunpack.c.l.b16 %v3815
      %v4085 = vunpack.c.l.b16 %v3817
      %v4086 = vunpack.c.l.b16 %v3819
      %v4087 = vunpack.c.l.b16 %v3821
      %v4088 = vpack.c.b16 %v4081, %v4080
      %v4089 = vpack.c.b16 %v4083, %v4082
      %v4090 = vpack.c.b16 %v4085, %v4084
      %v4091 = vpack.c.b16 %v4087, %v4086
      %v4100 = vunpack.c.l.b16 %v3827
      %v4101 = vunpack.c.l.b16 %v3828
      %v4102 = vunpack.c.l.b16 %v3829
      %v4103 = vunpack.c.l.b16 %v3830
      %v4104 = vunpack.c.l.b16 %v3831
      %v4105 = vunpack.c.l.b16 %v3832
      %v4106 = vunpack.c.l.b16 %v3833
      %v4107 = vunpack.c.l.b16 %v3834
      %v4108 = vpack.c.b16 %v4101, %v4100
      %v4109 = vpack.c.b16 %v4103, %v4102
      %v4110 = vpack.c.b16 %v4105, %v4104
      %v4111 = vpack.c.b16 %v4107, %v4106
      %v4117 = vsel %vm565, %v4088, 0
      %v4120 = vsel %vm565, %v4089, 0
      %v4123 = vsel %vm565, %v4090, 0
      %v4126 = vsel %vm565, %v4091, 0
      %4128 = vmatprep.subr.bf16.mxu0 0
      %4129 = vmatpush1.bf16.msra.mxu0 0
      %4130 = vmatprep.subr.bf16.mxu0 0
      %4131 = vmatpush1.bf16.msra.mxu0 0
      %4132 = vmatprep.subr.bf16.mxu0 0
      %4133 = vmatpush1.bf16.msra.mxu0 0
      %4134 = vmatprep.subr.bf16.mxu0 0
      %4135 = vmatpush1.bf16.msra.mxu0 0
      %4136 = vmatprep.subr.bf16.mxu0 0
      %4137 = vmatpush1.bf16.msra.mxu0 %v4111
      %4138 = vmatprep.subr.bf16.mxu0 0
      %4139 = vmatpush1.bf16.msra.mxu0 %v4110
      %4140 = vmatprep.subr.bf16.mxu0 0
      %4141 = vmatpush1.bf16.msra.mxu0 %v4109
      %4142 = vmatprep.subr.bf16.mxu0 0
      %4143 = vmatpush1.bf16.msra.mxu0 %v4108
      %4144 = vmatprep.subr.bf16.mxu0 0
      %4145 = vmatpush2.bf16.msra.mxu0 0
      %4146 = vmatprep.subr.bf16.mxu0 0
      %4147 = vmatpush2.bf16.msra.mxu0 0
      %4148 = vmatprep.subr.bf16.mxu0 0
      %4149 = vmatpush2.bf16.msra.mxu0 0
      %4150 = vmatprep.subr.bf16.mxu0 0
      %4151 = vmatpush2.bf16.msra.mxu0 0
      %4152 = vmatprep.subr.bf16.mxu0 0
      %4153 = vmatpush2.bf16.msra.mxu0 0
      %4154 = vmatprep.subr.bf16.mxu0 0
      %4155 = vmatpush2.bf16.msra.mxu0 0
      %4156 = vmatprep.subr.bf16.mxu0 0
      %4157 = vmatpush2.bf16.msra.mxu0 0
      %4158 = vmatprep.subr.bf16.mxu0 0
      %4159 = vmatpush2.bf16.msra.mxu0 0
      %4160 = vmatprep.mubr.bf16.mxu0 0
      %4161 = vmatmul.mubr.bf16.gmra.mxu0 %v4117
      %v4162 = vpop.f32.mrf.mxu0
      %v4163 = vadd.f32 %v4042, %v4162
      %v4164 = vpop.f32.mrf.mxu0
      %v4165 = vpop.f32.mrf.mxu0
      %v4166 = vadd.f32 %v4045, %v4165
      %v4167 = vpop.f32.mrf.mxu0
      %4168 = vmatprep.mubr.bf16.mxu0 0
      %4169 = vmatmul.mubr.bf16.gmra.mxu0 %v4120
      %v4170 = vpop.f32.mrf.mxu0
      %v4171 = vadd.f32 %v4050, %v4170
      %v4172 = vpop.f32.mrf.mxu0
      %v4173 = vpop.f32.mrf.mxu0
      %v4174 = vadd.f32 %v4053, %v4173
      %v4175 = vpop.f32.mrf.mxu0
      %4176 = vmatprep.mubr.bf16.mxu0 0
      %4177 = vmatmul.mubr.bf16.gmra.mxu0 %v4123
      %v4178 = vpop.f32.mrf.mxu0
      %v4179 = vadd.f32 %v4058, %v4178
      %v4180 = vpop.f32.mrf.mxu0
      %v4181 = vpop.f32.mrf.mxu0
      %v4182 = vadd.f32 %v4061, %v4181
      %v4183 = vpop.f32.mrf.mxu0
      %4184 = vmatprep.mubr.bf16.mxu0 0
      %4185 = vmatmul.mubr.bf16.gmra.mxu0 %v4126
      %v4186 = vpop.f32.mrf.mxu0
      %v4187 = vadd.f32 %v4066, %v4186
      %v4188 = vpop.f32.mrf.mxu0
      %v4189 = vpop.f32.mrf.mxu0
      %v4190 = vadd.f32 %v4069, %v4189
      %v4191 = vpop.f32.mrf.mxu0
      %4192 = vdwg.mxu0
      %vm4201 = vcmask 1042432
      %vm4202 = vcmask 1046532
      %vm4203 = vmor %vm4201, %vm4202
      %v4204 = vrot.slane %v3807, 5
      %v4205 = vrot.slane %v4204, 4
      %v4206 = vrot.slane %v3808, 5
      %v4207 = vsel %vm4203, %v4205, %v4206
      %v4208 = vrot.slane %v3809, 5
      %v4209 = vrot.slane %v4208, 4
      %v4210 = vrot.slane %v3810, 5
      %v4211 = vsel %vm4203, %v4209, %v4210
      %v4212 = vrot.slane %v3811, 5
      %v4213 = vrot.slane %v4212, 4
      %v4214 = vrot.slane %v3812, 5
      %v4215 = vsel %vm4203, %v4213, %v4214
      %v4216 = vrot.slane %v3813, 5
      %v4217 = vrot.slane %v4216, 4
      %v4218 = vrot.slane %v3814, 5
      %v4219 = vsel %vm4203, %v4217, %v4218
      %v4220 = vrot.slane %v3815, 5
      %v4221 = vrot.slane %v4220, 4
      %v4222 = vrot.slane %v3816, 5
      %v4223 = vsel %vm4203, %v4221, %v4222
      %v4224 = vrot.slane %v3817, 5
      %v4225 = vrot.slane %v4224, 4
      %v4226 = vrot.slane %v3818, 5
      %v4227 = vsel %vm4203, %v4225, %v4226
      %v4228 = vrot.slane %v3819, 5
      %v4229 = vrot.slane %v4228, 4
      %v4230 = vrot.slane %v3820, 5
      %v4231 = vsel %vm4203, %v4229, %v4230
      %v4232 = vrot.slane %v3821, 5
      %v4233 = vrot.slane %v4232, 4
      %v4234 = vrot.slane %v3822, 5
      %v4235 = vsel %vm4203, %v4233, %v4234
      %s4236 = scalar_lea.vmem %s5, 64
      %v4237 = vld [vmem:[%s4236] sm:$0xf]
      %v4238 = vld [vmem:[%s4236 + $0x4] sm:$0xf]
      %v4239 = vld [vmem:[%s4236 + $0x8] sm:$0xf]
      %v4240 = vld [vmem:[%s4236 + $0xc] sm:$0xf]
      %v4241 = vld [vmem:[%s4236 + $0x10] sm:$0xf]
      %v4242 = vld [vmem:[%s4236 + $0x14] sm:$0xf]
      %v4243 = vld [vmem:[%s4236 + $0x18] sm:$0xf]
      %v4244 = vld [vmem:[%s4236 + $0x1c] sm:$0xf]
      %v4245 = vunpack.c.l.b16 %v4207
      %v4246 = vunpack.c.l.b16 %v4211
      %v4247 = vunpack.c.l.b16 %v4215
      %v4248 = vunpack.c.l.b16 %v4219
      %v4249 = vunpack.c.l.b16 %v4223
      %v4250 = vunpack.c.l.b16 %v4227
      %v4251 = vunpack.c.l.b16 %v4231
      %v4252 = vunpack.c.l.b16 %v4235
      %v4253 = vpack.c.b16 %v4246, %v4245
      %v4254 = vpack.c.b16 %v4248, %v4247
      %v4255 = vpack.c.b16 %v4250, %v4249
      %v4256 = vpack.c.b16 %v4252, %v4251
      %v4265 = vunpack.c.l.b16 %v4237
      %v4266 = vunpack.c.l.b16 %v4238
      %v4267 = vunpack.c.l.b16 %v4239
      %v4268 = vunpack.c.l.b16 %v4240
      %v4269 = vunpack.c.l.b16 %v4241
      %v4270 = vunpack.c.l.b16 %v4242
      %v4271 = vunpack.c.l.b16 %v4243
      %v4272 = vunpack.c.l.b16 %v4244
      %v4273 = vpack.c.b16 %v4266, %v4265
      %v4274 = vpack.c.b16 %v4268, %v4267
      %v4275 = vpack.c.b16 %v4270, %v4269
      %v4276 = vpack.c.b16 %v4272, %v4271
      %v4282 = vsel %vm565, %v4253, 0
      %v4285 = vsel %vm565, %v4254, 0
      %v4288 = vsel %vm565, %v4255, 0
      %v4291 = vsel %vm565, %v4256, 0
      %4293 = vmatprep.subr.bf16.mxu0 0
      %4294 = vmatpush1.bf16.msra.mxu0 0
      %4295 = vmatprep.subr.bf16.mxu0 0
      %4296 = vmatpush1.bf16.msra.mxu0 0
      %4297 = vmatprep.subr.bf16.mxu0 0
      %4298 = vmatpush1.bf16.msra.mxu0 0
      %4299 = vmatprep.subr.bf16.mxu0 0
      %4300 = vmatpush1.bf16.msra.mxu0 0
      %4301 = vmatprep.subr.bf16.mxu0 0
      %4302 = vmatpush1.bf16.msra.mxu0 %v4276
      %4303 = vmatprep.subr.bf16.mxu0 0
      %4304 = vmatpush1.bf16.msra.mxu0 %v4275
      %4305 = vmatprep.subr.bf16.mxu0 0
      %4306 = vmatpush1.bf16.msra.mxu0 %v4274
      %4307 = vmatprep.subr.bf16.mxu0 0
      %4308 = vmatpush1.bf16.msra.mxu0 %v4273
      %4309 = vmatprep.subr.bf16.mxu0 0
      %4310 = vmatpush2.bf16.msra.mxu0 0
      %4311 = vmatprep.subr.bf16.mxu0 0
      %4312 = vmatpush2.bf16.msra.mxu0 0
      %4313 = vmatprep.subr.bf16.mxu0 0
      %4314 = vmatpush2.bf16.msra.mxu0 0
      %4315 = vmatprep.subr.bf16.mxu0 0
      %4316 = vmatpush2.bf16.msra.mxu0 0
      %4317 = vmatprep.subr.bf16.mxu0 0
      %4318 = vmatpush2.bf16.msra.mxu0 0
      %4319 = vmatprep.subr.bf16.mxu0 0
      %4320 = vmatpush2.bf16.msra.mxu0 0
      %4321 = vmatprep.subr.bf16.mxu0 0
      %4322 = vmatpush2.bf16.msra.mxu0 0
      %4323 = vmatprep.subr.bf16.mxu0 0
      %4324 = vmatpush2.bf16.msra.mxu0 0
      %4325 = vmatprep.mubr.bf16.mxu0 0
      %4326 = vmatmul.mubr.bf16.gmra.mxu0 %v4282
      %v4327 = vpop.f32.mrf.mxu0
      %v4328 = vadd.f32 0.0, %v4327
      %v4329 = vpop.f32.mrf.mxu0
      %v4330 = vpop.f32.mrf.mxu0
      %v4331 = vadd.f32 0.0, %v4330
      %v4332 = vpop.f32.mrf.mxu0
      %4333 = vmatprep.mubr.bf16.mxu0 0
      %4334 = vmatmul.mubr.bf16.gmra.mxu0 %v4285
      %v4335 = vpop.f32.mrf.mxu0
      %v4336 = vadd.f32 0.0, %v4335
      %v4337 = vpop.f32.mrf.mxu0
      %v4338 = vpop.f32.mrf.mxu0
      %v4339 = vadd.f32 0.0, %v4338
      %v4340 = vpop.f32.mrf.mxu0
      %4341 = vmatprep.mubr.bf16.mxu0 0
      %4342 = vmatmul.mubr.bf16.gmra.mxu0 %v4288
      %v4343 = vpop.f32.mrf.mxu0
      %v4344 = vadd.f32 0.0, %v4343
      %v4345 = vpop.f32.mrf.mxu0
      %v4346 = vpop.f32.mrf.mxu0
      %v4347 = vadd.f32 0.0, %v4346
      %v4348 = vpop.f32.mrf.mxu0
      %4349 = vmatprep.mubr.bf16.mxu0 0
      %4350 = vmatmul.mubr.bf16.gmra.mxu0 %v4291
      %v4351 = vpop.f32.mrf.mxu0
      %v4352 = vadd.f32 0.0, %v4351
      %v4353 = vpop.f32.mrf.mxu0
      %v4354 = vpop.f32.mrf.mxu0
      %v4355 = vadd.f32 0.0, %v4354
      %v4356 = vpop.f32.mrf.mxu0
      %4357 = vdwg.mxu0
      %v4358 = vadd.f32 %v4163, %v4328
      %v4359 = vadd.f32 %v4166, %v4331
      %v4360 = vadd.f32 %v4171, %v4336
      %v4361 = vadd.f32 %v4174, %v4339
      %v4362 = vadd.f32 %v4179, %v4344
      %v4363 = vadd.f32 %v4182, %v4347
      %v4364 = vadd.f32 %v4187, %v4352
      %v4365 = vadd.f32 %v4190, %v4355
      %s4366 = scalar_lea.vmem %s5, 96
      %v4367 = vld [vmem:[%s4366] sm:$0xf]
      %v4368 = vld [vmem:[%s4366 + $0x4] sm:$0xf]
      %v4369 = vld [vmem:[%s4366 + $0x8] sm:$0xf]
      %v4370 = vld [vmem:[%s4366 + $0xc] sm:$0xf]
      %v4371 = vld [vmem:[%s4366 + $0x10] sm:$0xf]
      %v4372 = vld [vmem:[%s4366 + $0x14] sm:$0xf]
      %v4373 = vld [vmem:[%s4366 + $0x18] sm:$0xf]
      %v4374 = vld [vmem:[%s4366 + $0x1c] sm:$0xf]
      %v4376 = vunpack.c.l.b16 %v3823
      %v4377 = vpack.c.b16 %v4082, %v4081
      %v4378 = vpack.c.b16 %v4084, %v4083
      %v4379 = vpack.c.b16 %v4086, %v4085
      %v4380 = vpack.c.b16 %v4376, %v4087
      %v4389 = vunpack.c.l.b16 %v4367
      %v4390 = vunpack.c.l.b16 %v4368
      %v4391 = vunpack.c.l.b16 %v4369
      %v4392 = vunpack.c.l.b16 %v4370
      %v4393 = vunpack.c.l.b16 %v4371
      %v4394 = vunpack.c.l.b16 %v4372
      %v4395 = vunpack.c.l.b16 %v4373
      %v4396 = vunpack.c.l.b16 %v4374
      %v4397 = vpack.c.b16 %v4390, %v4389
      %v4398 = vpack.c.b16 %v4392, %v4391
      %v4399 = vpack.c.b16 %v4394, %v4393
      %v4400 = vpack.c.b16 %v4396, %v4395
      %v4406 = vsel %vm565, %v4377, 0
      %v4409 = vsel %vm565, %v4378, 0
      %v4412 = vsel %vm565, %v4379, 0
      %v4415 = vsel %vm565, %v4380, 0
      %4417 = vmatprep.subr.bf16.mxu0 0
      %4418 = vmatpush1.bf16.msra.mxu0 0
      %4419 = vmatprep.subr.bf16.mxu0 0
      %4420 = vmatpush1.bf16.msra.mxu0 0
      %4421 = vmatprep.subr.bf16.mxu0 0
      %4422 = vmatpush1.bf16.msra.mxu0 0
      %4423 = vmatprep.subr.bf16.mxu0 0
      %4424 = vmatpush1.bf16.msra.mxu0 0
      %4425 = vmatprep.subr.bf16.mxu0 0
      %4426 = vmatpush1.bf16.msra.mxu0 %v4400
      %4427 = vmatprep.subr.bf16.mxu0 0
      %4428 = vmatpush1.bf16.msra.mxu0 %v4399
      %4429 = vmatprep.subr.bf16.mxu0 0
      %4430 = vmatpush1.bf16.msra.mxu0 %v4398
      %4431 = vmatprep.subr.bf16.mxu0 0
      %4432 = vmatpush1.bf16.msra.mxu0 %v4397
      %4433 = vmatprep.subr.bf16.mxu0 0
      %4434 = vmatpush2.bf16.msra.mxu0 0
      %4435 = vmatprep.subr.bf16.mxu0 0
      %4436 = vmatpush2.bf16.msra.mxu0 0
      %4437 = vmatprep.subr.bf16.mxu0 0
      %4438 = vmatpush2.bf16.msra.mxu0 0
      %4439 = vmatprep.subr.bf16.mxu0 0
      %4440 = vmatpush2.bf16.msra.mxu0 0
      %4441 = vmatprep.subr.bf16.mxu0 0
      %4442 = vmatpush2.bf16.msra.mxu0 0
      %4443 = vmatprep.subr.bf16.mxu0 0
      %4444 = vmatpush2.bf16.msra.mxu0 0
      %4445 = vmatprep.subr.bf16.mxu0 0
      %4446 = vmatpush2.bf16.msra.mxu0 0
      %4447 = vmatprep.subr.bf16.mxu0 0
      %4448 = vmatpush2.bf16.msra.mxu0 0
      %4449 = vmatprep.mubr.bf16.mxu0 0
      %4450 = vmatmul.mubr.bf16.gmra.mxu0 %v4406
      %v4451 = vpop.f32.mrf.mxu0
      %v4452 = vadd.f32 0.0, %v4451
      %v4453 = vpop.f32.mrf.mxu0
      %v4454 = vpop.f32.mrf.mxu0
      %v4455 = vadd.f32 0.0, %v4454
      %v4456 = vpop.f32.mrf.mxu0
      %4457 = vmatprep.mubr.bf16.mxu0 0
      %4458 = vmatmul.mubr.bf16.gmra.mxu0 %v4409
      %v4459 = vpop.f32.mrf.mxu0
      %v4460 = vadd.f32 0.0, %v4459
      %v4461 = vpop.f32.mrf.mxu0
      %v4462 = vpop.f32.mrf.mxu0
      %v4463 = vadd.f32 0.0, %v4462
      %v4464 = vpop.f32.mrf.mxu0
      %4465 = vmatprep.mubr.bf16.mxu0 0
      %4466 = vmatmul.mubr.bf16.gmra.mxu0 %v4412
      %v4467 = vpop.f32.mrf.mxu0
      %v4468 = vadd.f32 0.0, %v4467
      %v4469 = vpop.f32.mrf.mxu0
      %v4470 = vpop.f32.mrf.mxu0
      %v4471 = vadd.f32 0.0, %v4470
      %v4472 = vpop.f32.mrf.mxu0
      %4473 = vmatprep.mubr.bf16.mxu0 0
      %4474 = vmatmul.mubr.bf16.gmra.mxu0 %v4415
      %v4475 = vpop.f32.mrf.mxu0
      %v4476 = vadd.f32 0.0, %v4475
      %v4477 = vpop.f32.mrf.mxu0
      %v4478 = vpop.f32.mrf.mxu0
      %v4479 = vadd.f32 0.0, %v4478
      %v4480 = vpop.f32.mrf.mxu0
      %4481 = vdwg.mxu0
      %v4482 = vadd.f32 %v4358, %v4452
      %v4483 = vadd.f32 %v4359, %v4455
      %v4484 = vadd.f32 %v4360, %v4460
      %v4485 = vadd.f32 %v4361, %v4463
      %v4486 = vadd.f32 %v4362, %v4468
      %v4487 = vadd.f32 %v4363, %v4471
      %v4488 = vadd.f32 %v4364, %v4476
      %v4489 = vadd.f32 %v4365, %v4479
      %v4491 = vshrl.u32 %v3823, 16
      %v4493 = vrot.slane %v4491, 4
      %v4494 = vshll.u32 %v3823, 16
      %v4496 = vrot.slane %v4494, 5
      %v4497 = vor.u32 %v4493, %v4496
      %v4498 = vrot.slane %v4497, 4
      %v4500 = vshll.u32 %v3824, 16
      %v4502 = vrot.slane %v4500, 5
      %v4503 = vsel %vm3837, %v4498, %v4502
      %s4504 = scalar_lea.vmem %s5, 128
      %v4505 = vld [vmem:[%s4504] sm:$0xf]
      %v4506 = vld [vmem:[%s4504 + $0x4] sm:$0xf]
      %v4507 = vld [vmem:[%s4504 + $0x8] sm:$0xf]
      %v4508 = vld [vmem:[%s4504 + $0xc] sm:$0xf]
      %v4509 = vld [vmem:[%s4504 + $0x10] sm:$0xf]
      %v4510 = vld [vmem:[%s4504 + $0x14] sm:$0xf]
      %v4511 = vld [vmem:[%s4504 + $0x18] sm:$0xf]
      %v4512 = vld [vmem:[%s4504 + $0x1c] sm:$0xf]
      %v4513 = vunpack.c.l.b16 %v4503
      %v4514 = vpack.c.b16 %v3961, %v3960
      %v4515 = vpack.c.b16 %v3963, %v3962
      %v4516 = vpack.c.b16 %v3965, %v3964
      %v4517 = vpack.c.b16 %v4513, %v3966
      %v4526 = vunpack.c.l.b16 %v4505
      %v4527 = vunpack.c.l.b16 %v4506
      %v4528 = vunpack.c.l.b16 %v4507
      %v4529 = vunpack.c.l.b16 %v4508
      %v4530 = vunpack.c.l.b16 %v4509
      %v4531 = vunpack.c.l.b16 %v4510
      %v4532 = vunpack.c.l.b16 %v4511
      %v4533 = vunpack.c.l.b16 %v4512
      %v4534 = vpack.c.b16 %v4527, %v4526
      %v4535 = vpack.c.b16 %v4529, %v4528
      %v4536 = vpack.c.b16 %v4531, %v4530
      %v4537 = vpack.c.b16 %v4533, %v4532
      %v4543 = vsel %vm565, %v4514, 0
      %v4546 = vsel %vm565, %v4515, 0
      %v4549 = vsel %vm565, %v4516, 0
      %v4552 = vsel %vm565, %v4517, 0
      %4554 = vmatprep.subr.bf16.mxu0 0
      %4555 = vmatpush1.bf16.msra.mxu0 0
      %4556 = vmatprep.subr.bf16.mxu0 0
      %4557 = vmatpush1.bf16.msra.mxu0 0
      %4558 = vmatprep.subr.bf16.mxu0 0
      %4559 = vmatpush1.bf16.msra.mxu0 0
      %4560 = vmatprep.subr.bf16.mxu0 0
      %4561 = vmatpush1.bf16.msra.mxu0 0
      %4562 = vmatprep.subr.bf16.mxu0 0
      %4563 = vmatpush1.bf16.msra.mxu0 %v4537
      %4564 = vmatprep.subr.bf16.mxu0 0
      %4565 = vmatpush1.bf16.msra.mxu0 %v4536
      %4566 = vmatprep.subr.bf16.mxu0 0
      %4567 = vmatpush1.bf16.msra.mxu0 %v4535
      %4568 = vmatprep.subr.bf16.mxu0 0
      %4569 = vmatpush1.bf16.msra.mxu0 %v4534
      %4570 = vmatprep.subr.bf16.mxu0 0
      %4571 = vmatpush2.bf16.msra.mxu0 0
      %4572 = vmatprep.subr.bf16.mxu0 0
      %4573 = vmatpush2.bf16.msra.mxu0 0
      %4574 = vmatprep.subr.bf16.mxu0 0
      %4575 = vmatpush2.bf16.msra.mxu0 0
      %4576 = vmatprep.subr.bf16.mxu0 0
      %4577 = vmatpush2.bf16.msra.mxu0 0
      %4578 = vmatprep.subr.bf16.mxu0 0
      %4579 = vmatpush2.bf16.msra.mxu0 0
      %4580 = vmatprep.subr.bf16.mxu0 0
      %4581 = vmatpush2.bf16.msra.mxu0 0
      %4582 = vmatprep.subr.bf16.mxu0 0
      %4583 = vmatpush2.bf16.msra.mxu0 0
      %4584 = vmatprep.subr.bf16.mxu0 0
      %4585 = vmatpush2.bf16.msra.mxu0 0
      %4586 = vmatprep.mubr.bf16.mxu0 0
      %4587 = vmatmul.mubr.bf16.gmra.mxu0 %v4543
      %v4588 = vpop.f32.mrf.mxu0
      %v4589 = vadd.f32 0.0, %v4588
      %v4590 = vpop.f32.mrf.mxu0
      %v4591 = vpop.f32.mrf.mxu0
      %v4592 = vadd.f32 0.0, %v4591
      %v4593 = vpop.f32.mrf.mxu0
      %4594 = vmatprep.mubr.bf16.mxu0 0
      %4595 = vmatmul.mubr.bf16.gmra.mxu0 %v4546
      %v4596 = vpop.f32.mrf.mxu0
      %v4597 = vadd.f32 0.0, %v4596
      %v4598 = vpop.f32.mrf.mxu0
      %v4599 = vpop.f32.mrf.mxu0
      %v4600 = vadd.f32 0.0, %v4599
      %v4601 = vpop.f32.mrf.mxu0
      %4602 = vmatprep.mubr.bf16.mxu0 0
      %4603 = vmatmul.mubr.bf16.gmra.mxu0 %v4549
      %v4604 = vpop.f32.mrf.mxu0
      %v4605 = vadd.f32 0.0, %v4604
      %v4606 = vpop.f32.mrf.mxu0
      %v4607 = vpop.f32.mrf.mxu0
      %v4608 = vadd.f32 0.0, %v4607
      %v4609 = vpop.f32.mrf.mxu0
      %4610 = vmatprep.mubr.bf16.mxu0 0
      %4611 = vmatmul.mubr.bf16.gmra.mxu0 %v4552
      %v4612 = vpop.f32.mrf.mxu0
      %v4613 = vadd.f32 0.0, %v4612
      %v4614 = vpop.f32.mrf.mxu0
      %v4615 = vpop.f32.mrf.mxu0
      %v4616 = vadd.f32 0.0, %v4615
      %v4617 = vpop.f32.mrf.mxu0
      %4618 = vdwg.mxu0
      %v4619 = vadd.f32 %v4482, %v4589
      %v4620 = vadd.f32 %v4483, %v4592
      %v4621 = vadd.f32 %v4484, %v4597
      %v4622 = vadd.f32 %v4485, %v4600
      %v4623 = vadd.f32 %v4486, %v4605
      %v4624 = vadd.f32 %v4487, %v4608
      %v4625 = vadd.f32 %v4488, %v4613
      %v4626 = vadd.f32 %v4489, %v4616
      %v4628 = vrot.slane %v3823, 5
      %v4629 = vrot.slane %v4628, 4
      %v4630 = vrot.slane %v3824, 5
      %v4631 = vsel %vm4203, %v4629, %v4630
      %s4632 = scalar_lea.vmem %s5, 160
      %v4633 = vld [vmem:[%s4632] sm:$0xf]
      %v4634 = vld [vmem:[%s4632 + $0x4] sm:$0xf]
      %v4635 = vld [vmem:[%s4632 + $0x8] sm:$0xf]
      %v4636 = vld [vmem:[%s4632 + $0xc] sm:$0xf]
      %v4637 = vld [vmem:[%s4632 + $0x10] sm:$0xf]
      %v4638 = vld [vmem:[%s4632 + $0x14] sm:$0xf]
      %v4639 = vld [vmem:[%s4632 + $0x18] sm:$0xf]
      %v4640 = vld [vmem:[%s4632 + $0x1c] sm:$0xf]
      %v4641 = vunpack.c.l.b16 %v4631
      %v4642 = vpack.c.b16 %v4247, %v4246
      %v4643 = vpack.c.b16 %v4249, %v4248
      %v4644 = vpack.c.b16 %v4251, %v4250
      %v4645 = vpack.c.b16 %v4641, %v4252
      %v4654 = vunpack.c.l.b16 %v4633
      %v4655 = vunpack.c.l.b16 %v4634
      %v4656 = vunpack.c.l.b16 %v4635
      %v4657 = vunpack.c.l.b16 %v4636
      %v4658 = vunpack.c.l.b16 %v4637
      %v4659 = vunpack.c.l.b16 %v4638
      %v4660 = vunpack.c.l.b16 %v4639
      %v4661 = vunpack.c.l.b16 %v4640
      %v4662 = vpack.c.b16 %v4655, %v4654
      %v4663 = vpack.c.b16 %v4657, %v4656
      %v4664 = vpack.c.b16 %v4659, %v4658
      %v4665 = vpack.c.b16 %v4661, %v4660
      %v4671 = vsel %vm565, %v4642, 0
      %v4674 = vsel %vm565, %v4643, 0
      %v4677 = vsel %vm565, %v4644, 0
      %v4680 = vsel %vm565, %v4645, 0
      %4682 = vmatprep.subr.bf16.mxu0 0
      %4683 = vmatpush1.bf16.msra.mxu0 0
      %4684 = vmatprep.subr.bf16.mxu0 0
      %4685 = vmatpush1.bf16.msra.mxu0 0
      %4686 = vmatprep.subr.bf16.mxu0 0
      %4687 = vmatpush1.bf16.msra.mxu0 0
      %4688 = vmatprep.subr.bf16.mxu0 0
      %4689 = vmatpush1.bf16.msra.mxu0 0
      %4690 = vmatprep.subr.bf16.mxu0 0
      %4691 = vmatpush1.bf16.msra.mxu0 %v4665
      %4692 = vmatprep.subr.bf16.mxu0 0
      %4693 = vmatpush1.bf16.msra.mxu0 %v4664
      %4694 = vmatprep.subr.bf16.mxu0 0
      %4695 = vmatpush1.bf16.msra.mxu0 %v4663
      %4696 = vmatprep.subr.bf16.mxu0 0
      %4697 = vmatpush1.bf16.msra.mxu0 %v4662
      %4698 = vmatprep.subr.bf16.mxu0 0
      %4699 = vmatpush2.bf16.msra.mxu0 0
      %4700 = vmatprep.subr.bf16.mxu0 0
      %4701 = vmatpush2.bf16.msra.mxu0 0
      %4702 = vmatprep.subr.bf16.mxu0 0
      %4703 = vmatpush2.bf16.msra.mxu0 0
      %4704 = vmatprep.subr.bf16.mxu0 0
      %4705 = vmatpush2.bf16.msra.mxu0 0
      %4706 = vmatprep.subr.bf16.mxu0 0
      %4707 = vmatpush2.bf16.msra.mxu0 0
      %4708 = vmatprep.subr.bf16.mxu0 0
      %4709 = vmatpush2.bf16.msra.mxu0 0
      %4710 = vmatprep.subr.bf16.mxu0 0
      %4711 = vmatpush2.bf16.msra.mxu0 0
      %4712 = vmatprep.subr.bf16.mxu0 0
      %4713 = vmatpush2.bf16.msra.mxu0 0
      %4714 = vmatprep.mubr.bf16.mxu0 0
      %4715 = vmatmul.mubr.bf16.gmra.mxu0 %v4671
      %v4716 = vpop.f32.mrf.mxu0
      %v4717 = vadd.f32 0.0, %v4716
      %v4718 = vpop.f32.mrf.mxu0
      %v4719 = vpop.f32.mrf.mxu0
      %v4720 = vadd.f32 0.0, %v4719
      %v4721 = vpop.f32.mrf.mxu0
      %4722 = vmatprep.mubr.bf16.mxu0 0
      %4723 = vmatmul.mubr.bf16.gmra.mxu0 %v4674
      %v4724 = vpop.f32.mrf.mxu0
      %v4725 = vadd.f32 0.0, %v4724
      %v4726 = vpop.f32.mrf.mxu0
      %v4727 = vpop.f32.mrf.mxu0
      %v4728 = vadd.f32 0.0, %v4727
      %v4729 = vpop.f32.mrf.mxu0
      %4730 = vmatprep.mubr.bf16.mxu0 0
      %4731 = vmatmul.mubr.bf16.gmra.mxu0 %v4677
      %v4732 = vpop.f32.mrf.mxu0
      %v4733 = vadd.f32 0.0, %v4732
      %v4734 = vpop.f32.mrf.mxu0
      %v4735 = vpop.f32.mrf.mxu0
      %v4736 = vadd.f32 0.0, %v4735
      %v4737 = vpop.f32.mrf.mxu0
      %4738 = vmatprep.mubr.bf16.mxu0 0
      %4739 = vmatmul.mubr.bf16.gmra.mxu0 %v4680
      %v4740 = vpop.f32.mrf.mxu0
      %v4741 = vadd.f32 0.0, %v4740
      %v4742 = vpop.f32.mrf.mxu0
      %v4743 = vpop.f32.mrf.mxu0
      %v4744 = vadd.f32 0.0, %v4743
      %v4745 = vpop.f32.mrf.mxu0
      %4746 = vdwg.mxu0
      %v4747 = vadd.f32 %v4619, %v4717
      %v4748 = vadd.f32 %v4620, %v4720
      %v4749 = vadd.f32 %v4621, %v4725
      %v4750 = vadd.f32 %v4622, %v4728
      %v4751 = vadd.f32 %v4623, %v4733
      %v4752 = vadd.f32 %v4624, %v4736
      %v4753 = vadd.f32 %v4625, %v4741
      %v4754 = vadd.f32 %v4626, %v4744
      %s4755 = scalar_lea.vmem %s5, 192
      %v4756 = vld [vmem:[%s4755] sm:$0xf]
      %v4757 = vld [vmem:[%s4755 + $0x4] sm:$0xf]
      %v4758 = vld [vmem:[%s4755 + $0x8] sm:$0xf]
      %v4759 = vld [vmem:[%s4755 + $0xc] sm:$0xf]
      %v4760 = vld [vmem:[%s4755 + $0x10] sm:$0xf]
      %v4761 = vld [vmem:[%s4755 + $0x14] sm:$0xf]
      %v4762 = vld [vmem:[%s4755 + $0x18] sm:$0xf]
      %v4763 = vld [vmem:[%s4755 + $0x1c] sm:$0xf]
      %v4765 = vunpack.c.l.b16 %v3825
      %v4766 = vpack.c.b16 %v4765, %v4376
      %v4775 = vunpack.c.l.b16 %v4756
      %v4776 = vunpack.c.l.b16 %v4757
      %v4777 = vunpack.c.l.b16 %v4758
      %v4778 = vunpack.c.l.b16 %v4759
      %v4779 = vunpack.c.l.b16 %v4760
      %v4780 = vunpack.c.l.b16 %v4761
      %v4781 = vunpack.c.l.b16 %v4762
      %v4782 = vunpack.c.l.b16 %v4763
      %v4783 = vpack.c.b16 %v4776, %v4775
      %v4784 = vpack.c.b16 %v4778, %v4777
      %v4785 = vpack.c.b16 %v4780, %v4779
      %v4786 = vpack.c.b16 %v4782, %v4781
      %v4792 = vsel %vm565, %v4766, 0
      %4794 = vmatprep.subr.bf16.mxu0 0
      %4795 = vmatpush1.bf16.msra.mxu0 0
      %4796 = vmatprep.subr.bf16.mxu0 0
      %4797 = vmatpush1.bf16.msra.mxu0 0
      %4798 = vmatprep.subr.bf16.mxu0 0
      %4799 = vmatpush1.bf16.msra.mxu0 0
      %4800 = vmatprep.subr.bf16.mxu0 0
      %4801 = vmatpush1.bf16.msra.mxu0 0
      %4802 = vmatprep.subr.bf16.mxu0 0
      %4803 = vmatpush1.bf16.msra.mxu0 %v4786
      %4804 = vmatprep.subr.bf16.mxu0 0
      %4805 = vmatpush1.bf16.msra.mxu0 %v4785
      %4806 = vmatprep.subr.bf16.mxu0 0
      %4807 = vmatpush1.bf16.msra.mxu0 %v4784
      %4808 = vmatprep.subr.bf16.mxu0 0
      %4809 = vmatpush1.bf16.msra.mxu0 %v4783
      %4810 = vmatprep.subr.bf16.mxu0 0
      %4811 = vmatpush2.bf16.msra.mxu0 0
      %4812 = vmatprep.subr.bf16.mxu0 0
      %4813 = vmatpush2.bf16.msra.mxu0 0
      %4814 = vmatprep.subr.bf16.mxu0 0
      %4815 = vmatpush2.bf16.msra.mxu0 0
      %4816 = vmatprep.subr.bf16.mxu0 0
      %4817 = vmatpush2.bf16.msra.mxu0 0
      %4818 = vmatprep.subr.bf16.mxu0 0
      %4819 = vmatpush2.bf16.msra.mxu0 0
      %4820 = vmatprep.subr.bf16.mxu0 0
      %4821 = vmatpush2.bf16.msra.mxu0 0
      %4822 = vmatprep.subr.bf16.mxu0 0
      %4823 = vmatpush2.bf16.msra.mxu0 0
      %4824 = vmatprep.subr.bf16.mxu0 0
      %4825 = vmatpush2.bf16.msra.mxu0 0
      %4826 = vmatprep.mubr.bf16.mxu0 0
      %4827 = vmatmul.mubr.bf16.gmra.mxu0 %v4120
      %v4828 = vpop.f32.mrf.mxu0
      %v4829 = vadd.f32 0.0, %v4828
      %v4830 = vpop.f32.mrf.mxu0
      %v4831 = vpop.f32.mrf.mxu0
      %v4832 = vadd.f32 0.0, %v4831
      %v4833 = vpop.f32.mrf.mxu0
      %4834 = vmatprep.mubr.bf16.mxu0 0
      %4835 = vmatmul.mubr.bf16.gmra.mxu0 %v4123
      %v4836 = vpop.f32.mrf.mxu0
      %v4837 = vadd.f32 0.0, %v4836
      %v4838 = vpop.f32.mrf.mxu0
      %v4839 = vpop.f32.mrf.mxu0
      %v4840 = vadd.f32 0.0, %v4839
      %v4841 = vpop.f32.mrf.mxu0
      %4842 = vmatprep.mubr.bf16.mxu0 0
      %4843 = vmatmul.mubr.bf16.gmra.mxu0 %v4126
      %v4844 = vpop.f32.mrf.mxu0
      %v4845 = vadd.f32 0.0, %v4844
      %v4846 = vpop.f32.mrf.mxu0
      %v4847 = vpop.f32.mrf.mxu0
      %v4848 = vadd.f32 0.0, %v4847
      %v4849 = vpop.f32.mrf.mxu0
      %4850 = vmatprep.mubr.bf16.mxu0 0
      %4851 = vmatmul.mubr.bf16.gmra.mxu0 %v4792
      %v4852 = vpop.f32.mrf.mxu0
      %v4853 = vadd.f32 0.0, %v4852
      %v4854 = vpop.f32.mrf.mxu0
      %v4855 = vpop.f32.mrf.mxu0
      %v4856 = vadd.f32 0.0, %v4855
      %v4857 = vpop.f32.mrf.mxu0
      %4858 = vdwg.mxu0
      %v4859 = vadd.f32 %v4747, %v4829
      %v4860 = vadd.f32 %v4748, %v4832
      %v4861 = vadd.f32 %v4749, %v4837
      %v4862 = vadd.f32 %v4750, %v4840
      %v4863 = vadd.f32 %v4751, %v4845
      %v4864 = vadd.f32 %v4752, %v4848
      %v4865 = vadd.f32 %v4753, %v4853
      %v4866 = vadd.f32 %v4754, %v4856
      %v4868 = vshrl.u32 %v3825, 16
      %v4870 = vrot.slane %v4868, 4
      %v4871 = vshll.u32 %v3825, 16
      %v4873 = vrot.slane %v4871, 5
      %v4874 = vor.u32 %v4870, %v4873
      %v4875 = vrot.slane %v4874, 4
      %v4877 = vshll.u32 %v3826, 16
      %v4879 = vrot.slane %v4877, 5
      %v4880 = vsel %vm3837, %v4875, %v4879
      %s4881 = scalar_lea.vmem %s5, 224
      %v4882 = vld [vmem:[%s4881] sm:$0xf]
      %v4883 = vld [vmem:[%s4881 + $0x4] sm:$0xf]
      %v4884 = vld [vmem:[%s4881 + $0x8] sm:$0xf]
      %v4885 = vld [vmem:[%s4881 + $0xc] sm:$0xf]
      %v4886 = vld [vmem:[%s4881 + $0x10] sm:$0xf]
      %v4887 = vld [vmem:[%s4881 + $0x14] sm:$0xf]
      %v4888 = vld [vmem:[%s4881 + $0x18] sm:$0xf]
      %v4889 = vld [vmem:[%s4881 + $0x1c] sm:$0xf]
      %v4890 = vunpack.c.l.b16 %v4880
      %v4891 = vpack.c.b16 %v4890, %v4513
      %v4900 = vunpack.c.l.b16 %v4882
      %v4901 = vunpack.c.l.b16 %v4883
      %v4902 = vunpack.c.l.b16 %v4884
      %v4903 = vunpack.c.l.b16 %v4885
      %v4904 = vunpack.c.l.b16 %v4886
      %v4905 = vunpack.c.l.b16 %v4887
      %v4906 = vunpack.c.l.b16 %v4888
      %v4907 = vunpack.c.l.b16 %v4889
      %v4908 = vpack.c.b16 %v4901, %v4900
      %v4909 = vpack.c.b16 %v4903, %v4902
      %v4910 = vpack.c.b16 %v4905, %v4904
      %v4911 = vpack.c.b16 %v4907, %v4906
      %v4917 = vsel %vm565, %v4891, 0
      %4919 = vmatprep.subr.bf16.mxu0 0
      %4920 = vmatpush1.bf16.msra.mxu0 0
      %4921 = vmatprep.subr.bf16.mxu0 0
      %4922 = vmatpush1.bf16.msra.mxu0 0
      %4923 = vmatprep.subr.bf16.mxu0 0
      %4924 = vmatpush1.bf16.msra.mxu0 0
      %4925 = vmatprep.subr.bf16.mxu0 0
      %4926 = vmatpush1.bf16.msra.mxu0 0
      %4927 = vmatprep.subr.bf16.mxu0 0
      %4928 = vmatpush1.bf16.msra.mxu0 %v4911
      %4929 = vmatprep.subr.bf16.mxu0 0
      %4930 = vmatpush1.bf16.msra.mxu0 %v4910
      %4931 = vmatprep.subr.bf16.mxu0 0
      %4932 = vmatpush1.bf16.msra.mxu0 %v4909
      %4933 = vmatprep.subr.bf16.mxu0 0
      %4934 = vmatpush1.bf16.msra.mxu0 %v4908
      %4935 = vmatprep.subr.bf16.mxu0 0
      %4936 = vmatpush2.bf16.msra.mxu0 0
      %4937 = vmatprep.subr.bf16.mxu0 0
      %4938 = vmatpush2.bf16.msra.mxu0 0
      %4939 = vmatprep.subr.bf16.mxu0 0
      %4940 = vmatpush2.bf16.msra.mxu0 0
      %4941 = vmatprep.subr.bf16.mxu0 0
      %4942 = vmatpush2.bf16.msra.mxu0 0
      %4943 = vmatprep.subr.bf16.mxu0 0
      %4944 = vmatpush2.bf16.msra.mxu0 0
      %4945 = vmatprep.subr.bf16.mxu0 0
      %4946 = vmatpush2.bf16.msra.mxu0 0
      %4947 = vmatprep.subr.bf16.mxu0 0
      %4948 = vmatpush2.bf16.msra.mxu0 0
      %4949 = vmatprep.subr.bf16.mxu0 0
      %4950 = vmatpush2.bf16.msra.mxu0 0
      %4951 = vmatprep.mubr.bf16.mxu0 0
      %4952 = vmatmul.mubr.bf16.gmra.mxu0 %v3999
      %v4953 = vpop.f32.mrf.mxu0
      %v4954 = vadd.f32 0.0, %v4953
      %v4955 = vpop.f32.mrf.mxu0
      %v4956 = vpop.f32.mrf.mxu0
      %v4957 = vadd.f32 0.0, %v4956
      %v4958 = vpop.f32.mrf.mxu0
      %4959 = vmatprep.mubr.bf16.mxu0 0
      %4960 = vmatmul.mubr.bf16.gmra.mxu0 %v4002
      %v4961 = vpop.f32.mrf.mxu0
      %v4962 = vadd.f32 0.0, %v4961
      %v4963 = vpop.f32.mrf.mxu0
      %v4964 = vpop.f32.mrf.mxu0
      %v4965 = vadd.f32 0.0, %v4964
      %v4966 = vpop.f32.mrf.mxu0
      %4967 = vmatprep.mubr.bf16.mxu0 0
      %4968 = vmatmul.mubr.bf16.gmra.mxu0 %v4005
      %v4969 = vpop.f32.mrf.mxu0
      %v4970 = vadd.f32 0.0, %v4969
      %v4971 = vpop.f32.mrf.mxu0
      %v4972 = vpop.f32.mrf.mxu0
      %v4973 = vadd.f32 0.0, %v4972
      %v4974 = vpop.f32.mrf.mxu0
      %4975 = vmatprep.mubr.bf16.mxu0 0
      %4976 = vmatmul.mubr.bf16.gmra.mxu0 %v4917
      %v4977 = vpop.f32.mrf.mxu0
      %v4978 = vadd.f32 0.0, %v4977
      %v4979 = vpop.f32.mrf.mxu0
      %v4980 = vpop.f32.mrf.mxu0
      %v4981 = vadd.f32 0.0, %v4980
      %v4982 = vpop.f32.mrf.mxu0
      %4983 = vdwg.mxu0
      %v4984 = vadd.f32 %v4859, %v4954
      %v4985 = vadd.f32 %v4860, %v4957
      %v4986 = vadd.f32 %v4861, %v4962
      %v4987 = vadd.f32 %v4862, %v4965
      %v4988 = vadd.f32 %v4863, %v4970
      %v4989 = vadd.f32 %v4864, %v4973
      %v4990 = vadd.f32 %v4865, %v4978
      %v4991 = vadd.f32 %v4866, %v4981
      %v4993 = vrot.slane %v3825, 5
      %v4994 = vrot.slane %v4993, 4
      %v4995 = vrot.slane %v3826, 5
      %v4996 = vsel %vm4203, %v4994, %v4995
      %s4997 = scalar_lea.vmem %s5, 256
      %v4998 = vld [vmem:[%s4997] sm:$0xf]
      %v4999 = vld [vmem:[%s4997 + $0x4] sm:$0xf]
      %v5000 = vld [vmem:[%s4997 + $0x8] sm:$0xf]
      %v5001 = vld [vmem:[%s4997 + $0xc] sm:$0xf]
      %v5002 = vld [vmem:[%s4997 + $0x10] sm:$0xf]
      %v5003 = vld [vmem:[%s4997 + $0x14] sm:$0xf]
      %v5004 = vld [vmem:[%s4997 + $0x18] sm:$0xf]
      %v5005 = vld [vmem:[%s4997 + $0x1c] sm:$0xf]
      %v5006 = vunpack.c.l.b16 %v4996
      %v5007 = vpack.c.b16 %v5006, %v4641
      %v5016 = vunpack.c.l.b16 %v4998
      %v5017 = vunpack.c.l.b16 %v4999
      %v5018 = vunpack.c.l.b16 %v5000
      %v5019 = vunpack.c.l.b16 %v5001
      %v5020 = vunpack.c.l.b16 %v5002
      %v5021 = vunpack.c.l.b16 %v5003
      %v5022 = vunpack.c.l.b16 %v5004
      %v5023 = vunpack.c.l.b16 %v5005
      %v5024 = vpack.c.b16 %v5017, %v5016
      %v5025 = vpack.c.b16 %v5019, %v5018
      %v5026 = vpack.c.b16 %v5021, %v5020
      %v5027 = vpack.c.b16 %v5023, %v5022
      %v5033 = vsel %vm565, %v5007, 0
      %5035 = vmatprep.subr.bf16.mxu0 0
      %5036 = vmatpush1.bf16.msra.mxu0 0
      %5037 = vmatprep.subr.bf16.mxu0 0
      %5038 = vmatpush1.bf16.msra.mxu0 0
      %5039 = vmatprep.subr.bf16.mxu0 0
      %5040 = vmatpush1.bf16.msra.mxu0 0
      %5041 = vmatprep.subr.bf16.mxu0 0
      %5042 = vmatpush1.bf16.msra.mxu0 0
      %5043 = vmatprep.subr.bf16.mxu0 0
      %5044 = vmatpush1.bf16.msra.mxu0 %v5027
      %5045 = vmatprep.subr.bf16.mxu0 0
      %5046 = vmatpush1.bf16.msra.mxu0 %v5026
      %5047 = vmatprep.subr.bf16.mxu0 0
      %5048 = vmatpush1.bf16.msra.mxu0 %v5025
      %5049 = vmatprep.subr.bf16.mxu0 0
      %5050 = vmatpush1.bf16.msra.mxu0 %v5024
      %5051 = vmatprep.subr.bf16.mxu0 0
      %5052 = vmatpush2.bf16.msra.mxu0 0
      %5053 = vmatprep.subr.bf16.mxu0 0
      %5054 = vmatpush2.bf16.msra.mxu0 0
      %5055 = vmatprep.subr.bf16.mxu0 0
      %5056 = vmatpush2.bf16.msra.mxu0 0
      %5057 = vmatprep.subr.bf16.mxu0 0
      %5058 = vmatpush2.bf16.msra.mxu0 0
      %5059 = vmatprep.subr.bf16.mxu0 0
      %5060 = vmatpush2.bf16.msra.mxu0 0
      %5061 = vmatprep.subr.bf16.mxu0 0
      %5062 = vmatpush2.bf16.msra.mxu0 0
      %5063 = vmatprep.subr.bf16.mxu0 0
      %5064 = vmatpush2.bf16.msra.mxu0 0
      %5065 = vmatprep.subr.bf16.mxu0 0
      %5066 = vmatpush2.bf16.msra.mxu0 0
      %5067 = vmatprep.mubr.bf16.mxu0 0
      %5068 = vmatmul.mubr.bf16.gmra.mxu0 %v4285
      %v5069 = vpop.f32.mrf.mxu0
      %v5070 = vadd.f32 0.0, %v5069
      %v5071 = vpop.f32.mrf.mxu0
      %v5072 = vpop.f32.mrf.mxu0
      %v5073 = vadd.f32 0.0, %v5072
      %v5074 = vpop.f32.mrf.mxu0
      %5075 = vmatprep.mubr.bf16.mxu0 0
      %5076 = vmatmul.mubr.bf16.gmra.mxu0 %v4288
      %v5077 = vpop.f32.mrf.mxu0
      %v5078 = vadd.f32 0.0, %v5077
      %v5079 = vpop.f32.mrf.mxu0
      %v5080 = vpop.f32.mrf.mxu0
      %v5081 = vadd.f32 0.0, %v5080
      %v5082 = vpop.f32.mrf.mxu0
      %5083 = vmatprep.mubr.bf16.mxu0 0
      %5084 = vmatmul.mubr.bf16.gmra.mxu0 %v4291
      %v5085 = vpop.f32.mrf.mxu0
      %v5086 = vadd.f32 0.0, %v5085
      %v5087 = vpop.f32.mrf.mxu0
      %v5088 = vpop.f32.mrf.mxu0
      %v5089 = vadd.f32 0.0, %v5088
      %v5090 = vpop.f32.mrf.mxu0
      %5091 = vmatprep.mubr.bf16.mxu0 0
      %5092 = vmatmul.mubr.bf16.gmra.mxu0 %v5033
      %v5093 = vpop.f32.mrf.mxu0
      %v5094 = vadd.f32 0.0, %v5093
      %v5095 = vpop.f32.mrf.mxu0
      %v5096 = vpop.f32.mrf.mxu0
      %v5097 = vadd.f32 0.0, %v5096
      %v5098 = vpop.f32.mrf.mxu0
      %5099 = vdwg.mxu0
      %v5100 = vadd.f32 %v4984, %v5070
      %v5101 = vadd.f32 %v4985, %v5073
      %v5102 = vadd.f32 %v4986, %v5078
      %v5103 = vadd.f32 %v4987, %v5081
      %v5104 = vadd.f32 %v4988, %v5086
      %v5105 = vadd.f32 %v4989, %v5089
      %v5106 = vadd.f32 %v4990, %v5094
      %v5107 = vadd.f32 %v4991, %v5097
      %v5109 = vlaneseq
      %v5110 = vshrl.u32 %v5109, 7
      %v5111 = vsub.s32 0, %v5110
      %v5112 = vrot.slane %v3806, %v5111
      %v5114 = vadd.f32 %v5100, %v5112
      %v5115 = vadd.f32 %v5101, %v5112
      %v5116 = vadd.f32 %v5102, %v5112
      %v5117 = vadd.f32 %v5103, %v5112
      %v5118 = vadd.f32 %v5104, %v5112
      %v5119 = vadd.f32 %v5105, %v5112
      %v5120 = vadd.f32 %v5106, %v5112
      %v5121 = vadd.f32 %v5107, %v5112
      %vm5122 = vcmp.ge.f32.partialorder %v5114, 0.0
      %vm5123 = vcmp.ge.f32.partialorder %v5115, 0.0
      %vm5124 = vcmp.ge.f32.partialorder %v5116, 0.0
      %vm5125 = vcmp.ge.f32.partialorder %v5117, 0.0
      %vm5126 = vcmp.ge.f32.partialorder %v5118, 0.0
      %vm5127 = vcmp.ge.f32.partialorder %v5119, 0.0
      %vm5128 = vcmp.ge.f32.partialorder %v5120, 0.0
      %vm5129 = vcmp.ge.f32.partialorder %v5121, 0.0
      %v5130 = vmul.f32 %v5114, 0.1
      %v5131 = vmul.f32 %v5115, 0.1
      %v5132 = vmul.f32 %v5116, 0.1
      %v5133 = vmul.f32 %v5117, 0.1
      %v5134 = vmul.f32 %v5118, 0.1
      %v5135 = vmul.f32 %v5119, 0.1
      %v5136 = vmul.f32 %v5120, 0.1
      %v5137 = vmul.f32 %v5121, 0.1
      %v5138 = vsel %vm5122, %v5114, %v5130
      %v5139 = vsel %vm5123, %v5115, %v5131
      %v5140 = vsel %vm5124, %v5116, %v5132
      %v5141 = vsel %vm5125, %v5117, %v5133
      %v5142 = vsel %vm5126, %v5118, %v5134
      %v5143 = vsel %vm5127, %v5119, %v5135
      %v5144 = vsel %vm5128, %v5120, %v5136
      %v5145 = vsel %vm5129, %v5121, %v5137
      %v5146 = vpack.c.bf16 %v5138, %v5138
      %v5147 = vpack.c.bf16 %v5139, %v5139
      %v5148 = vpack.c.bf16 %v5140, %v5140
      %v5149 = vpack.c.bf16 %v5141, %v5141
      %v5150 = vpack.c.bf16 %v5142, %v5142
      %v5151 = vpack.c.bf16 %v5143, %v5143
      %v5152 = vpack.c.bf16 %v5144, %v5144
      %v5153 = vpack.c.bf16 %v5145, %v5145
      %v5162 = vunpack.c.l.b16 %v5146
      %v5163 = vunpack.c.l.b16 %v5147
      %v5164 = vunpack.c.l.b16 %v5148
      %v5165 = vunpack.c.l.b16 %v5149
      %v5166 = vunpack.c.l.b16 %v5150
      %v5167 = vunpack.c.l.b16 %v5151
      %v5168 = vunpack.c.l.b16 %v5152
      %v5169 = vunpack.c.l.b16 %v5153
      %v5170 = vpack.c.b16 %v5162, %v5162
      %v5171 = vpack.c.b16 %v5163, %v5163
      %v5172 = vpack.c.b16 %v5164, %v5164
      %v5173 = vpack.c.b16 %v5165, %v5165
      %v5174 = vpack.c.b16 %v5166, %v5166
      %v5175 = vpack.c.b16 %v5167, %v5167
      %v5176 = vpack.c.b16 %v5168, %v5168
      %v5177 = vpack.c.b16 %v5169, %v5169
      %v5179 = vshrl.u32 %v5170, 16
      %v5181 = vrot.slane %v5179, 7
      %v5182 = vshll.u32 %v5170, 16
      %v5184 = vor.u32 %v5181, %v5182
      %v5185 = vrot.slane %v5181, 4
      %v5187 = vshrl.u32 %v5171, 16
      %v5189 = vrot.slane %v5187, 7
      %v5190 = vshll.u32 %v5171, 16
      %v5192 = vor.u32 %v5189, %v5190
      %v5193 = vrot.slane %v5189, 4
      %v5195 = vshrl.u32 %v5172, 16
      %v5197 = vrot.slane %v5195, 7
      %v5198 = vshll.u32 %v5172, 16
      %v5200 = vor.u32 %v5197, %v5198
      %v5201 = vrot.slane %v5197, 4
      %v5203 = vshrl.u32 %v5173, 16
      %v5205 = vrot.slane %v5203, 7
      %v5206 = vshll.u32 %v5173, 16
      %v5208 = vor.u32 %v5205, %v5206
      %v5209 = vrot.slane %v5205, 4
      %v5211 = vshrl.u32 %v5174, 16
      %v5213 = vrot.slane %v5211, 7
      %v5214 = vshll.u32 %v5174, 16
      %v5216 = vor.u32 %v5213, %v5214
      %v5217 = vrot.slane %v5213, 4
      %v5219 = vshrl.u32 %v5175, 16
      %v5221 = vrot.slane %v5219, 7
      %v5222 = vshll.u32 %v5175, 16
      %v5224 = vor.u32 %v5221, %v5222
      %v5225 = vrot.slane %v5221, 4
      %v5227 = vshrl.u32 %v5176, 16
      %v5229 = vrot.slane %v5227, 7
      %v5230 = vshll.u32 %v5176, 16
      %v5232 = vor.u32 %v5229, %v5230
      %v5233 = vrot.slane %v5229, 4
      %v5235 = vshrl.u32 %v5177, 16
      %v5237 = vrot.slane %v5235, 7
      %v5238 = vshll.u32 %v5177, 16
      %v5240 = vor.u32 %v5237, %v5238
      %v5241 = vrot.slane %v5237, 4
      %v5258 = vld [vmem:[%s3755] sm:$0xf]
      %v5259 = vsel %vm3757, %v5184, %v5258
      %5260 = vst [vmem:[%s3755] sm:$0xf] %v5259
      %v5261 = vld [vmem:[%s3755 + $0x4] sm:$0x1]
      %v5262 = vsel %vm343, %v5185, %v5261
      %5263 = vst [vmem:[%s3755 + $0x4] sm:$0x1] %v5262
      %v5264 = vld [vmem:[%s3755 + $0x8] sm:$0xf]
      %v5265 = vsel %vm3757, %v5192, %v5264
      %5266 = vst [vmem:[%s3755 + $0x8] sm:$0xf] %v5265
      %v5267 = vld [vmem:[%s3755 + $0xc] sm:$0x1]
      %v5268 = vsel %vm343, %v5193, %v5267
      %5269 = vst [vmem:[%s3755 + $0xc] sm:$0x1] %v5268
      %v5270 = vld [vmem:[%s3755 + $0x10] sm:$0xf]
      %v5271 = vsel %vm3757, %v5200, %v5270
      %5272 = vst [vmem:[%s3755 + $0x10] sm:$0xf] %v5271
      %v5273 = vld [vmem:[%s3755 + $0x14] sm:$0x1]
      %v5274 = vsel %vm343, %v5201, %v5273
      %5275 = vst [vmem:[%s3755 + $0x14] sm:$0x1] %v5274
      %v5276 = vld [vmem:[%s3755 + $0x18] sm:$0xf]
      %v5277 = vsel %vm3757, %v5208, %v5276
      %5278 = vst [vmem:[%s3755 + $0x18] sm:$0xf] %v5277
      %v5279 = vld [vmem:[%s3755 + $0x1c] sm:$0x1]
      %v5280 = vsel %vm343, %v5209, %v5279
      %5281 = vst [vmem:[%s3755 + $0x1c] sm:$0x1] %v5280
      %v5282 = vld [vmem:[%s3755 + $0x20] sm:$0xf]
      %v5283 = vsel %vm3757, %v5216, %v5282
      %5284 = vst [vmem:[%s3755 + $0x20] sm:$0xf] %v5283
      %v5285 = vld [vmem:[%s3755 + $0x24] sm:$0x1]
      %v5286 = vsel %vm343, %v5217, %v5285
      %5287 = vst [vmem:[%s3755 + $0x24] sm:$0x1] %v5286
      %v5288 = vld [vmem:[%s3755 + $0x28] sm:$0xf]
      %v5289 = vsel %vm3757, %v5224, %v5288
      %5290 = vst [vmem:[%s3755 + $0x28] sm:$0xf] %v5289
      %v5291 = vld [vmem:[%s3755 + $0x2c] sm:$0x1]
      %v5292 = vsel %vm343, %v5225, %v5291
      %5293 = vst [vmem:[%s3755 + $0x2c] sm:$0x1] %v5292
      %v5294 = vld [vmem:[%s3755 + $0x30] sm:$0xf]
      %v5295 = vsel %vm3757, %v5232, %v5294
      %5296 = vst [vmem:[%s3755 + $0x30] sm:$0xf] %v5295
      %v5297 = vld [vmem:[%s3755 + $0x34] sm:$0x1]
      %v5298 = vsel %vm343, %v5233, %v5297
      %5299 = vst [vmem:[%s3755 + $0x34] sm:$0x1] %v5298
      %v5300 = vld [vmem:[%s3755 + $0x38] sm:$0xf]
      %v5301 = vsel %vm3757, %v5240, %v5300
      %5302 = vst [vmem:[%s3755 + $0x38] sm:$0xf] %v5301
      %v5303 = vld [vmem:[%s3755 + $0x3c] sm:$0x1]
      %v5304 = vsel %vm343, %v5241, %v5303
      %5305 = vst [vmem:[%s3755 + $0x3c] sm:$0x1] %v5304
      %v5306 = vld [vmem:[#allocation2] sm:$0xf]
      %v5307 = vld [vmem:[#allocation2 + $0x4] sm:$0x1]
      %v5308 = vld [vmem:[#allocation2 + $0x8] sm:$0xf]
      %v5309 = vld [vmem:[#allocation2 + $0xc] sm:$0x1]
      %v5310 = vld [vmem:[#allocation2 + $0x10] sm:$0xf]
      %v5311 = vld [vmem:[#allocation2 + $0x14] sm:$0x1]
      %v5312 = vld [vmem:[#allocation2 + $0x18] sm:$0xf]
      %v5313 = vld [vmem:[#allocation2 + $0x1c] sm:$0x1]
      %v5314 = vld [vmem:[#allocation2 + $0x20] sm:$0xf]
      %v5315 = vld [vmem:[#allocation2 + $0x24] sm:$0x1]
      %v5316 = vld [vmem:[#allocation2 + $0x28] sm:$0xf]
      %v5317 = vld [vmem:[#allocation2 + $0x2c] sm:$0x1]
      %v5318 = vld [vmem:[#allocation2 + $0x30] sm:$0xf]
      %v5319 = vld [vmem:[#allocation2 + $0x34] sm:$0x1]
      %v5320 = vld [vmem:[#allocation2 + $0x38] sm:$0xf]
      %v5321 = vld [vmem:[#allocation2 + $0x3c] sm:$0x1]
      %v5322 = vld [vmem:[#allocation2 + $0x40] sm:$0xf]
      %v5323 = vld [vmem:[#allocation2 + $0x44] sm:$0x1]
      %v5324 = vld [vmem:[%s7] sm:$0xf]
      %v5325 = vld [vmem:[%s7 + $0x4] sm:$0xf]
      %v5326 = vld [vmem:[%s7 + $0x8] sm:$0xf]
      %v5327 = vld [vmem:[%s7 + $0xc] sm:$0xf]
      %v5328 = vld [vmem:[%s7 + $0x10] sm:$0xf]
      %v5329 = vld [vmem:[%s7 + $0x14] sm:$0xf]
      %v5330 = vld [vmem:[%s7 + $0x18] sm:$0xf]
      %v5331 = vld [vmem:[%s7 + $0x1c] sm:$0xf]
      %v5333 = vshrl.u32 %v5306, 16
      %v5335 = vrot.slane %v5333, 4
      %v5336 = vshll.u32 %v5306, 16
      %v5338 = vrot.slane %v5336, 5
      %v5339 = vor.u32 %v5335, %v5338
      %v5340 = vrot.slane %v5339, 4
      %v5342 = vshll.u32 %v5307, 16
      %v5344 = vrot.slane %v5342, 5
      %v5345 = vsel %vm3837, %v5340, %v5344
      %v5347 = vshrl.u32 %v5310, 16
      %v5349 = vrot.slane %v5347, 4
      %v5350 = vshll.u32 %v5310, 16
      %v5352 = vrot.slane %v5350, 5
      %v5353 = vor.u32 %v5349, %v5352
      %v5354 = vrot.slane %v5353, 4
      %v5356 = vshll.u32 %v5311, 16
      %v5358 = vrot.slane %v5356, 5
      %v5359 = vsel %vm3837, %v5354, %v5358
      %v5361 = vshrl.u32 %v5314, 16
      %v5363 = vrot.slane %v5361, 4
      %v5364 = vshll.u32 %v5314, 16
      %v5366 = vrot.slane %v5364, 5
      %v5367 = vor.u32 %v5363, %v5366
      %v5368 = vrot.slane %v5367, 4
      %v5370 = vshll.u32 %v5315, 16
      %v5372 = vrot.slane %v5370, 5
      %v5373 = vsel %vm3837, %v5368, %v5372
      %v5375 = vshrl.u32 %v5318, 16
      %v5377 = vrot.slane %v5375, 4
      %v5378 = vshll.u32 %v5318, 16
      %v5380 = vrot.slane %v5378, 5
      %v5381 = vor.u32 %v5377, %v5380
      %v5382 = vrot.slane %v5381, 4
      %v5384 = vshll.u32 %v5319, 16
      %v5386 = vrot.slane %v5384, 5
      %v5387 = vsel %vm3837, %v5382, %v5386
      %s5388 = scalar_lea.vmem %s7, 32
      %v5389 = vld [vmem:[%s5388] sm:$0xf]
      %v5390 = vld [vmem:[%s5388 + $0x4] sm:$0xf]
      %v5391 = vld [vmem:[%s5388 + $0x8] sm:$0xf]
      %v5392 = vld [vmem:[%s5388 + $0xc] sm:$0xf]
      %v5393 = vld [vmem:[%s5388 + $0x10] sm:$0xf]
      %v5394 = vld [vmem:[%s5388 + $0x14] sm:$0xf]
      %v5395 = vld [vmem:[%s5388 + $0x18] sm:$0xf]
      %v5396 = vld [vmem:[%s5388 + $0x1c] sm:$0xf]
      %v5397 = vunpack.c.l.b16 %v5345
      %v5398 = vunpack.c.l.b16 %v5359
      %v5399 = vunpack.c.l.b16 %v5373
      %v5400 = vunpack.c.l.b16 %v5387
      %v5401 = vpack.c.b16 %v5398, %v5397
      %v5402 = vpack.c.b16 %v5400, %v5399
      %v5411 = vunpack.c.l.b16 %v5389
      %v5412 = vunpack.c.l.b16 %v5390
      %v5413 = vunpack.c.l.b16 %v5391
      %v5414 = vunpack.c.l.b16 %v5392
      %v5415 = vunpack.c.l.b16 %v5393
      %v5416 = vunpack.c.l.b16 %v5394
      %v5417 = vunpack.c.l.b16 %v5395
      %v5418 = vunpack.c.l.b16 %v5396
      %v5419 = vpack.c.b16 %v5412, %v5411
      %v5420 = vpack.c.b16 %v5414, %v5413
      %v5421 = vpack.c.b16 %v5416, %v5415
      %v5422 = vpack.c.b16 %v5418, %v5417
      %v5428 = vsel %vm565, %v5401, 0
      %v5431 = vsel %vm565, %v5402, 0
      %5433 = vmatprep.subr.bf16.mxu0 0
      %5434 = vmatpush1.bf16.msra.mxu0 0
      %5435 = vmatprep.subr.bf16.mxu0 0
      %5436 = vmatpush1.bf16.msra.mxu0 0
      %5437 = vmatprep.subr.bf16.mxu0 0
      %5438 = vmatpush1.bf16.msra.mxu0 0
      %5439 = vmatprep.subr.bf16.mxu0 0
      %5440 = vmatpush1.bf16.msra.mxu0 0
      %5441 = vmatprep.subr.bf16.mxu0 0
      %5442 = vmatpush1.bf16.msra.mxu0 %v5422
      %5443 = vmatprep.subr.bf16.mxu0 0
      %5444 = vmatpush1.bf16.msra.mxu0 %v5421
      %5445 = vmatprep.subr.bf16.mxu0 0
      %5446 = vmatpush1.bf16.msra.mxu0 %v5420
      %5447 = vmatprep.subr.bf16.mxu0 0
      %5448 = vmatpush1.bf16.msra.mxu0 %v5419
      %5449 = vmatprep.subr.bf16.mxu0 0
      %5450 = vmatpush2.bf16.msra.mxu0 0
      %5451 = vmatprep.subr.bf16.mxu0 0
      %5452 = vmatpush2.bf16.msra.mxu0 0
      %5453 = vmatprep.subr.bf16.mxu0 0
      %5454 = vmatpush2.bf16.msra.mxu0 0
      %5455 = vmatprep.subr.bf16.mxu0 0
      %5456 = vmatpush2.bf16.msra.mxu0 0
      %5457 = vmatprep.subr.bf16.mxu0 0
      %5458 = vmatpush2.bf16.msra.mxu0 0
      %5459 = vmatprep.subr.bf16.mxu0 0
      %5460 = vmatpush2.bf16.msra.mxu0 0
      %5461 = vmatprep.subr.bf16.mxu0 0
      %5462 = vmatpush2.bf16.msra.mxu0 0
      %5463 = vmatprep.subr.bf16.mxu0 0
      %5464 = vmatpush2.bf16.msra.mxu0 0
      %5465 = vmatprep.mubr.bf16.mxu0 0
      %5466 = vmatmul.mubr.bf16.gmra.mxu0 %v5428
      %v5467 = vpop.f32.mrf.mxu0
      %v5468 = vadd.f32 0.0, %v5467
      %v5469 = vpop.f32.mrf.mxu0
      %v5470 = vpop.f32.mrf.mxu0
      %v5471 = vadd.f32 0.0, %v5470
      %v5472 = vpop.f32.mrf.mxu0
      %5473 = vmatprep.mubr.bf16.mxu0 0
      %5474 = vmatmul.mubr.bf16.gmra.mxu0 %v5431
      %v5475 = vpop.f32.mrf.mxu0
      %v5476 = vadd.f32 0.0, %v5475
      %v5477 = vpop.f32.mrf.mxu0
      %v5478 = vpop.f32.mrf.mxu0
      %v5479 = vadd.f32 0.0, %v5478
      %v5480 = vpop.f32.mrf.mxu0
      %5481 = vdwg.mxu0
      %v5486 = vunpack.c.l.b16 %v5306
      %v5487 = vunpack.c.l.b16 %v5310
      %v5488 = vunpack.c.l.b16 %v5314
      %v5489 = vunpack.c.l.b16 %v5318
      %v5490 = vpack.c.b16 %v5487, %v5486
      %v5491 = vpack.c.b16 %v5489, %v5488
      %v5500 = vunpack.c.l.b16 %v5324
      %v5501 = vunpack.c.l.b16 %v5325
      %v5502 = vunpack.c.l.b16 %v5326
      %v5503 = vunpack.c.l.b16 %v5327
      %v5504 = vunpack.c.l.b16 %v5328
      %v5505 = vunpack.c.l.b16 %v5329
      %v5506 = vunpack.c.l.b16 %v5330
      %v5507 = vunpack.c.l.b16 %v5331
      %v5508 = vpack.c.b16 %v5501, %v5500
      %v5509 = vpack.c.b16 %v5503, %v5502
      %v5510 = vpack.c.b16 %v5505, %v5504
      %v5511 = vpack.c.b16 %v5507, %v5506
      %v5517 = vsel %vm565, %v5490, 0
      %v5520 = vsel %vm565, %v5491, 0
      %5522 = vmatprep.subr.bf16.mxu0 0
      %5523 = vmatpush1.bf16.msra.mxu0 0
      %5524 = vmatprep.subr.bf16.mxu0 0
      %5525 = vmatpush1.bf16.msra.mxu0 0
      %5526 = vmatprep.subr.bf16.mxu0 0
      %5527 = vmatpush1.bf16.msra.mxu0 0
      %5528 = vmatprep.subr.bf16.mxu0 0
      %5529 = vmatpush1.bf16.msra.mxu0 0
      %5530 = vmatprep.subr.bf16.mxu0 0
      %5531 = vmatpush1.bf16.msra.mxu0 %v5511
      %5532 = vmatprep.subr.bf16.mxu0 0
      %5533 = vmatpush1.bf16.msra.mxu0 %v5510
      %5534 = vmatprep.subr.bf16.mxu0 0
      %5535 = vmatpush1.bf16.msra.mxu0 %v5509
      %5536 = vmatprep.subr.bf16.mxu0 0
      %5537 = vmatpush1.bf16.msra.mxu0 %v5508
      %5538 = vmatprep.subr.bf16.mxu0 0
      %5539 = vmatpush2.bf16.msra.mxu0 0
      %5540 = vmatprep.subr.bf16.mxu0 0
      %5541 = vmatpush2.bf16.msra.mxu0 0
      %5542 = vmatprep.subr.bf16.mxu0 0
      %5543 = vmatpush2.bf16.msra.mxu0 0
      %5544 = vmatprep.subr.bf16.mxu0 0
      %5545 = vmatpush2.bf16.msra.mxu0 0
      %5546 = vmatprep.subr.bf16.mxu0 0
      %5547 = vmatpush2.bf16.msra.mxu0 0
      %5548 = vmatprep.subr.bf16.mxu0 0
      %5549 = vmatpush2.bf16.msra.mxu0 0
      %5550 = vmatprep.subr.bf16.mxu0 0
      %5551 = vmatpush2.bf16.msra.mxu0 0
      %5552 = vmatprep.subr.bf16.mxu0 0
      %5553 = vmatpush2.bf16.msra.mxu0 0
      %5554 = vmatprep.mubr.bf16.mxu0 0
      %5555 = vmatmul.mubr.bf16.gmra.mxu0 %v5517
      %v5556 = vpop.f32.mrf.mxu0
      %v5557 = vadd.f32 %v5468, %v5556
      %v5558 = vpop.f32.mrf.mxu0
      %v5559 = vpop.f32.mrf.mxu0
      %v5560 = vadd.f32 %v5471, %v5559
      %v5561 = vpop.f32.mrf.mxu0
      %5562 = vmatprep.mubr.bf16.mxu0 0
      %5563 = vmatmul.mubr.bf16.gmra.mxu0 %v5520
      %v5564 = vpop.f32.mrf.mxu0
      %v5565 = vadd.f32 %v5476, %v5564
      %v5566 = vpop.f32.mrf.mxu0
      %v5567 = vpop.f32.mrf.mxu0
      %v5568 = vadd.f32 %v5479, %v5567
      %v5569 = vpop.f32.mrf.mxu0
      %5570 = vdwg.mxu0
      %v5575 = vrot.slane %v5306, 5
      %v5576 = vrot.slane %v5575, 4
      %v5577 = vrot.slane %v5307, 5
      %v5578 = vsel %vm4203, %v5576, %v5577
      %v5579 = vrot.slane %v5310, 5
      %v5580 = vrot.slane %v5579, 4
      %v5581 = vrot.slane %v5311, 5
      %v5582 = vsel %vm4203, %v5580, %v5581
      %v5583 = vrot.slane %v5314, 5
      %v5584 = vrot.slane %v5583, 4
      %v5585 = vrot.slane %v5315, 5
      %v5586 = vsel %vm4203, %v5584, %v5585
      %v5587 = vrot.slane %v5318, 5
      %v5588 = vrot.slane %v5587, 4
      %v5589 = vrot.slane %v5319, 5
      %v5590 = vsel %vm4203, %v5588, %v5589
      %s5591 = scalar_lea.vmem %s7, 64
      %v5592 = vld [vmem:[%s5591] sm:$0xf]
      %v5593 = vld [vmem:[%s5591 + $0x4] sm:$0xf]
      %v5594 = vld [vmem:[%s5591 + $0x8] sm:$0xf]
      %v5595 = vld [vmem:[%s5591 + $0xc] sm:$0xf]
      %v5596 = vld [vmem:[%s5591 + $0x10] sm:$0xf]
      %v5597 = vld [vmem:[%s5591 + $0x14] sm:$0xf]
      %v5598 = vld [vmem:[%s5591 + $0x18] sm:$0xf]
      %v5599 = vld [vmem:[%s5591 + $0x1c] sm:$0xf]
      %v5600 = vunpack.c.l.b16 %v5578
      %v5601 = vunpack.c.l.b16 %v5582
      %v5602 = vunpack.c.l.b16 %v5586
      %v5603 = vunpack.c.l.b16 %v5590
      %v5604 = vpack.c.b16 %v5601, %v5600
      %v5605 = vpack.c.b16 %v5603, %v5602
      %v5614 = vunpack.c.l.b16 %v5592
      %v5615 = vunpack.c.l.b16 %v5593
      %v5616 = vunpack.c.l.b16 %v5594
      %v5617 = vunpack.c.l.b16 %v5595
      %v5618 = vunpack.c.l.b16 %v5596
      %v5619 = vunpack.c.l.b16 %v5597
      %v5620 = vunpack.c.l.b16 %v5598
      %v5621 = vunpack.c.l.b16 %v5599
      %v5622 = vpack.c.b16 %v5615, %v5614
      %v5623 = vpack.c.b16 %v5617, %v5616
      %v5624 = vpack.c.b16 %v5619, %v5618
      %v5625 = vpack.c.b16 %v5621, %v5620
      %v5631 = vsel %vm565, %v5604, 0
      %v5634 = vsel %vm565, %v5605, 0
      %5636 = vmatprep.subr.bf16.mxu0 0
      %5637 = vmatpush1.bf16.msra.mxu0 0
      %5638 = vmatprep.subr.bf16.mxu0 0
      %5639 = vmatpush1.bf16.msra.mxu0 0
      %5640 = vmatprep.subr.bf16.mxu0 0
      %5641 = vmatpush1.bf16.msra.mxu0 0
      %5642 = vmatprep.subr.bf16.mxu0 0
      %5643 = vmatpush1.bf16.msra.mxu0 0
      %5644 = vmatprep.subr.bf16.mxu0 0
      %5645 = vmatpush1.bf16.msra.mxu0 %v5625
      %5646 = vmatprep.subr.bf16.mxu0 0
      %5647 = vmatpush1.bf16.msra.mxu0 %v5624
      %5648 = vmatprep.subr.bf16.mxu0 0
      %5649 = vmatpush1.bf16.msra.mxu0 %v5623
      %5650 = vmatprep.subr.bf16.mxu0 0
      %5651 = vmatpush1.bf16.msra.mxu0 %v5622
      %5652 = vmatprep.subr.bf16.mxu0 0
      %5653 = vmatpush2.bf16.msra.mxu0 0
      %5654 = vmatprep.subr.bf16.mxu0 0
      %5655 = vmatpush2.bf16.msra.mxu0 0
      %5656 = vmatprep.subr.bf16.mxu0 0
      %5657 = vmatpush2.bf16.msra.mxu0 0
      %5658 = vmatprep.subr.bf16.mxu0 0
      %5659 = vmatpush2.bf16.msra.mxu0 0
      %5660 = vmatprep.subr.bf16.mxu0 0
      %5661 = vmatpush2.bf16.msra.mxu0 0
      %5662 = vmatprep.subr.bf16.mxu0 0
      %5663 = vmatpush2.bf16.msra.mxu0 0
      %5664 = vmatprep.subr.bf16.mxu0 0
      %5665 = vmatpush2.bf16.msra.mxu0 0
      %5666 = vmatprep.subr.bf16.mxu0 0
      %5667 = vmatpush2.bf16.msra.mxu0 0
      %5668 = vmatprep.mubr.bf16.mxu0 0
      %5669 = vmatmul.mubr.bf16.gmra.mxu0 %v5631
      %v5670 = vpop.f32.mrf.mxu0
      %v5671 = vadd.f32 0.0, %v5670
      %v5672 = vpop.f32.mrf.mxu0
      %v5673 = vpop.f32.mrf.mxu0
      %v5674 = vadd.f32 0.0, %v5673
      %v5675 = vpop.f32.mrf.mxu0
      %5676 = vmatprep.mubr.bf16.mxu0 0
      %5677 = vmatmul.mubr.bf16.gmra.mxu0 %v5634
      %v5678 = vpop.f32.mrf.mxu0
      %v5679 = vadd.f32 0.0, %v5678
      %v5680 = vpop.f32.mrf.mxu0
      %v5681 = vpop.f32.mrf.mxu0
      %v5682 = vadd.f32 0.0, %v5681
      %v5683 = vpop.f32.mrf.mxu0
      %5684 = vdwg.mxu0
      %v5685 = vadd.f32 %v5557, %v5671
      %v5686 = vadd.f32 %v5560, %v5674
      %v5687 = vadd.f32 %v5565, %v5679
      %v5688 = vadd.f32 %v5568, %v5682
      %s5689 = scalar_lea.vmem %s7, 96
      %v5690 = vld [vmem:[%s5689] sm:$0xf]
      %v5691 = vld [vmem:[%s5689 + $0x4] sm:$0xf]
      %v5692 = vld [vmem:[%s5689 + $0x8] sm:$0xf]
      %v5693 = vld [vmem:[%s5689 + $0xc] sm:$0xf]
      %v5694 = vld [vmem:[%s5689 + $0x10] sm:$0xf]
      %v5695 = vld [vmem:[%s5689 + $0x14] sm:$0xf]
      %v5696 = vld [vmem:[%s5689 + $0x18] sm:$0xf]
      %v5697 = vld [vmem:[%s5689 + $0x1c] sm:$0xf]
      %v5702 = vunpack.c.l.b16 %v5308
      %v5703 = vunpack.c.l.b16 %v5312
      %v5704 = vunpack.c.l.b16 %v5316
      %v5705 = vunpack.c.l.b16 %v5320
      %v5706 = vpack.c.b16 %v5703, %v5702
      %v5707 = vpack.c.b16 %v5705, %v5704
      %v5716 = vunpack.c.l.b16 %v5690
      %v5717 = vunpack.c.l.b16 %v5691
      %v5718 = vunpack.c.l.b16 %v5692
      %v5719 = vunpack.c.l.b16 %v5693
      %v5720 = vunpack.c.l.b16 %v5694
      %v5721 = vunpack.c.l.b16 %v5695
      %v5722 = vunpack.c.l.b16 %v5696
      %v5723 = vunpack.c.l.b16 %v5697
      %v5724 = vpack.c.b16 %v5717, %v5716
      %v5725 = vpack.c.b16 %v5719, %v5718
      %v5726 = vpack.c.b16 %v5721, %v5720
      %v5727 = vpack.c.b16 %v5723, %v5722
      %v5733 = vsel %vm565, %v5706, 0
      %v5736 = vsel %vm565, %v5707, 0
      %5738 = vmatprep.subr.bf16.mxu0 0
      %5739 = vmatpush1.bf16.msra.mxu0 0
      %5740 = vmatprep.subr.bf16.mxu0 0
      %5741 = vmatpush1.bf16.msra.mxu0 0
      %5742 = vmatprep.subr.bf16.mxu0 0
      %5743 = vmatpush1.bf16.msra.mxu0 0
      %5744 = vmatprep.subr.bf16.mxu0 0
      %5745 = vmatpush1.bf16.msra.mxu0 0
      %5746 = vmatprep.subr.bf16.mxu0 0
      %5747 = vmatpush1.bf16.msra.mxu0 %v5727
      %5748 = vmatprep.subr.bf16.mxu0 0
      %5749 = vmatpush1.bf16.msra.mxu0 %v5726
      %5750 = vmatprep.subr.bf16.mxu0 0
      %5751 = vmatpush1.bf16.msra.mxu0 %v5725
      %5752 = vmatprep.subr.bf16.mxu0 0
      %5753 = vmatpush1.bf16.msra.mxu0 %v5724
      %5754 = vmatprep.subr.bf16.mxu0 0
      %5755 = vmatpush2.bf16.msra.mxu0 0
      %5756 = vmatprep.subr.bf16.mxu0 0
      %5757 = vmatpush2.bf16.msra.mxu0 0
      %5758 = vmatprep.subr.bf16.mxu0 0
      %5759 = vmatpush2.bf16.msra.mxu0 0
      %5760 = vmatprep.subr.bf16.mxu0 0
      %5761 = vmatpush2.bf16.msra.mxu0 0
      %5762 = vmatprep.subr.bf16.mxu0 0
      %5763 = vmatpush2.bf16.msra.mxu0 0
      %5764 = vmatprep.subr.bf16.mxu0 0
      %5765 = vmatpush2.bf16.msra.mxu0 0
      %5766 = vmatprep.subr.bf16.mxu0 0
      %5767 = vmatpush2.bf16.msra.mxu0 0
      %5768 = vmatprep.subr.bf16.mxu0 0
      %5769 = vmatpush2.bf16.msra.mxu0 0
      %5770 = vmatprep.mubr.bf16.mxu0 0
      %5771 = vmatmul.mubr.bf16.gmra.mxu0 %v5733
      %v5772 = vpop.f32.mrf.mxu0
      %v5773 = vadd.f32 0.0, %v5772
      %v5774 = vpop.f32.mrf.mxu0
      %v5775 = vpop.f32.mrf.mxu0
      %v5776 = vadd.f32 0.0, %v5775
      %v5777 = vpop.f32.mrf.mxu0
      %5778 = vmatprep.mubr.bf16.mxu0 0
      %5779 = vmatmul.mubr.bf16.gmra.mxu0 %v5736
      %v5780 = vpop.f32.mrf.mxu0
      %v5781 = vadd.f32 0.0, %v5780
      %v5782 = vpop.f32.mrf.mxu0
      %v5783 = vpop.f32.mrf.mxu0
      %v5784 = vadd.f32 0.0, %v5783
      %v5785 = vpop.f32.mrf.mxu0
      %5786 = vdwg.mxu0
      %v5787 = vadd.f32 %v5685, %v5773
      %v5788 = vadd.f32 %v5686, %v5776
      %v5789 = vadd.f32 %v5687, %v5781
      %v5790 = vadd.f32 %v5688, %v5784
      %v5792 = vshrl.u32 %v5308, 16
      %v5794 = vrot.slane %v5792, 4
      %v5795 = vshll.u32 %v5308, 16
      %v5797 = vrot.slane %v5795, 5
      %v5798 = vor.u32 %v5794, %v5797
      %v5799 = vrot.slane %v5798, 4
      %v5801 = vshll.u32 %v5309, 16
      %v5803 = vrot.slane %v5801, 5
      %v5804 = vsel %vm3837, %v5799, %v5803
      %v5806 = vshrl.u32 %v5312, 16
      %v5808 = vrot.slane %v5806, 4
      %v5809 = vshll.u32 %v5312, 16
      %v5811 = vrot.slane %v5809, 5
      %v5812 = vor.u32 %v5808, %v5811
      %v5813 = vrot.slane %v5812, 4
      %v5815 = vshll.u32 %v5313, 16
      %v5817 = vrot.slane %v5815, 5
      %v5818 = vsel %vm3837, %v5813, %v5817
      %v5820 = vshrl.u32 %v5316, 16
      %v5822 = vrot.slane %v5820, 4
      %v5823 = vshll.u32 %v5316, 16
      %v5825 = vrot.slane %v5823, 5
      %v5826 = vor.u32 %v5822, %v5825
      %v5827 = vrot.slane %v5826, 4
      %v5829 = vshll.u32 %v5317, 16
      %v5831 = vrot.slane %v5829, 5
      %v5832 = vsel %vm3837, %v5827, %v5831
      %v5834 = vshrl.u32 %v5320, 16
      %v5836 = vrot.slane %v5834, 4
      %v5837 = vshll.u32 %v5320, 16
      %v5839 = vrot.slane %v5837, 5
      %v5840 = vor.u32 %v5836, %v5839
      %v5841 = vrot.slane %v5840, 4
      %v5843 = vshll.u32 %v5321, 16
      %v5845 = vrot.slane %v5843, 5
      %v5846 = vsel %vm3837, %v5841, %v5845
      %s5847 = scalar_lea.vmem %s7, 128
      %v5848 = vld [vmem:[%s5847] sm:$0xf]
      %v5849 = vld [vmem:[%s5847 + $0x4] sm:$0xf]
      %v5850 = vld [vmem:[%s5847 + $0x8] sm:$0xf]
      %v5851 = vld [vmem:[%s5847 + $0xc] sm:$0xf]
      %v5852 = vld [vmem:[%s5847 + $0x10] sm:$0xf]
      %v5853 = vld [vmem:[%s5847 + $0x14] sm:$0xf]
      %v5854 = vld [vmem:[%s5847 + $0x18] sm:$0xf]
      %v5855 = vld [vmem:[%s5847 + $0x1c] sm:$0xf]
      %v5856 = vunpack.c.l.b16 %v5804
      %v5857 = vunpack.c.l.b16 %v5818
      %v5858 = vunpack.c.l.b16 %v5832
      %v5859 = vunpack.c.l.b16 %v5846
      %v5860 = vpack.c.b16 %v5857, %v5856
      %v5861 = vpack.c.b16 %v5859, %v5858
      %v5870 = vunpack.c.l.b16 %v5848
      %v5871 = vunpack.c.l.b16 %v5849
      %v5872 = vunpack.c.l.b16 %v5850
      %v5873 = vunpack.c.l.b16 %v5851
      %v5874 = vunpack.c.l.b16 %v5852
      %v5875 = vunpack.c.l.b16 %v5853
      %v5876 = vunpack.c.l.b16 %v5854
      %v5877 = vunpack.c.l.b16 %v5855
      %v5878 = vpack.c.b16 %v5871, %v5870
      %v5879 = vpack.c.b16 %v5873, %v5872
      %v5880 = vpack.c.b16 %v5875, %v5874
      %v5881 = vpack.c.b16 %v5877, %v5876
      %v5887 = vsel %vm565, %v5860, 0
      %v5890 = vsel %vm565, %v5861, 0
      %5892 = vmatprep.subr.bf16.mxu0 0
      %5893 = vmatpush1.bf16.msra.mxu0 0
      %5894 = vmatprep.subr.bf16.mxu0 0
      %5895 = vmatpush1.bf16.msra.mxu0 0
      %5896 = vmatprep.subr.bf16.mxu0 0
      %5897 = vmatpush1.bf16.msra.mxu0 0
      %5898 = vmatprep.subr.bf16.mxu0 0
      %5899 = vmatpush1.bf16.msra.mxu0 0
      %5900 = vmatprep.subr.bf16.mxu0 0
      %5901 = vmatpush1.bf16.msra.mxu0 %v5881
      %5902 = vmatprep.subr.bf16.mxu0 0
      %5903 = vmatpush1.bf16.msra.mxu0 %v5880
      %5904 = vmatprep.subr.bf16.mxu0 0
      %5905 = vmatpush1.bf16.msra.mxu0 %v5879
      %5906 = vmatprep.subr.bf16.mxu0 0
      %5907 = vmatpush1.bf16.msra.mxu0 %v5878
      %5908 = vmatprep.subr.bf16.mxu0 0
      %5909 = vmatpush2.bf16.msra.mxu0 0
      %5910 = vmatprep.subr.bf16.mxu0 0
      %5911 = vmatpush2.bf16.msra.mxu0 0
      %5912 = vmatprep.subr.bf16.mxu0 0
      %5913 = vmatpush2.bf16.msra.mxu0 0
      %5914 = vmatprep.subr.bf16.mxu0 0
      %5915 = vmatpush2.bf16.msra.mxu0 0
      %5916 = vmatprep.subr.bf16.mxu0 0
      %5917 = vmatpush2.bf16.msra.mxu0 0
      %5918 = vmatprep.subr.bf16.mxu0 0
      %5919 = vmatpush2.bf16.msra.mxu0 0
      %5920 = vmatprep.subr.bf16.mxu0 0
      %5921 = vmatpush2.bf16.msra.mxu0 0
      %5922 = vmatprep.subr.bf16.mxu0 0
      %5923 = vmatpush2.bf16.msra.mxu0 0
      %5924 = vmatprep.mubr.bf16.mxu0 0
      %5925 = vmatmul.mubr.bf16.gmra.mxu0 %v5887
      %v5926 = vpop.f32.mrf.mxu0
      %v5927 = vadd.f32 0.0, %v5926
      %v5928 = vpop.f32.mrf.mxu0
      %v5929 = vpop.f32.mrf.mxu0
      %v5930 = vadd.f32 0.0, %v5929
      %v5931 = vpop.f32.mrf.mxu0
      %5932 = vmatprep.mubr.bf16.mxu0 0
      %5933 = vmatmul.mubr.bf16.gmra.mxu0 %v5890
      %v5934 = vpop.f32.mrf.mxu0
      %v5935 = vadd.f32 0.0, %v5934
      %v5936 = vpop.f32.mrf.mxu0
      %v5937 = vpop.f32.mrf.mxu0
      %v5938 = vadd.f32 0.0, %v5937
      %v5939 = vpop.f32.mrf.mxu0
      %5940 = vdwg.mxu0
      %v5941 = vadd.f32 %v5787, %v5927
      %v5942 = vadd.f32 %v5788, %v5930
      %v5943 = vadd.f32 %v5789, %v5935
      %v5944 = vadd.f32 %v5790, %v5938
      %v5949 = vrot.slane %v5308, 5
      %v5950 = vrot.slane %v5949, 4
      %v5951 = vrot.slane %v5309, 5
      %v5952 = vsel %vm4203, %v5950, %v5951
      %v5953 = vrot.slane %v5312, 5
      %v5954 = vrot.slane %v5953, 4
      %v5955 = vrot.slane %v5313, 5
      %v5956 = vsel %vm4203, %v5954, %v5955
      %v5957 = vrot.slane %v5316, 5
      %v5958 = vrot.slane %v5957, 4
      %v5959 = vrot.slane %v5317, 5
      %v5960 = vsel %vm4203, %v5958, %v5959
      %v5961 = vrot.slane %v5320, 5
      %v5962 = vrot.slane %v5961, 4
      %v5963 = vrot.slane %v5321, 5
      %v5964 = vsel %vm4203, %v5962, %v5963
      %s5965 = scalar_lea.vmem %s7, 160
      %v5966 = vld [vmem:[%s5965] sm:$0xf]
      %v5967 = vld [vmem:[%s5965 + $0x4] sm:$0xf]
      %v5968 = vld [vmem:[%s5965 + $0x8] sm:$0xf]
      %v5969 = vld [vmem:[%s5965 + $0xc] sm:$0xf]
      %v5970 = vld [vmem:[%s5965 + $0x10] sm:$0xf]
      %v5971 = vld [vmem:[%s5965 + $0x14] sm:$0xf]
      %v5972 = vld [vmem:[%s5965 + $0x18] sm:$0xf]
      %v5973 = vld [vmem:[%s5965 + $0x1c] sm:$0xf]
      %v5974 = vunpack.c.l.b16 %v5952
      %v5975 = vunpack.c.l.b16 %v5956
      %v5976 = vunpack.c.l.b16 %v5960
      %v5977 = vunpack.c.l.b16 %v5964
      %v5978 = vpack.c.b16 %v5975, %v5974
      %v5979 = vpack.c.b16 %v5977, %v5976
      %v5988 = vunpack.c.l.b16 %v5966
      %v5989 = vunpack.c.l.b16 %v5967
      %v5990 = vunpack.c.l.b16 %v5968
      %v5991 = vunpack.c.l.b16 %v5969
      %v5992 = vunpack.c.l.b16 %v5970
      %v5993 = vunpack.c.l.b16 %v5971
      %v5994 = vunpack.c.l.b16 %v5972
      %v5995 = vunpack.c.l.b16 %v5973
      %v5996 = vpack.c.b16 %v5989, %v5988
      %v5997 = vpack.c.b16 %v5991, %v5990
      %v5998 = vpack.c.b16 %v5993, %v5992
      %v5999 = vpack.c.b16 %v5995, %v5994
      %v6005 = vsel %vm565, %v5978, 0
      %v6008 = vsel %vm565, %v5979, 0
      %6010 = vmatprep.subr.bf16.mxu0 0
      %6011 = vmatpush1.bf16.msra.mxu0 0
      %6012 = vmatprep.subr.bf16.mxu0 0
      %6013 = vmatpush1.bf16.msra.mxu0 0
      %6014 = vmatprep.subr.bf16.mxu0 0
      %6015 = vmatpush1.bf16.msra.mxu0 0
      %6016 = vmatprep.subr.bf16.mxu0 0
      %6017 = vmatpush1.bf16.msra.mxu0 0
      %6018 = vmatprep.subr.bf16.mxu0 0
      %6019 = vmatpush1.bf16.msra.mxu0 %v5999
      %6020 = vmatprep.subr.bf16.mxu0 0
      %6021 = vmatpush1.bf16.msra.mxu0 %v5998
      %6022 = vmatprep.subr.bf16.mxu0 0
      %6023 = vmatpush1.bf16.msra.mxu0 %v5997
      %6024 = vmatprep.subr.bf16.mxu0 0
      %6025 = vmatpush1.bf16.msra.mxu0 %v5996
      %6026 = vmatprep.subr.bf16.mxu0 0
      %6027 = vmatpush2.bf16.msra.mxu0 0
      %6028 = vmatprep.subr.bf16.mxu0 0
      %6029 = vmatpush2.bf16.msra.mxu0 0
      %6030 = vmatprep.subr.bf16.mxu0 0
      %6031 = vmatpush2.bf16.msra.mxu0 0
      %6032 = vmatprep.subr.bf16.mxu0 0
      %6033 = vmatpush2.bf16.msra.mxu0 0
      %6034 = vmatprep.subr.bf16.mxu0 0
      %6035 = vmatpush2.bf16.msra.mxu0 0
      %6036 = vmatprep.subr.bf16.mxu0 0
      %6037 = vmatpush2.bf16.msra.mxu0 0
      %6038 = vmatprep.subr.bf16.mxu0 0
      %6039 = vmatpush2.bf16.msra.mxu0 0
      %6040 = vmatprep.subr.bf16.mxu0 0
      %6041 = vmatpush2.bf16.msra.mxu0 0
      %6042 = vmatprep.mubr.bf16.mxu0 0
      %6043 = vmatmul.mubr.bf16.gmra.mxu0 %v6005
      %v6044 = vpop.f32.mrf.mxu0
      %v6045 = vadd.f32 0.0, %v6044
      %v6046 = vpop.f32.mrf.mxu0
      %v6047 = vpop.f32.mrf.mxu0
      %v6048 = vadd.f32 0.0, %v6047
      %v6049 = vpop.f32.mrf.mxu0
      %6050 = vmatprep.mubr.bf16.mxu0 0
      %6051 = vmatmul.mubr.bf16.gmra.mxu0 %v6008
      %v6052 = vpop.f32.mrf.mxu0
      %v6053 = vadd.f32 0.0, %v6052
      %v6054 = vpop.f32.mrf.mxu0
      %v6055 = vpop.f32.mrf.mxu0
      %v6056 = vadd.f32 0.0, %v6055
      %v6057 = vpop.f32.mrf.mxu0
      %6058 = vdwg.mxu0
      %v6059 = vadd.f32 %v5941, %v6045
      %v6060 = vadd.f32 %v5942, %v6048
      %v6061 = vadd.f32 %v5943, %v6053
      %v6062 = vadd.f32 %v5944, %v6056
      %s6063 = scalar_lea.vmem %s7, 192
      %v6064 = vld [vmem:[%s6063] sm:$0xf]
      %v6065 = vld [vmem:[%s6063 + $0x4] sm:$0xf]
      %v6066 = vld [vmem:[%s6063 + $0x8] sm:$0xf]
      %v6067 = vld [vmem:[%s6063 + $0xc] sm:$0xf]
      %v6068 = vld [vmem:[%s6063 + $0x10] sm:$0xf]
      %v6069 = vld [vmem:[%s6063 + $0x14] sm:$0xf]
      %v6070 = vld [vmem:[%s6063 + $0x18] sm:$0xf]
      %v6071 = vld [vmem:[%s6063 + $0x1c] sm:$0xf]
      %v6073 = vunpack.c.l.b16 %v5322
      %v6074 = vpack.c.b16 %v5488, %v5487
      %v6075 = vpack.c.b16 %v6073, %v5489
      %v6084 = vunpack.c.l.b16 %v6064
      %v6085 = vunpack.c.l.b16 %v6065
      %v6086 = vunpack.c.l.b16 %v6066
      %v6087 = vunpack.c.l.b16 %v6067
      %v6088 = vunpack.c.l.b16 %v6068
      %v6089 = vunpack.c.l.b16 %v6069
      %v6090 = vunpack.c.l.b16 %v6070
      %v6091 = vunpack.c.l.b16 %v6071
      %v6092 = vpack.c.b16 %v6085, %v6084
      %v6093 = vpack.c.b16 %v6087, %v6086
      %v6094 = vpack.c.b16 %v6089, %v6088
      %v6095 = vpack.c.b16 %v6091, %v6090
      %v6101 = vsel %vm565, %v6074, 0
      %v6104 = vsel %vm565, %v6075, 0
      %6106 = vmatprep.subr.bf16.mxu0 0
      %6107 = vmatpush1.bf16.msra.mxu0 0
      %6108 = vmatprep.subr.bf16.mxu0 0
      %6109 = vmatpush1.bf16.msra.mxu0 0
      %6110 = vmatprep.subr.bf16.mxu0 0
      %6111 = vmatpush1.bf16.msra.mxu0 0
      %6112 = vmatprep.subr.bf16.mxu0 0
      %6113 = vmatpush1.bf16.msra.mxu0 0
      %6114 = vmatprep.subr.bf16.mxu0 0
      %6115 = vmatpush1.bf16.msra.mxu0 %v6095
      %6116 = vmatprep.subr.bf16.mxu0 0
      %6117 = vmatpush1.bf16.msra.mxu0 %v6094
      %6118 = vmatprep.subr.bf16.mxu0 0
      %6119 = vmatpush1.bf16.msra.mxu0 %v6093
      %6120 = vmatprep.subr.bf16.mxu0 0
      %6121 = vmatpush1.bf16.msra.mxu0 %v6092
      %6122 = vmatprep.subr.bf16.mxu0 0
      %6123 = vmatpush2.bf16.msra.mxu0 0
      %6124 = vmatprep.subr.bf16.mxu0 0
      %6125 = vmatpush2.bf16.msra.mxu0 0
      %6126 = vmatprep.subr.bf16.mxu0 0
      %6127 = vmatpush2.bf16.msra.mxu0 0
      %6128 = vmatprep.subr.bf16.mxu0 0
      %6129 = vmatpush2.bf16.msra.mxu0 0
      %6130 = vmatprep.subr.bf16.mxu0 0
      %6131 = vmatpush2.bf16.msra.mxu0 0
      %6132 = vmatprep.subr.bf16.mxu0 0
      %6133 = vmatpush2.bf16.msra.mxu0 0
      %6134 = vmatprep.subr.bf16.mxu0 0
      %6135 = vmatpush2.bf16.msra.mxu0 0
      %6136 = vmatprep.subr.bf16.mxu0 0
      %6137 = vmatpush2.bf16.msra.mxu0 0
      %6138 = vmatprep.mubr.bf16.mxu0 0
      %6139 = vmatmul.mubr.bf16.gmra.mxu0 %v6101
      %v6140 = vpop.f32.mrf.mxu0
      %v6141 = vadd.f32 0.0, %v6140
      %v6142 = vpop.f32.mrf.mxu0
      %v6143 = vpop.f32.mrf.mxu0
      %v6144 = vadd.f32 0.0, %v6143
      %v6145 = vpop.f32.mrf.mxu0
      %6146 = vmatprep.mubr.bf16.mxu0 0
      %6147 = vmatmul.mubr.bf16.gmra.mxu0 %v6104
      %v6148 = vpop.f32.mrf.mxu0
      %v6149 = vadd.f32 0.0, %v6148
      %v6150 = vpop.f32.mrf.mxu0
      %v6151 = vpop.f32.mrf.mxu0
      %v6152 = vadd.f32 0.0, %v6151
      %v6153 = vpop.f32.mrf.mxu0
      %6154 = vdwg.mxu0
      %v6155 = vadd.f32 %v6059, %v6141
      %v6156 = vadd.f32 %v6060, %v6144
      %v6157 = vadd.f32 %v6061, %v6149
      %v6158 = vadd.f32 %v6062, %v6152
      %v6160 = vshrl.u32 %v5322, 16
      %v6162 = vrot.slane %v6160, 4
      %v6163 = vshll.u32 %v5322, 16
      %v6165 = vrot.slane %v6163, 5
      %v6166 = vor.u32 %v6162, %v6165
      %v6167 = vrot.slane %v6166, 4
      %v6169 = vshll.u32 %v5323, 16
      %v6171 = vrot.slane %v6169, 5
      %v6172 = vsel %vm3837, %v6167, %v6171
      %s6173 = scalar_lea.vmem %s7, 224
      %v6174 = vld [vmem:[%s6173] sm:$0xf]
      %v6175 = vld [vmem:[%s6173 + $0x4] sm:$0xf]
      %v6176 = vld [vmem:[%s6173 + $0x8] sm:$0xf]
      %v6177 = vld [vmem:[%s6173 + $0xc] sm:$0xf]
      %v6178 = vld [vmem:[%s6173 + $0x10] sm:$0xf]
      %v6179 = vld [vmem:[%s6173 + $0x14] sm:$0xf]
      %v6180 = vld [vmem:[%s6173 + $0x18] sm:$0xf]
      %v6181 = vld [vmem:[%s6173 + $0x1c] sm:$0xf]
      %v6182 = vunpack.c.l.b16 %v6172
      %v6183 = vpack.c.b16 %v5399, %v5398
      %v6184 = vpack.c.b16 %v6182, %v5400
      %v6193 = vunpack.c.l.b16 %v6174
      %v6194 = vunpack.c.l.b16 %v6175
      %v6195 = vunpack.c.l.b16 %v6176
      %v6196 = vunpack.c.l.b16 %v6177
      %v6197 = vunpack.c.l.b16 %v6178
      %v6198 = vunpack.c.l.b16 %v6179
      %v6199 = vunpack.c.l.b16 %v6180
      %v6200 = vunpack.c.l.b16 %v6181
      %v6201 = vpack.c.b16 %v6194, %v6193
      %v6202 = vpack.c.b16 %v6196, %v6195
      %v6203 = vpack.c.b16 %v6198, %v6197
      %v6204 = vpack.c.b16 %v6200, %v6199
      %v6210 = vsel %vm565, %v6183, 0
      %v6213 = vsel %vm565, %v6184, 0
      %6215 = vmatprep.subr.bf16.mxu0 0
      %6216 = vmatpush1.bf16.msra.mxu0 0
      %6217 = vmatprep.subr.bf16.mxu0 0
      %6218 = vmatpush1.bf16.msra.mxu0 0
      %6219 = vmatprep.subr.bf16.mxu0 0
      %6220 = vmatpush1.bf16.msra.mxu0 0
      %6221 = vmatprep.subr.bf16.mxu0 0
      %6222 = vmatpush1.bf16.msra.mxu0 0
      %6223 = vmatprep.subr.bf16.mxu0 0
      %6224 = vmatpush1.bf16.msra.mxu0 %v6204
      %6225 = vmatprep.subr.bf16.mxu0 0
      %6226 = vmatpush1.bf16.msra.mxu0 %v6203
      %6227 = vmatprep.subr.bf16.mxu0 0
      %6228 = vmatpush1.bf16.msra.mxu0 %v6202
      %6229 = vmatprep.subr.bf16.mxu0 0
      %6230 = vmatpush1.bf16.msra.mxu0 %v6201
      %6231 = vmatprep.subr.bf16.mxu0 0
      %6232 = vmatpush2.bf16.msra.mxu0 0
      %6233 = vmatprep.subr.bf16.mxu0 0
      %6234 = vmatpush2.bf16.msra.mxu0 0
      %6235 = vmatprep.subr.bf16.mxu0 0
      %6236 = vmatpush2.bf16.msra.mxu0 0
      %6237 = vmatprep.subr.bf16.mxu0 0
      %6238 = vmatpush2.bf16.msra.mxu0 0
      %6239 = vmatprep.subr.bf16.mxu0 0
      %6240 = vmatpush2.bf16.msra.mxu0 0
      %6241 = vmatprep.subr.bf16.mxu0 0
      %6242 = vmatpush2.bf16.msra.mxu0 0
      %6243 = vmatprep.subr.bf16.mxu0 0
      %6244 = vmatpush2.bf16.msra.mxu0 0
      %6245 = vmatprep.subr.bf16.mxu0 0
      %6246 = vmatpush2.bf16.msra.mxu0 0
      %6247 = vmatprep.mubr.bf16.mxu0 0
      %6248 = vmatmul.mubr.bf16.gmra.mxu0 %v6210
      %v6249 = vpop.f32.mrf.mxu0
      %v6250 = vadd.f32 0.0, %v6249
      %v6251 = vpop.f32.mrf.mxu0
      %v6252 = vpop.f32.mrf.mxu0
      %v6253 = vadd.f32 0.0, %v6252
      %v6254 = vpop.f32.mrf.mxu0
      %6255 = vmatprep.mubr.bf16.mxu0 0
      %6256 = vmatmul.mubr.bf16.gmra.mxu0 %v6213
      %v6257 = vpop.f32.mrf.mxu0
      %v6258 = vadd.f32 0.0, %v6257
      %v6259 = vpop.f32.mrf.mxu0
      %v6260 = vpop.f32.mrf.mxu0
      %v6261 = vadd.f32 0.0, %v6260
      %v6262 = vpop.f32.mrf.mxu0
      %6263 = vdwg.mxu0
      %v6264 = vadd.f32 %v6155, %v6250
      %v6265 = vadd.f32 %v6156, %v6253
      %v6266 = vadd.f32 %v6157, %v6258
      %v6267 = vadd.f32 %v6158, %v6261
      %v6269 = vrot.slane %v5322, 5
      %v6270 = vrot.slane %v6269, 4
      %v6271 = vrot.slane %v5323, 5
      %v6272 = vsel %vm4203, %v6270, %v6271
      %s6273 = scalar_lea.vmem %s7, 256
      %v6274 = vld [vmem:[%s6273] sm:$0xf]
      %v6275 = vld [vmem:[%s6273 + $0x4] sm:$0xf]
      %v6276 = vld [vmem:[%s6273 + $0x8] sm:$0xf]
      %v6277 = vld [vmem:[%s6273 + $0xc] sm:$0xf]
      %v6278 = vld [vmem:[%s6273 + $0x10] sm:$0xf]
      %v6279 = vld [vmem:[%s6273 + $0x14] sm:$0xf]
      %v6280 = vld [vmem:[%s6273 + $0x18] sm:$0xf]
      %v6281 = vld [vmem:[%s6273 + $0x1c] sm:$0xf]
      %v6282 = vunpack.c.l.b16 %v6272
      %v6283 = vpack.c.b16 %v5602, %v5601
      %v6284 = vpack.c.b16 %v6282, %v5603
      %v6293 = vunpack.c.l.b16 %v6274
      %v6294 = vunpack.c.l.b16 %v6275
      %v6295 = vunpack.c.l.b16 %v6276
      %v6296 = vunpack.c.l.b16 %v6277
      %v6297 = vunpack.c.l.b16 %v6278
      %v6298 = vunpack.c.l.b16 %v6279
      %v6299 = vunpack.c.l.b16 %v6280
      %v6300 = vunpack.c.l.b16 %v6281
      %v6301 = vpack.c.b16 %v6294, %v6293
      %v6302 = vpack.c.b16 %v6296, %v6295
      %v6303 = vpack.c.b16 %v6298, %v6297
      %v6304 = vpack.c.b16 %v6300, %v6299
      %v6310 = vsel %vm565, %v6283, 0
      %v6313 = vsel %vm565, %v6284, 0
      %6315 = vmatprep.subr.bf16.mxu0 0
      %6316 = vmatpush1.bf16.msra.mxu0 0
      %6317 = vmatprep.subr.bf16.mxu0 0
      %6318 = vmatpush1.bf16.msra.mxu0 0
      %6319 = vmatprep.subr.bf16.mxu0 0
      %6320 = vmatpush1.bf16.msra.mxu0 0
      %6321 = vmatprep.subr.bf16.mxu0 0
      %6322 = vmatpush1.bf16.msra.mxu0 0
      %6323 = vmatprep.subr.bf16.mxu0 0
      %6324 = vmatpush1.bf16.msra.mxu0 %v6304
      %6325 = vmatprep.subr.bf16.mxu0 0
      %6326 = vmatpush1.bf16.msra.mxu0 %v6303
      %6327 = vmatprep.subr.bf16.mxu0 0
      %6328 = vmatpush1.bf16.msra.mxu0 %v6302
      %6329 = vmatprep.subr.bf16.mxu0 0
      %6330 = vmatpush1.bf16.msra.mxu0 %v6301
      %6331 = vmatprep.subr.bf16.mxu0 0
      %6332 = vmatpush2.bf16.msra.mxu0 0
      %6333 = vmatprep.subr.bf16.mxu0 0
      %6334 = vmatpush2.bf16.msra.mxu0 0
      %6335 = vmatprep.subr.bf16.mxu0 0
      %6336 = vmatpush2.bf16.msra.mxu0 0
      %6337 = vmatprep.subr.bf16.mxu0 0
      %6338 = vmatpush2.bf16.msra.mxu0 0
      %6339 = vmatprep.subr.bf16.mxu0 0
      %6340 = vmatpush2.bf16.msra.mxu0 0
      %6341 = vmatprep.subr.bf16.mxu0 0
      %6342 = vmatpush2.bf16.msra.mxu0 0
      %6343 = vmatprep.subr.bf16.mxu0 0
      %6344 = vmatpush2.bf16.msra.mxu0 0
      %6345 = vmatprep.subr.bf16.mxu0 0
      %6346 = vmatpush2.bf16.msra.mxu0 0
      %6347 = vmatprep.mubr.bf16.mxu0 0
      %6348 = vmatmul.mubr.bf16.gmra.mxu0 %v6310
      %v6349 = vpop.f32.mrf.mxu0
      %v6350 = vadd.f32 0.0, %v6349
      %v6351 = vpop.f32.mrf.mxu0
      %v6352 = vpop.f32.mrf.mxu0
      %v6353 = vadd.f32 0.0, %v6352
      %v6354 = vpop.f32.mrf.mxu0
      %6355 = vmatprep.mubr.bf16.mxu0 0
      %6356 = vmatmul.mubr.bf16.gmra.mxu0 %v6313
      %v6357 = vpop.f32.mrf.mxu0
      %v6358 = vadd.f32 0.0, %v6357
      %v6359 = vpop.f32.mrf.mxu0
      %v6360 = vpop.f32.mrf.mxu0
      %v6361 = vadd.f32 0.0, %v6360
      %v6362 = vpop.f32.mrf.mxu0
      %6363 = vdwg.mxu0
      %v6364 = vadd.f32 %v6264, %v6350
      %v6365 = vadd.f32 %v6265, %v6353
      %v6366 = vadd.f32 %v6266, %v6358
      %v6367 = vadd.f32 %v6267, %v6361
      %v6368 = vld [vmem:[%s8] sm:$0x1]
      %v6370 = vlaneseq
      %v6371 = vshrl.u32 %v6370, 7
      %v6372 = vsub.s32 0, %v6371
      %v6373 = vrot.slane %v6368, %v6372
      %v6375 = vadd.f32 %v6364, %v6373
      %v6376 = vadd.f32 %v6365, %v6373
      %v6377 = vadd.f32 %v6366, %v6373
      %v6378 = vadd.f32 %v6367, %v6373
      %vm6379 = vcmask 23552
      %6380 = vst.msk [vmem:[%s332] sm:$0xff] %vm6379, %v6375
      %6381 = vst.msk [vmem:[%s332 + $0x8] sm:$0xff] %vm6379, %v6376
      %6382 = vst.msk [vmem:[%s332 + $0x10] sm:$0xff] %vm6379, %v6377
      %6383 = vst.msk [vmem:[%s332 + $0x18] sm:$0xff] %vm6379, %v6378
      %p6384 = scmp.lt.s32.totalorder %s20, 1
      %s6385 = scalar_select %p6384, %s20, 1
      %s6386 = smul.addr %s6385, 4
      %s6387 = smul.addr %s6386, 8
      %s6388 = scalar_lea.vmem %s9, %s6387
      // Predicated region
      $region64: #{_lambda_.1} parent=55 // pred_check
        %p6389 = pneg %p232
      $region65: #{_lambda_.1} parent=55 // pred_check_branch
        %6391 = sbr.rel (%p6389) target = $region67
      $region66: #{_lambda_.1} parent=55 // pred_region
        _
      $region67: #{_lambda_.1} parent=55 // pred_fallthru
        _
    $region56: #{_lambda_.1} parent=5 // pred_fallthru
      _
    %p6392 = scmp.le.s32.totalorder 2, %s15
    // Predicated region
    $region68: #{_lambda_.1} parent=5 // pred_check
      %p6393 = pneg %p6392
    $region69: #{_lambda_.1} parent=5 // pred_check_branch
      %6395 = sbr.rel (%p6393) target = $region71
    $region70: #{_lambda_.1} parent=5 // pred_region
      %s6396 = ssub.s32 %s15, 2
      // Predicated region
      $region72: #{_lambda_.1} parent=70 // pred_check
        %p6397 = pneg %p238
      $region73: #{_lambda_.1} parent=70 // pred_check_branch
        %6399 = sbr.rel (%p6397) target = $region75
      $region74: #{_lambda_.1} parent=70 // pred_region
        %p6400 = scmp.lt.s32.totalorder %s21, 1
        %s6401 = scalar_select %p6400, %s21, 1
        %s6402 = smul.addr %s6401, 4
        %s6403 = smul.addr %s6402, 8
        %s6404 = scalar_lea.vmem %s9, %s6403
      $region75: #{_lambda_.1} parent=70 // pred_fallthru
        _
    $region71: #{_lambda_.1} parent=5 // pred_fallthru
      _
  $region6: #{_lambda_.1} parent=0 // loop_footer
    %s19 = sadd.s32 1, %s15
  $region7: #{_lambda_.1} parent=0 // loop_footer_branch
    %14 = sbr.rel target = $region3
  $region8: #{_lambda_.1} parent=0 // loop_exit
    _

</llo_original>
